<compile_context>
chip_gen: v7x
topology: tpu7x:2x2x1
jax: 0.10.0
libtpu: 0.0.40
codegen_flags: <defaults>
</compile_context>

<pallas_src>
import functools

import jax
import jax.numpy as jnp
import numpy as np
from jax.experimental import pallas as pl
from jax.experimental.pallas import tpu as pltpu


# ----------------------------------------------------------------------------
# Fused Pallas kernel: full LSTMVAE forward
# ----------------------------------------------------------------------------
def _lstm_vae_kernel(x_ref, ctx_ref, noise_ref,
                     e_wih0_ref, e_whh0_ref, e_b0_ref, e_w1_ref, e_b1_ref,
                     e_cw_ref, e_cb_ref,
                     mv_w_ref, mv_b_ref,
                     d_cw_ref, d_cb_ref,
                     d_wih0_ref, d_whh0_ref, d_b0_ref, d_w1_ref, d_b1_ref,
                     o_w_ref, o_b_ref,
                     act_ref, mean_ref, logvar_ref,
                     enc_scr, dec_scr, pack_scr,
                     *, hidden_size, latent_size, seq_len):
  H = hidden_size
  L = latent_size
  T = seq_len
  B = x_ref.shape[0]
  Fin = x_ref.shape[2]

  def dot(a, b):
    return jnp.dot(a, b, preferred_element_type=jnp.float32)

  def gate_activations(gates):
    # Full-vreg nonlinearities on the (B, 4H) gate block (4H = 128 lanes),
    # then cheap lane extracts.  2 full-vreg EUP ops instead of 4 quarter-vreg ones.
    sig = jax.nn.sigmoid(gates)
    tnh = jnp.tanh(gates)
    i = sig[:, 0:H]
    f = sig[:, H:2 * H]
    o = sig[:, 3 * H:4 * H]
    g = tnh[:, 2 * H:3 * H]
    return i, f, g, o

  def run_lstm2(in_gates3, h_init, whh0_ref, w1_ref, b1_ref, out_scr):
    """2-layer LSTM over time.  in_gates3: (B, T, 4H) = x_t @ W_ih0 + b0 precomputed.
    Layer-1 uses a single matmul on packed [h_lower | h_prev] with stacked weights."""
    # Hoist weight loads out of the time loop.
    whh0 = whh0_ref[...]
    w1 = w1_ref[...]
    b1 = b1_ref[...]

    h0 = h_init
    h1 = h_init
    c0 = jnp.zeros((B, H), jnp.float32)
    c1 = jnp.zeros((B, H), jnp.float32)

    for t in range(T):                              # static, fully unrolled
      # ---- layer 0 ----
      g0 = in_gates3[:, t, :] + dot(h0, whh0)       # (B, 4H)
      i, f, g, o = gate_activations(g0)
      c0 = f * c0 + i * g
      h0 = o * jnp.tanh(c0)
      # ---- layer 1: one matmul on packed [h0 | h1_prev] ----
      pack_scr[:, pl.ds(0, H)] = h0
      pack_scr[:, pl.ds(H, H)] = h1
      g1 = dot(pack_scr[...], w1) + b1              # (B, 4H)
      i, f, g, o = gate_activations(g1)
      c1 = f * c1 + i * g
      h1 = o * jnp.tanh(c1)
      # Stash the layer-1 hidden for this step in VMEM scratch (written to HBM once,
      # in bulk, at the end).
      out_scr[:, pl.ds(t, 1), :] = h1[:, None, :]

  # Hoisted loads of shared inputs.
  ctx = ctx_ref[...]                                # (B, C)

  # ------------------------------- encoder ---------------------------------
  h0_enc = dot(ctx, e_cw_ref[...]) + e_cb_ref[...]  # (B, H); used for both layers
  x_flat = x_ref[...].reshape(B * T, Fin)
  enc_in_gates = (dot(x_flat, e_wih0_ref[...]) + e_b0_ref[...]).reshape(B, T, 4 * H)
  run_lstm2(enc_in_gates, h0_enc, e_whh0_ref, e_w1_ref, e_b1_ref, enc_scr)

  # ------------------- fused mu/logvar head + reparametrize ----------------
  enc_all = enc_scr[...].reshape(B * T, H)
  mulv = dot(enc_all, mv_w_ref[...]) + mv_b_ref[...]        # (B*T, 2L)
  mean3 = mulv[:, 0:L].reshape(B, T, L)
  logvar3 = mulv[:, L:2 * L].reshape(B, T, L)
  mean_ref[...] = mean3
  logvar_ref[...] = logvar3
  z3 = mean3 + noise_ref[...] * jnp.exp(0.5 * logvar3)      # (B, T, L)

  # ------------------------------- decoder ---------------------------------
  h0_dec = dot(ctx, d_cw_ref[...]) + d_cb_ref[...]
  z_flat = z3.reshape(B * T, L)
  dec_in_gates = (dot(z_flat, d_wih0_ref[...]) + d_b0_ref[...]).reshape(B, T, 4 * H)
  run_lstm2(dec_in_gates, h0_dec, d_whh0_ref, d_w1_ref, d_b1_ref, dec_scr)

  dec_all = dec_scr[...].reshape(B * T, H)
  act = dot(dec_all, o_w_ref[...]) + o_b_ref[...]           # (B*T, Dout)
  act_ref[...] = act.reshape(B, T, act_ref.shape[2])


def lstm_vae_forward(params, x, context, noise):
  """x: (B, T, input_size); context: (B, cond_dim); noise: (B, T, latent_size)."""
  B, T, _ = x.shape
  H = params["enc_whh0"].shape[0]
  L = params["mulv_w"].shape[1] // 2
  Dout = params["out_w"].shape[1]

  kernel = functools.partial(_lstm_vae_kernel,
                             hidden_size=H, latent_size=L, seq_len=T)
  out_shape = (jax.ShapeDtypeStruct((B, T, Dout), jnp.float32),
               jax.ShapeDtypeStruct((B, T, L), jnp.float32),
               jax.ShapeDtypeStruct((B, T, L), jnp.float32))

  return pl.pallas_call(
      kernel,
      out_shape=out_shape,
      # No grid: single invocation, all inputs/outputs fully resident in VMEM
      # (total weights + activations << 1 MiB on v5e/v6e/v7x).
      scratch_shapes=[
          pltpu.VMEM((B, T, H), jnp.float32),   # encoder hidden history
          pltpu.VMEM((B, T, H), jnp.float32),   # decoder hidden history
          pltpu.VMEM((B, 2 * H), jnp.float32),  # [h_lower | h_prev] pack for layer 1
      ],
  )(x, context, noise,
    params["enc_wih0"], params["enc_whh0"], params["enc_b0"],
    params["enc_w1"], params["enc_b1"],
    params["enc_cond_w"], params["enc_cond_b"],
    params["mulv_w"], params["mulv_b"],
    params["dec_cond_w"], params["dec_cond_b"],
    params["dec_wih0"], params["dec_whh0"], params["dec_b0"],
    params["dec_w1"], params["dec_b1"],
    params["out_w"], params["out_b"])


# ----------------------------------------------------------------------------
# Parameter construction (deterministic).  Weights are stored in the fused layout
# consumed by the kernel:
#   * LSTM layer 1 weight stacked as [W_ih1; W_hh1]  -> (2H, 4H)
#   * mu / logvar heads concatenated on output dim   -> (H, 2L)
#   * biases are the effective (b_ih + b_hh) sums, shape (1, 4H)
# ----------------------------------------------------------------------------
def init_params(key, input_size, hidden_size, latent_size, output_size, cond_dim):
  H, L = hidden_size, latent_size
  ks = iter(jax.random.split(key, 32))

  def rnd(shape, scale=0.1):
    return jax.random.normal(next(ks), shape, jnp.float32) * scale

  p = {}
  # encoder LSTM
  p["enc_wih0"] = rnd((input_size, 4 * H))
  p["enc_whh0"] = rnd((H, 4 * H))
  p["enc_b0"] = rnd((1, 4 * H))
  p["enc_w1"] = rnd((2 * H, 4 * H))       # [W_ih1; W_hh1]
  p["enc_b1"] = rnd((1, 4 * H))
  p["enc_cond_w"] = rnd((cond_dim, H))
  p["enc_cond_b"] = rnd((1, H))
  # fused latent heads (mu | logvar)
  p["mulv_w"] = rnd((H, 2 * L))
  p["mulv_b"] = rnd((1, 2 * L))
  # decoder
  p["dec_cond_w"] = rnd((cond_dim, H))
  p["dec_cond_b"] = rnd((1, H))
  p["dec_wih0"] = rnd((latent_size, 4 * H))
  p["dec_whh0"] = rnd((H, 4 * H))
  p["dec_b0"] = rnd((1, 4 * H))
  p["dec_w1"] = rnd((2 * H, 4 * H))
  p["dec_b1"] = rnd((1, 4 * H))
  p["out_w"] = rnd((H, output_size))
  p["out_b"] = rnd((1, output_size))
  return p


# ----------------------------------------------------------------------------
# Pure-JAX reference for validation (same fused parameter layout)
# ----------------------------------------------------------------------------
def _ref_forward(params, x, context, noise):
  H = params["enc_whh0"].shape[0]
  L = params["mulv_w"].shape[1] // 2

  def cell(inp, h, c, wih, whh, b):
    g = inp @ wih + h @ whh + b
    i = jax.nn.sigmoid(g[:, :H])
    f = jax.nn.sigmoid(g[:, H:2 * H])
    gg = jnp.tanh(g[:, 2 * H:3 * H])
    o = jax.nn.sigmoid(g[:, 3 * H:])
    c = f * c + i * gg
    return o * jnp.tanh(c), c

  def lstm2(x_tm, h_init, wih0, whh0, b0, w1, b1):
    wih1, whh1 = w1[:H], w1[H:]

    def step(carry, x_t):
      h0_, c0_, h1_, c1_ = carry
      h0_, c0_ = cell(x_t, h0_, c0_, wih0, whh0, b0)
      h1_, c1_ = cell(h0_, h1_, c1_, wih1, whh1, b1)
      return (h0_, c0_, h1_, c1_), h1_

    z = jnp.zeros_like(h_init)
    _, ys = jax.lax.scan(step, (h_init, z, h_init, z), x_tm)
    return ys  # (T, B, H)

  h0e = context @ params["enc_cond_w"] + params["enc_cond_b"]
  eo = lstm2(jnp.transpose(x, (1, 0, 2)), h0e,
             params["enc_wih0"], params["enc_whh0"], params["enc_b0"],
             params["enc_w1"], params["enc_b1"])
  eo = jnp.transpose(eo, (1, 0, 2))                 # (B, T, H)
  mulv = eo @ params["mulv_w"] + params["mulv_b"]
  mean = mulv[..., :L]
  logvar = mulv[..., L:]
  z = mean + noise * jnp.exp(0.5 * logvar)
  h0d = context @ params["dec_cond_w"] + params["dec_cond_b"]
  do = lstm2(jnp.transpose(z, (1, 0, 2)), h0d,
             params["dec_wih0"], params["dec_whh0"], params["dec_b0"],
             params["dec_w1"], params["dec_b1"])
  do = jnp.transpose(do, (1, 0, 2))
  act = do @ params["out_w"] + params["out_b"]
  return act, mean, logvar


# ----------------------------------------------------------------------------
if __name__ == "__main__":
  B, T = 2, 8
  input_size, hidden_size, latent_size, output_size, cond_dim = 16, 32, 8, 16, 256

  key = jax.random.PRNGKey(0)
  kp, kx, kc, kn = jax.random.split(key, 4)
  params = init_params(kp, input_size, hidden_size, latent_size, output_size, cond_dim)
  x = jax.random.normal(kx, (B, T, input_size), jnp.float32)
  context = jax.random.normal(kc, (B, cond_dim), jnp.float32)
  noise = jax.random.normal(kn, (B, T, latent_size), jnp.float32)

  fwd = jax.jit(lstm_vae_forward)
  act_out, mean, logvar = fwd(params, x, context, noise)
  jax.block_until_ready((act_out, mean, logvar))

  ref_out, ref_mean, ref_logvar = _ref_forward(params, x, context, noise)
  np.testing.assert_allclose(np.asarray(mean), np.asarray(ref_mean), rtol=1e-3, atol=1e-3)
  np.testing.assert_allclose(np.asarray(logvar), np.asarray(ref_logvar), rtol=1e-3, atol=1e-3)
  np.testing.assert_allclose(np.asarray(act_out), np.asarray(ref_out), rtol=1e-3, atol=1e-3)

  assert act_out.shape == (B, T, output_size)
  assert mean.shape == (B, T, latent_size)
  assert logvar.shape == (B, T, latent_size)
  print("KERNEL_OK")
</pallas_src>

<mosaic_0001>
module attributes {stable_mosaic.version = 11 : i64} {
  func.func @_lstm_vae_kernel(%arg0: memref<2x8x16xf32, #tpu.memory_space<vmem>>, %arg1: memref<2x256xf32, #tpu.memory_space<vmem>>, %arg2: memref<2x8x8xf32, #tpu.memory_space<vmem>>, %arg3: memref<16x128xf32, #tpu.memory_space<vmem>>, %arg4: memref<32x128xf32, #tpu.memory_space<vmem>>, %arg5: memref<1x128xf32, #tpu.memory_space<vmem>>, %arg6: memref<64x128xf32, #tpu.memory_space<vmem>>, %arg7: memref<1x128xf32, #tpu.memory_space<vmem>>, %arg8: memref<256x32xf32, #tpu.memory_space<vmem>>, %arg9: memref<1x32xf32, #tpu.memory_space<vmem>>, %arg10: memref<32x16xf32, #tpu.memory_space<vmem>>, %arg11: memref<1x16xf32, #tpu.memory_space<vmem>>, %arg12: memref<256x32xf32, #tpu.memory_space<vmem>>, %arg13: memref<1x32xf32, #tpu.memory_space<vmem>>, %arg14: memref<8x128xf32, #tpu.memory_space<vmem>>, %arg15: memref<32x128xf32, #tpu.memory_space<vmem>>, %arg16: memref<1x128xf32, #tpu.memory_space<vmem>>, %arg17: memref<64x128xf32, #tpu.memory_space<vmem>>, %arg18: memref<1x128xf32, #tpu.memory_space<vmem>>, %arg19: memref<32x16xf32, #tpu.memory_space<vmem>>, %arg20: memref<1x16xf32, #tpu.memory_space<vmem>>, %arg21: memref<2x8x16xf32, #tpu.memory_space<vmem>>, %arg22: memref<2x8x8xf32, #tpu.memory_space<vmem>>, %arg23: memref<2x8x8xf32, #tpu.memory_space<vmem>>, %arg24: memref<2x8x32xf32, #tpu.memory_space<vmem>>, %arg25: memref<2x8x32xf32, #tpu.memory_space<vmem>>, %arg26: memref<2x64xf32, #tpu.memory_space<vmem>>) attributes {dimension_semantics = [], scalar_prefetch = 0 : i64, scratch_operands = 3 : i64, tpu.core_type = #tpu.core_type<tc>} {
    %c0 = arith.constant 0 : index
    %c0_0 = arith.constant 0 : index
    %0 = vector.load %arg1[%c0, %c0_0] : memref<2x256xf32, #tpu.memory_space<vmem>>, vector<2x256xf32>
    %c0_1 = arith.constant 0 : index
    %c0_2 = arith.constant 0 : index
    %1 = vector.load %arg8[%c0_1, %c0_2] : memref<256x32xf32, #tpu.memory_space<vmem>>, vector<256x32xf32>
    %cst = arith.constant dense<0.000000e+00> : vector<2x32xf32>
    %2 = tpu.matmul %0, %1, %cst {dimension_numbers = #tpu.dot_dimension_numbers<[1], [0], [0], [1], [0, 0, 1, 1], [], []>} : vector<2x256xf32>, vector<256x32xf32>, vector<2x32xf32> -> vector<2x32xf32>
    %c0_3 = arith.constant 0 : index
    %c0_4 = arith.constant 0 : index
    %3 = vector.load %arg9[%c0_3, %c0_4] : memref<1x32xf32, #tpu.memory_space<vmem>>, vector<1x32xf32>
    %4 = vector.broadcast %3 : vector<1x32xf32> to vector<2x32xf32>
    %5 = arith.addf %2, %4 : vector<2x32xf32>
    %c0_5 = arith.constant 0 : index
    %c0_6 = arith.constant 0 : index
    %c0_7 = arith.constant 0 : index
    %6 = vector.load %arg0[%c0_5, %c0_6, %c0_7] : memref<2x8x16xf32, #tpu.memory_space<vmem>>, vector<2x8x16xf32>
    %7 = vector.shape_cast %6 : vector<2x8x16xf32> to vector<16x16xf32>
    %c0_8 = arith.constant 0 : index
    %c0_9 = arith.constant 0 : index
    %8 = vector.load %arg3[%c0_8, %c0_9] : memref<16x128xf32, #tpu.memory_space<vmem>>, vector<16x128xf32>
    %cst_10 = arith.constant dense<0.000000e+00> : vector<16x128xf32>
    %9 = tpu.matmul %7, %8, %cst_10 {dimension_numbers = #tpu.dot_dimension_numbers<[1], [0], [0], [1], [0, 0, 1, 1], [], []>} : vector<16x16xf32>, vector<16x128xf32>, vector<16x128xf32> -> vector<16x128xf32>
    %c0_11 = arith.constant 0 : index
    %c0_12 = arith.constant 0 : index
    %10 = vector.load %arg5[%c0_11, %c0_12] : memref<1x128xf32, #tpu.memory_space<vmem>>, vector<1x128xf32>
    %11 = vector.broadcast %10 : vector<1x128xf32> to vector<16x128xf32>
    %12 = arith.addf %9, %11 : vector<16x128xf32>
    %13 = vector.shape_cast %12 : vector<16x128xf32> to vector<2x8x128xf32>
    %c0_13 = arith.constant 0 : index
    %c0_14 = arith.constant 0 : index
    %14 = vector.load %arg4[%c0_13, %c0_14] : memref<32x128xf32, #tpu.memory_space<vmem>>, vector<32x128xf32>
    %c0_15 = arith.constant 0 : index
    %c0_16 = arith.constant 0 : index
    %15 = vector.load %arg6[%c0_15, %c0_16] : memref<64x128xf32, #tpu.memory_space<vmem>>, vector<64x128xf32>
    %c0_17 = arith.constant 0 : index
    %c0_18 = arith.constant 0 : index
    %16 = vector.load %arg7[%c0_17, %c0_18] : memref<1x128xf32, #tpu.memory_space<vmem>>, vector<1x128xf32>
    %cst_19 = arith.constant 0.000000e+00 : f32
    %17 = vector.broadcast %cst_19 : f32 to vector<2x32xf32>
    %cst_20 = arith.constant 0.000000e+00 : f32
    %18 = vector.broadcast %cst_20 : f32 to vector<2x32xf32>
    %19 = vector.extract_strided_slice %13 {offsets = [0, 0, 0], sizes = [2, 1, 128], strides = [1, 1, 1]} : vector<2x8x128xf32> to vector<2x1x128xf32>
    %20 = vector.shape_cast %19 : vector<2x1x128xf32> to vector<2x128xf32>
    %cst_21 = arith.constant dense<0.000000e+00> : vector<2x128xf32>
    %21 = tpu.matmul %5, %14, %cst_21 {dimension_numbers = #tpu.dot_dimension_numbers<[1], [0], [0], [1], [0, 0, 1, 1], [], []>} : vector<2x32xf32>, vector<32x128xf32>, vector<2x128xf32> -> vector<2x128xf32>
    %22 = arith.addf %20, %21 : vector<2x128xf32>
    %23 = arith.negf %22 : vector<2x128xf32>
    %24 = math.exp %23 : vector<2x128xf32>
    %cst_22 = arith.constant 1.000000e+00 : f32
    %25 = vector.broadcast %cst_22 : f32 to vector<2x128xf32>
    %26 = arith.addf %25, %24 : vector<2x128xf32>
    %27 = arith.divf %25, %26 : vector<2x128xf32>
    %28 = math.tanh %22 : vector<2x128xf32>
    %29 = vector.extract_strided_slice %27 {offsets = [0, 0], sizes = [2, 32], strides = [1, 1]} : vector<2x128xf32> to vector<2x32xf32>
    %30 = vector.extract_strided_slice %27 {offsets = [0, 32], sizes = [2, 32], strides = [1, 1]} : vector<2x128xf32> to vector<2x32xf32>
    %31 = vector.extract_strided_slice %27 {offsets = [0, 96], sizes = [2, 32], strides = [1, 1]} : vector<2x128xf32> to vector<2x32xf32>
    %32 = vector.extract_strided_slice %28 {offsets = [0, 64], sizes = [2, 32], strides = [1, 1]} : vector<2x128xf32> to vector<2x32xf32>
    %33 = arith.mulf %30, %17 : vector<2x32xf32>
    %34 = arith.mulf %29, %32 : vector<2x32xf32>
    %35 = arith.addf %33, %34 : vector<2x32xf32>
    %36 = math.tanh %35 : vector<2x32xf32>
    %37 = arith.mulf %31, %36 : vector<2x32xf32>
    %c0_23 = arith.constant 0 : index
    %c0_24 = arith.constant 0 : index
    %38 = vector.load %arg26[%c0_23, %c0_24] : memref<2x64xf32, #tpu.memory_space<vmem>>, vector<2x32xf32>
    tpu.vector_store %arg26[%c0_23, %c0_24], %37 {strides = array<i32>} : memref<2x64xf32, #tpu.memory_space<vmem>>, vector<2x32xf32>,
    %c0_25 = arith.constant 0 : index
    %c32 = arith.constant 32 : index
    %39 = vector.load %arg26[%c0_25, %c32] : memref<2x64xf32, #tpu.memory_space<vmem>>, vector<2x32xf32>
    tpu.vector_store %arg26[%c0_25, %c32], %5 {strides = array<i32>} : memref<2x64xf32, #tpu.memory_space<vmem>>, vector<2x32xf32>,
    %c0_26 = arith.constant 0 : index
    %c0_27 = arith.constant 0 : index
    %40 = vector.load %arg26[%c0_26, %c0_27] : memref<2x64xf32, #tpu.memory_space<vmem>>, vector<2x64xf32>
    %cst_28 = arith.constant dense<0.000000e+00> : vector<2x128xf32>
    %41 = tpu.matmul %40, %15, %cst_28 {dimension_numbers = #tpu.dot_dimension_numbers<[1], [0], [0], [1], [0, 0, 1, 1], [], []>} : vector<2x64xf32>, vector<64x128xf32>, vector<2x128xf32> -> vector<2x128xf32>
    %42 = vector.broadcast %16 : vector<1x128xf32> to vector<2x128xf32>
    %43 = arith.addf %41, %42 : vector<2x128xf32>
    %44 = arith.negf %43 : vector<2x128xf32>
    %45 = math.exp %44 : vector<2x128xf32>
    %cst_29 = arith.constant 1.000000e+00 : f32
    %46 = vector.broadcast %cst_29 : f32 to vector<2x128xf32>
    %47 = arith.addf %46, %45 : vector<2x128xf32>
    %48 = arith.divf %46, %47 : vector<2x128xf32>
    %49 = math.tanh %43 : vector<2x128xf32>
    %50 = vector.extract_strided_slice %48 {offsets = [0, 0], sizes = [2, 32], strides = [1, 1]} : vector<2x128xf32> to vector<2x32xf32>
    %51 = vector.extract_strided_slice %48 {offsets = [0, 32], sizes = [2, 32], strides = [1, 1]} : vector<2x128xf32> to vector<2x32xf32>
    %52 = vector.extract_strided_slice %48 {offsets = [0, 96], sizes = [2, 32], strides = [1, 1]} : vector<2x128xf32> to vector<2x32xf32>
    %53 = vector.extract_strided_slice %49 {offsets = [0, 64], sizes = [2, 32], strides = [1, 1]} : vector<2x128xf32> to vector<2x32xf32>
    %54 = arith.mulf %51, %18 : vector<2x32xf32>
    %55 = arith.mulf %50, %53 : vector<2x32xf32>
    %56 = arith.addf %54, %55 : vector<2x32xf32>
    %57 = math.tanh %56 : vector<2x32xf32>
    %58 = arith.mulf %52, %57 : vector<2x32xf32>
    %59 = vector.shape_cast %58 : vector<2x32xf32> to vector<2x1x32xf32>
    %c0_30 = arith.constant 0 : index
    %c0_31 = arith.constant 0 : index
    %c0_32 = arith.constant 0 : index
    %60 = vector.load %arg24[%c0_30, %c0_31, %c0_32] : memref<2x8x32xf32, #tpu.memory_space<vmem>>, vector<2x1x32xf32>
    tpu.vector_store %arg24[%c0_30, %c0_31, %c0_32], %59 {strides = array<i32>} : memref<2x8x32xf32, #tpu.memory_space<vmem>>, vector<2x1x32xf32>,
    %61 = vector.extract_strided_slice %13 {offsets = [0, 1, 0], sizes = [2, 1, 128], strides = [1, 1, 1]} : vector<2x8x128xf32> to vector<2x1x128xf32>
    %62 = vector.shape_cast %61 : vector<2x1x128xf32> to vector<2x128xf32>
    %cst_33 = arith.constant dense<0.000000e+00> : vector<2x128xf32>
    %63 = tpu.matmul %37, %14, %cst_33 {dimension_numbers = #tpu.dot_dimension_numbers<[1], [0], [0], [1], [0, 0, 1, 1], [], []>} : vector<2x32xf32>, vector<32x128xf32>, vector<2x128xf32> -> vector<2x128xf32>
    %64 = arith.addf %62, %63 : vector<2x128xf32>
    %65 = arith.negf %64 : vector<2x128xf32>
    %66 = math.exp %65 : vector<2x128xf32>
    %cst_34 = arith.constant 1.000000e+00 : f32
    %67 = vector.broadcast %cst_34 : f32 to vector<2x128xf32>
    %68 = arith.addf %67, %66 : vector<2x128xf32>
    %69 = arith.divf %67, %68 : vector<2x128xf32>
    %70 = math.tanh %64 : vector<2x128xf32>
    %71 = vector.extract_strided_slice %69 {offsets = [0, 0], sizes = [2, 32], strides = [1, 1]} : vector<2x128xf32> to vector<2x32xf32>
    %72 = vector.extract_strided_slice %69 {offsets = [0, 32], sizes = [2, 32], strides = [1, 1]} : vector<2x128xf32> to vector<2x32xf32>
    %73 = vector.extract_strided_slice %69 {offsets = [0, 96], sizes = [2, 32], strides = [1, 1]} : vector<2x128xf32> to vector<2x32xf32>
    %74 = vector.extract_strided_slice %70 {offsets = [0, 64], sizes = [2, 32], strides = [1, 1]} : vector<2x128xf32> to vector<2x32xf32>
    %75 = arith.mulf %72, %35 : vector<2x32xf32>
    %76 = arith.mulf %71, %74 : vector<2x32xf32>
    %77 = arith.addf %75, %76 : vector<2x32xf32>
    %78 = math.tanh %77 : vector<2x32xf32>
    %79 = arith.mulf %73, %78 : vector<2x32xf32>
    %c0_35 = arith.constant 0 : index
    %c0_36 = arith.constant 0 : index
    %80 = vector.load %arg26[%c0_35, %c0_36] : memref<2x64xf32, #tpu.memory_space<vmem>>, vector<2x32xf32>
    tpu.vector_store %arg26[%c0_35, %c0_36], %79 {strides = array<i32>} : memref<2x64xf32, #tpu.memory_space<vmem>>, vector<2x32xf32>,
    %c0_37 = arith.constant 0 : index
    %c32_38 = arith.constant 32 : index
    %81 = vector.load %arg26[%c0_37, %c32_38] : memref<2x64xf32, #tpu.memory_space<vmem>>, vector<2x32xf32>
    tpu.vector_store %arg26[%c0_37, %c32_38], %58 {strides = array<i32>} : memref<2x64xf32, #tpu.memory_space<vmem>>, vector<2x32xf32>,
    %c0_39 = arith.constant 0 : index
    %c0_40 = arith.constant 0 : index
    %82 = vector.load %arg26[%c0_39, %c0_40] : memref<2x64xf32, #tpu.memory_space<vmem>>, vector<2x64xf32>
    %cst_41 = arith.constant dense<0.000000e+00> : vector<2x128xf32>
    %83 = tpu.matmul %82, %15, %cst_41 {dimension_numbers = #tpu.dot_dimension_numbers<[1], [0], [0], [1], [0, 0, 1, 1], [], []>} : vector<2x64xf32>, vector<64x128xf32>, vector<2x128xf32> -> vector<2x128xf32>
    %84 = vector.broadcast %16 : vector<1x128xf32> to vector<2x128xf32>
    %85 = arith.addf %83, %84 : vector<2x128xf32>
    %86 = arith.negf %85 : vector<2x128xf32>
    %87 = math.exp %86 : vector<2x128xf32>
    %cst_42 = arith.constant 1.000000e+00 : f32
    %88 = vector.broadcast %cst_42 : f32 to vector<2x128xf32>
    %89 = arith.addf %88, %87 : vector<2x128xf32>
    %90 = arith.divf %88, %89 : vector<2x128xf32>
    %91 = math.tanh %85 : vector<2x128xf32>
    %92 = vector.extract_strided_slice %90 {offsets = [0, 0], sizes = [2, 32], strides = [1, 1]} : vector<2x128xf32> to vector<2x32xf32>
    %93 = vector.extract_strided_slice %90 {offsets = [0, 32], sizes = [2, 32], strides = [1, 1]} : vector<2x128xf32> to vector<2x32xf32>
    %94 = vector.extract_strided_slice %90 {offsets = [0, 96], sizes = [2, 32], strides = [1, 1]} : vector<2x128xf32> to vector<2x32xf32>
    %95 = vector.extract_strided_slice %91 {offsets = [0, 64], sizes = [2, 32], strides = [1, 1]} : vector<2x128xf32> to vector<2x32xf32>
    %96 = arith.mulf %93, %56 : vector<2x32xf32>
    %97 = arith.mulf %92, %95 : vector<2x32xf32>
    %98 = arith.addf %96, %97 : vector<2x32xf32>
    %99 = math.tanh %98 : vector<2x32xf32>
    %100 = arith.mulf %94, %99 : vector<2x32xf32>
    %101 = vector.shape_cast %100 : vector<2x32xf32> to vector<2x1x32xf32>
    %c0_43 = arith.constant 0 : index
    %c1 = arith.constant 1 : index
    %c0_44 = arith.constant 0 : index
    %102 = vector.load %arg24[%c0_43, %c1, %c0_44] : memref<2x8x32xf32, #tpu.memory_space<vmem>>, vector<2x1x32xf32>
    tpu.vector_store %arg24[%c0_43, %c1, %c0_44], %101 {strides = array<i32>} : memref<2x8x32xf32, #tpu.memory_space<vmem>>, vector<2x1x32xf32>,
    %103 = vector.extract_strided_slice %13 {offsets = [0, 2, 0], sizes = [2, 1, 128], strides = [1, 1, 1]} : vector<2x8x128xf32> to vector<2x1x128xf32>
    %104 = vector.shape_cast %103 : vector<2x1x128xf32> to vector<2x128xf32>
    %cst_45 = arith.constant dense<0.000000e+00> : vector<2x128xf32>
    %105 = tpu.matmul %79, %14, %cst_45 {dimension_numbers = #tpu.dot_dimension_numbers<[1], [0], [0], [1], [0, 0, 1, 1], [], []>} : vector<2x32xf32>, vector<32x128xf32>, vector<2x128xf32> -> vector<2x128xf32>
    %106 = arith.addf %104, %105 : vector<2x128xf32>
    %107 = arith.negf %106 : vector<2x128xf32>
    %108 = math.exp %107 : vector<2x128xf32>
    %cst_46 = arith.constant 1.000000e+00 : f32
    %109 = vector.broadcast %cst_46 : f32 to vector<2x128xf32>
    %110 = arith.addf %109, %108 : vector<2x128xf32>
    %111 = arith.divf %109, %110 : vector<2x128xf32>
    %112 = math.tanh %106 : vector<2x128xf32>
    %113 = vector.extract_strided_slice %111 {offsets = [0, 0], sizes = [2, 32], strides = [1, 1]} : vector<2x128xf32> to vector<2x32xf32>
    %114 = vector.extract_strided_slice %111 {offsets = [0, 32], sizes = [2, 32], strides = [1, 1]} : vector<2x128xf32> to vector<2x32xf32>
    %115 = vector.extract_strided_slice %111 {offsets = [0, 96], sizes = [2, 32], strides = [1, 1]} : vector<2x128xf32> to vector<2x32xf32>
    %116 = vector.extract_strided_slice %112 {offsets = [0, 64], sizes = [2, 32], strides = [1, 1]} : vector<2x128xf32> to vector<2x32xf32>
    %117 = arith.mulf %114, %77 : vector<2x32xf32>
    %118 = arith.mulf %113, %116 : vector<2x32xf32>
    %119 = arith.addf %117, %118 : vector<2x32xf32>
    %120 = math.tanh %119 : vector<2x32xf32>
    %121 = arith.mulf %115, %120 : vector<2x32xf32>
    %c0_47 = arith.constant 0 : index
    %c0_48 = arith.constant 0 : index
    %122 = vector.load %arg26[%c0_47, %c0_48] : memref<2x64xf32, #tpu.memory_space<vmem>>, vector<2x32xf32>
    tpu.vector_store %arg26[%c0_47, %c0_48], %121 {strides = array<i32>} : memref<2x64xf32, #tpu.memory_space<vmem>>, vector<2x32xf32>,
    %c0_49 = arith.constant 0 : index
    %c32_50 = arith.constant 32 : index
    %123 = vector.load %arg26[%c0_49, %c32_50] : memref<2x64xf32, #tpu.memory_space<vmem>>, vector<2x32xf32>
    tpu.vector_store %arg26[%c0_49, %c32_50], %100 {strides = array<i32>} : memref<2x64xf32, #tpu.memory_space<vmem>>, vector<2x32xf32>,
    %c0_51 = arith.constant 0 : index
    %c0_52 = arith.constant 0 : index
    %124 = vector.load %arg26[%c0_51, %c0_52] : memref<2x64xf32, #tpu.memory_space<vmem>>, vector<2x64xf32>
    %cst_53 = arith.constant dense<0.000000e+00> : vector<2x128xf32>
    %125 = tpu.matmul %124, %15, %cst_53 {dimension_numbers = #tpu.dot_dimension_numbers<[1], [0], [0], [1], [0, 0, 1, 1], [], []>} : vector<2x64xf32>, vector<64x128xf32>, vector<2x128xf32> -> vector<2x128xf32>
    %126 = vector.broadcast %16 : vector<1x128xf32> to vector<2x128xf32>
    %127 = arith.addf %125, %126 : vector<2x128xf32>
    %128 = arith.negf %127 : vector<2x128xf32>
    %129 = math.exp %128 : vector<2x128xf32>
    %cst_54 = arith.constant 1.000000e+00 : f32
    %130 = vector.broadcast %cst_54 : f32 to vector<2x128xf32>
    %131 = arith.addf %130, %129 : vector<2x128xf32>
    %132 = arith.divf %130, %131 : vector<2x128xf32>
    %133 = math.tanh %127 : vector<2x128xf32>
    %134 = vector.extract_strided_slice %132 {offsets = [0, 0], sizes = [2, 32], strides = [1, 1]} : vector<2x128xf32> to vector<2x32xf32>
    %135 = vector.extract_strided_slice %132 {offsets = [0, 32], sizes = [2, 32], strides = [1, 1]} : vector<2x128xf32> to vector<2x32xf32>
    %136 = vector.extract_strided_slice %132 {offsets = [0, 96], sizes = [2, 32], strides = [1, 1]} : vector<2x128xf32> to vector<2x32xf32>
    %137 = vector.extract_strided_slice %133 {offsets = [0, 64], sizes = [2, 32], strides = [1, 1]} : vector<2x128xf32> to vector<2x32xf32>
    %138 = arith.mulf %135, %98 : vector<2x32xf32>
    %139 = arith.mulf %134, %137 : vector<2x32xf32>
    %140 = arith.addf %138, %139 : vector<2x32xf32>
    %141 = math.tanh %140 : vector<2x32xf32>
    %142 = arith.mulf %136, %141 : vector<2x32xf32>
    %143 = vector.shape_cast %142 : vector<2x32xf32> to vector<2x1x32xf32>
    %c0_55 = arith.constant 0 : index
    %c2 = arith.constant 2 : index
    %c0_56 = arith.constant 0 : index
    %144 = vector.load %arg24[%c0_55, %c2, %c0_56] : memref<2x8x32xf32, #tpu.memory_space<vmem>>, vector<2x1x32xf32>
    tpu.vector_store %arg24[%c0_55, %c2, %c0_56], %143 {strides = array<i32>} : memref<2x8x32xf32, #tpu.memory_space<vmem>>, vector<2x1x32xf32>,
    %145 = vector.extract_strided_slice %13 {offsets = [0, 3, 0], sizes = [2, 1, 128], strides = [1, 1, 1]} : vector<2x8x128xf32> to vector<2x1x128xf32>
    %146 = vector.shape_cast %145 : vector<2x1x128xf32> to vector<2x128xf32>
    %cst_57 = arith.constant dense<0.000000e+00> : vector<2x128xf32>
    %147 = tpu.matmul %121, %14, %cst_57 {dimension_numbers = #tpu.dot_dimension_numbers<[1], [0], [0], [1], [0, 0, 1, 1], [], []>} : vector<2x32xf32>, vector<32x128xf32>, vector<2x128xf32> -> vector<2x128xf32>
    %148 = arith.addf %146, %147 : vector<2x128xf32>
    %149 = arith.negf %148 : vector<2x128xf32>
    %150 = math.exp %149 : vector<2x128xf32>
    %cst_58 = arith.constant 1.000000e+00 : f32
    %151 = vector.broadcast %cst_58 : f32 to vector<2x128xf32>
    %152 = arith.addf %151, %150 : vector<2x128xf32>
    %153 = arith.divf %151, %152 : vector<2x128xf32>
    %154 = math.tanh %148 : vector<2x128xf32>
    %155 = vector.extract_strided_slice %153 {offsets = [0, 0], sizes = [2, 32], strides = [1, 1]} : vector<2x128xf32> to vector<2x32xf32>
    %156 = vector.extract_strided_slice %153 {offsets = [0, 32], sizes = [2, 32], strides = [1, 1]} : vector<2x128xf32> to vector<2x32xf32>
    %157 = vector.extract_strided_slice %153 {offsets = [0, 96], sizes = [2, 32], strides = [1, 1]} : vector<2x128xf32> to vector<2x32xf32>
    %158 = vector.extract_strided_slice %154 {offsets = [0, 64], sizes = [2, 32], strides = [1, 1]} : vector<2x128xf32> to vector<2x32xf32>
    %159 = arith.mulf %156, %119 : vector<2x32xf32>
    %160 = arith.mulf %155, %158 : vector<2x32xf32>
    %161 = arith.addf %159, %160 : vector<2x32xf32>
    %162 = math.tanh %161 : vector<2x32xf32>
    %163 = arith.mulf %157, %162 : vector<2x32xf32>
    %c0_59 = arith.constant 0 : index
    %c0_60 = arith.constant 0 : index
    %164 = vector.load %arg26[%c0_59, %c0_60] : memref<2x64xf32, #tpu.memory_space<vmem>>, vector<2x32xf32>
    tpu.vector_store %arg26[%c0_59, %c0_60], %163 {strides = array<i32>} : memref<2x64xf32, #tpu.memory_space<vmem>>, vector<2x32xf32>,
    %c0_61 = arith.constant 0 : index
    %c32_62 = arith.constant 32 : index
    %165 = vector.load %arg26[%c0_61, %c32_62] : memref<2x64xf32, #tpu.memory_space<vmem>>, vector<2x32xf32>
    tpu.vector_store %arg26[%c0_61, %c32_62], %142 {strides = array<i32>} : memref<2x64xf32, #tpu.memory_space<vmem>>, vector<2x32xf32>,
    %c0_63 = arith.constant 0 : index
    %c0_64 = arith.constant 0 : index
    %166 = vector.load %arg26[%c0_63, %c0_64] : memref<2x64xf32, #tpu.memory_space<vmem>>, vector<2x64xf32>
    %cst_65 = arith.constant dense<0.000000e+00> : vector<2x128xf32>
    %167 = tpu.matmul %166, %15, %cst_65 {dimension_numbers = #tpu.dot_dimension_numbers<[1], [0], [0], [1], [0, 0, 1, 1], [], []>} : vector<2x64xf32>, vector<64x128xf32>, vector<2x128xf32> -> vector<2x128xf32>
    %168 = vector.broadcast %16 : vector<1x128xf32> to vector<2x128xf32>
    %169 = arith.addf %167, %168 : vector<2x128xf32>
    %170 = arith.negf %169 : vector<2x128xf32>
    %171 = math.exp %170 : vector<2x128xf32>
    %cst_66 = arith.constant 1.000000e+00 : f32
    %172 = vector.broadcast %cst_66 : f32 to vector<2x128xf32>
    %173 = arith.addf %172, %171 : vector<2x128xf32>
    %174 = arith.divf %172, %173 : vector<2x128xf32>
    %175 = math.tanh %169 : vector<2x128xf32>
    %176 = vector.extract_strided_slice %174 {offsets = [0, 0], sizes = [2, 32], strides = [1, 1]} : vector<2x128xf32> to vector<2x32xf32>
    %177 = vector.extract_strided_slice %174 {offsets = [0, 32], sizes = [2, 32], strides = [1, 1]} : vector<2x128xf32> to vector<2x32xf32>
    %178 = vector.extract_strided_slice %174 {offsets = [0, 96], sizes = [2, 32], strides = [1, 1]} : vector<2x128xf32> to vector<2x32xf32>
    %179 = vector.extract_strided_slice %175 {offsets = [0, 64], sizes = [2, 32], strides = [1, 1]} : vector<2x128xf32> to vector<2x32xf32>
    %180 = arith.mulf %177, %140 : vector<2x32xf32>
    %181 = arith.mulf %176, %179 : vector<2x32xf32>
    %182 = arith.addf %180, %181 : vector<2x32xf32>
    %183 = math.tanh %182 : vector<2x32xf32>
    %184 = arith.mulf %178, %183 : vector<2x32xf32>
    %185 = vector.shape_cast %184 : vector<2x32xf32> to vector<2x1x32xf32>
    %c0_67 = arith.constant 0 : index
    %c3 = arith.constant 3 : index
    %c0_68 = arith.constant 0 : index
    %186 = vector.load %arg24[%c0_67, %c3, %c0_68] : memref<2x8x32xf32, #tpu.memory_space<vmem>>, vector<2x1x32xf32>
    tpu.vector_store %arg24[%c0_67, %c3, %c0_68], %185 {strides = array<i32>} : memref<2x8x32xf32, #tpu.memory_space<vmem>>, vector<2x1x32xf32>,
    %187 = vector.extract_strided_slice %13 {offsets = [0, 4, 0], sizes = [2, 1, 128], strides = [1, 1, 1]} : vector<2x8x128xf32> to vector<2x1x128xf32>
    %188 = vector.shape_cast %187 : vector<2x1x128xf32> to vector<2x128xf32>
    %cst_69 = arith.constant dense<0.000000e+00> : vector<2x128xf32>
    %189 = tpu.matmul %163, %14, %cst_69 {dimension_numbers = #tpu.dot_dimension_numbers<[1], [0], [0], [1], [0, 0, 1, 1], [], []>} : vector<2x32xf32>, vector<32x128xf32>, vector<2x128xf32> -> vector<2x128xf32>
    %190 = arith.addf %188, %189 : vector<2x128xf32>
    %191 = arith.negf %190 : vector<2x128xf32>
    %192 = math.exp %191 : vector<2x128xf32>
    %cst_70 = arith.constant 1.000000e+00 : f32
    %193 = vector.broadcast %cst_70 : f32 to vector<2x128xf32>
    %194 = arith.addf %193, %192 : vector<2x128xf32>
    %195 = arith.divf %193, %194 : vector<2x128xf32>
    %196 = math.tanh %190 : vector<2x128xf32>
    %197 = vector.extract_strided_slice %195 {offsets = [0, 0], sizes = [2, 32], strides = [1, 1]} : vector<2x128xf32> to vector<2x32xf32>
    %198 = vector.extract_strided_slice %195 {offsets = [0, 32], sizes = [2, 32], strides = [1, 1]} : vector<2x128xf32> to vector<2x32xf32>
    %199 = vector.extract_strided_slice %195 {offsets = [0, 96], sizes = [2, 32], strides = [1, 1]} : vector<2x128xf32> to vector<2x32xf32>
    %200 = vector.extract_strided_slice %196 {offsets = [0, 64], sizes = [2, 32], strides = [1, 1]} : vector<2x128xf32> to vector<2x32xf32>
    %201 = arith.mulf %198, %161 : vector<2x32xf32>
    %202 = arith.mulf %197, %200 : vector<2x32xf32>
    %203 = arith.addf %201, %202 : vector<2x32xf32>
    %204 = math.tanh %203 : vector<2x32xf32>
    %205 = arith.mulf %199, %204 : vector<2x32xf32>
    %c0_71 = arith.constant 0 : index
    %c0_72 = arith.constant 0 : index
    %206 = vector.load %arg26[%c0_71, %c0_72] : memref<2x64xf32, #tpu.memory_space<vmem>>, vector<2x32xf32>
    tpu.vector_store %arg26[%c0_71, %c0_72], %205 {strides = array<i32>} : memref<2x64xf32, #tpu.memory_space<vmem>>, vector<2x32xf32>,
    %c0_73 = arith.constant 0 : index
    %c32_74 = arith.constant 32 : index
    %207 = vector.load %arg26[%c0_73, %c32_74] : memref<2x64xf32, #tpu.memory_space<vmem>>, vector<2x32xf32>
    tpu.vector_store %arg26[%c0_73, %c32_74], %184 {strides = array<i32>} : memref<2x64xf32, #tpu.memory_space<vmem>>, vector<2x32xf32>,
    %c0_75 = arith.constant 0 : index
    %c0_76 = arith.constant 0 : index
    %208 = vector.load %arg26[%c0_75, %c0_76] : memref<2x64xf32, #tpu.memory_space<vmem>>, vector<2x64xf32>
    %cst_77 = arith.constant dense<0.000000e+00> : vector<2x128xf32>
    %209 = tpu.matmul %208, %15, %cst_77 {dimension_numbers = #tpu.dot_dimension_numbers<[1], [0], [0], [1], [0, 0, 1, 1], [], []>} : vector<2x64xf32>, vector<64x128xf32>, vector<2x128xf32> -> vector<2x128xf32>
    %210 = vector.broadcast %16 : vector<1x128xf32> to vector<2x128xf32>
    %211 = arith.addf %209, %210 : vector<2x128xf32>
    %212 = arith.negf %211 : vector<2x128xf32>
    %213 = math.exp %212 : vector<2x128xf32>
    %cst_78 = arith.constant 1.000000e+00 : f32
    %214 = vector.broadcast %cst_78 : f32 to vector<2x128xf32>
    %215 = arith.addf %214, %213 : vector<2x128xf32>
    %216 = arith.divf %214, %215 : vector<2x128xf32>
    %217 = math.tanh %211 : vector<2x128xf32>
    %218 = vector.extract_strided_slice %216 {offsets = [0, 0], sizes = [2, 32], strides = [1, 1]} : vector<2x128xf32> to vector<2x32xf32>
    %219 = vector.extract_strided_slice %216 {offsets = [0, 32], sizes = [2, 32], strides = [1, 1]} : vector<2x128xf32> to vector<2x32xf32>
    %220 = vector.extract_strided_slice %216 {offsets = [0, 96], sizes = [2, 32], strides = [1, 1]} : vector<2x128xf32> to vector<2x32xf32>
    %221 = vector.extract_strided_slice %217 {offsets = [0, 64], sizes = [2, 32], strides = [1, 1]} : vector<2x128xf32> to vector<2x32xf32>
    %222 = arith.mulf %219, %182 : vector<2x32xf32>
    %223 = arith.mulf %218, %221 : vector<2x32xf32>
    %224 = arith.addf %222, %223 : vector<2x32xf32>
    %225 = math.tanh %224 : vector<2x32xf32>
    %226 = arith.mulf %220, %225 : vector<2x32xf32>
    %227 = vector.shape_cast %226 : vector<2x32xf32> to vector<2x1x32xf32>
    %c0_79 = arith.constant 0 : index
    %c4 = arith.constant 4 : index
    %c0_80 = arith.constant 0 : index
    %228 = vector.load %arg24[%c0_79, %c4, %c0_80] : memref<2x8x32xf32, #tpu.memory_space<vmem>>, vector<2x1x32xf32>
    tpu.vector_store %arg24[%c0_79, %c4, %c0_80], %227 {strides = array<i32>} : memref<2x8x32xf32, #tpu.memory_space<vmem>>, vector<2x1x32xf32>,
    %229 = vector.extract_strided_slice %13 {offsets = [0, 5, 0], sizes = [2, 1, 128], strides = [1, 1, 1]} : vector<2x8x128xf32> to vector<2x1x128xf32>
    %230 = vector.shape_cast %229 : vector<2x1x128xf32> to vector<2x128xf32>
    %cst_81 = arith.constant dense<0.000000e+00> : vector<2x128xf32>
    %231 = tpu.matmul %205, %14, %cst_81 {dimension_numbers = #tpu.dot_dimension_numbers<[1], [0], [0], [1], [0, 0, 1, 1], [], []>} : vector<2x32xf32>, vector<32x128xf32>, vector<2x128xf32> -> vector<2x128xf32>
    %232 = arith.addf %230, %231 : vector<2x128xf32>
    %233 = arith.negf %232 : vector<2x128xf32>
    %234 = math.exp %233 : vector<2x128xf32>
    %cst_82 = arith.constant 1.000000e+00 : f32
    %235 = vector.broadcast %cst_82 : f32 to vector<2x128xf32>
    %236 = arith.addf %235, %234 : vector<2x128xf32>
    %237 = arith.divf %235, %236 : vector<2x128xf32>
    %238 = math.tanh %232 : vector<2x128xf32>
    %239 = vector.extract_strided_slice %237 {offsets = [0, 0], sizes = [2, 32], strides = [1, 1]} : vector<2x128xf32> to vector<2x32xf32>
    %240 = vector.extract_strided_slice %237 {offsets = [0, 32], sizes = [2, 32], strides = [1, 1]} : vector<2x128xf32> to vector<2x32xf32>
    %241 = vector.extract_strided_slice %237 {offsets = [0, 96], sizes = [2, 32], strides = [1, 1]} : vector<2x128xf32> to vector<2x32xf32>
    %242 = vector.extract_strided_slice %238 {offsets = [0, 64], sizes = [2, 32], strides = [1, 1]} : vector<2x128xf32> to vector<2x32xf32>
    %243 = arith.mulf %240, %203 : vector<2x32xf32>
    %244 = arith.mulf %239, %242 : vector<2x32xf32>
    %245 = arith.addf %243, %244 : vector<2x32xf32>
    %246 = math.tanh %245 : vector<2x32xf32>
    %247 = arith.mulf %241, %246 : vector<2x32xf32>
    %c0_83 = arith.constant 0 : index
    %c0_84 = arith.constant 0 : index
    %248 = vector.load %arg26[%c0_83, %c0_84] : memref<2x64xf32, #tpu.memory_space<vmem>>, vector<2x32xf32>
    tpu.vector_store %arg26[%c0_83, %c0_84], %247 {strides = array<i32>} : memref<2x64xf32, #tpu.memory_space<vmem>>, vector<2x32xf32>,
    %c0_85 = arith.constant 0 : index
    %c32_86 = arith.constant 32 : index
    %249 = vector.load %arg26[%c0_85, %c32_86] : memref<2x64xf32, #tpu.memory_space<vmem>>, vector<2x32xf32>
    tpu.vector_store %arg26[%c0_85, %c32_86], %226 {strides = array<i32>} : memref<2x64xf32, #tpu.memory_space<vmem>>, vector<2x32xf32>,
    %c0_87 = arith.constant 0 : index
    %c0_88 = arith.constant 0 : index
    %250 = vector.load %arg26[%c0_87, %c0_88] : memref<2x64xf32, #tpu.memory_space<vmem>>, vector<2x64xf32>
    %cst_89 = arith.constant dense<0.000000e+00> : vector<2x128xf32>
    %251 = tpu.matmul %250, %15, %cst_89 {dimension_numbers = #tpu.dot_dimension_numbers<[1], [0], [0], [1], [0, 0, 1, 1], [], []>} : vector<2x64xf32>, vector<64x128xf32>, vector<2x128xf32> -> vector<2x128xf32>
    %252 = vector.broadcast %16 : vector<1x128xf32> to vector<2x128xf32>
    %253 = arith.addf %251, %252 : vector<2x128xf32>
    %254 = arith.negf %253 : vector<2x128xf32>
    %255 = math.exp %254 : vector<2x128xf32>
    %cst_90 = arith.constant 1.000000e+00 : f32
    %256 = vector.broadcast %cst_90 : f32 to vector<2x128xf32>
    %257 = arith.addf %256, %255 : vector<2x128xf32>
    %258 = arith.divf %256, %257 : vector<2x128xf32>
    %259 = math.tanh %253 : vector<2x128xf32>
    %260 = vector.extract_strided_slice %258 {offsets = [0, 0], sizes = [2, 32], strides = [1, 1]} : vector<2x128xf32> to vector<2x32xf32>
    %261 = vector.extract_strided_slice %258 {offsets = [0, 32], sizes = [2, 32], strides = [1, 1]} : vector<2x128xf32> to vector<2x32xf32>
    %262 = vector.extract_strided_slice %258 {offsets = [0, 96], sizes = [2, 32], strides = [1, 1]} : vector<2x128xf32> to vector<2x32xf32>
    %263 = vector.extract_strided_slice %259 {offsets = [0, 64], sizes = [2, 32], strides = [1, 1]} : vector<2x128xf32> to vector<2x32xf32>
    %264 = arith.mulf %261, %224 : vector<2x32xf32>
    %265 = arith.mulf %260, %263 : vector<2x32xf32>
    %266 = arith.addf %264, %265 : vector<2x32xf32>
    %267 = math.tanh %266 : vector<2x32xf32>
    %268 = arith.mulf %262, %267 : vector<2x32xf32>
    %269 = vector.shape_cast %268 : vector<2x32xf32> to vector<2x1x32xf32>
    %c0_91 = arith.constant 0 : index
    %c5 = arith.constant 5 : index
    %c0_92 = arith.constant 0 : index
    %270 = vector.load %arg24[%c0_91, %c5, %c0_92] : memref<2x8x32xf32, #tpu.memory_space<vmem>>, vector<2x1x32xf32>
    tpu.vector_store %arg24[%c0_91, %c5, %c0_92], %269 {strides = array<i32>} : memref<2x8x32xf32, #tpu.memory_space<vmem>>, vector<2x1x32xf32>,
    %271 = vector.extract_strided_slice %13 {offsets = [0, 6, 0], sizes = [2, 1, 128], strides = [1, 1, 1]} : vector<2x8x128xf32> to vector<2x1x128xf32>
    %272 = vector.shape_cast %271 : vector<2x1x128xf32> to vector<2x128xf32>
    %cst_93 = arith.constant dense<0.000000e+00> : vector<2x128xf32>
    %273 = tpu.matmul %247, %14, %cst_93 {dimension_numbers = #tpu.dot_dimension_numbers<[1], [0], [0], [1], [0, 0, 1, 1], [], []>} : vector<2x32xf32>, vector<32x128xf32>, vector<2x128xf32> -> vector<2x128xf32>
    %274 = arith.addf %272, %273 : vector<2x128xf32>
    %275 = arith.negf %274 : vector<2x128xf32>
    %276 = math.exp %275 : vector<2x128xf32>
    %cst_94 = arith.constant 1.000000e+00 : f32
    %277 = vector.broadcast %cst_94 : f32 to vector<2x128xf32>
    %278 = arith.addf %277, %276 : vector<2x128xf32>
    %279 = arith.divf %277, %278 : vector<2x128xf32>
    %280 = math.tanh %274 : vector<2x128xf32>
    %281 = vector.extract_strided_slice %279 {offsets = [0, 0], sizes = [2, 32], strides = [1, 1]} : vector<2x128xf32> to vector<2x32xf32>
    %282 = vector.extract_strided_slice %279 {offsets = [0, 32], sizes = [2, 32], strides = [1, 1]} : vector<2x128xf32> to vector<2x32xf32>
    %283 = vector.extract_strided_slice %279 {offsets = [0, 96], sizes = [2, 32], strides = [1, 1]} : vector<2x128xf32> to vector<2x32xf32>
    %284 = vector.extract_strided_slice %280 {offsets = [0, 64], sizes = [2, 32], strides = [1, 1]} : vector<2x128xf32> to vector<2x32xf32>
    %285 = arith.mulf %282, %245 : vector<2x32xf32>
    %286 = arith.mulf %281, %284 : vector<2x32xf32>
    %287 = arith.addf %285, %286 : vector<2x32xf32>
    %288 = math.tanh %287 : vector<2x32xf32>
    %289 = arith.mulf %283, %288 : vector<2x32xf32>
    %c0_95 = arith.constant 0 : index
    %c0_96 = arith.constant 0 : index
    %290 = vector.load %arg26[%c0_95, %c0_96] : memref<2x64xf32, #tpu.memory_space<vmem>>, vector<2x32xf32>
    tpu.vector_store %arg26[%c0_95, %c0_96], %289 {strides = array<i32>} : memref<2x64xf32, #tpu.memory_space<vmem>>, vector<2x32xf32>,
    %c0_97 = arith.constant 0 : index
    %c32_98 = arith.constant 32 : index
    %291 = vector.load %arg26[%c0_97, %c32_98] : memref<2x64xf32, #tpu.memory_space<vmem>>, vector<2x32xf32>
    tpu.vector_store %arg26[%c0_97, %c32_98], %268 {strides = array<i32>} : memref<2x64xf32, #tpu.memory_space<vmem>>, vector<2x32xf32>,
    %c0_99 = arith.constant 0 : index
    %c0_100 = arith.constant 0 : index
    %292 = vector.load %arg26[%c0_99, %c0_100] : memref<2x64xf32, #tpu.memory_space<vmem>>, vector<2x64xf32>
    %cst_101 = arith.constant dense<0.000000e+00> : vector<2x128xf32>
    %293 = tpu.matmul %292, %15, %cst_101 {dimension_numbers = #tpu.dot_dimension_numbers<[1], [0], [0], [1], [0, 0, 1, 1], [], []>} : vector<2x64xf32>, vector<64x128xf32>, vector<2x128xf32> -> vector<2x128xf32>
    %294 = vector.broadcast %16 : vector<1x128xf32> to vector<2x128xf32>
    %295 = arith.addf %293, %294 : vector<2x128xf32>
    %296 = arith.negf %295 : vector<2x128xf32>
    %297 = math.exp %296 : vector<2x128xf32>
    %cst_102 = arith.constant 1.000000e+00 : f32
    %298 = vector.broadcast %cst_102 : f32 to vector<2x128xf32>
    %299 = arith.addf %298, %297 : vector<2x128xf32>
    %300 = arith.divf %298, %299 : vector<2x128xf32>
    %301 = math.tanh %295 : vector<2x128xf32>
    %302 = vector.extract_strided_slice %300 {offsets = [0, 0], sizes = [2, 32], strides = [1, 1]} : vector<2x128xf32> to vector<2x32xf32>
    %303 = vector.extract_strided_slice %300 {offsets = [0, 32], sizes = [2, 32], strides = [1, 1]} : vector<2x128xf32> to vector<2x32xf32>
    %304 = vector.extract_strided_slice %300 {offsets = [0, 96], sizes = [2, 32], strides = [1, 1]} : vector<2x128xf32> to vector<2x32xf32>
    %305 = vector.extract_strided_slice %301 {offsets = [0, 64], sizes = [2, 32], strides = [1, 1]} : vector<2x128xf32> to vector<2x32xf32>
    %306 = arith.mulf %303, %266 : vector<2x32xf32>
    %307 = arith.mulf %302, %305 : vector<2x32xf32>
    %308 = arith.addf %306, %307 : vector<2x32xf32>
    %309 = math.tanh %308 : vector<2x32xf32>
    %310 = arith.mulf %304, %309 : vector<2x32xf32>
    %311 = vector.shape_cast %310 : vector<2x32xf32> to vector<2x1x32xf32>
    %c0_103 = arith.constant 0 : index
    %c6 = arith.constant 6 : index
    %c0_104 = arith.constant 0 : index
    %312 = vector.load %arg24[%c0_103, %c6, %c0_104] : memref<2x8x32xf32, #tpu.memory_space<vmem>>, vector<2x1x32xf32>
    tpu.vector_store %arg24[%c0_103, %c6, %c0_104], %311 {strides = array<i32>} : memref<2x8x32xf32, #tpu.memory_space<vmem>>, vector<2x1x32xf32>,
    %313 = vector.extract_strided_slice %13 {offsets = [0, 7, 0], sizes = [2, 1, 128], strides = [1, 1, 1]} : vector<2x8x128xf32> to vector<2x1x128xf32>
    %314 = vector.shape_cast %313 : vector<2x1x128xf32> to vector<2x128xf32>
    %cst_105 = arith.constant dense<0.000000e+00> : vector<2x128xf32>
    %315 = tpu.matmul %289, %14, %cst_105 {dimension_numbers = #tpu.dot_dimension_numbers<[1], [0], [0], [1], [0, 0, 1, 1], [], []>} : vector<2x32xf32>, vector<32x128xf32>, vector<2x128xf32> -> vector<2x128xf32>
    %316 = arith.addf %314, %315 : vector<2x128xf32>
    %317 = arith.negf %316 : vector<2x128xf32>
    %318 = math.exp %317 : vector<2x128xf32>
    %cst_106 = arith.constant 1.000000e+00 : f32
    %319 = vector.broadcast %cst_106 : f32 to vector<2x128xf32>
    %320 = arith.addf %319, %318 : vector<2x128xf32>
    %321 = arith.divf %319, %320 : vector<2x128xf32>
    %322 = math.tanh %316 : vector<2x128xf32>
    %323 = vector.extract_strided_slice %321 {offsets = [0, 0], sizes = [2, 32], strides = [1, 1]} : vector<2x128xf32> to vector<2x32xf32>
    %324 = vector.extract_strided_slice %321 {offsets = [0, 32], sizes = [2, 32], strides = [1, 1]} : vector<2x128xf32> to vector<2x32xf32>
    %325 = vector.extract_strided_slice %321 {offsets = [0, 96], sizes = [2, 32], strides = [1, 1]} : vector<2x128xf32> to vector<2x32xf32>
    %326 = vector.extract_strided_slice %322 {offsets = [0, 64], sizes = [2, 32], strides = [1, 1]} : vector<2x128xf32> to vector<2x32xf32>
    %327 = arith.mulf %324, %287 : vector<2x32xf32>
    %328 = arith.mulf %323, %326 : vector<2x32xf32>
    %329 = arith.addf %327, %328 : vector<2x32xf32>
    %330 = math.tanh %329 : vector<2x32xf32>
    %331 = arith.mulf %325, %330 : vector<2x32xf32>
    %c0_107 = arith.constant 0 : index
    %c0_108 = arith.constant 0 : index
    %332 = vector.load %arg26[%c0_107, %c0_108] : memref<2x64xf32, #tpu.memory_space<vmem>>, vector<2x32xf32>
    tpu.vector_store %arg26[%c0_107, %c0_108], %331 {strides = array<i32>} : memref<2x64xf32, #tpu.memory_space<vmem>>, vector<2x32xf32>,
    %c0_109 = arith.constant 0 : index
    %c32_110 = arith.constant 32 : index
    %333 = vector.load %arg26[%c0_109, %c32_110] : memref<2x64xf32, #tpu.memory_space<vmem>>, vector<2x32xf32>
    tpu.vector_store %arg26[%c0_109, %c32_110], %310 {strides = array<i32>} : memref<2x64xf32, #tpu.memory_space<vmem>>, vector<2x32xf32>,
    %c0_111 = arith.constant 0 : index
    %c0_112 = arith.constant 0 : index
    %334 = vector.load %arg26[%c0_111, %c0_112] : memref<2x64xf32, #tpu.memory_space<vmem>>, vector<2x64xf32>
    %cst_113 = arith.constant dense<0.000000e+00> : vector<2x128xf32>
    %335 = tpu.matmul %334, %15, %cst_113 {dimension_numbers = #tpu.dot_dimension_numbers<[1], [0], [0], [1], [0, 0, 1, 1], [], []>} : vector<2x64xf32>, vector<64x128xf32>, vector<2x128xf32> -> vector<2x128xf32>
    %336 = vector.broadcast %16 : vector<1x128xf32> to vector<2x128xf32>
    %337 = arith.addf %335, %336 : vector<2x128xf32>
    %338 = arith.negf %337 : vector<2x128xf32>
    %339 = math.exp %338 : vector<2x128xf32>
    %cst_114 = arith.constant 1.000000e+00 : f32
    %340 = vector.broadcast %cst_114 : f32 to vector<2x128xf32>
    %341 = arith.addf %340, %339 : vector<2x128xf32>
    %342 = arith.divf %340, %341 : vector<2x128xf32>
    %343 = math.tanh %337 : vector<2x128xf32>
    %344 = vector.extract_strided_slice %342 {offsets = [0, 0], sizes = [2, 32], strides = [1, 1]} : vector<2x128xf32> to vector<2x32xf32>
    %345 = vector.extract_strided_slice %342 {offsets = [0, 32], sizes = [2, 32], strides = [1, 1]} : vector<2x128xf32> to vector<2x32xf32>
    %346 = vector.extract_strided_slice %342 {offsets = [0, 96], sizes = [2, 32], strides = [1, 1]} : vector<2x128xf32> to vector<2x32xf32>
    %347 = vector.extract_strided_slice %343 {offsets = [0, 64], sizes = [2, 32], strides = [1, 1]} : vector<2x128xf32> to vector<2x32xf32>
    %348 = arith.mulf %345, %308 : vector<2x32xf32>
    %349 = arith.mulf %344, %347 : vector<2x32xf32>
    %350 = arith.addf %348, %349 : vector<2x32xf32>
    %351 = math.tanh %350 : vector<2x32xf32>
    %352 = arith.mulf %346, %351 : vector<2x32xf32>
    %353 = vector.shape_cast %352 : vector<2x32xf32> to vector<2x1x32xf32>
    %c0_115 = arith.constant 0 : index
    %c7 = arith.constant 7 : index
    %c0_116 = arith.constant 0 : index
    %354 = vector.load %arg24[%c0_115, %c7, %c0_116] : memref<2x8x32xf32, #tpu.memory_space<vmem>>, vector<2x1x32xf32>
    tpu.vector_store %arg24[%c0_115, %c7, %c0_116], %353 {strides = array<i32>} : memref<2x8x32xf32, #tpu.memory_space<vmem>>, vector<2x1x32xf32>,
    %c0_117 = arith.constant 0 : index
    %c0_118 = arith.constant 0 : index
    %c0_119 = arith.constant 0 : index
    %355 = vector.load %arg24[%c0_117, %c0_118, %c0_119] : memref<2x8x32xf32, #tpu.memory_space<vmem>>, vector<2x8x32xf32>
    %356 = vector.shape_cast %355 : vector<2x8x32xf32> to vector<16x32xf32>
    %c0_120 = arith.constant 0 : index
    %c0_121 = arith.constant 0 : index
    %357 = vector.load %arg10[%c0_120, %c0_121] : memref<32x16xf32, #tpu.memory_space<vmem>>, vector<32x16xf32>
    %cst_122 = arith.constant dense<0.000000e+00> : vector<16x16xf32>
    %358 = tpu.matmul %356, %357, %cst_122 {dimension_numbers = #tpu.dot_dimension_numbers<[1], [0], [0], [1], [0, 0, 1, 1], [], []>} : vector<16x32xf32>, vector<32x16xf32>, vector<16x16xf32> -> vector<16x16xf32>
    %c0_123 = arith.constant 0 : index
    %c0_124 = arith.constant 0 : index
    %359 = vector.load %arg11[%c0_123, %c0_124] : memref<1x16xf32, #tpu.memory_space<vmem>>, vector<1x16xf32>
    %360 = vector.broadcast %359 : vector<1x16xf32> to vector<16x16xf32>
    %361 = arith.addf %358, %360 : vector<16x16xf32>
    %362 = vector.extract_strided_slice %361 {offsets = [0, 0], sizes = [16, 8], strides = [1, 1]} : vector<16x16xf32> to vector<16x8xf32>
    %363 = vector.shape_cast %362 : vector<16x8xf32> to vector<2x8x8xf32>
    %364 = vector.extract_strided_slice %361 {offsets = [0, 8], sizes = [16, 8], strides = [1, 1]} : vector<16x16xf32> to vector<16x8xf32>
    %365 = vector.shape_cast %364 : vector<16x8xf32> to vector<2x8x8xf32>
    %c0_125 = arith.constant 0 : index
    %c0_126 = arith.constant 0 : index
    %c0_127 = arith.constant 0 : index
    %366 = vector.load %arg22[%c0_125, %c0_126, %c0_127] : memref<2x8x8xf32, #tpu.memory_space<vmem>>, vector<2x8x8xf32>
    tpu.vector_store %arg22[%c0_125, %c0_126, %c0_127], %363 {strides = array<i32>} : memref<2x8x8xf32, #tpu.memory_space<vmem>>, vector<2x8x8xf32>,
    %c0_128 = arith.constant 0 : index
    %c0_129 = arith.constant 0 : index
    %c0_130 = arith.constant 0 : index
    %367 = vector.load %arg23[%c0_128, %c0_129, %c0_130] : memref<2x8x8xf32, #tpu.memory_space<vmem>>, vector<2x8x8xf32>
    tpu.vector_store %arg23[%c0_128, %c0_129, %c0_130], %365 {strides = array<i32>} : memref<2x8x8xf32, #tpu.memory_space<vmem>>, vector<2x8x8xf32>,
    %c0_131 = arith.constant 0 : index
    %c0_132 = arith.constant 0 : index
    %c0_133 = arith.constant 0 : index
    %368 = vector.load %arg2[%c0_131, %c0_132, %c0_133] : memref<2x8x8xf32, #tpu.memory_space<vmem>>, vector<2x8x8xf32>
    %cst_134 = arith.constant 5.000000e-01 : f32
    %369 = vector.broadcast %cst_134 : f32 to vector<2x8x8xf32>
    %370 = arith.mulf %369, %365 : vector<2x8x8xf32>
    %371 = math.exp %370 : vector<2x8x8xf32>
    %372 = arith.mulf %368, %371 : vector<2x8x8xf32>
    %373 = arith.addf %363, %372 : vector<2x8x8xf32>
    %c0_135 = arith.constant 0 : index
    %c0_136 = arith.constant 0 : index
    %374 = vector.load %arg12[%c0_135, %c0_136] : memref<256x32xf32, #tpu.memory_space<vmem>>, vector<256x32xf32>
    %cst_137 = arith.constant dense<0.000000e+00> : vector<2x32xf32>
    %375 = tpu.matmul %0, %374, %cst_137 {dimension_numbers = #tpu.dot_dimension_numbers<[1], [0], [0], [1], [0, 0, 1, 1], [], []>} : vector<2x256xf32>, vector<256x32xf32>, vector<2x32xf32> -> vector<2x32xf32>
    %c0_138 = arith.constant 0 : index
    %c0_139 = arith.constant 0 : index
    %376 = vector.load %arg13[%c0_138, %c0_139] : memref<1x32xf32, #tpu.memory_space<vmem>>, vector<1x32xf32>
    %377 = vector.broadcast %376 : vector<1x32xf32> to vector<2x32xf32>
    %378 = arith.addf %375, %377 : vector<2x32xf32>
    %379 = vector.shape_cast %373 : vector<2x8x8xf32> to vector<16x8xf32>
    %c0_140 = arith.constant 0 : index
    %c0_141 = arith.constant 0 : index
    %380 = vector.load %arg14[%c0_140, %c0_141] : memref<8x128xf32, #tpu.memory_space<vmem>>, vector<8x128xf32>
    %cst_142 = arith.constant dense<0.000000e+00> : vector<16x128xf32>
    %381 = tpu.matmul %379, %380, %cst_142 {dimension_numbers = #tpu.dot_dimension_numbers<[1], [0], [0], [1], [0, 0, 1, 1], [], []>} : vector<16x8xf32>, vector<8x128xf32>, vector<16x128xf32> -> vector<16x128xf32>
    %c0_143 = arith.constant 0 : index
    %c0_144 = arith.constant 0 : index
    %382 = vector.load %arg16[%c0_143, %c0_144] : memref<1x128xf32, #tpu.memory_space<vmem>>, vector<1x128xf32>
    %383 = vector.broadcast %382 : vector<1x128xf32> to vector<16x128xf32>
    %384 = arith.addf %381, %383 : vector<16x128xf32>
    %385 = vector.shape_cast %384 : vector<16x128xf32> to vector<2x8x128xf32>
    %c0_145 = arith.constant 0 : index
    %c0_146 = arith.constant 0 : index
    %386 = vector.load %arg15[%c0_145, %c0_146] : memref<32x128xf32, #tpu.memory_space<vmem>>, vector<32x128xf32>
    %c0_147 = arith.constant 0 : index
    %c0_148 = arith.constant 0 : index
    %387 = vector.load %arg17[%c0_147, %c0_148] : memref<64x128xf32, #tpu.memory_space<vmem>>, vector<64x128xf32>
    %c0_149 = arith.constant 0 : index
    %c0_150 = arith.constant 0 : index
    %388 = vector.load %arg18[%c0_149, %c0_150] : memref<1x128xf32, #tpu.memory_space<vmem>>, vector<1x128xf32>
    %cst_151 = arith.constant 0.000000e+00 : f32
    %389 = vector.broadcast %cst_151 : f32 to vector<2x32xf32>
    %cst_152 = arith.constant 0.000000e+00 : f32
    %390 = vector.broadcast %cst_152 : f32 to vector<2x32xf32>
    %391 = vector.extract_strided_slice %385 {offsets = [0, 0, 0], sizes = [2, 1, 128], strides = [1, 1, 1]} : vector<2x8x128xf32> to vector<2x1x128xf32>
    %392 = vector.shape_cast %391 : vector<2x1x128xf32> to vector<2x128xf32>
    %cst_153 = arith.constant dense<0.000000e+00> : vector<2x128xf32>
    %393 = tpu.matmul %378, %386, %cst_153 {dimension_numbers = #tpu.dot_dimension_numbers<[1], [0], [0], [1], [0, 0, 1, 1], [], []>} : vector<2x32xf32>, vector<32x128xf32>, vector<2x128xf32> -> vector<2x128xf32>
    %394 = arith.addf %392, %393 : vector<2x128xf32>
    %395 = arith.negf %394 : vector<2x128xf32>
    %396 = math.exp %395 : vector<2x128xf32>
    %cst_154 = arith.constant 1.000000e+00 : f32
    %397 = vector.broadcast %cst_154 : f32 to vector<2x128xf32>
    %398 = arith.addf %397, %396 : vector<2x128xf32>
    %399 = arith.divf %397, %398 : vector<2x128xf32>
    %400 = math.tanh %394 : vector<2x128xf32>
    %401 = vector.extract_strided_slice %399 {offsets = [0, 0], sizes = [2, 32], strides = [1, 1]} : vector<2x128xf32> to vector<2x32xf32>
    %402 = vector.extract_strided_slice %399 {offsets = [0, 32], sizes = [2, 32], strides = [1, 1]} : vector<2x128xf32> to vector<2x32xf32>
    %403 = vector.extract_strided_slice %399 {offsets = [0, 96], sizes = [2, 32], strides = [1, 1]} : vector<2x128xf32> to vector<2x32xf32>
    %404 = vector.extract_strided_slice %400 {offsets = [0, 64], sizes = [2, 32], strides = [1, 1]} : vector<2x128xf32> to vector<2x32xf32>
    %405 = arith.mulf %402, %389 : vector<2x32xf32>
    %406 = arith.mulf %401, %404 : vector<2x32xf32>
    %407 = arith.addf %405, %406 : vector<2x32xf32>
    %408 = math.tanh %407 : vector<2x32xf32>
    %409 = arith.mulf %403, %408 : vector<2x32xf32>
    %c0_155 = arith.constant 0 : index
    %c0_156 = arith.constant 0 : index
    %410 = vector.load %arg26[%c0_155, %c0_156] : memref<2x64xf32, #tpu.memory_space<vmem>>, vector<2x32xf32>
    tpu.vector_store %arg26[%c0_155, %c0_156], %409 {strides = array<i32>} : memref<2x64xf32, #tpu.memory_space<vmem>>, vector<2x32xf32>,
    %c0_157 = arith.constant 0 : index
    %c32_158 = arith.constant 32 : index
    %411 = vector.load %arg26[%c0_157, %c32_158] : memref<2x64xf32, #tpu.memory_space<vmem>>, vector<2x32xf32>
    tpu.vector_store %arg26[%c0_157, %c32_158], %378 {strides = array<i32>} : memref<2x64xf32, #tpu.memory_space<vmem>>, vector<2x32xf32>,
    %c0_159 = arith.constant 0 : index
    %c0_160 = arith.constant 0 : index
    %412 = vector.load %arg26[%c0_159, %c0_160] : memref<2x64xf32, #tpu.memory_space<vmem>>, vector<2x64xf32>
    %cst_161 = arith.constant dense<0.000000e+00> : vector<2x128xf32>
    %413 = tpu.matmul %412, %387, %cst_161 {dimension_numbers = #tpu.dot_dimension_numbers<[1], [0], [0], [1], [0, 0, 1, 1], [], []>} : vector<2x64xf32>, vector<64x128xf32>, vector<2x128xf32> -> vector<2x128xf32>
    %414 = vector.broadcast %388 : vector<1x128xf32> to vector<2x128xf32>
    %415 = arith.addf %413, %414 : vector<2x128xf32>
    %416 = arith.negf %415 : vector<2x128xf32>
    %417 = math.exp %416 : vector<2x128xf32>
    %cst_162 = arith.constant 1.000000e+00 : f32
    %418 = vector.broadcast %cst_162 : f32 to vector<2x128xf32>
    %419 = arith.addf %418, %417 : vector<2x128xf32>
    %420 = arith.divf %418, %419 : vector<2x128xf32>
    %421 = math.tanh %415 : vector<2x128xf32>
    %422 = vector.extract_strided_slice %420 {offsets = [0, 0], sizes = [2, 32], strides = [1, 1]} : vector<2x128xf32> to vector<2x32xf32>
    %423 = vector.extract_strided_slice %420 {offsets = [0, 32], sizes = [2, 32], strides = [1, 1]} : vector<2x128xf32> to vector<2x32xf32>
    %424 = vector.extract_strided_slice %420 {offsets = [0, 96], sizes = [2, 32], strides = [1, 1]} : vector<2x128xf32> to vector<2x32xf32>
    %425 = vector.extract_strided_slice %421 {offsets = [0, 64], sizes = [2, 32], strides = [1, 1]} : vector<2x128xf32> to vector<2x32xf32>
    %426 = arith.mulf %423, %390 : vector<2x32xf32>
    %427 = arith.mulf %422, %425 : vector<2x32xf32>
    %428 = arith.addf %426, %427 : vector<2x32xf32>
    %429 = math.tanh %428 : vector<2x32xf32>
    %430 = arith.mulf %424, %429 : vector<2x32xf32>
    %431 = vector.shape_cast %430 : vector<2x32xf32> to vector<2x1x32xf32>
    %c0_163 = arith.constant 0 : index
    %c0_164 = arith.constant 0 : index
    %c0_165 = arith.constant 0 : index
    %432 = vector.load %arg25[%c0_163, %c0_164, %c0_165] : memref<2x8x32xf32, #tpu.memory_space<vmem>>, vector<2x1x32xf32>
    tpu.vector_store %arg25[%c0_163, %c0_164, %c0_165], %431 {strides = array<i32>} : memref<2x8x32xf32, #tpu.memory_space<vmem>>, vector<2x1x32xf32>,
    %433 = vector.extract_strided_slice %385 {offsets = [0, 1, 0], sizes = [2, 1, 128], strides = [1, 1, 1]} : vector<2x8x128xf32> to vector<2x1x128xf32>
    %434 = vector.shape_cast %433 : vector<2x1x128xf32> to vector<2x128xf32>
    %cst_166 = arith.constant dense<0.000000e+00> : vector<2x128xf32>
    %435 = tpu.matmul %409, %386, %cst_166 {dimension_numbers = #tpu.dot_dimension_numbers<[1], [0], [0], [1], [0, 0, 1, 1], [], []>} : vector<2x32xf32>, vector<32x128xf32>, vector<2x128xf32> -> vector<2x128xf32>
    %436 = arith.addf %434, %435 : vector<2x128xf32>
    %437 = arith.negf %436 : vector<2x128xf32>
    %438 = math.exp %437 : vector<2x128xf32>
    %cst_167 = arith.constant 1.000000e+00 : f32
    %439 = vector.broadcast %cst_167 : f32 to vector<2x128xf32>
    %440 = arith.addf %439, %438 : vector<2x128xf32>
    %441 = arith.divf %439, %440 : vector<2x128xf32>
    %442 = math.tanh %436 : vector<2x128xf32>
    %443 = vector.extract_strided_slice %441 {offsets = [0, 0], sizes = [2, 32], strides = [1, 1]} : vector<2x128xf32> to vector<2x32xf32>
    %444 = vector.extract_strided_slice %441 {offsets = [0, 32], sizes = [2, 32], strides = [1, 1]} : vector<2x128xf32> to vector<2x32xf32>
    %445 = vector.extract_strided_slice %441 {offsets = [0, 96], sizes = [2, 32], strides = [1, 1]} : vector<2x128xf32> to vector<2x32xf32>
    %446 = vector.extract_strided_slice %442 {offsets = [0, 64], sizes = [2, 32], strides = [1, 1]} : vector<2x128xf32> to vector<2x32xf32>
    %447 = arith.mulf %444, %407 : vector<2x32xf32>
    %448 = arith.mulf %443, %446 : vector<2x32xf32>
    %449 = arith.addf %447, %448 : vector<2x32xf32>
    %450 = math.tanh %449 : vector<2x32xf32>
    %451 = arith.mulf %445, %450 : vector<2x32xf32>
    %c0_168 = arith.constant 0 : index
    %c0_169 = arith.constant 0 : index
    %452 = vector.load %arg26[%c0_168, %c0_169] : memref<2x64xf32, #tpu.memory_space<vmem>>, vector<2x32xf32>
    tpu.vector_store %arg26[%c0_168, %c0_169], %451 {strides = array<i32>} : memref<2x64xf32, #tpu.memory_space<vmem>>, vector<2x32xf32>,
    %c0_170 = arith.constant 0 : index
    %c32_171 = arith.constant 32 : index
    %453 = vector.load %arg26[%c0_170, %c32_171] : memref<2x64xf32, #tpu.memory_space<vmem>>, vector<2x32xf32>
    tpu.vector_store %arg26[%c0_170, %c32_171], %430 {strides = array<i32>} : memref<2x64xf32, #tpu.memory_space<vmem>>, vector<2x32xf32>,
    %c0_172 = arith.constant 0 : index
    %c0_173 = arith.constant 0 : index
    %454 = vector.load %arg26[%c0_172, %c0_173] : memref<2x64xf32, #tpu.memory_space<vmem>>, vector<2x64xf32>
    %cst_174 = arith.constant dense<0.000000e+00> : vector<2x128xf32>
    %455 = tpu.matmul %454, %387, %cst_174 {dimension_numbers = #tpu.dot_dimension_numbers<[1], [0], [0], [1], [0, 0, 1, 1], [], []>} : vector<2x64xf32>, vector<64x128xf32>, vector<2x128xf32> -> vector<2x128xf32>
    %456 = vector.broadcast %388 : vector<1x128xf32> to vector<2x128xf32>
    %457 = arith.addf %455, %456 : vector<2x128xf32>
    %458 = arith.negf %457 : vector<2x128xf32>
    %459 = math.exp %458 : vector<2x128xf32>
    %cst_175 = arith.constant 1.000000e+00 : f32
    %460 = vector.broadcast %cst_175 : f32 to vector<2x128xf32>
    %461 = arith.addf %460, %459 : vector<2x128xf32>
    %462 = arith.divf %460, %461 : vector<2x128xf32>
    %463 = math.tanh %457 : vector<2x128xf32>
    %464 = vector.extract_strided_slice %462 {offsets = [0, 0], sizes = [2, 32], strides = [1, 1]} : vector<2x128xf32> to vector<2x32xf32>
    %465 = vector.extract_strided_slice %462 {offsets = [0, 32], sizes = [2, 32], strides = [1, 1]} : vector<2x128xf32> to vector<2x32xf32>
    %466 = vector.extract_strided_slice %462 {offsets = [0, 96], sizes = [2, 32], strides = [1, 1]} : vector<2x128xf32> to vector<2x32xf32>
    %467 = vector.extract_strided_slice %463 {offsets = [0, 64], sizes = [2, 32], strides = [1, 1]} : vector<2x128xf32> to vector<2x32xf32>
    %468 = arith.mulf %465, %428 : vector<2x32xf32>
    %469 = arith.mulf %464, %467 : vector<2x32xf32>
    %470 = arith.addf %468, %469 : vector<2x32xf32>
    %471 = math.tanh %470 : vector<2x32xf32>
    %472 = arith.mulf %466, %471 : vector<2x32xf32>
    %473 = vector.shape_cast %472 : vector<2x32xf32> to vector<2x1x32xf32>
    %c0_176 = arith.constant 0 : index
    %c1_177 = arith.constant 1 : index
    %c0_178 = arith.constant 0 : index
    %474 = vector.load %arg25[%c0_176, %c1_177, %c0_178] : memref<2x8x32xf32, #tpu.memory_space<vmem>>, vector<2x1x32xf32>
    tpu.vector_store %arg25[%c0_176, %c1_177, %c0_178], %473 {strides = array<i32>} : memref<2x8x32xf32, #tpu.memory_space<vmem>>, vector<2x1x32xf32>,
    %475 = vector.extract_strided_slice %385 {offsets = [0, 2, 0], sizes = [2, 1, 128], strides = [1, 1, 1]} : vector<2x8x128xf32> to vector<2x1x128xf32>
    %476 = vector.shape_cast %475 : vector<2x1x128xf32> to vector<2x128xf32>
    %cst_179 = arith.constant dense<0.000000e+00> : vector<2x128xf32>
    %477 = tpu.matmul %451, %386, %cst_179 {dimension_numbers = #tpu.dot_dimension_numbers<[1], [0], [0], [1], [0, 0, 1, 1], [], []>} : vector<2x32xf32>, vector<32x128xf32>, vector<2x128xf32> -> vector<2x128xf32>
    %478 = arith.addf %476, %477 : vector<2x128xf32>
    %479 = arith.negf %478 : vector<2x128xf32>
    %480 = math.exp %479 : vector<2x128xf32>
    %cst_180 = arith.constant 1.000000e+00 : f32
    %481 = vector.broadcast %cst_180 : f32 to vector<2x128xf32>
    %482 = arith.addf %481, %480 : vector<2x128xf32>
    %483 = arith.divf %481, %482 : vector<2x128xf32>
    %484 = math.tanh %478 : vector<2x128xf32>
    %485 = vector.extract_strided_slice %483 {offsets = [0, 0], sizes = [2, 32], strides = [1, 1]} : vector<2x128xf32> to vector<2x32xf32>
    %486 = vector.extract_strided_slice %483 {offsets = [0, 32], sizes = [2, 32], strides = [1, 1]} : vector<2x128xf32> to vector<2x32xf32>
    %487 = vector.extract_strided_slice %483 {offsets = [0, 96], sizes = [2, 32], strides = [1, 1]} : vector<2x128xf32> to vector<2x32xf32>
    %488 = vector.extract_strided_slice %484 {offsets = [0, 64], sizes = [2, 32], strides = [1, 1]} : vector<2x128xf32> to vector<2x32xf32>
    %489 = arith.mulf %486, %449 : vector<2x32xf32>
    %490 = arith.mulf %485, %488 : vector<2x32xf32>
    %491 = arith.addf %489, %490 : vector<2x32xf32>
    %492 = math.tanh %491 : vector<2x32xf32>
    %493 = arith.mulf %487, %492 : vector<2x32xf32>
    %c0_181 = arith.constant 0 : index
    %c0_182 = arith.constant 0 : index
    %494 = vector.load %arg26[%c0_181, %c0_182] : memref<2x64xf32, #tpu.memory_space<vmem>>, vector<2x32xf32>
    tpu.vector_store %arg26[%c0_181, %c0_182], %493 {strides = array<i32>} : memref<2x64xf32, #tpu.memory_space<vmem>>, vector<2x32xf32>,
    %c0_183 = arith.constant 0 : index
    %c32_184 = arith.constant 32 : index
    %495 = vector.load %arg26[%c0_183, %c32_184] : memref<2x64xf32, #tpu.memory_space<vmem>>, vector<2x32xf32>
    tpu.vector_store %arg26[%c0_183, %c32_184], %472 {strides = array<i32>} : memref<2x64xf32, #tpu.memory_space<vmem>>, vector<2x32xf32>,
    %c0_185 = arith.constant 0 : index
    %c0_186 = arith.constant 0 : index
    %496 = vector.load %arg26[%c0_185, %c0_186] : memref<2x64xf32, #tpu.memory_space<vmem>>, vector<2x64xf32>
    %cst_187 = arith.constant dense<0.000000e+00> : vector<2x128xf32>
    %497 = tpu.matmul %496, %387, %cst_187 {dimension_numbers = #tpu.dot_dimension_numbers<[1], [0], [0], [1], [0, 0, 1, 1], [], []>} : vector<2x64xf32>, vector<64x128xf32>, vector<2x128xf32> -> vector<2x128xf32>
    %498 = vector.broadcast %388 : vector<1x128xf32> to vector<2x128xf32>
    %499 = arith.addf %497, %498 : vector<2x128xf32>
    %500 = arith.negf %499 : vector<2x128xf32>
    %501 = math.exp %500 : vector<2x128xf32>
    %cst_188 = arith.constant 1.000000e+00 : f32
    %502 = vector.broadcast %cst_188 : f32 to vector<2x128xf32>
    %503 = arith.addf %502, %501 : vector<2x128xf32>
    %504 = arith.divf %502, %503 : vector<2x128xf32>
    %505 = math.tanh %499 : vector<2x128xf32>
    %506 = vector.extract_strided_slice %504 {offsets = [0, 0], sizes = [2, 32], strides = [1, 1]} : vector<2x128xf32> to vector<2x32xf32>
    %507 = vector.extract_strided_slice %504 {offsets = [0, 32], sizes = [2, 32], strides = [1, 1]} : vector<2x128xf32> to vector<2x32xf32>
    %508 = vector.extract_strided_slice %504 {offsets = [0, 96], sizes = [2, 32], strides = [1, 1]} : vector<2x128xf32> to vector<2x32xf32>
    %509 = vector.extract_strided_slice %505 {offsets = [0, 64], sizes = [2, 32], strides = [1, 1]} : vector<2x128xf32> to vector<2x32xf32>
    %510 = arith.mulf %507, %470 : vector<2x32xf32>
    %511 = arith.mulf %506, %509 : vector<2x32xf32>
    %512 = arith.addf %510, %511 : vector<2x32xf32>
    %513 = math.tanh %512 : vector<2x32xf32>
    %514 = arith.mulf %508, %513 : vector<2x32xf32>
    %515 = vector.shape_cast %514 : vector<2x32xf32> to vector<2x1x32xf32>
    %c0_189 = arith.constant 0 : index
    %c2_190 = arith.constant 2 : index
    %c0_191 = arith.constant 0 : index
    %516 = vector.load %arg25[%c0_189, %c2_190, %c0_191] : memref<2x8x32xf32, #tpu.memory_space<vmem>>, vector<2x1x32xf32>
    tpu.vector_store %arg25[%c0_189, %c2_190, %c0_191], %515 {strides = array<i32>} : memref<2x8x32xf32, #tpu.memory_space<vmem>>, vector<2x1x32xf32>,
    %517 = vector.extract_strided_slice %385 {offsets = [0, 3, 0], sizes = [2, 1, 128], strides = [1, 1, 1]} : vector<2x8x128xf32> to vector<2x1x128xf32>
    %518 = vector.shape_cast %517 : vector<2x1x128xf32> to vector<2x128xf32>
    %cst_192 = arith.constant dense<0.000000e+00> : vector<2x128xf32>
    %519 = tpu.matmul %493, %386, %cst_192 {dimension_numbers = #tpu.dot_dimension_numbers<[1], [0], [0], [1], [0, 0, 1, 1], [], []>} : vector<2x32xf32>, vector<32x128xf32>, vector<2x128xf32> -> vector<2x128xf32>
    %520 = arith.addf %518, %519 : vector<2x128xf32>
    %521 = arith.negf %520 : vector<2x128xf32>
    %522 = math.exp %521 : vector<2x128xf32>
    %cst_193 = arith.constant 1.000000e+00 : f32
    %523 = vector.broadcast %cst_193 : f32 to vector<2x128xf32>
    %524 = arith.addf %523, %522 : vector<2x128xf32>
    %525 = arith.divf %523, %524 : vector<2x128xf32>
    %526 = math.tanh %520 : vector<2x128xf32>
    %527 = vector.extract_strided_slice %525 {offsets = [0, 0], sizes = [2, 32], strides = [1, 1]} : vector<2x128xf32> to vector<2x32xf32>
    %528 = vector.extract_strided_slice %525 {offsets = [0, 32], sizes = [2, 32], strides = [1, 1]} : vector<2x128xf32> to vector<2x32xf32>
    %529 = vector.extract_strided_slice %525 {offsets = [0, 96], sizes = [2, 32], strides = [1, 1]} : vector<2x128xf32> to vector<2x32xf32>
    %530 = vector.extract_strided_slice %526 {offsets = [0, 64], sizes = [2, 32], strides = [1, 1]} : vector<2x128xf32> to vector<2x32xf32>
    %531 = arith.mulf %528, %491 : vector<2x32xf32>
    %532 = arith.mulf %527, %530 : vector<2x32xf32>
    %533 = arith.addf %531, %532 : vector<2x32xf32>
    %534 = math.tanh %533 : vector<2x32xf32>
    %535 = arith.mulf %529, %534 : vector<2x32xf32>
    %c0_194 = arith.constant 0 : index
    %c0_195 = arith.constant 0 : index
    %536 = vector.load %arg26[%c0_194, %c0_195] : memref<2x64xf32, #tpu.memory_space<vmem>>, vector<2x32xf32>
    tpu.vector_store %arg26[%c0_194, %c0_195], %535 {strides = array<i32>} : memref<2x64xf32, #tpu.memory_space<vmem>>, vector<2x32xf32>,
    %c0_196 = arith.constant 0 : index
    %c32_197 = arith.constant 32 : index
    %537 = vector.load %arg26[%c0_196, %c32_197] : memref<2x64xf32, #tpu.memory_space<vmem>>, vector<2x32xf32>
    tpu.vector_store %arg26[%c0_196, %c32_197], %514 {strides = array<i32>} : memref<2x64xf32, #tpu.memory_space<vmem>>, vector<2x32xf32>,
    %c0_198 = arith.constant 0 : index
    %c0_199 = arith.constant 0 : index
    %538 = vector.load %arg26[%c0_198, %c0_199] : memref<2x64xf32, #tpu.memory_space<vmem>>, vector<2x64xf32>
    %cst_200 = arith.constant dense<0.000000e+00> : vector<2x128xf32>
    %539 = tpu.matmul %538, %387, %cst_200 {dimension_numbers = #tpu.dot_dimension_numbers<[1], [0], [0], [1], [0, 0, 1, 1], [], []>} : vector<2x64xf32>, vector<64x128xf32>, vector<2x128xf32> -> vector<2x128xf32>
    %540 = vector.broadcast %388 : vector<1x128xf32> to vector<2x128xf32>
    %541 = arith.addf %539, %540 : vector<2x128xf32>
    %542 = arith.negf %541 : vector<2x128xf32>
    %543 = math.exp %542 : vector<2x128xf32>
    %cst_201 = arith.constant 1.000000e+00 : f32
    %544 = vector.broadcast %cst_201 : f32 to vector<2x128xf32>
    %545 = arith.addf %544, %543 : vector<2x128xf32>
    %546 = arith.divf %544, %545 : vector<2x128xf32>
    %547 = math.tanh %541 : vector<2x128xf32>
    %548 = vector.extract_strided_slice %546 {offsets = [0, 0], sizes = [2, 32], strides = [1, 1]} : vector<2x128xf32> to vector<2x32xf32>
    %549 = vector.extract_strided_slice %546 {offsets = [0, 32], sizes = [2, 32], strides = [1, 1]} : vector<2x128xf32> to vector<2x32xf32>
    %550 = vector.extract_strided_slice %546 {offsets = [0, 96], sizes = [2, 32], strides = [1, 1]} : vector<2x128xf32> to vector<2x32xf32>
    %551 = vector.extract_strided_slice %547 {offsets = [0, 64], sizes = [2, 32], strides = [1, 1]} : vector<2x128xf32> to vector<2x32xf32>
    %552 = arith.mulf %549, %512 : vector<2x32xf32>
    %553 = arith.mulf %548, %551 : vector<2x32xf32>
    %554 = arith.addf %552, %553 : vector<2x32xf32>
    %555 = math.tanh %554 : vector<2x32xf32>
    %556 = arith.mulf %550, %555 : vector<2x32xf32>
    %557 = vector.shape_cast %556 : vector<2x32xf32> to vector<2x1x32xf32>
    %c0_202 = arith.constant 0 : index
    %c3_203 = arith.constant 3 : index
    %c0_204 = arith.constant 0 : index
    %558 = vector.load %arg25[%c0_202, %c3_203, %c0_204] : memref<2x8x32xf32, #tpu.memory_space<vmem>>, vector<2x1x32xf32>
    tpu.vector_store %arg25[%c0_202, %c3_203, %c0_204], %557 {strides = array<i32>} : memref<2x8x32xf32, #tpu.memory_space<vmem>>, vector<2x1x32xf32>,
    %559 = vector.extract_strided_slice %385 {offsets = [0, 4, 0], sizes = [2, 1, 128], strides = [1, 1, 1]} : vector<2x8x128xf32> to vector<2x1x128xf32>
    %560 = vector.shape_cast %559 : vector<2x1x128xf32> to vector<2x128xf32>
    %cst_205 = arith.constant dense<0.000000e+00> : vector<2x128xf32>
    %561 = tpu.matmul %535, %386, %cst_205 {dimension_numbers = #tpu.dot_dimension_numbers<[1], [0], [0], [1], [0, 0, 1, 1], [], []>} : vector<2x32xf32>, vector<32x128xf32>, vector<2x128xf32> -> vector<2x128xf32>
    %562 = arith.addf %560, %561 : vector<2x128xf32>
    %563 = arith.negf %562 : vector<2x128xf32>
    %564 = math.exp %563 : vector<2x128xf32>
    %cst_206 = arith.constant 1.000000e+00 : f32
    %565 = vector.broadcast %cst_206 : f32 to vector<2x128xf32>
    %566 = arith.addf %565, %564 : vector<2x128xf32>
    %567 = arith.divf %565, %566 : vector<2x128xf32>
    %568 = math.tanh %562 : vector<2x128xf32>
    %569 = vector.extract_strided_slice %567 {offsets = [0, 0], sizes = [2, 32], strides = [1, 1]} : vector<2x128xf32> to vector<2x32xf32>
    %570 = vector.extract_strided_slice %567 {offsets = [0, 32], sizes = [2, 32], strides = [1, 1]} : vector<2x128xf32> to vector<2x32xf32>
    %571 = vector.extract_strided_slice %567 {offsets = [0, 96], sizes = [2, 32], strides = [1, 1]} : vector<2x128xf32> to vector<2x32xf32>
    %572 = vector.extract_strided_slice %568 {offsets = [0, 64], sizes = [2, 32], strides = [1, 1]} : vector<2x128xf32> to vector<2x32xf32>
    %573 = arith.mulf %570, %533 : vector<2x32xf32>
    %574 = arith.mulf %569, %572 : vector<2x32xf32>
    %575 = arith.addf %573, %574 : vector<2x32xf32>
    %576 = math.tanh %575 : vector<2x32xf32>
    %577 = arith.mulf %571, %576 : vector<2x32xf32>
    %c0_207 = arith.constant 0 : index
    %c0_208 = arith.constant 0 : index
    %578 = vector.load %arg26[%c0_207, %c0_208] : memref<2x64xf32, #tpu.memory_space<vmem>>, vector<2x32xf32>
    tpu.vector_store %arg26[%c0_207, %c0_208], %577 {strides = array<i32>} : memref<2x64xf32, #tpu.memory_space<vmem>>, vector<2x32xf32>,
    %c0_209 = arith.constant 0 : index
    %c32_210 = arith.constant 32 : index
    %579 = vector.load %arg26[%c0_209, %c32_210] : memref<2x64xf32, #tpu.memory_space<vmem>>, vector<2x32xf32>
    tpu.vector_store %arg26[%c0_209, %c32_210], %556 {strides = array<i32>} : memref<2x64xf32, #tpu.memory_space<vmem>>, vector<2x32xf32>,
    %c0_211 = arith.constant 0 : index
    %c0_212 = arith.constant 0 : index
    %580 = vector.load %arg26[%c0_211, %c0_212] : memref<2x64xf32, #tpu.memory_space<vmem>>, vector<2x64xf32>
    %cst_213 = arith.constant dense<0.000000e+00> : vector<2x128xf32>
    %581 = tpu.matmul %580, %387, %cst_213 {dimension_numbers = #tpu.dot_dimension_numbers<[1], [0], [0], [1], [0, 0, 1, 1], [], []>} : vector<2x64xf32>, vector<64x128xf32>, vector<2x128xf32> -> vector<2x128xf32>
    %582 = vector.broadcast %388 : vector<1x128xf32> to vector<2x128xf32>
    %583 = arith.addf %581, %582 : vector<2x128xf32>
    %584 = arith.negf %583 : vector<2x128xf32>
    %585 = math.exp %584 : vector<2x128xf32>
    %cst_214 = arith.constant 1.000000e+00 : f32
    %586 = vector.broadcast %cst_214 : f32 to vector<2x128xf32>
    %587 = arith.addf %586, %585 : vector<2x128xf32>
    %588 = arith.divf %586, %587 : vector<2x128xf32>
    %589 = math.tanh %583 : vector<2x128xf32>
    %590 = vector.extract_strided_slice %588 {offsets = [0, 0], sizes = [2, 32], strides = [1, 1]} : vector<2x128xf32> to vector<2x32xf32>
    %591 = vector.extract_strided_slice %588 {offsets = [0, 32], sizes = [2, 32], strides = [1, 1]} : vector<2x128xf32> to vector<2x32xf32>
    %592 = vector.extract_strided_slice %588 {offsets = [0, 96], sizes = [2, 32], strides = [1, 1]} : vector<2x128xf32> to vector<2x32xf32>
    %593 = vector.extract_strided_slice %589 {offsets = [0, 64], sizes = [2, 32], strides = [1, 1]} : vector<2x128xf32> to vector<2x32xf32>
    %594 = arith.mulf %591, %554 : vector<2x32xf32>
    %595 = arith.mulf %590, %593 : vector<2x32xf32>
    %596 = arith.addf %594, %595 : vector<2x32xf32>
    %597 = math.tanh %596 : vector<2x32xf32>
    %598 = arith.mulf %592, %597 : vector<2x32xf32>
    %599 = vector.shape_cast %598 : vector<2x32xf32> to vector<2x1x32xf32>
    %c0_215 = arith.constant 0 : index
    %c4_216 = arith.constant 4 : index
    %c0_217 = arith.constant 0 : index
    %600 = vector.load %arg25[%c0_215, %c4_216, %c0_217] : memref<2x8x32xf32, #tpu.memory_space<vmem>>, vector<2x1x32xf32>
    tpu.vector_store %arg25[%c0_215, %c4_216, %c0_217], %599 {strides = array<i32>} : memref<2x8x32xf32, #tpu.memory_space<vmem>>, vector<2x1x32xf32>,
    %601 = vector.extract_strided_slice %385 {offsets = [0, 5, 0], sizes = [2, 1, 128], strides = [1, 1, 1]} : vector<2x8x128xf32> to vector<2x1x128xf32>
    %602 = vector.shape_cast %601 : vector<2x1x128xf32> to vector<2x128xf32>
    %cst_218 = arith.constant dense<0.000000e+00> : vector<2x128xf32>
    %603 = tpu.matmul %577, %386, %cst_218 {dimension_numbers = #tpu.dot_dimension_numbers<[1], [0], [0], [1], [0, 0, 1, 1], [], []>} : vector<2x32xf32>, vector<32x128xf32>, vector<2x128xf32> -> vector<2x128xf32>
    %604 = arith.addf %602, %603 : vector<2x128xf32>
    %605 = arith.negf %604 : vector<2x128xf32>
    %606 = math.exp %605 : vector<2x128xf32>
    %cst_219 = arith.constant 1.000000e+00 : f32
    %607 = vector.broadcast %cst_219 : f32 to vector<2x128xf32>
    %608 = arith.addf %607, %606 : vector<2x128xf32>
    %609 = arith.divf %607, %608 : vector<2x128xf32>
    %610 = math.tanh %604 : vector<2x128xf32>
    %611 = vector.extract_strided_slice %609 {offsets = [0, 0], sizes = [2, 32], strides = [1, 1]} : vector<2x128xf32> to vector<2x32xf32>
    %612 = vector.extract_strided_slice %609 {offsets = [0, 32], sizes = [2, 32], strides = [1, 1]} : vector<2x128xf32> to vector<2x32xf32>
    %613 = vector.extract_strided_slice %609 {offsets = [0, 96], sizes = [2, 32], strides = [1, 1]} : vector<2x128xf32> to vector<2x32xf32>
    %614 = vector.extract_strided_slice %610 {offsets = [0, 64], sizes = [2, 32], strides = [1, 1]} : vector<2x128xf32> to vector<2x32xf32>
    %615 = arith.mulf %612, %575 : vector<2x32xf32>
    %616 = arith.mulf %611, %614 : vector<2x32xf32>
    %617 = arith.addf %615, %616 : vector<2x32xf32>
    %618 = math.tanh %617 : vector<2x32xf32>
    %619 = arith.mulf %613, %618 : vector<2x32xf32>
    %c0_220 = arith.constant 0 : index
    %c0_221 = arith.constant 0 : index
    %620 = vector.load %arg26[%c0_220, %c0_221] : memref<2x64xf32, #tpu.memory_space<vmem>>, vector<2x32xf32>
    tpu.vector_store %arg26[%c0_220, %c0_221], %619 {strides = array<i32>} : memref<2x64xf32, #tpu.memory_space<vmem>>, vector<2x32xf32>,
    %c0_222 = arith.constant 0 : index
    %c32_223 = arith.constant 32 : index
    %621 = vector.load %arg26[%c0_222, %c32_223] : memref<2x64xf32, #tpu.memory_space<vmem>>, vector<2x32xf32>
    tpu.vector_store %arg26[%c0_222, %c32_223], %598 {strides = array<i32>} : memref<2x64xf32, #tpu.memory_space<vmem>>, vector<2x32xf32>,
    %c0_224 = arith.constant 0 : index
    %c0_225 = arith.constant 0 : index
    %622 = vector.load %arg26[%c0_224, %c0_225] : memref<2x64xf32, #tpu.memory_space<vmem>>, vector<2x64xf32>
    %cst_226 = arith.constant dense<0.000000e+00> : vector<2x128xf32>
    %623 = tpu.matmul %622, %387, %cst_226 {dimension_numbers = #tpu.dot_dimension_numbers<[1], [0], [0], [1], [0, 0, 1, 1], [], []>} : vector<2x64xf32>, vector<64x128xf32>, vector<2x128xf32> -> vector<2x128xf32>
    %624 = vector.broadcast %388 : vector<1x128xf32> to vector<2x128xf32>
    %625 = arith.addf %623, %624 : vector<2x128xf32>
    %626 = arith.negf %625 : vector<2x128xf32>
    %627 = math.exp %626 : vector<2x128xf32>
    %cst_227 = arith.constant 1.000000e+00 : f32
    %628 = vector.broadcast %cst_227 : f32 to vector<2x128xf32>
    %629 = arith.addf %628, %627 : vector<2x128xf32>
    %630 = arith.divf %628, %629 : vector<2x128xf32>
    %631 = math.tanh %625 : vector<2x128xf32>
    %632 = vector.extract_strided_slice %630 {offsets = [0, 0], sizes = [2, 32], strides = [1, 1]} : vector<2x128xf32> to vector<2x32xf32>
    %633 = vector.extract_strided_slice %630 {offsets = [0, 32], sizes = [2, 32], strides = [1, 1]} : vector<2x128xf32> to vector<2x32xf32>
    %634 = vector.extract_strided_slice %630 {offsets = [0, 96], sizes = [2, 32], strides = [1, 1]} : vector<2x128xf32> to vector<2x32xf32>
    %635 = vector.extract_strided_slice %631 {offsets = [0, 64], sizes = [2, 32], strides = [1, 1]} : vector<2x128xf32> to vector<2x32xf32>
    %636 = arith.mulf %633, %596 : vector<2x32xf32>
    %637 = arith.mulf %632, %635 : vector<2x32xf32>
    %638 = arith.addf %636, %637 : vector<2x32xf32>
    %639 = math.tanh %638 : vector<2x32xf32>
    %640 = arith.mulf %634, %639 : vector<2x32xf32>
    %641 = vector.shape_cast %640 : vector<2x32xf32> to vector<2x1x32xf32>
    %c0_228 = arith.constant 0 : index
    %c5_229 = arith.constant 5 : index
    %c0_230 = arith.constant 0 : index
    %642 = vector.load %arg25[%c0_228, %c5_229, %c0_230] : memref<2x8x32xf32, #tpu.memory_space<vmem>>, vector<2x1x32xf32>
    tpu.vector_store %arg25[%c0_228, %c5_229, %c0_230], %641 {strides = array<i32>} : memref<2x8x32xf32, #tpu.memory_space<vmem>>, vector<2x1x32xf32>,
    %643 = vector.extract_strided_slice %385 {offsets = [0, 6, 0], sizes = [2, 1, 128], strides = [1, 1, 1]} : vector<2x8x128xf32> to vector<2x1x128xf32>
    %644 = vector.shape_cast %643 : vector<2x1x128xf32> to vector<2x128xf32>
    %cst_231 = arith.constant dense<0.000000e+00> : vector<2x128xf32>
    %645 = tpu.matmul %619, %386, %cst_231 {dimension_numbers = #tpu.dot_dimension_numbers<[1], [0], [0], [1], [0, 0, 1, 1], [], []>} : vector<2x32xf32>, vector<32x128xf32>, vector<2x128xf32> -> vector<2x128xf32>
    %646 = arith.addf %644, %645 : vector<2x128xf32>
    %647 = arith.negf %646 : vector<2x128xf32>
    %648 = math.exp %647 : vector<2x128xf32>
    %cst_232 = arith.constant 1.000000e+00 : f32
    %649 = vector.broadcast %cst_232 : f32 to vector<2x128xf32>
    %650 = arith.addf %649, %648 : vector<2x128xf32>
    %651 = arith.divf %649, %650 : vector<2x128xf32>
    %652 = math.tanh %646 : vector<2x128xf32>
    %653 = vector.extract_strided_slice %651 {offsets = [0, 0], sizes = [2, 32], strides = [1, 1]} : vector<2x128xf32> to vector<2x32xf32>
    %654 = vector.extract_strided_slice %651 {offsets = [0, 32], sizes = [2, 32], strides = [1, 1]} : vector<2x128xf32> to vector<2x32xf32>
    %655 = vector.extract_strided_slice %651 {offsets = [0, 96], sizes = [2, 32], strides = [1, 1]} : vector<2x128xf32> to vector<2x32xf32>
    %656 = vector.extract_strided_slice %652 {offsets = [0, 64], sizes = [2, 32], strides = [1, 1]} : vector<2x128xf32> to vector<2x32xf32>
    %657 = arith.mulf %654, %617 : vector<2x32xf32>
    %658 = arith.mulf %653, %656 : vector<2x32xf32>
    %659 = arith.addf %657, %658 : vector<2x32xf32>
    %660 = math.tanh %659 : vector<2x32xf32>
    %661 = arith.mulf %655, %660 : vector<2x32xf32>
    %c0_233 = arith.constant 0 : index
    %c0_234 = arith.constant 0 : index
    %662 = vector.load %arg26[%c0_233, %c0_234] : memref<2x64xf32, #tpu.memory_space<vmem>>, vector<2x32xf32>
    tpu.vector_store %arg26[%c0_233, %c0_234], %661 {strides = array<i32>} : memref<2x64xf32, #tpu.memory_space<vmem>>, vector<2x32xf32>,
    %c0_235 = arith.constant 0 : index
    %c32_236 = arith.constant 32 : index
    %663 = vector.load %arg26[%c0_235, %c32_236] : memref<2x64xf32, #tpu.memory_space<vmem>>, vector<2x32xf32>
    tpu.vector_store %arg26[%c0_235, %c32_236], %640 {strides = array<i32>} : memref<2x64xf32, #tpu.memory_space<vmem>>, vector<2x32xf32>,
    %c0_237 = arith.constant 0 : index
    %c0_238 = arith.constant 0 : index
    %664 = vector.load %arg26[%c0_237, %c0_238] : memref<2x64xf32, #tpu.memory_space<vmem>>, vector<2x64xf32>
    %cst_239 = arith.constant dense<0.000000e+00> : vector<2x128xf32>
    %665 = tpu.matmul %664, %387, %cst_239 {dimension_numbers = #tpu.dot_dimension_numbers<[1], [0], [0], [1], [0, 0, 1, 1], [], []>} : vector<2x64xf32>, vector<64x128xf32>, vector<2x128xf32> -> vector<2x128xf32>
    %666 = vector.broadcast %388 : vector<1x128xf32> to vector<2x128xf32>
    %667 = arith.addf %665, %666 : vector<2x128xf32>
    %668 = arith.negf %667 : vector<2x128xf32>
    %669 = math.exp %668 : vector<2x128xf32>
    %cst_240 = arith.constant 1.000000e+00 : f32
    %670 = vector.broadcast %cst_240 : f32 to vector<2x128xf32>
    %671 = arith.addf %670, %669 : vector<2x128xf32>
    %672 = arith.divf %670, %671 : vector<2x128xf32>
    %673 = math.tanh %667 : vector<2x128xf32>
    %674 = vector.extract_strided_slice %672 {offsets = [0, 0], sizes = [2, 32], strides = [1, 1]} : vector<2x128xf32> to vector<2x32xf32>
    %675 = vector.extract_strided_slice %672 {offsets = [0, 32], sizes = [2, 32], strides = [1, 1]} : vector<2x128xf32> to vector<2x32xf32>
    %676 = vector.extract_strided_slice %672 {offsets = [0, 96], sizes = [2, 32], strides = [1, 1]} : vector<2x128xf32> to vector<2x32xf32>
    %677 = vector.extract_strided_slice %673 {offsets = [0, 64], sizes = [2, 32], strides = [1, 1]} : vector<2x128xf32> to vector<2x32xf32>
    %678 = arith.mulf %675, %638 : vector<2x32xf32>
    %679 = arith.mulf %674, %677 : vector<2x32xf32>
    %680 = arith.addf %678, %679 : vector<2x32xf32>
    %681 = math.tanh %680 : vector<2x32xf32>
    %682 = arith.mulf %676, %681 : vector<2x32xf32>
    %683 = vector.shape_cast %682 : vector<2x32xf32> to vector<2x1x32xf32>
    %c0_241 = arith.constant 0 : index
    %c6_242 = arith.constant 6 : index
    %c0_243 = arith.constant 0 : index
    %684 = vector.load %arg25[%c0_241, %c6_242, %c0_243] : memref<2x8x32xf32, #tpu.memory_space<vmem>>, vector<2x1x32xf32>
    tpu.vector_store %arg25[%c0_241, %c6_242, %c0_243], %683 {strides = array<i32>} : memref<2x8x32xf32, #tpu.memory_space<vmem>>, vector<2x1x32xf32>,
    %685 = vector.extract_strided_slice %385 {offsets = [0, 7, 0], sizes = [2, 1, 128], strides = [1, 1, 1]} : vector<2x8x128xf32> to vector<2x1x128xf32>
    %686 = vector.shape_cast %685 : vector<2x1x128xf32> to vector<2x128xf32>
    %cst_244 = arith.constant dense<0.000000e+00> : vector<2x128xf32>
    %687 = tpu.matmul %661, %386, %cst_244 {dimension_numbers = #tpu.dot_dimension_numbers<[1], [0], [0], [1], [0, 0, 1, 1], [], []>} : vector<2x32xf32>, vector<32x128xf32>, vector<2x128xf32> -> vector<2x128xf32>
    %688 = arith.addf %686, %687 : vector<2x128xf32>
    %689 = arith.negf %688 : vector<2x128xf32>
    %690 = math.exp %689 : vector<2x128xf32>
    %cst_245 = arith.constant 1.000000e+00 : f32
    %691 = vector.broadcast %cst_245 : f32 to vector<2x128xf32>
    %692 = arith.addf %691, %690 : vector<2x128xf32>
    %693 = arith.divf %691, %692 : vector<2x128xf32>
    %694 = math.tanh %688 : vector<2x128xf32>
    %695 = vector.extract_strided_slice %693 {offsets = [0, 0], sizes = [2, 32], strides = [1, 1]} : vector<2x128xf32> to vector<2x32xf32>
    %696 = vector.extract_strided_slice %693 {offsets = [0, 32], sizes = [2, 32], strides = [1, 1]} : vector<2x128xf32> to vector<2x32xf32>
    %697 = vector.extract_strided_slice %693 {offsets = [0, 96], sizes = [2, 32], strides = [1, 1]} : vector<2x128xf32> to vector<2x32xf32>
    %698 = vector.extract_strided_slice %694 {offsets = [0, 64], sizes = [2, 32], strides = [1, 1]} : vector<2x128xf32> to vector<2x32xf32>
    %699 = arith.mulf %696, %659 : vector<2x32xf32>
    %700 = arith.mulf %695, %698 : vector<2x32xf32>
    %701 = arith.addf %699, %700 : vector<2x32xf32>
    %702 = math.tanh %701 : vector<2x32xf32>
    %703 = arith.mulf %697, %702 : vector<2x32xf32>
    %c0_246 = arith.constant 0 : index
    %c0_247 = arith.constant 0 : index
    %704 = vector.load %arg26[%c0_246, %c0_247] : memref<2x64xf32, #tpu.memory_space<vmem>>, vector<2x32xf32>
    tpu.vector_store %arg26[%c0_246, %c0_247], %703 {strides = array<i32>} : memref<2x64xf32, #tpu.memory_space<vmem>>, vector<2x32xf32>,
    %c0_248 = arith.constant 0 : index
    %c32_249 = arith.constant 32 : index
    %705 = vector.load %arg26[%c0_248, %c32_249] : memref<2x64xf32, #tpu.memory_space<vmem>>, vector<2x32xf32>
    tpu.vector_store %arg26[%c0_248, %c32_249], %682 {strides = array<i32>} : memref<2x64xf32, #tpu.memory_space<vmem>>, vector<2x32xf32>,
    %c0_250 = arith.constant 0 : index
    %c0_251 = arith.constant 0 : index
    %706 = vector.load %arg26[%c0_250, %c0_251] : memref<2x64xf32, #tpu.memory_space<vmem>>, vector<2x64xf32>
    %cst_252 = arith.constant dense<0.000000e+00> : vector<2x128xf32>
    %707 = tpu.matmul %706, %387, %cst_252 {dimension_numbers = #tpu.dot_dimension_numbers<[1], [0], [0], [1], [0, 0, 1, 1], [], []>} : vector<2x64xf32>, vector<64x128xf32>, vector<2x128xf32> -> vector<2x128xf32>
    %708 = vector.broadcast %388 : vector<1x128xf32> to vector<2x128xf32>
    %709 = arith.addf %707, %708 : vector<2x128xf32>
    %710 = arith.negf %709 : vector<2x128xf32>
    %711 = math.exp %710 : vector<2x128xf32>
    %cst_253 = arith.constant 1.000000e+00 : f32
    %712 = vector.broadcast %cst_253 : f32 to vector<2x128xf32>
    %713 = arith.addf %712, %711 : vector<2x128xf32>
    %714 = arith.divf %712, %713 : vector<2x128xf32>
    %715 = math.tanh %709 : vector<2x128xf32>
    %716 = vector.extract_strided_slice %714 {offsets = [0, 0], sizes = [2, 32], strides = [1, 1]} : vector<2x128xf32> to vector<2x32xf32>
    %717 = vector.extract_strided_slice %714 {offsets = [0, 32], sizes = [2, 32], strides = [1, 1]} : vector<2x128xf32> to vector<2x32xf32>
    %718 = vector.extract_strided_slice %714 {offsets = [0, 96], sizes = [2, 32], strides = [1, 1]} : vector<2x128xf32> to vector<2x32xf32>
    %719 = vector.extract_strided_slice %715 {offsets = [0, 64], sizes = [2, 32], strides = [1, 1]} : vector<2x128xf32> to vector<2x32xf32>
    %720 = arith.mulf %717, %680 : vector<2x32xf32>
    %721 = arith.mulf %716, %719 : vector<2x32xf32>
    %722 = arith.addf %720, %721 : vector<2x32xf32>
    %723 = math.tanh %722 : vector<2x32xf32>
    %724 = arith.mulf %718, %723 : vector<2x32xf32>
    %725 = vector.shape_cast %724 : vector<2x32xf32> to vector<2x1x32xf32>
    %c0_254 = arith.constant 0 : index
    %c7_255 = arith.constant 7 : index
    %c0_256 = arith.constant 0 : index
    %726 = vector.load %arg25[%c0_254, %c7_255, %c0_256] : memref<2x8x32xf32, #tpu.memory_space<vmem>>, vector<2x1x32xf32>
    tpu.vector_store %arg25[%c0_254, %c7_255, %c0_256], %725 {strides = array<i32>} : memref<2x8x32xf32, #tpu.memory_space<vmem>>, vector<2x1x32xf32>,
    %c0_257 = arith.constant 0 : index
    %c0_258 = arith.constant 0 : index
    %c0_259 = arith.constant 0 : index
    %727 = vector.load %arg25[%c0_257, %c0_258, %c0_259] : memref<2x8x32xf32, #tpu.memory_space<vmem>>, vector<2x8x32xf32>
    %728 = vector.shape_cast %727 : vector<2x8x32xf32> to vector<16x32xf32>
    %c0_260 = arith.constant 0 : index
    %c0_261 = arith.constant 0 : index
    %729 = vector.load %arg19[%c0_260, %c0_261] : memref<32x16xf32, #tpu.memory_space<vmem>>, vector<32x16xf32>
    %cst_262 = arith.constant dense<0.000000e+00> : vector<16x16xf32>
    %730 = tpu.matmul %728, %729, %cst_262 {dimension_numbers = #tpu.dot_dimension_numbers<[1], [0], [0], [1], [0, 0, 1, 1], [], []>} : vector<16x32xf32>, vector<32x16xf32>, vector<16x16xf32> -> vector<16x16xf32>
    %c0_263 = arith.constant 0 : index
    %c0_264 = arith.constant 0 : index
    %731 = vector.load %arg20[%c0_263, %c0_264] : memref<1x16xf32, #tpu.memory_space<vmem>>, vector<1x16xf32>
    %732 = vector.broadcast %731 : vector<1x16xf32> to vector<16x16xf32>
    %733 = arith.addf %730, %732 : vector<16x16xf32>
    %734 = vector.shape_cast %733 : vector<16x16xf32> to vector<2x8x16xf32>
    %c0_265 = arith.constant 0 : index
    %c0_266 = arith.constant 0 : index
    %c0_267 = arith.constant 0 : index
    %735 = vector.load %arg21[%c0_265, %c0_266, %c0_267] : memref<2x8x16xf32, #tpu.memory_space<vmem>>, vector<2x8x16xf32>
    tpu.vector_store %arg21[%c0_265, %c0_266, %c0_267], %734 {strides = array<i32>} : memref<2x8x16xf32, #tpu.memory_space<vmem>>, vector<2x8x16xf32>,
    return
  }
}

</mosaic_0001>

<llo_original>
// kernel: lstm_vae_forward.1
$region0: #{lstm_vae_forward.1}
  #allocation0 [shape = 'u32[]', space=smem, size = 0x4, offset = 0x4, fixed_abs, tag = 'smem constant byte address 0x4 - core index']
  #allocation1 [shape = 'u32[144,128]{1,0:T(1,128)}', space=vmem, size = 0x12000, scoped, tag = 'internal scratch']
  #allocation2 [shape = 'f32[2,8,32]{2,1,0:T(8,128)}', space=vmem, size = 0x2000, scoped, tag = 'scratch operand']
  #allocation3 [shape = 'f32[2,8,32]{2,1,0:T(8,128)}', space=vmem, size = 0x2000, scoped, tag = 'scratch operand']
  #allocation4 [shape = 'f32[2,64]{1,0:T(2,128)}', space=vmem, size = 0x400, scoped, tag = 'scratch operand']
  %s0 = inlined_call_operand.vmem [shape: f32[2,8,16], index: 0, kind: input, shape index: {}]
  %s1 = inlined_call_operand.vmem [shape: f32[2,256], index: 1, kind: input, shape index: {}]
  %s2 = inlined_call_operand.vmem [shape: f32[2,8,8], index: 2, kind: input, shape index: {}]
  %s3 = inlined_call_operand.vmem [shape: f32[16,128], index: 3, kind: input, shape index: {}]
  %s4 = inlined_call_operand.vmem [shape: f32[32,128], index: 4, kind: input, shape index: {}]
  %s5 = inlined_call_operand.vmem [shape: f32[1,128], index: 5, kind: input, shape index: {}]
  %s6 = inlined_call_operand.vmem [shape: f32[64,128], index: 6, kind: input, shape index: {}]
  %s7 = inlined_call_operand.vmem [shape: f32[1,128], index: 7, kind: input, shape index: {}]
  %s8 = inlined_call_operand.vmem [shape: f32[256,32], index: 8, kind: input, shape index: {}]
  %s9 = inlined_call_operand.vmem [shape: f32[1,32], index: 9, kind: input, shape index: {}]
  %s10 = inlined_call_operand.vmem [shape: f32[32,16], index: 10, kind: input, shape index: {}]
  %s11 = inlined_call_operand.vmem [shape: f32[1,16], index: 11, kind: input, shape index: {}]
  %s12 = inlined_call_operand.vmem [shape: f32[256,32], index: 12, kind: input, shape index: {}]
  %s13 = inlined_call_operand.vmem [shape: f32[1,32], index: 13, kind: input, shape index: {}]
  %s14 = inlined_call_operand.vmem [shape: f32[8,128], index: 14, kind: input, shape index: {}]
  %s15 = inlined_call_operand.vmem [shape: f32[32,128], index: 15, kind: input, shape index: {}]
  %s16 = inlined_call_operand.vmem [shape: f32[1,128], index: 16, kind: input, shape index: {}]
  %s17 = inlined_call_operand.vmem [shape: f32[64,128], index: 17, kind: input, shape index: {}]
  %s18 = inlined_call_operand.vmem [shape: f32[1,128], index: 18, kind: input, shape index: {}]
  %s19 = inlined_call_operand.vmem [shape: f32[32,16], index: 19, kind: input, shape index: {}]
  %s20 = inlined_call_operand.vmem [shape: f32[1,16], index: 20, kind: input, shape index: {}]
  %s21 = inlined_call_operand.hbm [shape: f32[2,8,16], index: 21, kind: output, shape index: {0}]
  %s22 = inlined_call_operand.hbm [shape: f32[2,8,8], index: 22, kind: output, shape index: {1}]
  %s23 = inlined_call_operand.hbm [shape: f32[2,8,8], index: 23, kind: output, shape index: {2}]
  %24 = xla_tuple %s21, %s22, %s23
  %s25 = sld [smem:[#allocation0]]
  $region110: #{lstm_vae_forward.1} parent=0
    _
  %s27 = ssub.s32 1, %s25
  %s28 = scalar_select 0, %s27, %s25
  $region1: #{lstm_vae_forward.1} parent=0
    #allocation5 [shape = 'u8[8192]{0}', space=vmem, size = 0x2000, scoped, tag = 'output window, operand 0, single buffered']
    #allocation6 [shape = 's32[1]{0}', space=sflag, size = 0x4, scoped, tag = 'scoped memory for lstm_vae_forward.1']
    #allocation7 [shape = 'u8[8192]{0}', space=vmem, size = 0x2000, scoped, tag = 'output window, operand 1, single buffered']
    #allocation8 [shape = 's32[1]{0}', space=sflag, size = 0x4, scoped, tag = 'scoped memory for lstm_vae_forward.1']
    #allocation9 [shape = 'u8[8192]{0}', space=vmem, size = 0x2000, scoped, tag = 'output window, operand 2, single buffered']
    %29 = vsyncpa [#allocation6], 0
    %30 = vsyncpa [#allocation8], 0
    // Predicated region
    $region2: #{lstm_vae_forward.1} parent=1 // pred_check
      _
    $region3: #{lstm_vae_forward.1} parent=1 // pred_check_branch
      %32 = sbr.rel (0) target = $region5
    $region4: #{lstm_vae_forward.1} parent=1 // pred_region
      _
    $region5: #{lstm_vae_forward.1} parent=1 // pred_fallthru
      _
    // Predicated region
    $region6: #{lstm_vae_forward.1} parent=1 // pred_check
      _
    $region7: #{lstm_vae_forward.1} parent=1 // pred_check_branch
      %34 = sbr.rel (0) target = $region9
    $region8: #{lstm_vae_forward.1} parent=1 // pred_region
      _
    $region9: #{lstm_vae_forward.1} parent=1 // pred_fallthru
      _
    // Predicated region
    $region10: #{lstm_vae_forward.1} parent=1 // pred_check
      _
    $region11: #{lstm_vae_forward.1} parent=1 // pred_check_branch
      %36 = sbr.rel (0) target = $region13
    $region12: #{lstm_vae_forward.1} parent=1 // pred_region
      _
    $region13: #{lstm_vae_forward.1} parent=1 // pred_fallthru
      _
    // Predicated region
    $region14: #{lstm_vae_forward.1} parent=1 // pred_check
      _
    $region15: #{lstm_vae_forward.1} parent=1 // pred_check_branch
      %38 = sbr.rel (0) target = $region17
    $region16: #{lstm_vae_forward.1} parent=1 // pred_region
      _
    $region17: #{lstm_vae_forward.1} parent=1 // pred_fallthru
      _
    // Predicated region
    $region18: #{lstm_vae_forward.1} parent=1 // pred_check
      _
    $region19: #{lstm_vae_forward.1} parent=1 // pred_check_branch
      %40 = sbr.rel (0) target = $region21
    $region20: #{lstm_vae_forward.1} parent=1 // pred_region
      _
    $region21: #{lstm_vae_forward.1} parent=1 // pred_fallthru
      _
    // Predicated region
    $region22: #{lstm_vae_forward.1} parent=1 // pred_check
      _
    $region23: #{lstm_vae_forward.1} parent=1 // pred_check_branch
      %42 = sbr.rel (0) target = $region25
    $region24: #{lstm_vae_forward.1} parent=1 // pred_region
      _
    $region25: #{lstm_vae_forward.1} parent=1 // pred_fallthru
      _
    // Predicated region
    $region26: #{lstm_vae_forward.1} parent=1 // pred_check
      _
    $region27: #{lstm_vae_forward.1} parent=1 // pred_check_branch
      %44 = sbr.rel (0) target = $region29
    $region28: #{lstm_vae_forward.1} parent=1 // pred_region
      _
    $region29: #{lstm_vae_forward.1} parent=1 // pred_fallthru
      _
    // Predicated region
    $region30: #{lstm_vae_forward.1} parent=1 // pred_check
      _
    $region31: #{lstm_vae_forward.1} parent=1 // pred_check_branch
      %46 = sbr.rel (0) target = $region33
    $region32: #{lstm_vae_forward.1} parent=1 // pred_region
      _
    $region33: #{lstm_vae_forward.1} parent=1 // pred_fallthru
      _
    // Predicated region
    $region34: #{lstm_vae_forward.1} parent=1 // pred_check
      _
    $region35: #{lstm_vae_forward.1} parent=1 // pred_check_branch
      %48 = sbr.rel (0) target = $region37
    $region36: #{lstm_vae_forward.1} parent=1 // pred_region
      _
    $region37: #{lstm_vae_forward.1} parent=1 // pred_fallthru
      _
    // Predicated region
    $region38: #{lstm_vae_forward.1} parent=1 // pred_check
      _
    $region39: #{lstm_vae_forward.1} parent=1 // pred_check_branch
      %50 = sbr.rel (0) target = $region41
    $region40: #{lstm_vae_forward.1} parent=1 // pred_region
      _
    $region41: #{lstm_vae_forward.1} parent=1 // pred_fallthru
      _
    // Predicated region
    $region42: #{lstm_vae_forward.1} parent=1 // pred_check
      _
    $region43: #{lstm_vae_forward.1} parent=1 // pred_check_branch
      %52 = sbr.rel (0) target = $region45
    $region44: #{lstm_vae_forward.1} parent=1 // pred_region
      _
    $region45: #{lstm_vae_forward.1} parent=1 // pred_fallthru
      _
    // Predicated region
    $region46: #{lstm_vae_forward.1} parent=1 // pred_check
      _
    $region47: #{lstm_vae_forward.1} parent=1 // pred_check_branch
      %54 = sbr.rel (0) target = $region49
    $region48: #{lstm_vae_forward.1} parent=1 // pred_region
      _
    $region49: #{lstm_vae_forward.1} parent=1 // pred_fallthru
      _
    // Predicated region
    $region50: #{lstm_vae_forward.1} parent=1 // pred_check
      _
    $region51: #{lstm_vae_forward.1} parent=1 // pred_check_branch
      %56 = sbr.rel (0) target = $region53
    $region52: #{lstm_vae_forward.1} parent=1 // pred_region
      _
    $region53: #{lstm_vae_forward.1} parent=1 // pred_fallthru
      _
    // Predicated region
    $region54: #{lstm_vae_forward.1} parent=1 // pred_check
      _
    $region55: #{lstm_vae_forward.1} parent=1 // pred_check_branch
      %58 = sbr.rel (0) target = $region57
    $region56: #{lstm_vae_forward.1} parent=1 // pred_region
      _
    $region57: #{lstm_vae_forward.1} parent=1 // pred_fallthru
      _
    // Predicated region
    $region58: #{lstm_vae_forward.1} parent=1 // pred_check
      _
    $region59: #{lstm_vae_forward.1} parent=1 // pred_check_branch
      %60 = sbr.rel (0) target = $region61
    $region60: #{lstm_vae_forward.1} parent=1 // pred_region
      _
    $region61: #{lstm_vae_forward.1} parent=1 // pred_fallthru
      _
    // Predicated region
    $region62: #{lstm_vae_forward.1} parent=1 // pred_check
      _
    $region63: #{lstm_vae_forward.1} parent=1 // pred_check_branch
      %62 = sbr.rel (0) target = $region65
    $region64: #{lstm_vae_forward.1} parent=1 // pred_region
      _
    $region65: #{lstm_vae_forward.1} parent=1 // pred_fallthru
      _
    // Predicated region
    $region66: #{lstm_vae_forward.1} parent=1 // pred_check
      _
    $region67: #{lstm_vae_forward.1} parent=1 // pred_check_branch
      %64 = sbr.rel (0) target = $region69
    $region68: #{lstm_vae_forward.1} parent=1 // pred_region
      _
    $region69: #{lstm_vae_forward.1} parent=1 // pred_fallthru
      _
    // Predicated region
    $region70: #{lstm_vae_forward.1} parent=1 // pred_check
      _
    $region71: #{lstm_vae_forward.1} parent=1 // pred_check_branch
      %66 = sbr.rel (0) target = $region73
    $region72: #{lstm_vae_forward.1} parent=1 // pred_region
      _
    $region73: #{lstm_vae_forward.1} parent=1 // pred_fallthru
      _
    // Predicated region
    $region74: #{lstm_vae_forward.1} parent=1 // pred_check
      _
    $region75: #{lstm_vae_forward.1} parent=1 // pred_check_branch
      %68 = sbr.rel (0) target = $region77
    $region76: #{lstm_vae_forward.1} parent=1 // pred_region
      _
    $region77: #{lstm_vae_forward.1} parent=1 // pred_fallthru
      _
    // Predicated region
    $region78: #{lstm_vae_forward.1} parent=1 // pred_check
      _
    $region79: #{lstm_vae_forward.1} parent=1 // pred_check_branch
      %70 = sbr.rel (0) target = $region81
    $region80: #{lstm_vae_forward.1} parent=1 // pred_region
      _
    $region81: #{lstm_vae_forward.1} parent=1 // pred_fallthru
      _
    // Predicated region
    $region82: #{lstm_vae_forward.1} parent=1 // pred_check
      _
    $region83: #{lstm_vae_forward.1} parent=1 // pred_check_branch
      %72 = sbr.rel (0) target = $region85
    $region84: #{lstm_vae_forward.1} parent=1 // pred_region
      _
    $region85: #{lstm_vae_forward.1} parent=1 // pred_fallthru
      _
    %v73 = vld [vmem:[%s1] sm:$0xf]
    %v74 = vld [vmem:[%s8] sm:$0xff]
    %v75 = vld [vmem:[%s8 + $0x8] sm:$0xff]
    %v76 = vld [vmem:[%s8 + $0x10] sm:$0xff]
    %v77 = vld [vmem:[%s8 + $0x18] sm:$0xff]
    %v78 = vld [vmem:[%s8 + $0x20] sm:$0xff]
    %v79 = vld [vmem:[%s8 + $0x28] sm:$0xff]
    %v80 = vld [vmem:[%s8 + $0x30] sm:$0xff]
    %v81 = vld [vmem:[%s8 + $0x38] sm:$0xff]
    %v82 = vld [vmem:[%s8 + $0x40] sm:$0xff]
    %v83 = vld [vmem:[%s8 + $0x48] sm:$0xff]
    %v84 = vld [vmem:[%s8 + $0x50] sm:$0xff]
    %v85 = vld [vmem:[%s8 + $0x58] sm:$0xff]
    %v86 = vld [vmem:[%s8 + $0x60] sm:$0xff]
    %v87 = vld [vmem:[%s8 + $0x68] sm:$0xff]
    %v88 = vld [vmem:[%s8 + $0x70] sm:$0xff]
    %v89 = vld [vmem:[%s8 + $0x78] sm:$0xff]
    %v90 = vld [vmem:[%s8 + $0x80] sm:$0xff]
    %v91 = vld [vmem:[%s8 + $0x88] sm:$0xff]
    %v92 = vld [vmem:[%s8 + $0x90] sm:$0xff]
    %v93 = vld [vmem:[%s8 + $0x98] sm:$0xff]
    %v94 = vld [vmem:[%s8 + $0xa0] sm:$0xff]
    %v95 = vld [vmem:[%s8 + $0xa8] sm:$0xff]
    %v96 = vld [vmem:[%s8 + $0xb0] sm:$0xff]
    %v97 = vld [vmem:[%s8 + $0xb8] sm:$0xff]
    %v98 = vld [vmem:[%s8 + $0xc0] sm:$0xff]
    %v99 = vld [vmem:[%s8 + $0xc8] sm:$0xff]
    %v100 = vld [vmem:[%s8 + $0xd0] sm:$0xff]
    %v101 = vld [vmem:[%s8 + $0xd8] sm:$0xff]
    %v102 = vld [vmem:[%s8 + $0xe0] sm:$0xff]
    %v103 = vld [vmem:[%s8 + $0xe8] sm:$0xff]
    %v104 = vld [vmem:[%s8 + $0xf0] sm:$0xff]
    %v105 = vld [vmem:[%s8 + $0xf8] sm:$0xff]
    %v106 = vld [vmem:[%s9] sm:$0x1]
    %v108 = vlaneseq
    %v109 = vshrl.u32 %v108, 7
    %v110 = vsub.s32 0, %v109
    %v111 = vrot.slane %v106, %v110
    %v115 = vunpack.c.l.s4 1983009808
    %v116 = vunpack.c.0.s8 %v115
    %v117 = vlaneseq
    %v118 = vshrl.u32 %v117, 7
    %v119 = vsub.s32 %v116, %v118
    %v120 = vrot.slane %v73, %v119
    %v121 = vcombine.high %v120, %v120
    %124 = vmatprep.subr.mxu0 0.0
    %125 = vmatpush1.msra.mxu0 %v74
    %126 = vmatprep.subr.mxu0 0.0
    %127 = vmatpush1.msra.mxu0 %v75
    %128 = vmatprep.subr.mxu0 0.0
    %129 = vmatpush1.msra.mxu0 %v76
    %130 = vmatprep.subr.mxu0 0.0
    %131 = vmatpush1.msra.mxu0 %v77
    %132 = vmatprep.subr.mxu0 0.0
    %133 = vmatpush1.msra.mxu0 %v78
    %134 = vmatprep.subr.mxu0 0.0
    %135 = vmatpush1.msra.mxu0 %v79
    %136 = vmatprep.subr.mxu0 0.0
    %137 = vmatpush1.msra.mxu0 %v80
    %138 = vmatprep.subr.mxu0 0.0
    %139 = vmatpush1.msra.mxu0 %v81
    %140 = vmatprep.subr.mxu0 0.0
    %141 = vmatpush1.msra.mxu0 %v82
    %142 = vmatprep.subr.mxu0 0.0
    %143 = vmatpush1.msra.mxu0 %v83
    %144 = vmatprep.subr.mxu0 0.0
    %145 = vmatpush1.msra.mxu0 %v84
    %146 = vmatprep.subr.mxu0 0.0
    %147 = vmatpush1.msra.mxu0 %v85
    %148 = vmatprep.subr.mxu0 0.0
    %149 = vmatpush1.msra.mxu0 %v86
    %150 = vmatprep.subr.mxu0 0.0
    %151 = vmatpush1.msra.mxu0 %v87
    %152 = vmatprep.subr.mxu0 0.0
    %153 = vmatpush1.msra.mxu0 %v88
    %154 = vmatprep.subr.mxu0 0.0
    %155 = vmatpush1.msra.mxu0 %v89
    %156 = vmatprep.subr.mxu0 0.0
    %157 = vmatpush1.msra.mxu0 %v90
    %158 = vmatprep.subr.mxu0 0.0
    %159 = vmatpush1.msra.mxu0 %v91
    %160 = vmatprep.subr.mxu0 0.0
    %161 = vmatpush1.msra.mxu0 %v92
    %162 = vmatprep.subr.mxu0 0.0
    %163 = vmatpush1.msra.mxu0 %v93
    %164 = vmatprep.subr.mxu0 0.0
    %165 = vmatpush1.msra.mxu0 %v94
    %166 = vmatprep.subr.mxu0 0.0
    %167 = vmatpush1.msra.mxu0 %v95
    %168 = vmatprep.subr.mxu0 0.0
    %169 = vmatpush1.msra.mxu0 %v96
    %170 = vmatprep.subr.mxu0 0.0
    %171 = vmatpush1.msra.mxu0 %v97
    %172 = vmatprep.subr.mxu0 0.0
    %173 = vmatpush1.msra.mxu0 %v98
    %174 = vmatprep.subr.mxu0 0.0
    %175 = vmatpush1.msra.mxu0 %v99
    %176 = vmatprep.subr.mxu0 0.0
    %177 = vmatpush1.msra.mxu0 %v100
    %178 = vmatprep.subr.mxu0 0.0
    %179 = vmatpush1.msra.mxu0 %v101
    %180 = vmatprep.subr.mxu0 0.0
    %181 = vmatpush1.msra.mxu0 %v102
    %182 = vmatprep.subr.mxu0 0.0
    %183 = vmatpush1.msra.mxu0 %v103
    %184 = vmatprep.subr.mxu0 0.0
    %185 = vmatpush1.msra.mxu0 %v104
    %186 = vmatprep.subr.mxu0 0.0
    %187 = vmatpush1.msra.mxu0 %v105
    %188 = vmatprep.mubr.f32.mxu0 %v121
    %189 = vmatmul.mubr.f32.gmra.mrb[0].mxu0 %v120
    %v190 = vpop.f32.mrb[0].mxu0
    %v191 = vadd.f32 %v111, %v190
    %v192 = vpop.f32.mrb[0].mxu0
    %193 = vdwg.mxu0
    %v194 = vld [vmem:[%s0] sm:$0xff]
    %v195 = vld [vmem:[%s0 + $0x8] sm:$0xff]
    %v196 = vld [vmem:[%s3] sm:$0xff]
    %v197 = vld [vmem:[%s3 + $0x8] sm:$0xff]
    %v198 = vld [vmem:[%s5] sm:$0x1]
    %v200 = vlaneseq
    %v201 = vshrl.u32 %v200, 7
    %v202 = vsub.s32 0, %v201
    %v203 = vrot.slane %v198, %v202
    %vm205 = vcmask 130048
    %v207 = vsel %vm205, %v194, 0
    %v210 = vsel %vm205, %v195, 0
    %212 = vmatprep.subr.mxu0 0.0
    %213 = vmatpush1.msra.mxu0 %v196
    %214 = vmatprep.subr.mxu0 0.0
    %215 = vmatpush1.msra.mxu0 %v197
    %216 = vmatprep.subr.mxu0 0.0
    %217 = vmatpush1.msra.mxu0 0.0
    %218 = vmatprep.subr.mxu0 0.0
    %219 = vmatpush1.msra.mxu0 0.0
    %220 = vmatprep.subr.mxu0 0.0
    %221 = vmatpush1.msra.mxu0 0.0
    %222 = vmatprep.subr.mxu0 0.0
    %223 = vmatpush1.msra.mxu0 0.0
    %224 = vmatprep.subr.mxu0 0.0
    %225 = vmatpush1.msra.mxu0 0.0
    %226 = vmatprep.subr.mxu0 0.0
    %227 = vmatpush1.msra.mxu0 0.0
    %228 = vmatprep.subr.mxu0 0.0
    %229 = vmatpush1.msra.mxu0 0.0
    %230 = vmatprep.subr.mxu0 0.0
    %231 = vmatpush1.msra.mxu0 0.0
    %232 = vmatprep.subr.mxu0 0.0
    %233 = vmatpush1.msra.mxu0 0.0
    %234 = vmatprep.subr.mxu0 0.0
    %235 = vmatpush1.msra.mxu0 0.0
    %236 = vmatprep.subr.mxu0 0.0
    %237 = vmatpush1.msra.mxu0 0.0
    %238 = vmatprep.subr.mxu0 0.0
    %239 = vmatpush1.msra.mxu0 0.0
    %240 = vmatprep.subr.mxu0 0.0
    %241 = vmatpush1.msra.mxu0 0.0
    %242 = vmatprep.subr.mxu0 0.0
    %243 = vmatpush1.msra.mxu0 0.0
    %244 = vmatprep.subr.mxu0 0.0
    %245 = vmatpush1.msra.mxu0 0.0
    %246 = vmatprep.subr.mxu0 0.0
    %247 = vmatpush1.msra.mxu0 0.0
    %248 = vmatprep.subr.mxu0 0.0
    %249 = vmatpush1.msra.mxu0 0.0
    %250 = vmatprep.subr.mxu0 0.0
    %251 = vmatpush1.msra.mxu0 0.0
    %252 = vmatprep.subr.mxu0 0.0
    %253 = vmatpush1.msra.mxu0 0.0
    %254 = vmatprep.subr.mxu0 0.0
    %255 = vmatpush1.msra.mxu0 0.0
    %256 = vmatprep.subr.mxu0 0.0
    %257 = vmatpush1.msra.mxu0 0.0
    %258 = vmatprep.subr.mxu0 0.0
    %259 = vmatpush1.msra.mxu0 0.0
    %260 = vmatprep.subr.mxu0 0.0
    %261 = vmatpush1.msra.mxu0 0.0
    %262 = vmatprep.subr.mxu0 0.0
    %263 = vmatpush1.msra.mxu0 0.0
    %264 = vmatprep.subr.mxu0 0.0
    %265 = vmatpush1.msra.mxu0 0.0
    %266 = vmatprep.subr.mxu0 0.0
    %267 = vmatpush1.msra.mxu0 0.0
    %268 = vmatprep.subr.mxu0 0.0
    %269 = vmatpush1.msra.mxu0 0.0
    %270 = vmatprep.subr.mxu0 0.0
    %271 = vmatpush1.msra.mxu0 0.0
    %272 = vmatprep.subr.mxu0 0.0
    %273 = vmatpush1.msra.mxu0 0.0
    %274 = vmatprep.subr.mxu0 0.0
    %275 = vmatpush1.msra.mxu0 0.0
    %276 = vmatprep.mubr.f32.mxu0 0.0
    %277 = vmatmul.mubr.f32.gmra.mrb[0].mxu0 %v207
    %v278 = vpop.f32.mrb[0].mxu0
    %v279 = vadd.f32 %v203, %v278
    %v280 = vpop.f32.mrb[0].mxu0
    %281 = vmatprep.mubr.f32.mxu0 0.0
    %282 = vmatmul.mubr.f32.gmra.mrb[0].mxu0 %v210
    %v283 = vpop.f32.mrb[0].mxu0
    %v284 = vadd.f32 %v203, %v283
    %v285 = vpop.f32.mrb[0].mxu0
    %286 = vdwg.mxu0
    %v287 = vld [vmem:[%s4] sm:$0xff]
    %v288 = vld [vmem:[%s4 + $0x8] sm:$0xff]
    %v289 = vld [vmem:[%s4 + $0x10] sm:$0xff]
    %v290 = vld [vmem:[%s4 + $0x18] sm:$0xff]
    %v291 = vld [vmem:[%s6] sm:$0xff]
    %v292 = vld [vmem:[%s6 + $0x8] sm:$0xff]
    %v293 = vld [vmem:[%s6 + $0x10] sm:$0xff]
    %v294 = vld [vmem:[%s6 + $0x18] sm:$0xff]
    %v295 = vld [vmem:[%s6 + $0x20] sm:$0xff]
    %v296 = vld [vmem:[%s6 + $0x28] sm:$0xff]
    %v297 = vld [vmem:[%s6 + $0x30] sm:$0xff]
    %v298 = vld [vmem:[%s6 + $0x38] sm:$0xff]
    %v299 = vld [vmem:[%s7] sm:$0x1]
    %vm300 = vcmask 261120
    %v302 = vsel %vm300, %v191, 0
    %304 = vmatprep.subr.mxu0 0.0
    %305 = vmatpush1.msra.mxu0 %v287
    %306 = vmatprep.subr.mxu0 0.0
    %307 = vmatpush1.msra.mxu0 %v288
    %308 = vmatprep.subr.mxu0 0.0
    %309 = vmatpush1.msra.mxu0 %v289
    %310 = vmatprep.subr.mxu0 0.0
    %311 = vmatpush1.msra.mxu0 %v290
    %312 = vmatprep.subr.mxu0 0.0
    %313 = vmatpush1.msra.mxu0 0.0
    %314 = vmatprep.subr.mxu0 0.0
    %315 = vmatpush1.msra.mxu0 0.0
    %316 = vmatprep.subr.mxu0 0.0
    %317 = vmatpush1.msra.mxu0 0.0
    %318 = vmatprep.subr.mxu0 0.0
    %319 = vmatpush1.msra.mxu0 0.0
    %320 = vmatprep.subr.mxu0 0.0
    %321 = vmatpush1.msra.mxu0 0.0
    %322 = vmatprep.subr.mxu0 0.0
    %323 = vmatpush1.msra.mxu0 0.0
    %324 = vmatprep.subr.mxu0 0.0
    %325 = vmatpush1.msra.mxu0 0.0
    %326 = vmatprep.subr.mxu0 0.0
    %327 = vmatpush1.msra.mxu0 0.0
    %328 = vmatprep.subr.mxu0 0.0
    %329 = vmatpush1.msra.mxu0 0.0
    %330 = vmatprep.subr.mxu0 0.0
    %331 = vmatpush1.msra.mxu0 0.0
    %332 = vmatprep.subr.mxu0 0.0
    %333 = vmatpush1.msra.mxu0 0.0
    %334 = vmatprep.subr.mxu0 0.0
    %335 = vmatpush1.msra.mxu0 0.0
    %336 = vmatprep.subr.mxu0 0.0
    %337 = vmatpush1.msra.mxu0 0.0
    %338 = vmatprep.subr.mxu0 0.0
    %339 = vmatpush1.msra.mxu0 0.0
    %340 = vmatprep.subr.mxu0 0.0
    %341 = vmatpush1.msra.mxu0 0.0
    %342 = vmatprep.subr.mxu0 0.0
    %343 = vmatpush1.msra.mxu0 0.0
    %344 = vmatprep.subr.mxu0 0.0
    %345 = vmatpush1.msra.mxu0 0.0
    %346 = vmatprep.subr.mxu0 0.0
    %347 = vmatpush1.msra.mxu0 0.0
    %348 = vmatprep.subr.mxu0 0.0
    %349 = vmatpush1.msra.mxu0 0.0
    %350 = vmatprep.subr.mxu0 0.0
    %351 = vmatpush1.msra.mxu0 0.0
    %352 = vmatprep.subr.mxu0 0.0
    %353 = vmatpush1.msra.mxu0 0.0
    %354 = vmatprep.subr.mxu0 0.0
    %355 = vmatpush1.msra.mxu0 0.0
    %356 = vmatprep.subr.mxu0 0.0
    %357 = vmatpush1.msra.mxu0 0.0
    %358 = vmatprep.subr.mxu0 0.0
    %359 = vmatpush1.msra.mxu0 0.0
    %360 = vmatprep.subr.mxu0 0.0
    %361 = vmatpush1.msra.mxu0 0.0
    %362 = vmatprep.subr.mxu0 0.0
    %363 = vmatpush1.msra.mxu0 0.0
    %364 = vmatprep.subr.mxu0 0.0
    %365 = vmatpush1.msra.mxu0 0.0
    %366 = vmatprep.subr.mxu0 0.0
    %367 = vmatpush1.msra.mxu0 0.0
    %368 = vmatprep.mubr.f32.mxu0 0.0
    %369 = vmatmul.mubr.f32.gmra.mrb[0].mxu0 %v302
    %v370 = vpop.f32.mrb[0].mxu0
    %v371 = vadd.f32 0.0, %v370
    %v372 = vpop.f32.mrb[0].mxu0
    %373 = vdwg.mxu0
    %v375 = vrot.slane %v371, 1
    %v378 = vadd.f32 %v279, %v371
    %v379 = vadd.f32 %v284, %v375
    %v380 = vxor.u32 %v378, 2147483648
    %v381 = vxor.u32 %v379, 2147483648
    %v382 = vmul.f32 %v380, 1.442695
    %v383 = vpow.pop %v382
    %v384 = vmul.f32 %v381, 1.442695
    %v385 = vpow.pop %v384
    %v386 = vadd.f32 %v383, 1.0
    %v387 = vadd.f32 %v385, 1.0
    %v388 = vrcp.pop %v386
    %v389 = vmul.f32 1.0, %v388
    %v390 = vrcp.pop %v387
    %v391 = vmul.f32 1.0, %v390
    %v392 = vtanh.pop %v378
    %v393 = vtanh.pop %v379
    %v394 = vmul.f32 %v389, 0.0
    %v395 = vmul.f32 %v391, 0.0
    %398 = vrot.lane.b32.xlu0 %v392, 64
    %v399 = vpop.permute.xlu0 %398
    %400 = vrot.lane.b32.xlu0 %v393, 64
    %v401 = vpop.permute.xlu0 %400
    %v404 = vmul.f32 %v389, %v399
    %v405 = vmul.f32 %v391, %v401
    %408 = vrot.lane.b32.xlu0 %v404, 32
    %v409 = vpop.permute.xlu0 %408
    %410 = vrot.lane.b32.xlu0 %v405, 32
    %v411 = vpop.permute.xlu0 %410
    %v414 = vadd.f32 %v394, %v409
    %v415 = vadd.f32 %v395, %v411
    %v416 = vtanh.pop %v414
    %v417 = vtanh.pop %v415
    %420 = vrot.lane.b32.xlu0 %v416, 64
    %v421 = vpop.permute.xlu0 %420
    %422 = vrot.lane.b32.xlu0 %v417, 64
    %v423 = vpop.permute.xlu0 %422
    %v426 = vmul.f32 %v389, %v421
    %v427 = vmul.f32 %v391, %v423
    %v430 = vrot.slane %v427, 7
    %vm431 = vcmask 1041409
    %v432 = vsel %vm431, %v430, %v426
    %433 = vrot.lane.b32.xlu0 %v432, 32
    %v434 = vpop.permute.xlu0 %433
    %vm436 = vcmask 254976
    %437 = vst.msk [vmem:[#allocation4] sm:$0x3] %vm436, %v434
    %438 = vrot.lane.b32.xlu0 %v191, 32
    %v439 = vpop.permute.xlu0 %438
    %vm441 = vcmask 517376
    %442 = vst.msk [vmem:[#allocation4] sm:$0x3] %vm441, %v439
    %v443 = vld [vmem:[#allocation4] sm:$0x3]
    %v445 = vlaneseq
    %v446 = vshrl.u32 %v445, 7
    %v447 = vsub.s32 0, %v446
    %v448 = vrot.slane %v299, %v447
    %vm450 = vcmask 523264
    %v452 = vsel %vm450, %v443, 0
    %454 = vmatprep.subr.mxu0 0.0
    %455 = vmatpush1.msra.mxu0 %v291
    %456 = vmatprep.subr.mxu0 0.0
    %457 = vmatpush1.msra.mxu0 %v292
    %458 = vmatprep.subr.mxu0 0.0
    %459 = vmatpush1.msra.mxu0 %v293
    %460 = vmatprep.subr.mxu0 0.0
    %461 = vmatpush1.msra.mxu0 %v294
    %462 = vmatprep.subr.mxu0 0.0
    %463 = vmatpush1.msra.mxu0 %v295
    %464 = vmatprep.subr.mxu0 0.0
    %465 = vmatpush1.msra.mxu0 %v296
    %466 = vmatprep.subr.mxu0 0.0
    %467 = vmatpush1.msra.mxu0 %v297
    %468 = vmatprep.subr.mxu0 0.0
    %469 = vmatpush1.msra.mxu0 %v298
    %470 = vmatprep.subr.mxu0 0.0
    %471 = vmatpush1.msra.mxu0 0.0
    %472 = vmatprep.subr.mxu0 0.0
    %473 = vmatpush1.msra.mxu0 0.0
    %474 = vmatprep.subr.mxu0 0.0
    %475 = vmatpush1.msra.mxu0 0.0
    %476 = vmatprep.subr.mxu0 0.0
    %477 = vmatpush1.msra.mxu0 0.0
    %478 = vmatprep.subr.mxu0 0.0
    %479 = vmatpush1.msra.mxu0 0.0
    %480 = vmatprep.subr.mxu0 0.0
    %481 = vmatpush1.msra.mxu0 0.0
    %482 = vmatprep.subr.mxu0 0.0
    %483 = vmatpush1.msra.mxu0 0.0
    %484 = vmatprep.subr.mxu0 0.0
    %485 = vmatpush1.msra.mxu0 0.0
    %486 = vmatprep.subr.mxu0 0.0
    %487 = vmatpush1.msra.mxu0 0.0
    %488 = vmatprep.subr.mxu0 0.0
    %489 = vmatpush1.msra.mxu0 0.0
    %490 = vmatprep.subr.mxu0 0.0
    %491 = vmatpush1.msra.mxu0 0.0
    %492 = vmatprep.subr.mxu0 0.0
    %493 = vmatpush1.msra.mxu0 0.0
    %494 = vmatprep.subr.mxu0 0.0
    %495 = vmatpush1.msra.mxu0 0.0
    %496 = vmatprep.subr.mxu0 0.0
    %497 = vmatpush1.msra.mxu0 0.0
    %498 = vmatprep.subr.mxu0 0.0
    %499 = vmatpush1.msra.mxu0 0.0
    %500 = vmatprep.subr.mxu0 0.0
    %501 = vmatpush1.msra.mxu0 0.0
    %502 = vmatprep.subr.mxu0 0.0
    %503 = vmatpush1.msra.mxu0 0.0
    %504 = vmatprep.subr.mxu0 0.0
    %505 = vmatpush1.msra.mxu0 0.0
    %506 = vmatprep.subr.mxu0 0.0
    %507 = vmatpush1.msra.mxu0 0.0
    %508 = vmatprep.subr.mxu0 0.0
    %509 = vmatpush1.msra.mxu0 0.0
    %510 = vmatprep.subr.mxu0 0.0
    %511 = vmatpush1.msra.mxu0 0.0
    %512 = vmatprep.subr.mxu0 0.0
    %513 = vmatpush1.msra.mxu0 0.0
    %514 = vmatprep.subr.mxu0 0.0
    %515 = vmatpush1.msra.mxu0 0.0
    %516 = vmatprep.subr.mxu0 0.0
    %517 = vmatpush1.msra.mxu0 0.0
    %518 = vmatprep.mubr.f32.mxu0 0.0
    %519 = vmatmul.mubr.f32.gmra.mrb[0].mxu0 %v452
    %v520 = vpop.f32.mrb[0].mxu0
    %v521 = vadd.f32 %v448, %v520
    %v522 = vpop.f32.mrb[0].mxu0
    %523 = vdwg.mxu0
    %v524 = vxor.u32 %v521, 2147483648
    %v525 = vmul.f32 %v524, 1.442695
    %v526 = vpow.pop %v525
    %v527 = vadd.f32 %v526, 1.0
    %v528 = vrcp.pop %v527
    %v529 = vmul.f32 1.0, %v528
    %v530 = vtanh.pop %v521
    %v531 = vmul.f32 %v529, 0.0
    %533 = vrot.lane.b32.xlu0 %v530, 64
    %v534 = vpop.permute.xlu0 %533
    %v536 = vmul.f32 %v529, %v534
    %538 = vrot.lane.b32.xlu0 %v536, 32
    %v539 = vpop.permute.xlu0 %538
    %v541 = vadd.f32 %v531, %v539
    %v542 = vtanh.pop %v541
    %544 = vrot.lane.b32.xlu0 %v542, 64
    %v545 = vpop.permute.xlu0 %544
    %v547 = vmul.f32 %v529, %v545
    %v550 = vunpack.c.l.s4 1966171168
    %v551 = vunpack.c.0.s8 %v550
    %v552 = vlaneseq
    %v553 = vshrl.u32 %v552, 7
    %v554 = vsub.s32 %v551, %v553
    %v555 = vrot.slane %v547, %v554
    %v556 = vcombine.high %v555, %v555
    %v558 = vunpack.c.l.s4 1966171168
    %v559 = vunpack.c.0.s8 %v558
    %v560 = vlaneseq
    %v561 = vshrl.u32 %v560, 7
    %v562 = vsub.s32 %v559, %v561
    %v563 = vrot.slane %v555, %v562
    %v565 = vunpack.c.l.s4 1966171168
    %v566 = vunpack.c.0.s8 %v565
    %v567 = vlaneseq
    %v568 = vshrl.u32 %v567, 7
    %v569 = vsub.s32 %v566, %v568
    %v570 = vrot.slane %v556, %v569
    %v571 = vlaneseq
    %v572 = vshrl.u32 %v571, 7
    %v573 = vsub.s32 0, %v572
    %v574 = vrot.slane %v563, %v573
    %v575 = vlaneseq
    %v576 = vshrl.u32 %v575, 7
    %v577 = vsub.s32 0, %v576
    %v578 = vrot.slane %v570, %v577
    %579 = vrot.lane.b32.xlu0 %v574, 32
    %v580 = vpop.permute.xlu0 %579
    %581 = vrot.lane.b32.xlu0 %v578, 32
    %v582 = vpop.permute.xlu0 %581
    %vm585 = vcmask 253952
    %586 = vst.msk [vmem:[#allocation2] sm:$0x1] %vm585, %v580
    %587 = vst.msk [vmem:[#allocation2 + $0x8] sm:$0x1] %vm585, %v582
    %v588 = vsel %vm300, %v434, 0
    %590 = vmatprep.subr.mxu0 0.0
    %591 = vmatpush1.msra.mxu0 %v287
    %592 = vmatprep.subr.mxu0 0.0
    %593 = vmatpush1.msra.mxu0 %v288
    %594 = vmatprep.subr.mxu0 0.0
    %595 = vmatpush1.msra.mxu0 %v289
    %596 = vmatprep.subr.mxu0 0.0
    %597 = vmatpush1.msra.mxu0 %v290
    %598 = vmatprep.subr.mxu0 0.0
    %599 = vmatpush1.msra.mxu0 0.0
    %600 = vmatprep.subr.mxu0 0.0
    %601 = vmatpush1.msra.mxu0 0.0
    %602 = vmatprep.subr.mxu0 0.0
    %603 = vmatpush1.msra.mxu0 0.0
    %604 = vmatprep.subr.mxu0 0.0
    %605 = vmatpush1.msra.mxu0 0.0
    %606 = vmatprep.subr.mxu0 0.0
    %607 = vmatpush1.msra.mxu0 0.0
    %608 = vmatprep.subr.mxu0 0.0
    %609 = vmatpush1.msra.mxu0 0.0
    %610 = vmatprep.subr.mxu0 0.0
    %611 = vmatpush1.msra.mxu0 0.0
    %612 = vmatprep.subr.mxu0 0.0
    %613 = vmatpush1.msra.mxu0 0.0
    %614 = vmatprep.subr.mxu0 0.0
    %615 = vmatpush1.msra.mxu0 0.0
    %616 = vmatprep.subr.mxu0 0.0
    %617 = vmatpush1.msra.mxu0 0.0
    %618 = vmatprep.subr.mxu0 0.0
    %619 = vmatpush1.msra.mxu0 0.0
    %620 = vmatprep.subr.mxu0 0.0
    %621 = vmatpush1.msra.mxu0 0.0
    %622 = vmatprep.subr.mxu0 0.0
    %623 = vmatpush1.msra.mxu0 0.0
    %624 = vmatprep.subr.mxu0 0.0
    %625 = vmatpush1.msra.mxu0 0.0
    %626 = vmatprep.subr.mxu0 0.0
    %627 = vmatpush1.msra.mxu0 0.0
    %628 = vmatprep.subr.mxu0 0.0
    %629 = vmatpush1.msra.mxu0 0.0
    %630 = vmatprep.subr.mxu0 0.0
    %631 = vmatpush1.msra.mxu0 0.0
    %632 = vmatprep.subr.mxu0 0.0
    %633 = vmatpush1.msra.mxu0 0.0
    %634 = vmatprep.subr.mxu0 0.0
    %635 = vmatpush1.msra.mxu0 0.0
    %636 = vmatprep.subr.mxu0 0.0
    %637 = vmatpush1.msra.mxu0 0.0
    %638 = vmatprep.subr.mxu0 0.0
    %639 = vmatpush1.msra.mxu0 0.0
    %640 = vmatprep.subr.mxu0 0.0
    %641 = vmatpush1.msra.mxu0 0.0
    %642 = vmatprep.subr.mxu0 0.0
    %643 = vmatpush1.msra.mxu0 0.0
    %644 = vmatprep.subr.mxu0 0.0
    %645 = vmatpush1.msra.mxu0 0.0
    %646 = vmatprep.subr.mxu0 0.0
    %647 = vmatpush1.msra.mxu0 0.0
    %648 = vmatprep.subr.mxu0 0.0
    %649 = vmatpush1.msra.mxu0 0.0
    %650 = vmatprep.subr.mxu0 0.0
    %651 = vmatpush1.msra.mxu0 0.0
    %652 = vmatprep.subr.mxu0 0.0
    %653 = vmatpush1.msra.mxu0 0.0
    %654 = vmatprep.mubr.f32.mxu0 0.0
    %655 = vmatmul.mubr.f32.gmra.mrb[0].mxu0 %v588
    %v656 = vpop.f32.mrb[0].mxu0
    %v657 = vadd.f32 0.0, %v656
    %v658 = vpop.f32.mrb[0].mxu0
    %659 = vdwg.mxu0
    %v661 = vrot.slane %v657, 7
    %v664 = vadd.f32 %v279, %v661
    %v665 = vadd.f32 %v284, %v657
    %v666 = vxor.u32 %v664, 2147483648
    %v667 = vxor.u32 %v665, 2147483648
    %v668 = vmul.f32 %v666, 1.442695
    %v669 = vpow.pop %v668
    %v670 = vmul.f32 %v667, 1.442695
    %v671 = vpow.pop %v670
    %v672 = vadd.f32 %v669, 1.0
    %v673 = vadd.f32 %v671, 1.0
    %v674 = vrcp.pop %v672
    %v675 = vmul.f32 1.0, %v674
    %v676 = vrcp.pop %v673
    %v677 = vmul.f32 1.0, %v676
    %v678 = vtanh.pop %v664
    %v679 = vtanh.pop %v665
    %v682 = vrot.slane %v414, 7
    %v683 = vrot.slane %v415, 7
    %v686 = vmul.f32 %v675, %v682
    %v687 = vmul.f32 %v677, %v683
    %690 = vrot.lane.b32.xlu0 %v678, 64
    %v691 = vpop.permute.xlu0 %690
    %692 = vrot.lane.b32.xlu0 %v679, 64
    %v693 = vpop.permute.xlu0 %692
    %v696 = vmul.f32 %v675, %v691
    %v697 = vmul.f32 %v677, %v693
    %700 = vrot.lane.b32.xlu0 %v696, 32
    %v701 = vpop.permute.xlu0 %700
    %702 = vrot.lane.b32.xlu0 %v697, 32
    %v703 = vpop.permute.xlu0 %702
    %v706 = vadd.f32 %v686, %v701
    %v707 = vadd.f32 %v687, %v703
    %v708 = vtanh.pop %v706
    %v709 = vtanh.pop %v707
    %712 = vrot.lane.b32.xlu0 %v708, 64
    %v713 = vpop.permute.xlu0 %712
    %714 = vrot.lane.b32.xlu0 %v709, 64
    %v715 = vpop.permute.xlu0 %714
    %v718 = vmul.f32 %v675, %v713
    %v719 = vmul.f32 %v677, %v715
    %v722 = vrot.slane %v719, 7
    %vm723 = vcmask 1042434
    %v724 = vsel %vm723, %v722, %v718
    %725 = vrot.lane.b32.xlu0 %v724, 32
    %v726 = vpop.permute.xlu0 %725
    %vm728 = vcmask 256001
    %729 = vst.msk [vmem:[#allocation4 - $0x1] sm:$0x6] %vm728, %v726
    %730 = vrot.lane.b32.xlu0 %v547, 64
    %v731 = vpop.permute.xlu0 %730
    %733 = vst.msk [vmem:[#allocation4] sm:$0x3] %vm441, %v731
    %v734 = vld [vmem:[#allocation4] sm:$0x3]
    %v736 = vsel %vm450, %v734, 0
    %738 = vmatprep.subr.mxu0 0.0
    %739 = vmatpush1.msra.mxu0 %v291
    %740 = vmatprep.subr.mxu0 0.0
    %741 = vmatpush1.msra.mxu0 %v292
    %742 = vmatprep.subr.mxu0 0.0
    %743 = vmatpush1.msra.mxu0 %v293
    %744 = vmatprep.subr.mxu0 0.0
    %745 = vmatpush1.msra.mxu0 %v294
    %746 = vmatprep.subr.mxu0 0.0
    %747 = vmatpush1.msra.mxu0 %v295
    %748 = vmatprep.subr.mxu0 0.0
    %749 = vmatpush1.msra.mxu0 %v296
    %750 = vmatprep.subr.mxu0 0.0
    %751 = vmatpush1.msra.mxu0 %v297
    %752 = vmatprep.subr.mxu0 0.0
    %753 = vmatpush1.msra.mxu0 %v298
    %754 = vmatprep.subr.mxu0 0.0
    %755 = vmatpush1.msra.mxu0 0.0
    %756 = vmatprep.subr.mxu0 0.0
    %757 = vmatpush1.msra.mxu0 0.0
    %758 = vmatprep.subr.mxu0 0.0
    %759 = vmatpush1.msra.mxu0 0.0
    %760 = vmatprep.subr.mxu0 0.0
    %761 = vmatpush1.msra.mxu0 0.0
    %762 = vmatprep.subr.mxu0 0.0
    %763 = vmatpush1.msra.mxu0 0.0
    %764 = vmatprep.subr.mxu0 0.0
    %765 = vmatpush1.msra.mxu0 0.0
    %766 = vmatprep.subr.mxu0 0.0
    %767 = vmatpush1.msra.mxu0 0.0
    %768 = vmatprep.subr.mxu0 0.0
    %769 = vmatpush1.msra.mxu0 0.0
    %770 = vmatprep.subr.mxu0 0.0
    %771 = vmatpush1.msra.mxu0 0.0
    %772 = vmatprep.subr.mxu0 0.0
    %773 = vmatpush1.msra.mxu0 0.0
    %774 = vmatprep.subr.mxu0 0.0
    %775 = vmatpush1.msra.mxu0 0.0
    %776 = vmatprep.subr.mxu0 0.0
    %777 = vmatpush1.msra.mxu0 0.0
    %778 = vmatprep.subr.mxu0 0.0
    %779 = vmatpush1.msra.mxu0 0.0
    %780 = vmatprep.subr.mxu0 0.0
    %781 = vmatpush1.msra.mxu0 0.0
    %782 = vmatprep.subr.mxu0 0.0
    %783 = vmatpush1.msra.mxu0 0.0
    %784 = vmatprep.subr.mxu0 0.0
    %785 = vmatpush1.msra.mxu0 0.0
    %786 = vmatprep.subr.mxu0 0.0
    %787 = vmatpush1.msra.mxu0 0.0
    %788 = vmatprep.subr.mxu0 0.0
    %789 = vmatpush1.msra.mxu0 0.0
    %790 = vmatprep.subr.mxu0 0.0
    %791 = vmatpush1.msra.mxu0 0.0
    %792 = vmatprep.subr.mxu0 0.0
    %793 = vmatpush1.msra.mxu0 0.0
    %794 = vmatprep.subr.mxu0 0.0
    %795 = vmatpush1.msra.mxu0 0.0
    %796 = vmatprep.subr.mxu0 0.0
    %797 = vmatpush1.msra.mxu0 0.0
    %798 = vmatprep.subr.mxu0 0.0
    %799 = vmatpush1.msra.mxu0 0.0
    %800 = vmatprep.subr.mxu0 0.0
    %801 = vmatpush1.msra.mxu0 0.0
    %802 = vmatprep.mubr.f32.mxu0 0.0
    %803 = vmatmul.mubr.f32.gmra.mrb[0].mxu0 %v736
    %v804 = vpop.f32.mrb[0].mxu0
    %v805 = vadd.f32 %v448, %v804
    %v806 = vpop.f32.mrb[0].mxu0
    %807 = vdwg.mxu0
    %v808 = vxor.u32 %v805, 2147483648
    %v809 = vmul.f32 %v808, 1.442695
    %v810 = vpow.pop %v809
    %v811 = vadd.f32 %v810, 1.0
    %v812 = vrcp.pop %v811
    %v813 = vmul.f32 1.0, %v812
    %v814 = vtanh.pop %v805
    %v815 = vmul.f32 %v813, %v541
    %817 = vrot.lane.b32.xlu0 %v814, 64
    %v818 = vpop.permute.xlu0 %817
    %v820 = vmul.f32 %v813, %v818
    %822 = vrot.lane.b32.xlu0 %v820, 32
    %v823 = vpop.permute.xlu0 %822
    %v825 = vadd.f32 %v815, %v823
    %v826 = vtanh.pop %v825
    %828 = vrot.lane.b32.xlu0 %v826, 64
    %v829 = vpop.permute.xlu0 %828
    %v831 = vmul.f32 %v813, %v829
    %v834 = vunpack.c.l.s4 1966171168
    %v835 = vunpack.c.0.s8 %v834
    %v836 = vlaneseq
    %v837 = vshrl.u32 %v836, 7
    %v838 = vsub.s32 %v835, %v837
    %v839 = vrot.slane %v831, %v838
    %v840 = vcombine.high %v839, %v839
    %v842 = vunpack.c.l.s4 1966171168
    %v843 = vunpack.c.0.s8 %v842
    %v844 = vlaneseq
    %v845 = vshrl.u32 %v844, 7
    %v846 = vsub.s32 %v843, %v845
    %v847 = vrot.slane %v839, %v846
    %v849 = vunpack.c.l.s4 1966171168
    %v850 = vunpack.c.0.s8 %v849
    %v851 = vlaneseq
    %v852 = vshrl.u32 %v851, 7
    %v853 = vsub.s32 %v850, %v852
    %v854 = vrot.slane %v840, %v853
    %v855 = vlaneseq
    %v856 = vshrl.u32 %v855, 7
    %v857 = vsub.s32 0, %v856
    %v858 = vrot.slane %v847, %v857
    %v859 = vlaneseq
    %v860 = vshrl.u32 %v859, 7
    %v861 = vsub.s32 0, %v860
    %v862 = vrot.slane %v854, %v861
    %863 = vrot.lane.b32.xlu0 %v858, 32
    %v864 = vpop.permute.xlu0 %863
    %865 = vrot.lane.b32.xlu0 %v862, 32
    %v866 = vpop.permute.xlu0 %865
    %869 = vst.msk [vmem:[#allocation2 + $0x1] sm:$0x1] %vm585, %v864
    %870 = vst.msk [vmem:[#allocation2 + $0x9] sm:$0x1] %vm585, %v866
    %v871 = vrot.slane %v718, 1
    %v872 = vsel %vm431, %v719, %v871
    %873 = vrot.lane.b32.xlu0 %v872, 32
    %v874 = vpop.permute.xlu0 %873
    %v875 = vsel %vm300, %v874, 0
    %877 = vmatprep.subr.mxu0 0.0
    %878 = vmatpush1.msra.mxu0 %v287
    %879 = vmatprep.subr.mxu0 0.0
    %880 = vmatpush1.msra.mxu0 %v288
    %881 = vmatprep.subr.mxu0 0.0
    %882 = vmatpush1.msra.mxu0 %v289
    %883 = vmatprep.subr.mxu0 0.0
    %884 = vmatpush1.msra.mxu0 %v290
    %885 = vmatprep.subr.mxu0 0.0
    %886 = vmatpush1.msra.mxu0 0.0
    %887 = vmatprep.subr.mxu0 0.0
    %888 = vmatpush1.msra.mxu0 0.0
    %889 = vmatprep.subr.mxu0 0.0
    %890 = vmatpush1.msra.mxu0 0.0
    %891 = vmatprep.subr.mxu0 0.0
    %892 = vmatpush1.msra.mxu0 0.0
    %893 = vmatprep.subr.mxu0 0.0
    %894 = vmatpush1.msra.mxu0 0.0
    %895 = vmatprep.subr.mxu0 0.0
    %896 = vmatpush1.msra.mxu0 0.0
    %897 = vmatprep.subr.mxu0 0.0
    %898 = vmatpush1.msra.mxu0 0.0
    %899 = vmatprep.subr.mxu0 0.0
    %900 = vmatpush1.msra.mxu0 0.0
    %901 = vmatprep.subr.mxu0 0.0
    %902 = vmatpush1.msra.mxu0 0.0
    %903 = vmatprep.subr.mxu0 0.0
    %904 = vmatpush1.msra.mxu0 0.0
    %905 = vmatprep.subr.mxu0 0.0
    %906 = vmatpush1.msra.mxu0 0.0
    %907 = vmatprep.subr.mxu0 0.0
    %908 = vmatpush1.msra.mxu0 0.0
    %909 = vmatprep.subr.mxu0 0.0
    %910 = vmatpush1.msra.mxu0 0.0
    %911 = vmatprep.subr.mxu0 0.0
    %912 = vmatpush1.msra.mxu0 0.0
    %913 = vmatprep.subr.mxu0 0.0
    %914 = vmatpush1.msra.mxu0 0.0
    %915 = vmatprep.subr.mxu0 0.0
    %916 = vmatpush1.msra.mxu0 0.0
    %917 = vmatprep.subr.mxu0 0.0
    %918 = vmatpush1.msra.mxu0 0.0
    %919 = vmatprep.subr.mxu0 0.0
    %920 = vmatpush1.msra.mxu0 0.0
    %921 = vmatprep.subr.mxu0 0.0
    %922 = vmatpush1.msra.mxu0 0.0
    %923 = vmatprep.subr.mxu0 0.0
    %924 = vmatpush1.msra.mxu0 0.0
    %925 = vmatprep.subr.mxu0 0.0
    %926 = vmatpush1.msra.mxu0 0.0
    %927 = vmatprep.subr.mxu0 0.0
    %928 = vmatpush1.msra.mxu0 0.0
    %929 = vmatprep.subr.mxu0 0.0
    %930 = vmatpush1.msra.mxu0 0.0
    %931 = vmatprep.subr.mxu0 0.0
    %932 = vmatpush1.msra.mxu0 0.0
    %933 = vmatprep.subr.mxu0 0.0
    %934 = vmatpush1.msra.mxu0 0.0
    %935 = vmatprep.subr.mxu0 0.0
    %936 = vmatpush1.msra.mxu0 0.0
    %937 = vmatprep.subr.mxu0 0.0
    %938 = vmatpush1.msra.mxu0 0.0
    %939 = vmatprep.subr.mxu0 0.0
    %940 = vmatpush1.msra.mxu0 0.0
    %941 = vmatprep.mubr.f32.mxu0 0.0
    %942 = vmatmul.mubr.f32.gmra.mrb[0].mxu0 %v875
    %v943 = vpop.f32.mrb[0].mxu0
    %v944 = vadd.f32 0.0, %v943
    %v945 = vpop.f32.mrb[0].mxu0
    %946 = vdwg.mxu0
    %v948 = vrot.slane %v944, 6
    %v949 = vrot.slane %v944, 7
    %v952 = vadd.f32 %v279, %v948
    %v953 = vadd.f32 %v284, %v949
    %v954 = vxor.u32 %v952, 2147483648
    %v955 = vxor.u32 %v953, 2147483648
    %v956 = vmul.f32 %v954, 1.442695
    %v957 = vpow.pop %v956
    %v958 = vmul.f32 %v955, 1.442695
    %v959 = vpow.pop %v958
    %v960 = vadd.f32 %v957, 1.0
    %v961 = vadd.f32 %v959, 1.0
    %v962 = vrcp.pop %v960
    %v963 = vmul.f32 1.0, %v962
    %v964 = vrcp.pop %v961
    %v965 = vmul.f32 1.0, %v964
    %v966 = vtanh.pop %v952
    %v967 = vtanh.pop %v953
    %v970 = vrot.slane %v706, 7
    %v971 = vrot.slane %v707, 7
    %v974 = vmul.f32 %v963, %v970
    %v975 = vmul.f32 %v965, %v971
    %978 = vrot.lane.b32.xlu0 %v966, 64
    %v979 = vpop.permute.xlu0 %978
    %980 = vrot.lane.b32.xlu0 %v967, 64
    %v981 = vpop.permute.xlu0 %980
    %v984 = vmul.f32 %v963, %v979
    %v985 = vmul.f32 %v965, %v981
    %988 = vrot.lane.b32.xlu0 %v984, 32
    %v989 = vpop.permute.xlu0 %988
    %990 = vrot.lane.b32.xlu0 %v985, 32
    %v991 = vpop.permute.xlu0 %990
    %v994 = vadd.f32 %v974, %v989
    %v995 = vadd.f32 %v975, %v991
    %v996 = vtanh.pop %v994
    %v997 = vtanh.pop %v995
    %1000 = vrot.lane.b32.xlu0 %v996, 64
    %v1001 = vpop.permute.xlu0 %1000
    %1002 = vrot.lane.b32.xlu0 %v997, 64
    %v1003 = vpop.permute.xlu0 %1002
    %v1006 = vmul.f32 %v963, %v1001
    %v1007 = vmul.f32 %v965, %v1003
    %v1010 = vrot.slane %v1007, 7
    %vm1011 = vcmask 1043459
    %v1012 = vsel %vm1011, %v1010, %v1006
    %1013 = vrot.lane.b32.xlu0 %v1012, 32
    %v1014 = vpop.permute.xlu0 %1013
    %vm1016 = vcmask 257026
    %1017 = vst.msk [vmem:[#allocation4 - $0x2] sm:$0xc] %vm1016, %v1014
    %1018 = vrot.lane.b32.xlu0 %v831, 64
    %v1019 = vpop.permute.xlu0 %1018
    %1021 = vst.msk [vmem:[#allocation4] sm:$0x3] %vm441, %v1019
    %v1022 = vld [vmem:[#allocation4] sm:$0x3]
    %v1024 = vsel %vm450, %v1022, 0
    %1026 = vmatprep.subr.mxu0 0.0
    %1027 = vmatpush1.msra.mxu0 %v291
    %1028 = vmatprep.subr.mxu0 0.0
    %1029 = vmatpush1.msra.mxu0 %v292
    %1030 = vmatprep.subr.mxu0 0.0
    %1031 = vmatpush1.msra.mxu0 %v293
    %1032 = vmatprep.subr.mxu0 0.0
    %1033 = vmatpush1.msra.mxu0 %v294
    %1034 = vmatprep.subr.mxu0 0.0
    %1035 = vmatpush1.msra.mxu0 %v295
    %1036 = vmatprep.subr.mxu0 0.0
    %1037 = vmatpush1.msra.mxu0 %v296
    %1038 = vmatprep.subr.mxu0 0.0
    %1039 = vmatpush1.msra.mxu0 %v297
    %1040 = vmatprep.subr.mxu0 0.0
    %1041 = vmatpush1.msra.mxu0 %v298
    %1042 = vmatprep.subr.mxu0 0.0
    %1043 = vmatpush1.msra.mxu0 0.0
    %1044 = vmatprep.subr.mxu0 0.0
    %1045 = vmatpush1.msra.mxu0 0.0
    %1046 = vmatprep.subr.mxu0 0.0
    %1047 = vmatpush1.msra.mxu0 0.0
    %1048 = vmatprep.subr.mxu0 0.0
    %1049 = vmatpush1.msra.mxu0 0.0
    %1050 = vmatprep.subr.mxu0 0.0
    %1051 = vmatpush1.msra.mxu0 0.0
    %1052 = vmatprep.subr.mxu0 0.0
    %1053 = vmatpush1.msra.mxu0 0.0
    %1054 = vmatprep.subr.mxu0 0.0
    %1055 = vmatpush1.msra.mxu0 0.0
    %1056 = vmatprep.subr.mxu0 0.0
    %1057 = vmatpush1.msra.mxu0 0.0
    %1058 = vmatprep.subr.mxu0 0.0
    %1059 = vmatpush1.msra.mxu0 0.0
    %1060 = vmatprep.subr.mxu0 0.0
    %1061 = vmatpush1.msra.mxu0 0.0
    %1062 = vmatprep.subr.mxu0 0.0
    %1063 = vmatpush1.msra.mxu0 0.0
    %1064 = vmatprep.subr.mxu0 0.0
    %1065 = vmatpush1.msra.mxu0 0.0
    %1066 = vmatprep.subr.mxu0 0.0
    %1067 = vmatpush1.msra.mxu0 0.0
    %1068 = vmatprep.subr.mxu0 0.0
    %1069 = vmatpush1.msra.mxu0 0.0
    %1070 = vmatprep.subr.mxu0 0.0
    %1071 = vmatpush1.msra.mxu0 0.0
    %1072 = vmatprep.subr.mxu0 0.0
    %1073 = vmatpush1.msra.mxu0 0.0
    %1074 = vmatprep.subr.mxu0 0.0
    %1075 = vmatpush1.msra.mxu0 0.0
    %1076 = vmatprep.subr.mxu0 0.0
    %1077 = vmatpush1.msra.mxu0 0.0
    %1078 = vmatprep.subr.mxu0 0.0
    %1079 = vmatpush1.msra.mxu0 0.0
    %1080 = vmatprep.subr.mxu0 0.0
    %1081 = vmatpush1.msra.mxu0 0.0
    %1082 = vmatprep.subr.mxu0 0.0
    %1083 = vmatpush1.msra.mxu0 0.0
    %1084 = vmatprep.subr.mxu0 0.0
    %1085 = vmatpush1.msra.mxu0 0.0
    %1086 = vmatprep.subr.mxu0 0.0
    %1087 = vmatpush1.msra.mxu0 0.0
    %1088 = vmatprep.subr.mxu0 0.0
    %1089 = vmatpush1.msra.mxu0 0.0
    %1090 = vmatprep.mubr.f32.mxu0 0.0
    %1091 = vmatmul.mubr.f32.gmra.mrb[0].mxu0 %v1024
    %v1092 = vpop.f32.mrb[0].mxu0
    %v1093 = vadd.f32 %v448, %v1092
    %v1094 = vpop.f32.mrb[0].mxu0
    %1095 = vdwg.mxu0
    %v1096 = vxor.u32 %v1093, 2147483648
    %v1097 = vmul.f32 %v1096, 1.442695
    %v1098 = vpow.pop %v1097
    %v1099 = vadd.f32 %v1098, 1.0
    %v1100 = vrcp.pop %v1099
    %v1101 = vmul.f32 1.0, %v1100
    %v1102 = vtanh.pop %v1093
    %v1103 = vmul.f32 %v1101, %v825
    %1105 = vrot.lane.b32.xlu0 %v1102, 64
    %v1106 = vpop.permute.xlu0 %1105
    %v1108 = vmul.f32 %v1101, %v1106
    %1110 = vrot.lane.b32.xlu0 %v1108, 32
    %v1111 = vpop.permute.xlu0 %1110
    %v1113 = vadd.f32 %v1103, %v1111
    %v1114 = vtanh.pop %v1113
    %1116 = vrot.lane.b32.xlu0 %v1114, 64
    %v1117 = vpop.permute.xlu0 %1116
    %v1119 = vmul.f32 %v1101, %v1117
    %v1122 = vunpack.c.l.s4 1966171168
    %v1123 = vunpack.c.0.s8 %v1122
    %v1124 = vlaneseq
    %v1125 = vshrl.u32 %v1124, 7
    %v1126 = vsub.s32 %v1123, %v1125
    %v1127 = vrot.slane %v1119, %v1126
    %v1128 = vcombine.high %v1127, %v1127
    %v1130 = vunpack.c.l.s4 1966171168
    %v1131 = vunpack.c.0.s8 %v1130
    %v1132 = vlaneseq
    %v1133 = vshrl.u32 %v1132, 7
    %v1134 = vsub.s32 %v1131, %v1133
    %v1135 = vrot.slane %v1127, %v1134
    %v1137 = vunpack.c.l.s4 1966171168
    %v1138 = vunpack.c.0.s8 %v1137
    %v1139 = vlaneseq
    %v1140 = vshrl.u32 %v1139, 7
    %v1141 = vsub.s32 %v1138, %v1140
    %v1142 = vrot.slane %v1128, %v1141
    %v1143 = vlaneseq
    %v1144 = vshrl.u32 %v1143, 7
    %v1145 = vsub.s32 0, %v1144
    %v1146 = vrot.slane %v1135, %v1145
    %v1147 = vlaneseq
    %v1148 = vshrl.u32 %v1147, 7
    %v1149 = vsub.s32 0, %v1148
    %v1150 = vrot.slane %v1142, %v1149
    %1151 = vrot.lane.b32.xlu0 %v1146, 32
    %v1152 = vpop.permute.xlu0 %1151
    %1153 = vrot.lane.b32.xlu0 %v1150, 32
    %v1154 = vpop.permute.xlu0 %1153
    %1157 = vst.msk [vmem:[#allocation2 + $0x2] sm:$0x1] %vm585, %v1152
    %1158 = vst.msk [vmem:[#allocation2 + $0xa] sm:$0x1] %vm585, %v1154
    %v1159 = vrot.slane %v1006, 2
    %v1160 = vrot.slane %v1007, 1
    %v1161 = vsel %vm431, %v1160, %v1159
    %1162 = vrot.lane.b32.xlu0 %v1161, 32
    %v1163 = vpop.permute.xlu0 %1162
    %v1164 = vsel %vm300, %v1163, 0
    %1166 = vmatprep.subr.mxu0 0.0
    %1167 = vmatpush1.msra.mxu0 %v287
    %1168 = vmatprep.subr.mxu0 0.0
    %1169 = vmatpush1.msra.mxu0 %v288
    %1170 = vmatprep.subr.mxu0 0.0
    %1171 = vmatpush1.msra.mxu0 %v289
    %1172 = vmatprep.subr.mxu0 0.0
    %1173 = vmatpush1.msra.mxu0 %v290
    %1174 = vmatprep.subr.mxu0 0.0
    %1175 = vmatpush1.msra.mxu0 0.0
    %1176 = vmatprep.subr.mxu0 0.0
    %1177 = vmatpush1.msra.mxu0 0.0
    %1178 = vmatprep.subr.mxu0 0.0
    %1179 = vmatpush1.msra.mxu0 0.0
    %1180 = vmatprep.subr.mxu0 0.0
    %1181 = vmatpush1.msra.mxu0 0.0
    %1182 = vmatprep.subr.mxu0 0.0
    %1183 = vmatpush1.msra.mxu0 0.0
    %1184 = vmatprep.subr.mxu0 0.0
    %1185 = vmatpush1.msra.mxu0 0.0
    %1186 = vmatprep.subr.mxu0 0.0
    %1187 = vmatpush1.msra.mxu0 0.0
    %1188 = vmatprep.subr.mxu0 0.0
    %1189 = vmatpush1.msra.mxu0 0.0
    %1190 = vmatprep.subr.mxu0 0.0
    %1191 = vmatpush1.msra.mxu0 0.0
    %1192 = vmatprep.subr.mxu0 0.0
    %1193 = vmatpush1.msra.mxu0 0.0
    %1194 = vmatprep.subr.mxu0 0.0
    %1195 = vmatpush1.msra.mxu0 0.0
    %1196 = vmatprep.subr.mxu0 0.0
    %1197 = vmatpush1.msra.mxu0 0.0
    %1198 = vmatprep.subr.mxu0 0.0
    %1199 = vmatpush1.msra.mxu0 0.0
    %1200 = vmatprep.subr.mxu0 0.0
    %1201 = vmatpush1.msra.mxu0 0.0
    %1202 = vmatprep.subr.mxu0 0.0
    %1203 = vmatpush1.msra.mxu0 0.0
    %1204 = vmatprep.subr.mxu0 0.0
    %1205 = vmatpush1.msra.mxu0 0.0
    %1206 = vmatprep.subr.mxu0 0.0
    %1207 = vmatpush1.msra.mxu0 0.0
    %1208 = vmatprep.subr.mxu0 0.0
    %1209 = vmatpush1.msra.mxu0 0.0
    %1210 = vmatprep.subr.mxu0 0.0
    %1211 = vmatpush1.msra.mxu0 0.0
    %1212 = vmatprep.subr.mxu0 0.0
    %1213 = vmatpush1.msra.mxu0 0.0
    %1214 = vmatprep.subr.mxu0 0.0
    %1215 = vmatpush1.msra.mxu0 0.0
    %1216 = vmatprep.subr.mxu0 0.0
    %1217 = vmatpush1.msra.mxu0 0.0
    %1218 = vmatprep.subr.mxu0 0.0
    %1219 = vmatpush1.msra.mxu0 0.0
    %1220 = vmatprep.subr.mxu0 0.0
    %1221 = vmatpush1.msra.mxu0 0.0
    %1222 = vmatprep.subr.mxu0 0.0
    %1223 = vmatpush1.msra.mxu0 0.0
    %1224 = vmatprep.subr.mxu0 0.0
    %1225 = vmatpush1.msra.mxu0 0.0
    %1226 = vmatprep.subr.mxu0 0.0
    %1227 = vmatpush1.msra.mxu0 0.0
    %1228 = vmatprep.subr.mxu0 0.0
    %1229 = vmatpush1.msra.mxu0 0.0
    %1230 = vmatprep.mubr.f32.mxu0 0.0
    %1231 = vmatmul.mubr.f32.gmra.mrb[0].mxu0 %v1164
    %v1232 = vpop.f32.mrb[0].mxu0
    %v1233 = vadd.f32 0.0, %v1232
    %v1234 = vpop.f32.mrb[0].mxu0
    %1235 = vdwg.mxu0
    %v1237 = vrot.slane %v1233, 5
    %v1238 = vrot.slane %v1233, 6
    %v1241 = vadd.f32 %v279, %v1237
    %v1242 = vadd.f32 %v284, %v1238
    %v1243 = vxor.u32 %v1241, 2147483648
    %v1244 = vxor.u32 %v1242, 2147483648
    %v1245 = vmul.f32 %v1243, 1.442695
    %v1246 = vpow.pop %v1245
    %v1247 = vmul.f32 %v1244, 1.442695
    %v1248 = vpow.pop %v1247
    %v1249 = vadd.f32 %v1246, 1.0
    %v1250 = vadd.f32 %v1248, 1.0
    %v1251 = vrcp.pop %v1249
    %v1252 = vmul.f32 1.0, %v1251
    %v1253 = vrcp.pop %v1250
    %v1254 = vmul.f32 1.0, %v1253
    %v1255 = vtanh.pop %v1241
    %v1256 = vtanh.pop %v1242
    %v1259 = vrot.slane %v994, 7
    %v1260 = vrot.slane %v995, 7
    %v1263 = vmul.f32 %v1252, %v1259
    %v1264 = vmul.f32 %v1254, %v1260
    %1267 = vrot.lane.b32.xlu0 %v1255, 64
    %v1268 = vpop.permute.xlu0 %1267
    %1269 = vrot.lane.b32.xlu0 %v1256, 64
    %v1270 = vpop.permute.xlu0 %1269
    %v1273 = vmul.f32 %v1252, %v1268
    %v1274 = vmul.f32 %v1254, %v1270
    %1277 = vrot.lane.b32.xlu0 %v1273, 32
    %v1278 = vpop.permute.xlu0 %1277
    %1279 = vrot.lane.b32.xlu0 %v1274, 32
    %v1280 = vpop.permute.xlu0 %1279
    %v1283 = vadd.f32 %v1263, %v1278
    %v1284 = vadd.f32 %v1264, %v1280
    %v1285 = vtanh.pop %v1283
    %v1286 = vtanh.pop %v1284
    %1289 = vrot.lane.b32.xlu0 %v1285, 64
    %v1290 = vpop.permute.xlu0 %1289
    %1291 = vrot.lane.b32.xlu0 %v1286, 64
    %v1292 = vpop.permute.xlu0 %1291
    %v1295 = vmul.f32 %v1252, %v1290
    %v1296 = vmul.f32 %v1254, %v1292
    %v1299 = vrot.slane %v1296, 7
    %vm1300 = vcmask 1044484
    %v1301 = vsel %vm1300, %v1299, %v1295
    %1302 = vrot.lane.b32.xlu0 %v1301, 32
    %v1303 = vpop.permute.xlu0 %1302
    %vm1305 = vcmask 258051
    %1306 = vst.msk [vmem:[#allocation4 - $0x3] sm:$0x18] %vm1305, %v1303
    %1307 = vrot.lane.b32.xlu0 %v1119, 64
    %v1308 = vpop.permute.xlu0 %1307
    %1310 = vst.msk [vmem:[#allocation4] sm:$0x3] %vm441, %v1308
    %v1311 = vld [vmem:[#allocation4] sm:$0x3]
    %v1313 = vsel %vm450, %v1311, 0
    %1315 = vmatprep.subr.mxu0 0.0
    %1316 = vmatpush1.msra.mxu0 %v291
    %1317 = vmatprep.subr.mxu0 0.0
    %1318 = vmatpush1.msra.mxu0 %v292
    %1319 = vmatprep.subr.mxu0 0.0
    %1320 = vmatpush1.msra.mxu0 %v293
    %1321 = vmatprep.subr.mxu0 0.0
    %1322 = vmatpush1.msra.mxu0 %v294
    %1323 = vmatprep.subr.mxu0 0.0
    %1324 = vmatpush1.msra.mxu0 %v295
    %1325 = vmatprep.subr.mxu0 0.0
    %1326 = vmatpush1.msra.mxu0 %v296
    %1327 = vmatprep.subr.mxu0 0.0
    %1328 = vmatpush1.msra.mxu0 %v297
    %1329 = vmatprep.subr.mxu0 0.0
    %1330 = vmatpush1.msra.mxu0 %v298
    %1331 = vmatprep.subr.mxu0 0.0
    %1332 = vmatpush1.msra.mxu0 0.0
    %1333 = vmatprep.subr.mxu0 0.0
    %1334 = vmatpush1.msra.mxu0 0.0
    %1335 = vmatprep.subr.mxu0 0.0
    %1336 = vmatpush1.msra.mxu0 0.0
    %1337 = vmatprep.subr.mxu0 0.0
    %1338 = vmatpush1.msra.mxu0 0.0
    %1339 = vmatprep.subr.mxu0 0.0
    %1340 = vmatpush1.msra.mxu0 0.0
    %1341 = vmatprep.subr.mxu0 0.0
    %1342 = vmatpush1.msra.mxu0 0.0
    %1343 = vmatprep.subr.mxu0 0.0
    %1344 = vmatpush1.msra.mxu0 0.0
    %1345 = vmatprep.subr.mxu0 0.0
    %1346 = vmatpush1.msra.mxu0 0.0
    %1347 = vmatprep.subr.mxu0 0.0
    %1348 = vmatpush1.msra.mxu0 0.0
    %1349 = vmatprep.subr.mxu0 0.0
    %1350 = vmatpush1.msra.mxu0 0.0
    %1351 = vmatprep.subr.mxu0 0.0
    %1352 = vmatpush1.msra.mxu0 0.0
    %1353 = vmatprep.subr.mxu0 0.0
    %1354 = vmatpush1.msra.mxu0 0.0
    %1355 = vmatprep.subr.mxu0 0.0
    %1356 = vmatpush1.msra.mxu0 0.0
    %1357 = vmatprep.subr.mxu0 0.0
    %1358 = vmatpush1.msra.mxu0 0.0
    %1359 = vmatprep.subr.mxu0 0.0
    %1360 = vmatpush1.msra.mxu0 0.0
    %1361 = vmatprep.subr.mxu0 0.0
    %1362 = vmatpush1.msra.mxu0 0.0
    %1363 = vmatprep.subr.mxu0 0.0
    %1364 = vmatpush1.msra.mxu0 0.0
    %1365 = vmatprep.subr.mxu0 0.0
    %1366 = vmatpush1.msra.mxu0 0.0
    %1367 = vmatprep.subr.mxu0 0.0
    %1368 = vmatpush1.msra.mxu0 0.0
    %1369 = vmatprep.subr.mxu0 0.0
    %1370 = vmatpush1.msra.mxu0 0.0
    %1371 = vmatprep.subr.mxu0 0.0
    %1372 = vmatpush1.msra.mxu0 0.0
    %1373 = vmatprep.subr.mxu0 0.0
    %1374 = vmatpush1.msra.mxu0 0.0
    %1375 = vmatprep.subr.mxu0 0.0
    %1376 = vmatpush1.msra.mxu0 0.0
    %1377 = vmatprep.subr.mxu0 0.0
    %1378 = vmatpush1.msra.mxu0 0.0
    %1379 = vmatprep.mubr.f32.mxu0 0.0
    %1380 = vmatmul.mubr.f32.gmra.mrb[0].mxu0 %v1313
    %v1381 = vpop.f32.mrb[0].mxu0
    %v1382 = vadd.f32 %v448, %v1381
    %v1383 = vpop.f32.mrb[0].mxu0
    %1384 = vdwg.mxu0
    %v1385 = vxor.u32 %v1382, 2147483648
    %v1386 = vmul.f32 %v1385, 1.442695
    %v1387 = vpow.pop %v1386
    %v1388 = vadd.f32 %v1387, 1.0
    %v1389 = vrcp.pop %v1388
    %v1390 = vmul.f32 1.0, %v1389
    %v1391 = vtanh.pop %v1382
    %v1392 = vmul.f32 %v1390, %v1113
    %1394 = vrot.lane.b32.xlu0 %v1391, 64
    %v1395 = vpop.permute.xlu0 %1394
    %v1397 = vmul.f32 %v1390, %v1395
    %1399 = vrot.lane.b32.xlu0 %v1397, 32
    %v1400 = vpop.permute.xlu0 %1399
    %v1402 = vadd.f32 %v1392, %v1400
    %v1403 = vtanh.pop %v1402
    %1405 = vrot.lane.b32.xlu0 %v1403, 64
    %v1406 = vpop.permute.xlu0 %1405
    %v1408 = vmul.f32 %v1390, %v1406
    %v1411 = vunpack.c.l.s4 1966171168
    %v1412 = vunpack.c.0.s8 %v1411
    %v1413 = vlaneseq
    %v1414 = vshrl.u32 %v1413, 7
    %v1415 = vsub.s32 %v1412, %v1414
    %v1416 = vrot.slane %v1408, %v1415
    %v1417 = vcombine.high %v1416, %v1416
    %v1419 = vunpack.c.l.s4 1966171168
    %v1420 = vunpack.c.0.s8 %v1419
    %v1421 = vlaneseq
    %v1422 = vshrl.u32 %v1421, 7
    %v1423 = vsub.s32 %v1420, %v1422
    %v1424 = vrot.slane %v1416, %v1423
    %v1426 = vunpack.c.l.s4 1966171168
    %v1427 = vunpack.c.0.s8 %v1426
    %v1428 = vlaneseq
    %v1429 = vshrl.u32 %v1428, 7
    %v1430 = vsub.s32 %v1427, %v1429
    %v1431 = vrot.slane %v1417, %v1430
    %v1432 = vlaneseq
    %v1433 = vshrl.u32 %v1432, 7
    %v1434 = vsub.s32 0, %v1433
    %v1435 = vrot.slane %v1424, %v1434
    %v1436 = vlaneseq
    %v1437 = vshrl.u32 %v1436, 7
    %v1438 = vsub.s32 0, %v1437
    %v1439 = vrot.slane %v1431, %v1438
    %1440 = vrot.lane.b32.xlu0 %v1435, 32
    %v1441 = vpop.permute.xlu0 %1440
    %1442 = vrot.lane.b32.xlu0 %v1439, 32
    %v1443 = vpop.permute.xlu0 %1442
    %1446 = vst.msk [vmem:[#allocation2 + $0x3] sm:$0x1] %vm585, %v1441
    %1447 = vst.msk [vmem:[#allocation2 + $0xb] sm:$0x1] %vm585, %v1443
    %v1448 = vrot.slane %v1295, 3
    %v1449 = vrot.slane %v1296, 2
    %v1450 = vsel %vm431, %v1449, %v1448
    %1451 = vrot.lane.b32.xlu0 %v1450, 32
    %v1452 = vpop.permute.xlu0 %1451
    %v1453 = vsel %vm300, %v1452, 0
    %1455 = vmatprep.subr.mxu0 0.0
    %1456 = vmatpush1.msra.mxu0 %v287
    %1457 = vmatprep.subr.mxu0 0.0
    %1458 = vmatpush1.msra.mxu0 %v288
    %1459 = vmatprep.subr.mxu0 0.0
    %1460 = vmatpush1.msra.mxu0 %v289
    %1461 = vmatprep.subr.mxu0 0.0
    %1462 = vmatpush1.msra.mxu0 %v290
    %1463 = vmatprep.subr.mxu0 0.0
    %1464 = vmatpush1.msra.mxu0 0.0
    %1465 = vmatprep.subr.mxu0 0.0
    %1466 = vmatpush1.msra.mxu0 0.0
    %1467 = vmatprep.subr.mxu0 0.0
    %1468 = vmatpush1.msra.mxu0 0.0
    %1469 = vmatprep.subr.mxu0 0.0
    %1470 = vmatpush1.msra.mxu0 0.0
    %1471 = vmatprep.subr.mxu0 0.0
    %1472 = vmatpush1.msra.mxu0 0.0
    %1473 = vmatprep.subr.mxu0 0.0
    %1474 = vmatpush1.msra.mxu0 0.0
    %1475 = vmatprep.subr.mxu0 0.0
    %1476 = vmatpush1.msra.mxu0 0.0
    %1477 = vmatprep.subr.mxu0 0.0
    %1478 = vmatpush1.msra.mxu0 0.0
    %1479 = vmatprep.subr.mxu0 0.0
    %1480 = vmatpush1.msra.mxu0 0.0
    %1481 = vmatprep.subr.mxu0 0.0
    %1482 = vmatpush1.msra.mxu0 0.0
    %1483 = vmatprep.subr.mxu0 0.0
    %1484 = vmatpush1.msra.mxu0 0.0
    %1485 = vmatprep.subr.mxu0 0.0
    %1486 = vmatpush1.msra.mxu0 0.0
    %1487 = vmatprep.subr.mxu0 0.0
    %1488 = vmatpush1.msra.mxu0 0.0
    %1489 = vmatprep.subr.mxu0 0.0
    %1490 = vmatpush1.msra.mxu0 0.0
    %1491 = vmatprep.subr.mxu0 0.0
    %1492 = vmatpush1.msra.mxu0 0.0
    %1493 = vmatprep.subr.mxu0 0.0
    %1494 = vmatpush1.msra.mxu0 0.0
    %1495 = vmatprep.subr.mxu0 0.0
    %1496 = vmatpush1.msra.mxu0 0.0
    %1497 = vmatprep.subr.mxu0 0.0
    %1498 = vmatpush1.msra.mxu0 0.0
    %1499 = vmatprep.subr.mxu0 0.0
    %1500 = vmatpush1.msra.mxu0 0.0
    %1501 = vmatprep.subr.mxu0 0.0
    %1502 = vmatpush1.msra.mxu0 0.0
    %1503 = vmatprep.subr.mxu0 0.0
    %1504 = vmatpush1.msra.mxu0 0.0
    %1505 = vmatprep.subr.mxu0 0.0
    %1506 = vmatpush1.msra.mxu0 0.0
    %1507 = vmatprep.subr.mxu0 0.0
    %1508 = vmatpush1.msra.mxu0 0.0
    %1509 = vmatprep.subr.mxu0 0.0
    %1510 = vmatpush1.msra.mxu0 0.0
    %1511 = vmatprep.subr.mxu0 0.0
    %1512 = vmatpush1.msra.mxu0 0.0
    %1513 = vmatprep.subr.mxu0 0.0
    %1514 = vmatpush1.msra.mxu0 0.0
    %1515 = vmatprep.subr.mxu0 0.0
    %1516 = vmatpush1.msra.mxu0 0.0
    %1517 = vmatprep.subr.mxu0 0.0
    %1518 = vmatpush1.msra.mxu0 0.0
    %1519 = vmatprep.mubr.f32.mxu0 0.0
    %1520 = vmatmul.mubr.f32.gmra.mrb[0].mxu0 %v1453
    %v1521 = vpop.f32.mrb[0].mxu0
    %v1522 = vadd.f32 0.0, %v1521
    %v1523 = vpop.f32.mrb[0].mxu0
    %1524 = vdwg.mxu0
    %v1526 = vrot.slane %v1522, 4
    %v1527 = vrot.slane %v1522, 5
    %v1530 = vadd.f32 %v279, %v1526
    %v1531 = vadd.f32 %v284, %v1527
    %v1532 = vxor.u32 %v1530, 2147483648
    %v1533 = vxor.u32 %v1531, 2147483648
    %v1534 = vmul.f32 %v1532, 1.442695
    %v1535 = vpow.pop %v1534
    %v1536 = vmul.f32 %v1533, 1.442695
    %v1537 = vpow.pop %v1536
    %v1538 = vadd.f32 %v1535, 1.0
    %v1539 = vadd.f32 %v1537, 1.0
    %v1540 = vrcp.pop %v1538
    %v1541 = vmul.f32 1.0, %v1540
    %v1542 = vrcp.pop %v1539
    %v1543 = vmul.f32 1.0, %v1542
    %v1544 = vtanh.pop %v1530
    %v1545 = vtanh.pop %v1531
    %v1548 = vrot.slane %v1283, 7
    %v1549 = vrot.slane %v1284, 7
    %v1552 = vmul.f32 %v1541, %v1548
    %v1553 = vmul.f32 %v1543, %v1549
    %1556 = vrot.lane.b32.xlu0 %v1544, 64
    %v1557 = vpop.permute.xlu0 %1556
    %1558 = vrot.lane.b32.xlu0 %v1545, 64
    %v1559 = vpop.permute.xlu0 %1558
    %v1562 = vmul.f32 %v1541, %v1557
    %v1563 = vmul.f32 %v1543, %v1559
    %1566 = vrot.lane.b32.xlu0 %v1562, 32
    %v1567 = vpop.permute.xlu0 %1566
    %1568 = vrot.lane.b32.xlu0 %v1563, 32
    %v1569 = vpop.permute.xlu0 %1568
    %v1572 = vadd.f32 %v1552, %v1567
    %v1573 = vadd.f32 %v1553, %v1569
    %v1574 = vtanh.pop %v1572
    %v1575 = vtanh.pop %v1573
    %1578 = vrot.lane.b32.xlu0 %v1574, 64
    %v1579 = vpop.permute.xlu0 %1578
    %1580 = vrot.lane.b32.xlu0 %v1575, 64
    %v1581 = vpop.permute.xlu0 %1580
    %v1584 = vmul.f32 %v1541, %v1579
    %v1585 = vmul.f32 %v1543, %v1581
    %v1588 = vrot.slane %v1585, 7
    %vm1589 = vcmask 1045509
    %v1590 = vsel %vm1589, %v1588, %v1584
    %1591 = vrot.lane.b32.xlu0 %v1590, 32
    %v1592 = vpop.permute.xlu0 %1591
    %vm1594 = vcmask 259076
    %1595 = vst.msk [vmem:[#allocation4 - $0x4] sm:$0x30] %vm1594, %v1592
    %1596 = vrot.lane.b32.xlu0 %v1408, 64
    %v1597 = vpop.permute.xlu0 %1596
    %1599 = vst.msk [vmem:[#allocation4] sm:$0x3] %vm441, %v1597
    %v1600 = vld [vmem:[#allocation4] sm:$0x3]
    %v1602 = vsel %vm450, %v1600, 0
    %1604 = vmatprep.subr.mxu0 0.0
    %1605 = vmatpush1.msra.mxu0 %v291
    %1606 = vmatprep.subr.mxu0 0.0
    %1607 = vmatpush1.msra.mxu0 %v292
    %1608 = vmatprep.subr.mxu0 0.0
    %1609 = vmatpush1.msra.mxu0 %v293
    %1610 = vmatprep.subr.mxu0 0.0
    %1611 = vmatpush1.msra.mxu0 %v294
    %1612 = vmatprep.subr.mxu0 0.0
    %1613 = vmatpush1.msra.mxu0 %v295
    %1614 = vmatprep.subr.mxu0 0.0
    %1615 = vmatpush1.msra.mxu0 %v296
    %1616 = vmatprep.subr.mxu0 0.0
    %1617 = vmatpush1.msra.mxu0 %v297
    %1618 = vmatprep.subr.mxu0 0.0
    %1619 = vmatpush1.msra.mxu0 %v298
    %1620 = vmatprep.subr.mxu0 0.0
    %1621 = vmatpush1.msra.mxu0 0.0
    %1622 = vmatprep.subr.mxu0 0.0
    %1623 = vmatpush1.msra.mxu0 0.0
    %1624 = vmatprep.subr.mxu0 0.0
    %1625 = vmatpush1.msra.mxu0 0.0
    %1626 = vmatprep.subr.mxu0 0.0
    %1627 = vmatpush1.msra.mxu0 0.0
    %1628 = vmatprep.subr.mxu0 0.0
    %1629 = vmatpush1.msra.mxu0 0.0
    %1630 = vmatprep.subr.mxu0 0.0
    %1631 = vmatpush1.msra.mxu0 0.0
    %1632 = vmatprep.subr.mxu0 0.0
    %1633 = vmatpush1.msra.mxu0 0.0
    %1634 = vmatprep.subr.mxu0 0.0
    %1635 = vmatpush1.msra.mxu0 0.0
    %1636 = vmatprep.subr.mxu0 0.0
    %1637 = vmatpush1.msra.mxu0 0.0
    %1638 = vmatprep.subr.mxu0 0.0
    %1639 = vmatpush1.msra.mxu0 0.0
    %1640 = vmatprep.subr.mxu0 0.0
    %1641 = vmatpush1.msra.mxu0 0.0
    %1642 = vmatprep.subr.mxu0 0.0
    %1643 = vmatpush1.msra.mxu0 0.0
    %1644 = vmatprep.subr.mxu0 0.0
    %1645 = vmatpush1.msra.mxu0 0.0
    %1646 = vmatprep.subr.mxu0 0.0
    %1647 = vmatpush1.msra.mxu0 0.0
    %1648 = vmatprep.subr.mxu0 0.0
    %1649 = vmatpush1.msra.mxu0 0.0
    %1650 = vmatprep.subr.mxu0 0.0
    %1651 = vmatpush1.msra.mxu0 0.0
    %1652 = vmatprep.subr.mxu0 0.0
    %1653 = vmatpush1.msra.mxu0 0.0
    %1654 = vmatprep.subr.mxu0 0.0
    %1655 = vmatpush1.msra.mxu0 0.0
    %1656 = vmatprep.subr.mxu0 0.0
    %1657 = vmatpush1.msra.mxu0 0.0
    %1658 = vmatprep.subr.mxu0 0.0
    %1659 = vmatpush1.msra.mxu0 0.0
    %1660 = vmatprep.subr.mxu0 0.0
    %1661 = vmatpush1.msra.mxu0 0.0
    %1662 = vmatprep.subr.mxu0 0.0
    %1663 = vmatpush1.msra.mxu0 0.0
    %1664 = vmatprep.subr.mxu0 0.0
    %1665 = vmatpush1.msra.mxu0 0.0
    %1666 = vmatprep.subr.mxu0 0.0
    %1667 = vmatpush1.msra.mxu0 0.0
    %1668 = vmatprep.mubr.f32.mxu0 0.0
    %1669 = vmatmul.mubr.f32.gmra.mrb[0].mxu0 %v1602
    %v1670 = vpop.f32.mrb[0].mxu0
    %v1671 = vadd.f32 %v448, %v1670
    %v1672 = vpop.f32.mrb[0].mxu0
    %1673 = vdwg.mxu0
    %v1674 = vxor.u32 %v1671, 2147483648
    %v1675 = vmul.f32 %v1674, 1.442695
    %v1676 = vpow.pop %v1675
    %v1677 = vadd.f32 %v1676, 1.0
    %v1678 = vrcp.pop %v1677
    %v1679 = vmul.f32 1.0, %v1678
    %v1680 = vtanh.pop %v1671
    %v1681 = vmul.f32 %v1679, %v1402
    %1683 = vrot.lane.b32.xlu0 %v1680, 64
    %v1684 = vpop.permute.xlu0 %1683
    %v1686 = vmul.f32 %v1679, %v1684
    %1688 = vrot.lane.b32.xlu0 %v1686, 32
    %v1689 = vpop.permute.xlu0 %1688
    %v1691 = vadd.f32 %v1681, %v1689
    %v1692 = vtanh.pop %v1691
    %1694 = vrot.lane.b32.xlu0 %v1692, 64
    %v1695 = vpop.permute.xlu0 %1694
    %v1697 = vmul.f32 %v1679, %v1695
    %v1700 = vunpack.c.l.s4 1966171168
    %v1701 = vunpack.c.0.s8 %v1700
    %v1702 = vlaneseq
    %v1703 = vshrl.u32 %v1702, 7
    %v1704 = vsub.s32 %v1701, %v1703
    %v1705 = vrot.slane %v1697, %v1704
    %v1706 = vcombine.high %v1705, %v1705
    %v1708 = vunpack.c.l.s4 1966171168
    %v1709 = vunpack.c.0.s8 %v1708
    %v1710 = vlaneseq
    %v1711 = vshrl.u32 %v1710, 7
    %v1712 = vsub.s32 %v1709, %v1711
    %v1713 = vrot.slane %v1705, %v1712
    %v1715 = vunpack.c.l.s4 1966171168
    %v1716 = vunpack.c.0.s8 %v1715
    %v1717 = vlaneseq
    %v1718 = vshrl.u32 %v1717, 7
    %v1719 = vsub.s32 %v1716, %v1718
    %v1720 = vrot.slane %v1706, %v1719
    %v1721 = vlaneseq
    %v1722 = vshrl.u32 %v1721, 7
    %v1723 = vsub.s32 0, %v1722
    %v1724 = vrot.slane %v1713, %v1723
    %v1725 = vlaneseq
    %v1726 = vshrl.u32 %v1725, 7
    %v1727 = vsub.s32 0, %v1726
    %v1728 = vrot.slane %v1720, %v1727
    %1729 = vrot.lane.b32.xlu0 %v1724, 32
    %v1730 = vpop.permute.xlu0 %1729
    %1731 = vrot.lane.b32.xlu0 %v1728, 32
    %v1732 = vpop.permute.xlu0 %1731
    %1735 = vst.msk [vmem:[#allocation2 + $0x4] sm:$0x1] %vm585, %v1730
    %1736 = vst.msk [vmem:[#allocation2 + $0xc] sm:$0x1] %vm585, %v1732
    %v1737 = vrot.slane %v1584, 4
    %v1738 = vrot.slane %v1585, 3
    %v1739 = vsel %vm431, %v1738, %v1737
    %1740 = vrot.lane.b32.xlu0 %v1739, 32
    %v1741 = vpop.permute.xlu0 %1740
    %v1742 = vsel %vm300, %v1741, 0
    %1744 = vmatprep.subr.mxu0 0.0
    %1745 = vmatpush1.msra.mxu0 %v287
    %1746 = vmatprep.subr.mxu0 0.0
    %1747 = vmatpush1.msra.mxu0 %v288
    %1748 = vmatprep.subr.mxu0 0.0
    %1749 = vmatpush1.msra.mxu0 %v289
    %1750 = vmatprep.subr.mxu0 0.0
    %1751 = vmatpush1.msra.mxu0 %v290
    %1752 = vmatprep.subr.mxu0 0.0
    %1753 = vmatpush1.msra.mxu0 0.0
    %1754 = vmatprep.subr.mxu0 0.0
    %1755 = vmatpush1.msra.mxu0 0.0
    %1756 = vmatprep.subr.mxu0 0.0
    %1757 = vmatpush1.msra.mxu0 0.0
    %1758 = vmatprep.subr.mxu0 0.0
    %1759 = vmatpush1.msra.mxu0 0.0
    %1760 = vmatprep.subr.mxu0 0.0
    %1761 = vmatpush1.msra.mxu0 0.0
    %1762 = vmatprep.subr.mxu0 0.0
    %1763 = vmatpush1.msra.mxu0 0.0
    %1764 = vmatprep.subr.mxu0 0.0
    %1765 = vmatpush1.msra.mxu0 0.0
    %1766 = vmatprep.subr.mxu0 0.0
    %1767 = vmatpush1.msra.mxu0 0.0
    %1768 = vmatprep.subr.mxu0 0.0
    %1769 = vmatpush1.msra.mxu0 0.0
    %1770 = vmatprep.subr.mxu0 0.0
    %1771 = vmatpush1.msra.mxu0 0.0
    %1772 = vmatprep.subr.mxu0 0.0
    %1773 = vmatpush1.msra.mxu0 0.0
    %1774 = vmatprep.subr.mxu0 0.0
    %1775 = vmatpush1.msra.mxu0 0.0
    %1776 = vmatprep.subr.mxu0 0.0
    %1777 = vmatpush1.msra.mxu0 0.0
    %1778 = vmatprep.subr.mxu0 0.0
    %1779 = vmatpush1.msra.mxu0 0.0
    %1780 = vmatprep.subr.mxu0 0.0
    %1781 = vmatpush1.msra.mxu0 0.0
    %1782 = vmatprep.subr.mxu0 0.0
    %1783 = vmatpush1.msra.mxu0 0.0
    %1784 = vmatprep.subr.mxu0 0.0
    %1785 = vmatpush1.msra.mxu0 0.0
    %1786 = vmatprep.subr.mxu0 0.0
    %1787 = vmatpush1.msra.mxu0 0.0
    %1788 = vmatprep.subr.mxu0 0.0
    %1789 = vmatpush1.msra.mxu0 0.0
    %1790 = vmatprep.subr.mxu0 0.0
    %1791 = vmatpush1.msra.mxu0 0.0
    %1792 = vmatprep.subr.mxu0 0.0
    %1793 = vmatpush1.msra.mxu0 0.0
    %1794 = vmatprep.subr.mxu0 0.0
    %1795 = vmatpush1.msra.mxu0 0.0
    %1796 = vmatprep.subr.mxu0 0.0
    %1797 = vmatpush1.msra.mxu0 0.0
    %1798 = vmatprep.subr.mxu0 0.0
    %1799 = vmatpush1.msra.mxu0 0.0
    %1800 = vmatprep.subr.mxu0 0.0
    %1801 = vmatpush1.msra.mxu0 0.0
    %1802 = vmatprep.subr.mxu0 0.0
    %1803 = vmatpush1.msra.mxu0 0.0
    %1804 = vmatprep.subr.mxu0 0.0
    %1805 = vmatpush1.msra.mxu0 0.0
    %1806 = vmatprep.subr.mxu0 0.0
    %1807 = vmatpush1.msra.mxu0 0.0
    %1808 = vmatprep.mubr.f32.mxu0 0.0
    %1809 = vmatmul.mubr.f32.gmra.mrb[0].mxu0 %v1742
    %v1810 = vpop.f32.mrb[0].mxu0
    %v1811 = vadd.f32 0.0, %v1810
    %v1812 = vpop.f32.mrb[0].mxu0
    %1813 = vdwg.mxu0
    %v1815 = vrot.slane %v1811, 3
    %v1816 = vrot.slane %v1811, 4
    %v1819 = vadd.f32 %v279, %v1815
    %v1820 = vadd.f32 %v284, %v1816
    %v1821 = vxor.u32 %v1819, 2147483648
    %v1822 = vxor.u32 %v1820, 2147483648
    %v1823 = vmul.f32 %v1821, 1.442695
    %v1824 = vpow.pop %v1823
    %v1825 = vmul.f32 %v1822, 1.442695
    %v1826 = vpow.pop %v1825
    %v1827 = vadd.f32 %v1824, 1.0
    %v1828 = vadd.f32 %v1826, 1.0
    %v1829 = vrcp.pop %v1827
    %v1830 = vmul.f32 1.0, %v1829
    %v1831 = vrcp.pop %v1828
    %v1832 = vmul.f32 1.0, %v1831
    %v1833 = vtanh.pop %v1819
    %v1834 = vtanh.pop %v1820
    %v1837 = vrot.slane %v1572, 7
    %v1838 = vrot.slane %v1573, 7
    %v1841 = vmul.f32 %v1830, %v1837
    %v1842 = vmul.f32 %v1832, %v1838
    %1845 = vrot.lane.b32.xlu0 %v1833, 64
    %v1846 = vpop.permute.xlu0 %1845
    %1847 = vrot.lane.b32.xlu0 %v1834, 64
    %v1848 = vpop.permute.xlu0 %1847
    %v1851 = vmul.f32 %v1830, %v1846
    %v1852 = vmul.f32 %v1832, %v1848
    %1855 = vrot.lane.b32.xlu0 %v1851, 32
    %v1856 = vpop.permute.xlu0 %1855
    %1857 = vrot.lane.b32.xlu0 %v1852, 32
    %v1858 = vpop.permute.xlu0 %1857
    %v1861 = vadd.f32 %v1841, %v1856
    %v1862 = vadd.f32 %v1842, %v1858
    %v1863 = vtanh.pop %v1861
    %v1864 = vtanh.pop %v1862
    %1867 = vrot.lane.b32.xlu0 %v1863, 64
    %v1868 = vpop.permute.xlu0 %1867
    %1869 = vrot.lane.b32.xlu0 %v1864, 64
    %v1870 = vpop.permute.xlu0 %1869
    %v1873 = vmul.f32 %v1830, %v1868
    %v1874 = vmul.f32 %v1832, %v1870
    %v1877 = vrot.slane %v1874, 7
    %vm1878 = vcmask 1046534
    %v1879 = vsel %vm1878, %v1877, %v1873
    %1880 = vrot.lane.b32.xlu0 %v1879, 32
    %v1881 = vpop.permute.xlu0 %1880
    %vm1883 = vcmask 260101
    %1884 = vst.msk [vmem:[#allocation4 - $0x5] sm:$0x60] %vm1883, %v1881
    %1885 = vrot.lane.b32.xlu0 %v1697, 64
    %v1886 = vpop.permute.xlu0 %1885
    %1888 = vst.msk [vmem:[#allocation4] sm:$0x3] %vm441, %v1886
    %v1889 = vld [vmem:[#allocation4] sm:$0x3]
    %v1891 = vsel %vm450, %v1889, 0
    %1893 = vmatprep.subr.mxu0 0.0
    %1894 = vmatpush1.msra.mxu0 %v291
    %1895 = vmatprep.subr.mxu0 0.0
    %1896 = vmatpush1.msra.mxu0 %v292
    %1897 = vmatprep.subr.mxu0 0.0
    %1898 = vmatpush1.msra.mxu0 %v293
    %1899 = vmatprep.subr.mxu0 0.0
    %1900 = vmatpush1.msra.mxu0 %v294
    %1901 = vmatprep.subr.mxu0 0.0
    %1902 = vmatpush1.msra.mxu0 %v295
    %1903 = vmatprep.subr.mxu0 0.0
    %1904 = vmatpush1.msra.mxu0 %v296
    %1905 = vmatprep.subr.mxu0 0.0
    %1906 = vmatpush1.msra.mxu0 %v297
    %1907 = vmatprep.subr.mxu0 0.0
    %1908 = vmatpush1.msra.mxu0 %v298
    %1909 = vmatprep.subr.mxu0 0.0
    %1910 = vmatpush1.msra.mxu0 0.0
    %1911 = vmatprep.subr.mxu0 0.0
    %1912 = vmatpush1.msra.mxu0 0.0
    %1913 = vmatprep.subr.mxu0 0.0
    %1914 = vmatpush1.msra.mxu0 0.0
    %1915 = vmatprep.subr.mxu0 0.0
    %1916 = vmatpush1.msra.mxu0 0.0
    %1917 = vmatprep.subr.mxu0 0.0
    %1918 = vmatpush1.msra.mxu0 0.0
    %1919 = vmatprep.subr.mxu0 0.0
    %1920 = vmatpush1.msra.mxu0 0.0
    %1921 = vmatprep.subr.mxu0 0.0
    %1922 = vmatpush1.msra.mxu0 0.0
    %1923 = vmatprep.subr.mxu0 0.0
    %1924 = vmatpush1.msra.mxu0 0.0
    %1925 = vmatprep.subr.mxu0 0.0
    %1926 = vmatpush1.msra.mxu0 0.0
    %1927 = vmatprep.subr.mxu0 0.0
    %1928 = vmatpush1.msra.mxu0 0.0
    %1929 = vmatprep.subr.mxu0 0.0
    %1930 = vmatpush1.msra.mxu0 0.0
    %1931 = vmatprep.subr.mxu0 0.0
    %1932 = vmatpush1.msra.mxu0 0.0
    %1933 = vmatprep.subr.mxu0 0.0
    %1934 = vmatpush1.msra.mxu0 0.0
    %1935 = vmatprep.subr.mxu0 0.0
    %1936 = vmatpush1.msra.mxu0 0.0
    %1937 = vmatprep.subr.mxu0 0.0
    %1938 = vmatpush1.msra.mxu0 0.0
    %1939 = vmatprep.subr.mxu0 0.0
    %1940 = vmatpush1.msra.mxu0 0.0
    %1941 = vmatprep.subr.mxu0 0.0
    %1942 = vmatpush1.msra.mxu0 0.0
    %1943 = vmatprep.subr.mxu0 0.0
    %1944 = vmatpush1.msra.mxu0 0.0
    %1945 = vmatprep.subr.mxu0 0.0
    %1946 = vmatpush1.msra.mxu0 0.0
    %1947 = vmatprep.subr.mxu0 0.0
    %1948 = vmatpush1.msra.mxu0 0.0
    %1949 = vmatprep.subr.mxu0 0.0
    %1950 = vmatpush1.msra.mxu0 0.0
    %1951 = vmatprep.subr.mxu0 0.0
    %1952 = vmatpush1.msra.mxu0 0.0
    %1953 = vmatprep.subr.mxu0 0.0
    %1954 = vmatpush1.msra.mxu0 0.0
    %1955 = vmatprep.subr.mxu0 0.0
    %1956 = vmatpush1.msra.mxu0 0.0
    %1957 = vmatprep.mubr.f32.mxu0 0.0
    %1958 = vmatmul.mubr.f32.gmra.mrb[0].mxu0 %v1891
    %v1959 = vpop.f32.mrb[0].mxu0
    %v1960 = vadd.f32 %v448, %v1959
    %v1961 = vpop.f32.mrb[0].mxu0
    %1962 = vdwg.mxu0
    %v1963 = vxor.u32 %v1960, 2147483648
    %v1964 = vmul.f32 %v1963, 1.442695
    %v1965 = vpow.pop %v1964
    %v1966 = vadd.f32 %v1965, 1.0
    %v1967 = vrcp.pop %v1966
    %v1968 = vmul.f32 1.0, %v1967
    %v1969 = vtanh.pop %v1960
    %v1970 = vmul.f32 %v1968, %v1691
    %1972 = vrot.lane.b32.xlu0 %v1969, 64
    %v1973 = vpop.permute.xlu0 %1972
    %v1975 = vmul.f32 %v1968, %v1973
    %1977 = vrot.lane.b32.xlu0 %v1975, 32
    %v1978 = vpop.permute.xlu0 %1977
    %v1980 = vadd.f32 %v1970, %v1978
    %v1981 = vtanh.pop %v1980
    %1983 = vrot.lane.b32.xlu0 %v1981, 64
    %v1984 = vpop.permute.xlu0 %1983
    %v1986 = vmul.f32 %v1968, %v1984
    %v1989 = vunpack.c.l.s4 1966171168
    %v1990 = vunpack.c.0.s8 %v1989
    %v1991 = vlaneseq
    %v1992 = vshrl.u32 %v1991, 7
    %v1993 = vsub.s32 %v1990, %v1992
    %v1994 = vrot.slane %v1986, %v1993
    %v1995 = vcombine.high %v1994, %v1994
    %v1997 = vunpack.c.l.s4 1966171168
    %v1998 = vunpack.c.0.s8 %v1997
    %v1999 = vlaneseq
    %v2000 = vshrl.u32 %v1999, 7
    %v2001 = vsub.s32 %v1998, %v2000
    %v2002 = vrot.slane %v1994, %v2001
    %v2004 = vunpack.c.l.s4 1966171168
    %v2005 = vunpack.c.0.s8 %v2004
    %v2006 = vlaneseq
    %v2007 = vshrl.u32 %v2006, 7
    %v2008 = vsub.s32 %v2005, %v2007
    %v2009 = vrot.slane %v1995, %v2008
    %v2010 = vlaneseq
    %v2011 = vshrl.u32 %v2010, 7
    %v2012 = vsub.s32 0, %v2011
    %v2013 = vrot.slane %v2002, %v2012
    %v2014 = vlaneseq
    %v2015 = vshrl.u32 %v2014, 7
    %v2016 = vsub.s32 0, %v2015
    %v2017 = vrot.slane %v2009, %v2016
    %2018 = vrot.lane.b32.xlu0 %v2013, 32
    %v2019 = vpop.permute.xlu0 %2018
    %2020 = vrot.lane.b32.xlu0 %v2017, 32
    %v2021 = vpop.permute.xlu0 %2020
    %2024 = vst.msk [vmem:[#allocation2 + $0x5] sm:$0x1] %vm585, %v2019
    %2025 = vst.msk [vmem:[#allocation2 + $0xd] sm:$0x1] %vm585, %v2021
    %v2026 = vrot.slane %v1873, 5
    %v2027 = vrot.slane %v1874, 4
    %v2028 = vsel %vm431, %v2027, %v2026
    %2029 = vrot.lane.b32.xlu0 %v2028, 32
    %v2030 = vpop.permute.xlu0 %2029
    %v2031 = vsel %vm300, %v2030, 0
    %2033 = vmatprep.subr.mxu0 0.0
    %2034 = vmatpush1.msra.mxu0 %v287
    %2035 = vmatprep.subr.mxu0 0.0
    %2036 = vmatpush1.msra.mxu0 %v288
    %2037 = vmatprep.subr.mxu0 0.0
    %2038 = vmatpush1.msra.mxu0 %v289
    %2039 = vmatprep.subr.mxu0 0.0
    %2040 = vmatpush1.msra.mxu0 %v290
    %2041 = vmatprep.subr.mxu0 0.0
    %2042 = vmatpush1.msra.mxu0 0.0
    %2043 = vmatprep.subr.mxu0 0.0
    %2044 = vmatpush1.msra.mxu0 0.0
    %2045 = vmatprep.subr.mxu0 0.0
    %2046 = vmatpush1.msra.mxu0 0.0
    %2047 = vmatprep.subr.mxu0 0.0
    %2048 = vmatpush1.msra.mxu0 0.0
    %2049 = vmatprep.subr.mxu0 0.0
    %2050 = vmatpush1.msra.mxu0 0.0
    %2051 = vmatprep.subr.mxu0 0.0
    %2052 = vmatpush1.msra.mxu0 0.0
    %2053 = vmatprep.subr.mxu0 0.0
    %2054 = vmatpush1.msra.mxu0 0.0
    %2055 = vmatprep.subr.mxu0 0.0
    %2056 = vmatpush1.msra.mxu0 0.0
    %2057 = vmatprep.subr.mxu0 0.0
    %2058 = vmatpush1.msra.mxu0 0.0
    %2059 = vmatprep.subr.mxu0 0.0
    %2060 = vmatpush1.msra.mxu0 0.0
    %2061 = vmatprep.subr.mxu0 0.0
    %2062 = vmatpush1.msra.mxu0 0.0
    %2063 = vmatprep.subr.mxu0 0.0
    %2064 = vmatpush1.msra.mxu0 0.0
    %2065 = vmatprep.subr.mxu0 0.0
    %2066 = vmatpush1.msra.mxu0 0.0
    %2067 = vmatprep.subr.mxu0 0.0
    %2068 = vmatpush1.msra.mxu0 0.0
    %2069 = vmatprep.subr.mxu0 0.0
    %2070 = vmatpush1.msra.mxu0 0.0
    %2071 = vmatprep.subr.mxu0 0.0
    %2072 = vmatpush1.msra.mxu0 0.0
    %2073 = vmatprep.subr.mxu0 0.0
    %2074 = vmatpush1.msra.mxu0 0.0
    %2075 = vmatprep.subr.mxu0 0.0
    %2076 = vmatpush1.msra.mxu0 0.0
    %2077 = vmatprep.subr.mxu0 0.0
    %2078 = vmatpush1.msra.mxu0 0.0
    %2079 = vmatprep.subr.mxu0 0.0
    %2080 = vmatpush1.msra.mxu0 0.0
    %2081 = vmatprep.subr.mxu0 0.0
    %2082 = vmatpush1.msra.mxu0 0.0
    %2083 = vmatprep.subr.mxu0 0.0
    %2084 = vmatpush1.msra.mxu0 0.0
    %2085 = vmatprep.subr.mxu0 0.0
    %2086 = vmatpush1.msra.mxu0 0.0
    %2087 = vmatprep.subr.mxu0 0.0
    %2088 = vmatpush1.msra.mxu0 0.0
    %2089 = vmatprep.subr.mxu0 0.0
    %2090 = vmatpush1.msra.mxu0 0.0
    %2091 = vmatprep.subr.mxu0 0.0
    %2092 = vmatpush1.msra.mxu0 0.0
    %2093 = vmatprep.subr.mxu0 0.0
    %2094 = vmatpush1.msra.mxu0 0.0
    %2095 = vmatprep.subr.mxu0 0.0
    %2096 = vmatpush1.msra.mxu0 0.0
    %2097 = vmatprep.mubr.f32.mxu0 0.0
    %2098 = vmatmul.mubr.f32.gmra.mrb[0].mxu0 %v2031
    %v2099 = vpop.f32.mrb[0].mxu0
    %v2100 = vadd.f32 0.0, %v2099
    %v2101 = vpop.f32.mrb[0].mxu0
    %2102 = vdwg.mxu0
    %v2104 = vrot.slane %v2100, 2
    %v2105 = vrot.slane %v2100, 3
    %v2108 = vadd.f32 %v279, %v2104
    %v2109 = vadd.f32 %v284, %v2105
    %v2110 = vxor.u32 %v2108, 2147483648
    %v2111 = vxor.u32 %v2109, 2147483648
    %v2112 = vmul.f32 %v2110, 1.442695
    %v2113 = vpow.pop %v2112
    %v2114 = vmul.f32 %v2111, 1.442695
    %v2115 = vpow.pop %v2114
    %v2116 = vadd.f32 %v2113, 1.0
    %v2117 = vadd.f32 %v2115, 1.0
    %v2118 = vrcp.pop %v2116
    %v2119 = vmul.f32 1.0, %v2118
    %v2120 = vrcp.pop %v2117
    %v2121 = vmul.f32 1.0, %v2120
    %v2122 = vtanh.pop %v2108
    %v2123 = vtanh.pop %v2109
    %v2126 = vrot.slane %v1861, 7
    %v2127 = vrot.slane %v1862, 7
    %v2130 = vmul.f32 %v2119, %v2126
    %v2131 = vmul.f32 %v2121, %v2127
    %2134 = vrot.lane.b32.xlu0 %v2122, 64
    %v2135 = vpop.permute.xlu0 %2134
    %2136 = vrot.lane.b32.xlu0 %v2123, 64
    %v2137 = vpop.permute.xlu0 %2136
    %v2140 = vmul.f32 %v2119, %v2135
    %v2141 = vmul.f32 %v2121, %v2137
    %2144 = vrot.lane.b32.xlu0 %v2140, 32
    %v2145 = vpop.permute.xlu0 %2144
    %2146 = vrot.lane.b32.xlu0 %v2141, 32
    %v2147 = vpop.permute.xlu0 %2146
    %v2150 = vadd.f32 %v2130, %v2145
    %v2151 = vadd.f32 %v2131, %v2147
    %v2152 = vtanh.pop %v2150
    %v2153 = vtanh.pop %v2151
    %2156 = vrot.lane.b32.xlu0 %v2152, 64
    %v2157 = vpop.permute.xlu0 %2156
    %2158 = vrot.lane.b32.xlu0 %v2153, 64
    %v2159 = vpop.permute.xlu0 %2158
    %v2162 = vmul.f32 %v2119, %v2157
    %v2163 = vmul.f32 %v2121, %v2159
    %v2166 = vrot.slane %v2163, 7
    %vm2167 = vcmask 1047559
    %v2168 = vsel %vm2167, %v2166, %v2162
    %2169 = vrot.lane.b32.xlu0 %v2168, 32
    %v2170 = vpop.permute.xlu0 %2169
    %vm2172 = vcmask 261126
    %2173 = vst.msk [vmem:[#allocation4 - $0x6] sm:$0xc0] %vm2172, %v2170
    %2174 = vrot.lane.b32.xlu0 %v1986, 64
    %v2175 = vpop.permute.xlu0 %2174
    %2177 = vst.msk [vmem:[#allocation4] sm:$0x3] %vm441, %v2175
    %v2178 = vld [vmem:[#allocation4] sm:$0x3]
    %v2180 = vsel %vm450, %v2178, 0
    %2182 = vmatprep.subr.mxu0 0.0
    %2183 = vmatpush1.msra.mxu0 %v291
    %2184 = vmatprep.subr.mxu0 0.0
    %2185 = vmatpush1.msra.mxu0 %v292
    %2186 = vmatprep.subr.mxu0 0.0
    %2187 = vmatpush1.msra.mxu0 %v293
    %2188 = vmatprep.subr.mxu0 0.0
    %2189 = vmatpush1.msra.mxu0 %v294
    %2190 = vmatprep.subr.mxu0 0.0
    %2191 = vmatpush1.msra.mxu0 %v295
    %2192 = vmatprep.subr.mxu0 0.0
    %2193 = vmatpush1.msra.mxu0 %v296
    %2194 = vmatprep.subr.mxu0 0.0
    %2195 = vmatpush1.msra.mxu0 %v297
    %2196 = vmatprep.subr.mxu0 0.0
    %2197 = vmatpush1.msra.mxu0 %v298
    %2198 = vmatprep.subr.mxu0 0.0
    %2199 = vmatpush1.msra.mxu0 0.0
    %2200 = vmatprep.subr.mxu0 0.0
    %2201 = vmatpush1.msra.mxu0 0.0
    %2202 = vmatprep.subr.mxu0 0.0
    %2203 = vmatpush1.msra.mxu0 0.0
    %2204 = vmatprep.subr.mxu0 0.0
    %2205 = vmatpush1.msra.mxu0 0.0
    %2206 = vmatprep.subr.mxu0 0.0
    %2207 = vmatpush1.msra.mxu0 0.0
    %2208 = vmatprep.subr.mxu0 0.0
    %2209 = vmatpush1.msra.mxu0 0.0
    %2210 = vmatprep.subr.mxu0 0.0
    %2211 = vmatpush1.msra.mxu0 0.0
    %2212 = vmatprep.subr.mxu0 0.0
    %2213 = vmatpush1.msra.mxu0 0.0
    %2214 = vmatprep.subr.mxu0 0.0
    %2215 = vmatpush1.msra.mxu0 0.0
    %2216 = vmatprep.subr.mxu0 0.0
    %2217 = vmatpush1.msra.mxu0 0.0
    %2218 = vmatprep.subr.mxu0 0.0
    %2219 = vmatpush1.msra.mxu0 0.0
    %2220 = vmatprep.subr.mxu0 0.0
    %2221 = vmatpush1.msra.mxu0 0.0
    %2222 = vmatprep.subr.mxu0 0.0
    %2223 = vmatpush1.msra.mxu0 0.0
    %2224 = vmatprep.subr.mxu0 0.0
    %2225 = vmatpush1.msra.mxu0 0.0
    %2226 = vmatprep.subr.mxu0 0.0
    %2227 = vmatpush1.msra.mxu0 0.0
    %2228 = vmatprep.subr.mxu0 0.0
    %2229 = vmatpush1.msra.mxu0 0.0
    %2230 = vmatprep.subr.mxu0 0.0
    %2231 = vmatpush1.msra.mxu0 0.0
    %2232 = vmatprep.subr.mxu0 0.0
    %2233 = vmatpush1.msra.mxu0 0.0
    %2234 = vmatprep.subr.mxu0 0.0
    %2235 = vmatpush1.msra.mxu0 0.0
    %2236 = vmatprep.subr.mxu0 0.0
    %2237 = vmatpush1.msra.mxu0 0.0
    %2238 = vmatprep.subr.mxu0 0.0
    %2239 = vmatpush1.msra.mxu0 0.0
    %2240 = vmatprep.subr.mxu0 0.0
    %2241 = vmatpush1.msra.mxu0 0.0
    %2242 = vmatprep.subr.mxu0 0.0
    %2243 = vmatpush1.msra.mxu0 0.0
    %2244 = vmatprep.subr.mxu0 0.0
    %2245 = vmatpush1.msra.mxu0 0.0
    %2246 = vmatprep.mubr.f32.mxu0 0.0
    %2247 = vmatmul.mubr.f32.gmra.mrb[0].mxu0 %v2180
    %v2248 = vpop.f32.mrb[0].mxu0
    %v2249 = vadd.f32 %v448, %v2248
    %v2250 = vpop.f32.mrb[0].mxu0
    %2251 = vdwg.mxu0
    %v2252 = vxor.u32 %v2249, 2147483648
    %v2253 = vmul.f32 %v2252, 1.442695
    %v2254 = vpow.pop %v2253
    %v2255 = vadd.f32 %v2254, 1.0
    %v2256 = vrcp.pop %v2255
    %v2257 = vmul.f32 1.0, %v2256
    %v2258 = vtanh.pop %v2249
    %v2259 = vmul.f32 %v2257, %v1980
    %2261 = vrot.lane.b32.xlu0 %v2258, 64
    %v2262 = vpop.permute.xlu0 %2261
    %v2264 = vmul.f32 %v2257, %v2262
    %2266 = vrot.lane.b32.xlu0 %v2264, 32
    %v2267 = vpop.permute.xlu0 %2266
    %v2269 = vadd.f32 %v2259, %v2267
    %v2270 = vtanh.pop %v2269
    %2272 = vrot.lane.b32.xlu0 %v2270, 64
    %v2273 = vpop.permute.xlu0 %2272
    %v2275 = vmul.f32 %v2257, %v2273
    %v2278 = vunpack.c.l.s4 1966171168
    %v2279 = vunpack.c.0.s8 %v2278
    %v2280 = vlaneseq
    %v2281 = vshrl.u32 %v2280, 7
    %v2282 = vsub.s32 %v2279, %v2281
    %v2283 = vrot.slane %v2275, %v2282
    %v2284 = vcombine.high %v2283, %v2283
    %v2286 = vunpack.c.l.s4 1966171168
    %v2287 = vunpack.c.0.s8 %v2286
    %v2288 = vlaneseq
    %v2289 = vshrl.u32 %v2288, 7
    %v2290 = vsub.s32 %v2287, %v2289
    %v2291 = vrot.slane %v2283, %v2290
    %v2293 = vunpack.c.l.s4 1966171168
    %v2294 = vunpack.c.0.s8 %v2293
    %v2295 = vlaneseq
    %v2296 = vshrl.u32 %v2295, 7
    %v2297 = vsub.s32 %v2294, %v2296
    %v2298 = vrot.slane %v2284, %v2297
    %v2299 = vlaneseq
    %v2300 = vshrl.u32 %v2299, 7
    %v2301 = vsub.s32 0, %v2300
    %v2302 = vrot.slane %v2291, %v2301
    %v2303 = vlaneseq
    %v2304 = vshrl.u32 %v2303, 7
    %v2305 = vsub.s32 0, %v2304
    %v2306 = vrot.slane %v2298, %v2305
    %2307 = vrot.lane.b32.xlu0 %v2302, 32
    %v2308 = vpop.permute.xlu0 %2307
    %2309 = vrot.lane.b32.xlu0 %v2306, 32
    %v2310 = vpop.permute.xlu0 %2309
    %2313 = vst.msk [vmem:[#allocation2 + $0x6] sm:$0x1] %vm585, %v2308
    %2314 = vst.msk [vmem:[#allocation2 + $0xe] sm:$0x1] %vm585, %v2310
    %v2315 = vrot.slane %v2162, 6
    %v2316 = vrot.slane %v2163, 5
    %v2317 = vsel %vm431, %v2316, %v2315
    %2318 = vrot.lane.b32.xlu0 %v2317, 32
    %v2319 = vpop.permute.xlu0 %2318
    %v2320 = vsel %vm300, %v2319, 0
    %2322 = vmatprep.subr.mxu0 0.0
    %2323 = vmatpush1.msra.mxu0 %v287
    %2324 = vmatprep.subr.mxu0 0.0
    %2325 = vmatpush1.msra.mxu0 %v288
    %2326 = vmatprep.subr.mxu0 0.0
    %2327 = vmatpush1.msra.mxu0 %v289
    %2328 = vmatprep.subr.mxu0 0.0
    %2329 = vmatpush1.msra.mxu0 %v290
    %2330 = vmatprep.subr.mxu0 0.0
    %2331 = vmatpush1.msra.mxu0 0.0
    %2332 = vmatprep.subr.mxu0 0.0
    %2333 = vmatpush1.msra.mxu0 0.0
    %2334 = vmatprep.subr.mxu0 0.0
    %2335 = vmatpush1.msra.mxu0 0.0
    %2336 = vmatprep.subr.mxu0 0.0
    %2337 = vmatpush1.msra.mxu0 0.0
    %2338 = vmatprep.subr.mxu0 0.0
    %2339 = vmatpush1.msra.mxu0 0.0
    %2340 = vmatprep.subr.mxu0 0.0
    %2341 = vmatpush1.msra.mxu0 0.0
    %2342 = vmatprep.subr.mxu0 0.0
    %2343 = vmatpush1.msra.mxu0 0.0
    %2344 = vmatprep.subr.mxu0 0.0
    %2345 = vmatpush1.msra.mxu0 0.0
    %2346 = vmatprep.subr.mxu0 0.0
    %2347 = vmatpush1.msra.mxu0 0.0
    %2348 = vmatprep.subr.mxu0 0.0
    %2349 = vmatpush1.msra.mxu0 0.0
    %2350 = vmatprep.subr.mxu0 0.0
    %2351 = vmatpush1.msra.mxu0 0.0
    %2352 = vmatprep.subr.mxu0 0.0
    %2353 = vmatpush1.msra.mxu0 0.0
    %2354 = vmatprep.subr.mxu0 0.0
    %2355 = vmatpush1.msra.mxu0 0.0
    %2356 = vmatprep.subr.mxu0 0.0
    %2357 = vmatpush1.msra.mxu0 0.0
    %2358 = vmatprep.subr.mxu0 0.0
    %2359 = vmatpush1.msra.mxu0 0.0
    %2360 = vmatprep.subr.mxu0 0.0
    %2361 = vmatpush1.msra.mxu0 0.0
    %2362 = vmatprep.subr.mxu0 0.0
    %2363 = vmatpush1.msra.mxu0 0.0
    %2364 = vmatprep.subr.mxu0 0.0
    %2365 = vmatpush1.msra.mxu0 0.0
    %2366 = vmatprep.subr.mxu0 0.0
    %2367 = vmatpush1.msra.mxu0 0.0
    %2368 = vmatprep.subr.mxu0 0.0
    %2369 = vmatpush1.msra.mxu0 0.0
    %2370 = vmatprep.subr.mxu0 0.0
    %2371 = vmatpush1.msra.mxu0 0.0
    %2372 = vmatprep.subr.mxu0 0.0
    %2373 = vmatpush1.msra.mxu0 0.0
    %2374 = vmatprep.subr.mxu0 0.0
    %2375 = vmatpush1.msra.mxu0 0.0
    %2376 = vmatprep.subr.mxu0 0.0
    %2377 = vmatpush1.msra.mxu0 0.0
    %2378 = vmatprep.subr.mxu0 0.0
    %2379 = vmatpush1.msra.mxu0 0.0
    %2380 = vmatprep.subr.mxu0 0.0
    %2381 = vmatpush1.msra.mxu0 0.0
    %2382 = vmatprep.subr.mxu0 0.0
    %2383 = vmatpush1.msra.mxu0 0.0
    %2384 = vmatprep.subr.mxu0 0.0
    %2385 = vmatpush1.msra.mxu0 0.0
    %2386 = vmatprep.mubr.f32.mxu0 0.0
    %2387 = vmatmul.mubr.f32.gmra.mrb[0].mxu0 %v2320
    %v2388 = vpop.f32.mrb[0].mxu0
    %v2389 = vadd.f32 0.0, %v2388
    %v2390 = vpop.f32.mrb[0].mxu0
    %2391 = vdwg.mxu0
    %v2393 = vrot.slane %v2389, 1
    %v2394 = vrot.slane %v2389, 2
    %v2397 = vadd.f32 %v279, %v2393
    %v2398 = vadd.f32 %v284, %v2394
    %v2399 = vxor.u32 %v2397, 2147483648
    %v2400 = vxor.u32 %v2398, 2147483648
    %v2401 = vmul.f32 %v2399, 1.442695
    %v2402 = vpow.pop %v2401
    %v2403 = vmul.f32 %v2400, 1.442695
    %v2404 = vpow.pop %v2403
    %v2405 = vadd.f32 %v2402, 1.0
    %v2406 = vadd.f32 %v2404, 1.0
    %v2407 = vrcp.pop %v2405
    %v2408 = vmul.f32 1.0, %v2407
    %v2409 = vrcp.pop %v2406
    %v2410 = vmul.f32 1.0, %v2409
    %v2411 = vtanh.pop %v2397
    %v2412 = vtanh.pop %v2398
    %v2415 = vrot.slane %v2150, 7
    %v2416 = vrot.slane %v2151, 7
    %v2419 = vmul.f32 %v2408, %v2415
    %v2420 = vmul.f32 %v2410, %v2416
    %2423 = vrot.lane.b32.xlu0 %v2411, 64
    %v2424 = vpop.permute.xlu0 %2423
    %2425 = vrot.lane.b32.xlu0 %v2412, 64
    %v2426 = vpop.permute.xlu0 %2425
    %v2429 = vmul.f32 %v2408, %v2424
    %v2430 = vmul.f32 %v2410, %v2426
    %2433 = vrot.lane.b32.xlu0 %v2429, 32
    %v2434 = vpop.permute.xlu0 %2433
    %2435 = vrot.lane.b32.xlu0 %v2430, 32
    %v2436 = vpop.permute.xlu0 %2435
    %v2439 = vadd.f32 %v2419, %v2434
    %v2440 = vadd.f32 %v2420, %v2436
    %v2441 = vtanh.pop %v2439
    %v2442 = vtanh.pop %v2440
    %2445 = vrot.lane.b32.xlu0 %v2441, 64
    %v2446 = vpop.permute.xlu0 %2445
    %2447 = vrot.lane.b32.xlu0 %v2442, 64
    %v2448 = vpop.permute.xlu0 %2447
    %v2451 = vmul.f32 %v2408, %v2446
    %v2452 = vmul.f32 %v2410, %v2448
    %v2455 = vrot.slane %v2452, 7
    %2456 = vrot.lane.b32.xlu0 %v2451, 32
    %v2457 = vpop.permute.xlu0 %2456
    %2458 = vrot.lane.b32.xlu0 %v2455, 32
    %v2459 = vpop.permute.xlu0 %2458
    %vm2462 = vcmask 261127
    %2463 = vst.msk [vmem:[#allocation4 - $0x7] sm:$0x80] %vm2462, %v2457
    %2464 = vst.msk [vmem:[#allocation4 + $0x1] sm:$0x1] %vm585, %v2459
    %2465 = vrot.lane.b32.xlu0 %v2275, 64
    %v2466 = vpop.permute.xlu0 %2465
    %2468 = vst.msk [vmem:[#allocation4] sm:$0x3] %vm441, %v2466
    %v2469 = vld [vmem:[#allocation4] sm:$0x3]
    %v2471 = vsel %vm450, %v2469, 0
    %2473 = vmatprep.subr.mxu0 0.0
    %2474 = vmatpush1.msra.mxu0 %v291
    %2475 = vmatprep.subr.mxu0 0.0
    %2476 = vmatpush1.msra.mxu0 %v292
    %2477 = vmatprep.subr.mxu0 0.0
    %2478 = vmatpush1.msra.mxu0 %v293
    %2479 = vmatprep.subr.mxu0 0.0
    %2480 = vmatpush1.msra.mxu0 %v294
    %2481 = vmatprep.subr.mxu0 0.0
    %2482 = vmatpush1.msra.mxu0 %v295
    %2483 = vmatprep.subr.mxu0 0.0
    %2484 = vmatpush1.msra.mxu0 %v296
    %2485 = vmatprep.subr.mxu0 0.0
    %2486 = vmatpush1.msra.mxu0 %v297
    %2487 = vmatprep.subr.mxu0 0.0
    %2488 = vmatpush1.msra.mxu0 %v298
    %2489 = vmatprep.subr.mxu0 0.0
    %2490 = vmatpush1.msra.mxu0 0.0
    %2491 = vmatprep.subr.mxu0 0.0
    %2492 = vmatpush1.msra.mxu0 0.0
    %2493 = vmatprep.subr.mxu0 0.0
    %2494 = vmatpush1.msra.mxu0 0.0
    %2495 = vmatprep.subr.mxu0 0.0
    %2496 = vmatpush1.msra.mxu0 0.0
    %2497 = vmatprep.subr.mxu0 0.0
    %2498 = vmatpush1.msra.mxu0 0.0
    %2499 = vmatprep.subr.mxu0 0.0
    %2500 = vmatpush1.msra.mxu0 0.0
    %2501 = vmatprep.subr.mxu0 0.0
    %2502 = vmatpush1.msra.mxu0 0.0
    %2503 = vmatprep.subr.mxu0 0.0
    %2504 = vmatpush1.msra.mxu0 0.0
    %2505 = vmatprep.subr.mxu0 0.0
    %2506 = vmatpush1.msra.mxu0 0.0
    %2507 = vmatprep.subr.mxu0 0.0
    %2508 = vmatpush1.msra.mxu0 0.0
    %2509 = vmatprep.subr.mxu0 0.0
    %2510 = vmatpush1.msra.mxu0 0.0
    %2511 = vmatprep.subr.mxu0 0.0
    %2512 = vmatpush1.msra.mxu0 0.0
    %2513 = vmatprep.subr.mxu0 0.0
    %2514 = vmatpush1.msra.mxu0 0.0
    %2515 = vmatprep.subr.mxu0 0.0
    %2516 = vmatpush1.msra.mxu0 0.0
    %2517 = vmatprep.subr.mxu0 0.0
    %2518 = vmatpush1.msra.mxu0 0.0
    %2519 = vmatprep.subr.mxu0 0.0
    %2520 = vmatpush1.msra.mxu0 0.0
    %2521 = vmatprep.subr.mxu0 0.0
    %2522 = vmatpush1.msra.mxu0 0.0
    %2523 = vmatprep.subr.mxu0 0.0
    %2524 = vmatpush1.msra.mxu0 0.0
    %2525 = vmatprep.subr.mxu0 0.0
    %2526 = vmatpush1.msra.mxu0 0.0
    %2527 = vmatprep.subr.mxu0 0.0
    %2528 = vmatpush1.msra.mxu0 0.0
    %2529 = vmatprep.subr.mxu0 0.0
    %2530 = vmatpush1.msra.mxu0 0.0
    %2531 = vmatprep.subr.mxu0 0.0
    %2532 = vmatpush1.msra.mxu0 0.0
    %2533 = vmatprep.subr.mxu0 0.0
    %2534 = vmatpush1.msra.mxu0 0.0
    %2535 = vmatprep.subr.mxu0 0.0
    %2536 = vmatpush1.msra.mxu0 0.0
    %2537 = vmatprep.mubr.f32.mxu0 0.0
    %2538 = vmatmul.mubr.f32.gmra.mrb[0].mxu0 %v2471
    %v2539 = vpop.f32.mrb[0].mxu0
    %v2540 = vadd.f32 %v448, %v2539
    %v2541 = vpop.f32.mrb[0].mxu0
    %2542 = vdwg.mxu0
    %v2543 = vxor.u32 %v2540, 2147483648
    %v2544 = vmul.f32 %v2543, 1.442695
    %v2545 = vpow.pop %v2544
    %v2546 = vadd.f32 %v2545, 1.0
    %v2547 = vrcp.pop %v2546
    %v2548 = vmul.f32 1.0, %v2547
    %v2549 = vtanh.pop %v2540
    %v2550 = vmul.f32 %v2548, %v2269
    %2552 = vrot.lane.b32.xlu0 %v2549, 64
    %v2553 = vpop.permute.xlu0 %2552
    %v2555 = vmul.f32 %v2548, %v2553
    %2557 = vrot.lane.b32.xlu0 %v2555, 32
    %v2558 = vpop.permute.xlu0 %2557
    %v2560 = vadd.f32 %v2550, %v2558
    %v2561 = vtanh.pop %v2560
    %2563 = vrot.lane.b32.xlu0 %v2561, 64
    %v2564 = vpop.permute.xlu0 %2563
    %v2566 = vmul.f32 %v2548, %v2564
    %v2569 = vunpack.c.l.s4 1966171168
    %v2570 = vunpack.c.0.s8 %v2569
    %v2571 = vlaneseq
    %v2572 = vshrl.u32 %v2571, 7
    %v2573 = vsub.s32 %v2570, %v2572
    %v2574 = vrot.slane %v2566, %v2573
    %v2575 = vcombine.high %v2574, %v2574
    %v2577 = vunpack.c.l.s4 1966171168
    %v2578 = vunpack.c.0.s8 %v2577
    %v2579 = vlaneseq
    %v2580 = vshrl.u32 %v2579, 7
    %v2581 = vsub.s32 %v2578, %v2580
    %v2582 = vrot.slane %v2574, %v2581
    %v2584 = vunpack.c.l.s4 1966171168
    %v2585 = vunpack.c.0.s8 %v2584
    %v2586 = vlaneseq
    %v2587 = vshrl.u32 %v2586, 7
    %v2588 = vsub.s32 %v2585, %v2587
    %v2589 = vrot.slane %v2575, %v2588
    %v2590 = vlaneseq
    %v2591 = vshrl.u32 %v2590, 7
    %v2592 = vsub.s32 0, %v2591
    %v2593 = vrot.slane %v2582, %v2592
    %v2594 = vlaneseq
    %v2595 = vshrl.u32 %v2594, 7
    %v2596 = vsub.s32 0, %v2595
    %v2597 = vrot.slane %v2589, %v2596
    %2598 = vrot.lane.b32.xlu0 %v2593, 32
    %v2599 = vpop.permute.xlu0 %2598
    %2600 = vrot.lane.b32.xlu0 %v2597, 32
    %v2601 = vpop.permute.xlu0 %2600
    %2604 = vst.msk [vmem:[#allocation2 + $0x7] sm:$0x1] %vm585, %v2599
    %2605 = vst.msk [vmem:[#allocation2 + $0xf] sm:$0x1] %vm585, %v2601
    %v2606 = vld [vmem:[#allocation2] sm:$0xff]
    %v2607 = vld [vmem:[#allocation2 + $0x8] sm:$0xff]
    %v2608 = vld [vmem:[%s10] sm:$0xff]
    %v2609 = vld [vmem:[%s10 + $0x8] sm:$0xff]
    %v2610 = vld [vmem:[%s10 + $0x10] sm:$0xff]
    %v2611 = vld [vmem:[%s10 + $0x18] sm:$0xff]
    %v2612 = vld [vmem:[%s11] sm:$0x1]
    %v2614 = vlaneseq
    %v2615 = vshrl.u32 %v2614, 7
    %v2616 = vsub.s32 0, %v2615
    %v2617 = vrot.slane %v2612, %v2616
    %v2620 = vsel %vm300, %v2606, 0
    %v2623 = vsel %vm300, %v2607, 0
    %2625 = vmatprep.subr.mxu0 0.0
    %2626 = vmatpush1.msra.mxu0 %v2608
    %2627 = vmatprep.subr.mxu0 0.0
    %2628 = vmatpush1.msra.mxu0 %v2609
    %2629 = vmatprep.subr.mxu0 0.0
    %2630 = vmatpush1.msra.mxu0 %v2610
    %2631 = vmatprep.subr.mxu0 0.0
    %2632 = vmatpush1.msra.mxu0 %v2611
    %2633 = vmatprep.subr.mxu0 0.0
    %2634 = vmatpush1.msra.mxu0 0.0
    %2635 = vmatprep.subr.mxu0 0.0
    %2636 = vmatpush1.msra.mxu0 0.0
    %2637 = vmatprep.subr.mxu0 0.0
    %2638 = vmatpush1.msra.mxu0 0.0
    %2639 = vmatprep.subr.mxu0 0.0
    %2640 = vmatpush1.msra.mxu0 0.0
    %2641 = vmatprep.subr.mxu0 0.0
    %2642 = vmatpush1.msra.mxu0 0.0
    %2643 = vmatprep.subr.mxu0 0.0
    %2644 = vmatpush1.msra.mxu0 0.0
    %2645 = vmatprep.subr.mxu0 0.0
    %2646 = vmatpush1.msra.mxu0 0.0
    %2647 = vmatprep.subr.mxu0 0.0
    %2648 = vmatpush1.msra.mxu0 0.0
    %2649 = vmatprep.subr.mxu0 0.0
    %2650 = vmatpush1.msra.mxu0 0.0
    %2651 = vmatprep.subr.mxu0 0.0
    %2652 = vmatpush1.msra.mxu0 0.0
    %2653 = vmatprep.subr.mxu0 0.0
    %2654 = vmatpush1.msra.mxu0 0.0
    %2655 = vmatprep.subr.mxu0 0.0
    %2656 = vmatpush1.msra.mxu0 0.0
    %2657 = vmatprep.subr.mxu0 0.0
    %2658 = vmatpush1.msra.mxu0 0.0
    %2659 = vmatprep.subr.mxu0 0.0
    %2660 = vmatpush1.msra.mxu0 0.0
    %2661 = vmatprep.subr.mxu0 0.0
    %2662 = vmatpush1.msra.mxu0 0.0
    %2663 = vmatprep.subr.mxu0 0.0
    %2664 = vmatpush1.msra.mxu0 0.0
    %2665 = vmatprep.subr.mxu0 0.0
    %2666 = vmatpush1.msra.mxu0 0.0
    %2667 = vmatprep.subr.mxu0 0.0
    %2668 = vmatpush1.msra.mxu0 0.0
    %2669 = vmatprep.subr.mxu0 0.0
    %2670 = vmatpush1.msra.mxu0 0.0
    %2671 = vmatprep.subr.mxu0 0.0
    %2672 = vmatpush1.msra.mxu0 0.0
    %2673 = vmatprep.subr.mxu0 0.0
    %2674 = vmatpush1.msra.mxu0 0.0
    %2675 = vmatprep.subr.mxu0 0.0
    %2676 = vmatpush1.msra.mxu0 0.0
    %2677 = vmatprep.subr.mxu0 0.0
    %2678 = vmatpush1.msra.mxu0 0.0
    %2679 = vmatprep.subr.mxu0 0.0
    %2680 = vmatpush1.msra.mxu0 0.0
    %2681 = vmatprep.subr.mxu0 0.0
    %2682 = vmatpush1.msra.mxu0 0.0
    %2683 = vmatprep.subr.mxu0 0.0
    %2684 = vmatpush1.msra.mxu0 0.0
    %2685 = vmatprep.subr.mxu0 0.0
    %2686 = vmatpush1.msra.mxu0 0.0
    %2687 = vmatprep.subr.mxu0 0.0
    %2688 = vmatpush1.msra.mxu0 0.0
    %2689 = vmatprep.mubr.f32.mxu0 0.0
    %2690 = vmatmul.mubr.f32.gmra.mrb[0].mxu0 %v2620
    %v2691 = vpop.f32.mrb[0].mxu0
    %v2692 = vadd.f32 %v2617, %v2691
    %v2693 = vpop.f32.mrb[0].mxu0
    %2694 = vmatprep.mubr.f32.mxu0 0.0
    %2695 = vmatmul.mubr.f32.gmra.mrb[0].mxu0 %v2623
    %v2696 = vpop.f32.mrb[0].mxu0
    %v2697 = vadd.f32 %v2617, %v2696
    %v2698 = vpop.f32.mrb[0].mxu0
    %2699 = vdwg.mxu0
    %vm2700 = vcmask 64512
    %2701 = vst.msk [vmem:[#allocation7] sm:$0xff] %vm2700, %v2692
    %2702 = vst.msk [vmem:[#allocation7 + $0x8] sm:$0xff] %vm2700, %v2697
    %2705 = vrot.lane.b32.xlu0 %v2692, 120
    %v2706 = vpop.permute.xlu0 %2705
    %2707 = vrot.lane.b32.xlu0 %v2697, 120
    %v2708 = vpop.permute.xlu0 %2707
    %2711 = vst.msk [vmem:[#allocation9] sm:$0xff] %vm2700, %v2706
    %2712 = vst.msk [vmem:[#allocation9 + $0x8] sm:$0xff] %vm2700, %v2708
    %v2713 = vld [vmem:[%s2] sm:$0xff]
    %v2714 = vld [vmem:[%s2 + $0x8] sm:$0xff]
    %v2715 = vmul.f32 %v2692, 0.5
    %v2716 = vmul.f32 %v2697, 0.5
    %v2717 = vmul.f32 %v2715, 1.442695
    %v2718 = vpow.pop %v2717
    %v2719 = vmul.f32 %v2716, 1.442695
    %v2720 = vpow.pop %v2719
    %2723 = vrot.lane.b32.xlu0 %v2718, 120
    %v2724 = vpop.permute.xlu0 %2723
    %2725 = vrot.lane.b32.xlu0 %v2720, 120
    %v2726 = vpop.permute.xlu0 %2725
    %v2729 = vmul.f32 %v2713, %v2724
    %v2730 = vmul.f32 %v2714, %v2726
    %v2731 = vadd.f32 %v2692, %v2729
    %v2732 = vadd.f32 %v2697, %v2730
    %v2733 = vld [vmem:[%s12] sm:$0xff]
    %v2734 = vld [vmem:[%s12 + $0x8] sm:$0xff]
    %v2735 = vld [vmem:[%s12 + $0x10] sm:$0xff]
    %v2736 = vld [vmem:[%s12 + $0x18] sm:$0xff]
    %v2737 = vld [vmem:[%s12 + $0x20] sm:$0xff]
    %v2738 = vld [vmem:[%s12 + $0x28] sm:$0xff]
    %v2739 = vld [vmem:[%s12 + $0x30] sm:$0xff]
    %v2740 = vld [vmem:[%s12 + $0x38] sm:$0xff]
    %v2741 = vld [vmem:[%s12 + $0x40] sm:$0xff]
    %v2742 = vld [vmem:[%s12 + $0x48] sm:$0xff]
    %v2743 = vld [vmem:[%s12 + $0x50] sm:$0xff]
    %v2744 = vld [vmem:[%s12 + $0x58] sm:$0xff]
    %v2745 = vld [vmem:[%s12 + $0x60] sm:$0xff]
    %v2746 = vld [vmem:[%s12 + $0x68] sm:$0xff]
    %v2747 = vld [vmem:[%s12 + $0x70] sm:$0xff]
    %v2748 = vld [vmem:[%s12 + $0x78] sm:$0xff]
    %v2749 = vld [vmem:[%s12 + $0x80] sm:$0xff]
    %v2750 = vld [vmem:[%s12 + $0x88] sm:$0xff]
    %v2751 = vld [vmem:[%s12 + $0x90] sm:$0xff]
    %v2752 = vld [vmem:[%s12 + $0x98] sm:$0xff]
    %v2753 = vld [vmem:[%s12 + $0xa0] sm:$0xff]
    %v2754 = vld [vmem:[%s12 + $0xa8] sm:$0xff]
    %v2755 = vld [vmem:[%s12 + $0xb0] sm:$0xff]
    %v2756 = vld [vmem:[%s12 + $0xb8] sm:$0xff]
    %v2757 = vld [vmem:[%s12 + $0xc0] sm:$0xff]
    %v2758 = vld [vmem:[%s12 + $0xc8] sm:$0xff]
    %v2759 = vld [vmem:[%s12 + $0xd0] sm:$0xff]
    %v2760 = vld [vmem:[%s12 + $0xd8] sm:$0xff]
    %v2761 = vld [vmem:[%s12 + $0xe0] sm:$0xff]
    %v2762 = vld [vmem:[%s12 + $0xe8] sm:$0xff]
    %v2763 = vld [vmem:[%s12 + $0xf0] sm:$0xff]
    %v2764 = vld [vmem:[%s12 + $0xf8] sm:$0xff]
    %v2765 = vld [vmem:[%s13] sm:$0x1]
    %v2767 = vlaneseq
    %v2768 = vshrl.u32 %v2767, 7
    %v2769 = vsub.s32 0, %v2768
    %v2770 = vrot.slane %v2765, %v2769
    %2772 = vmatprep.subr.mxu0 0.0
    %2773 = vmatpush1.msra.mxu0 %v2733
    %2774 = vmatprep.subr.mxu0 0.0
    %2775 = vmatpush1.msra.mxu0 %v2734
    %2776 = vmatprep.subr.mxu0 0.0
    %2777 = vmatpush1.msra.mxu0 %v2735
    %2778 = vmatprep.subr.mxu0 0.0
    %2779 = vmatpush1.msra.mxu0 %v2736
    %2780 = vmatprep.subr.mxu0 0.0
    %2781 = vmatpush1.msra.mxu0 %v2737
    %2782 = vmatprep.subr.mxu0 0.0
    %2783 = vmatpush1.msra.mxu0 %v2738
    %2784 = vmatprep.subr.mxu0 0.0
    %2785 = vmatpush1.msra.mxu0 %v2739
    %2786 = vmatprep.subr.mxu0 0.0
    %2787 = vmatpush1.msra.mxu0 %v2740
    %2788 = vmatprep.subr.mxu0 0.0
    %2789 = vmatpush1.msra.mxu0 %v2741
    %2790 = vmatprep.subr.mxu0 0.0
    %2791 = vmatpush1.msra.mxu0 %v2742
    %2792 = vmatprep.subr.mxu0 0.0
    %2793 = vmatpush1.msra.mxu0 %v2743
    %2794 = vmatprep.subr.mxu0 0.0
    %2795 = vmatpush1.msra.mxu0 %v2744
    %2796 = vmatprep.subr.mxu0 0.0
    %2797 = vmatpush1.msra.mxu0 %v2745
    %2798 = vmatprep.subr.mxu0 0.0
    %2799 = vmatpush1.msra.mxu0 %v2746
    %2800 = vmatprep.subr.mxu0 0.0
    %2801 = vmatpush1.msra.mxu0 %v2747
    %2802 = vmatprep.subr.mxu0 0.0
    %2803 = vmatpush1.msra.mxu0 %v2748
    %2804 = vmatprep.subr.mxu0 0.0
    %2805 = vmatpush1.msra.mxu0 %v2749
    %2806 = vmatprep.subr.mxu0 0.0
    %2807 = vmatpush1.msra.mxu0 %v2750
    %2808 = vmatprep.subr.mxu0 0.0
    %2809 = vmatpush1.msra.mxu0 %v2751
    %2810 = vmatprep.subr.mxu0 0.0
    %2811 = vmatpush1.msra.mxu0 %v2752
    %2812 = vmatprep.subr.mxu0 0.0
    %2813 = vmatpush1.msra.mxu0 %v2753
    %2814 = vmatprep.subr.mxu0 0.0
    %2815 = vmatpush1.msra.mxu0 %v2754
    %2816 = vmatprep.subr.mxu0 0.0
    %2817 = vmatpush1.msra.mxu0 %v2755
    %2818 = vmatprep.subr.mxu0 0.0
    %2819 = vmatpush1.msra.mxu0 %v2756
    %2820 = vmatprep.subr.mxu0 0.0
    %2821 = vmatpush1.msra.mxu0 %v2757
    %2822 = vmatprep.subr.mxu0 0.0
    %2823 = vmatpush1.msra.mxu0 %v2758
    %2824 = vmatprep.subr.mxu0 0.0
    %2825 = vmatpush1.msra.mxu0 %v2759
    %2826 = vmatprep.subr.mxu0 0.0
    %2827 = vmatpush1.msra.mxu0 %v2760
    %2828 = vmatprep.subr.mxu0 0.0
    %2829 = vmatpush1.msra.mxu0 %v2761
    %2830 = vmatprep.subr.mxu0 0.0
    %2831 = vmatpush1.msra.mxu0 %v2762
    %2832 = vmatprep.subr.mxu0 0.0
    %2833 = vmatpush1.msra.mxu0 %v2763
    %2834 = vmatprep.subr.mxu0 0.0
    %2835 = vmatpush1.msra.mxu0 %v2764
    %2836 = vmatprep.mubr.f32.mxu0 %v121
    %2837 = vmatmul.mubr.f32.gmra.mrb[0].mxu0 %v120
    %v2838 = vpop.f32.mrb[0].mxu0
    %v2839 = vadd.f32 %v2770, %v2838
    %v2840 = vpop.f32.mrb[0].mxu0
    %2841 = vdwg.mxu0
    %v2842 = vld [vmem:[%s14] sm:$0xff]
    %v2843 = vld [vmem:[%s16] sm:$0x1]
    %v2845 = vlaneseq
    %v2846 = vshrl.u32 %v2845, 7
    %v2847 = vsub.s32 0, %v2846
    %v2848 = vrot.slane %v2843, %v2847
    %v2851 = vsel %vm2700, %v2731, 0
    %v2854 = vsel %vm2700, %v2732, 0
    %2856 = vmatprep.subr.mxu0 0.0
    %2857 = vmatpush1.msra.mxu0 %v2842
    %2858 = vmatprep.subr.mxu0 0.0
    %2859 = vmatpush1.msra.mxu0 0.0
    %2860 = vmatprep.subr.mxu0 0.0
    %2861 = vmatpush1.msra.mxu0 0.0
    %2862 = vmatprep.subr.mxu0 0.0
    %2863 = vmatpush1.msra.mxu0 0.0
    %2864 = vmatprep.subr.mxu0 0.0
    %2865 = vmatpush1.msra.mxu0 0.0
    %2866 = vmatprep.subr.mxu0 0.0
    %2867 = vmatpush1.msra.mxu0 0.0
    %2868 = vmatprep.subr.mxu0 0.0
    %2869 = vmatpush1.msra.mxu0 0.0
    %2870 = vmatprep.subr.mxu0 0.0
    %2871 = vmatpush1.msra.mxu0 0.0
    %2872 = vmatprep.subr.mxu0 0.0
    %2873 = vmatpush1.msra.mxu0 0.0
    %2874 = vmatprep.subr.mxu0 0.0
    %2875 = vmatpush1.msra.mxu0 0.0
    %2876 = vmatprep.subr.mxu0 0.0
    %2877 = vmatpush1.msra.mxu0 0.0
    %2878 = vmatprep.subr.mxu0 0.0
    %2879 = vmatpush1.msra.mxu0 0.0
    %2880 = vmatprep.subr.mxu0 0.0
    %2881 = vmatpush1.msra.mxu0 0.0
    %2882 = vmatprep.subr.mxu0 0.0
    %2883 = vmatpush1.msra.mxu0 0.0
    %2884 = vmatprep.subr.mxu0 0.0
    %2885 = vmatpush1.msra.mxu0 0.0
    %2886 = vmatprep.subr.mxu0 0.0
    %2887 = vmatpush1.msra.mxu0 0.0
    %2888 = vmatprep.subr.mxu0 0.0
    %2889 = vmatpush1.msra.mxu0 0.0
    %2890 = vmatprep.subr.mxu0 0.0
    %2891 = vmatpush1.msra.mxu0 0.0
    %2892 = vmatprep.subr.mxu0 0.0
    %2893 = vmatpush1.msra.mxu0 0.0
    %2894 = vmatprep.subr.mxu0 0.0
    %2895 = vmatpush1.msra.mxu0 0.0
    %2896 = vmatprep.subr.mxu0 0.0
    %2897 = vmatpush1.msra.mxu0 0.0
    %2898 = vmatprep.subr.mxu0 0.0
    %2899 = vmatpush1.msra.mxu0 0.0
    %2900 = vmatprep.subr.mxu0 0.0
    %2901 = vmatpush1.msra.mxu0 0.0
    %2902 = vmatprep.subr.mxu0 0.0
    %2903 = vmatpush1.msra.mxu0 0.0
    %2904 = vmatprep.subr.mxu0 0.0
    %2905 = vmatpush1.msra.mxu0 0.0
    %2906 = vmatprep.subr.mxu0 0.0
    %2907 = vmatpush1.msra.mxu0 0.0
    %2908 = vmatprep.subr.mxu0 0.0
    %2909 = vmatpush1.msra.mxu0 0.0
    %2910 = vmatprep.subr.mxu0 0.0
    %2911 = vmatpush1.msra.mxu0 0.0
    %2912 = vmatprep.subr.mxu0 0.0
    %2913 = vmatpush1.msra.mxu0 0.0
    %2914 = vmatprep.subr.mxu0 0.0
    %2915 = vmatpush1.msra.mxu0 0.0
    %2916 = vmatprep.subr.mxu0 0.0
    %2917 = vmatpush1.msra.mxu0 0.0
    %2918 = vmatprep.subr.mxu0 0.0
    %2919 = vmatpush1.msra.mxu0 0.0
    %2920 = vmatprep.mubr.f32.mxu0 0.0
    %2921 = vmatmul.mubr.f32.gmra.mrb[0].mxu0 %v2851
    %v2922 = vpop.f32.mrb[0].mxu0
    %v2923 = vadd.f32 %v2848, %v2922
    %v2924 = vpop.f32.mrb[0].mxu0
    %2925 = vmatprep.mubr.f32.mxu0 0.0
    %2926 = vmatmul.mubr.f32.gmra.mrb[0].mxu0 %v2854
    %v2927 = vpop.f32.mrb[0].mxu0
    %v2928 = vadd.f32 %v2848, %v2927
    %v2929 = vpop.f32.mrb[0].mxu0
    %2930 = vdwg.mxu0
    %v2931 = vld [vmem:[%s15] sm:$0xff]
    %v2932 = vld [vmem:[%s15 + $0x8] sm:$0xff]
    %v2933 = vld [vmem:[%s15 + $0x10] sm:$0xff]
    %v2934 = vld [vmem:[%s15 + $0x18] sm:$0xff]
    %v2935 = vld [vmem:[%s17] sm:$0xff]
    %v2936 = vld [vmem:[%s17 + $0x8] sm:$0xff]
    %v2937 = vld [vmem:[%s17 + $0x10] sm:$0xff]
    %v2938 = vld [vmem:[%s17 + $0x18] sm:$0xff]
    %v2939 = vld [vmem:[%s17 + $0x20] sm:$0xff]
    %v2940 = vld [vmem:[%s17 + $0x28] sm:$0xff]
    %v2941 = vld [vmem:[%s17 + $0x30] sm:$0xff]
    %v2942 = vld [vmem:[%s17 + $0x38] sm:$0xff]
    %v2943 = vld [vmem:[%s18] sm:$0x1]
    %v2945 = vsel %vm300, %v2839, 0
    %2947 = vmatprep.subr.mxu0 0.0
    %2948 = vmatpush1.msra.mxu0 %v2931
    %2949 = vmatprep.subr.mxu0 0.0
    %2950 = vmatpush1.msra.mxu0 %v2932
    %2951 = vmatprep.subr.mxu0 0.0
    %2952 = vmatpush1.msra.mxu0 %v2933
    %2953 = vmatprep.subr.mxu0 0.0
    %2954 = vmatpush1.msra.mxu0 %v2934
    %2955 = vmatprep.subr.mxu0 0.0
    %2956 = vmatpush1.msra.mxu0 0.0
    %2957 = vmatprep.subr.mxu0 0.0
    %2958 = vmatpush1.msra.mxu0 0.0
    %2959 = vmatprep.subr.mxu0 0.0
    %2960 = vmatpush1.msra.mxu0 0.0
    %2961 = vmatprep.subr.mxu0 0.0
    %2962 = vmatpush1.msra.mxu0 0.0
    %2963 = vmatprep.subr.mxu0 0.0
    %2964 = vmatpush1.msra.mxu0 0.0
    %2965 = vmatprep.subr.mxu0 0.0
    %2966 = vmatpush1.msra.mxu0 0.0
    %2967 = vmatprep.subr.mxu0 0.0
    %2968 = vmatpush1.msra.mxu0 0.0
    %2969 = vmatprep.subr.mxu0 0.0
    %2970 = vmatpush1.msra.mxu0 0.0
    %2971 = vmatprep.subr.mxu0 0.0
    %2972 = vmatpush1.msra.mxu0 0.0
    %2973 = vmatprep.subr.mxu0 0.0
    %2974 = vmatpush1.msra.mxu0 0.0
    %2975 = vmatprep.subr.mxu0 0.0
    %2976 = vmatpush1.msra.mxu0 0.0
    %2977 = vmatprep.subr.mxu0 0.0
    %2978 = vmatpush1.msra.mxu0 0.0
    %2979 = vmatprep.subr.mxu0 0.0
    %2980 = vmatpush1.msra.mxu0 0.0
    %2981 = vmatprep.subr.mxu0 0.0
    %2982 = vmatpush1.msra.mxu0 0.0
    %2983 = vmatprep.subr.mxu0 0.0
    %2984 = vmatpush1.msra.mxu0 0.0
    %2985 = vmatprep.subr.mxu0 0.0
    %2986 = vmatpush1.msra.mxu0 0.0
    %2987 = vmatprep.subr.mxu0 0.0
    %2988 = vmatpush1.msra.mxu0 0.0
    %2989 = vmatprep.subr.mxu0 0.0
    %2990 = vmatpush1.msra.mxu0 0.0
    %2991 = vmatprep.subr.mxu0 0.0
    %2992 = vmatpush1.msra.mxu0 0.0
    %2993 = vmatprep.subr.mxu0 0.0
    %2994 = vmatpush1.msra.mxu0 0.0
    %2995 = vmatprep.subr.mxu0 0.0
    %2996 = vmatpush1.msra.mxu0 0.0
    %2997 = vmatprep.subr.mxu0 0.0
    %2998 = vmatpush1.msra.mxu0 0.0
    %2999 = vmatprep.subr.mxu0 0.0
    %3000 = vmatpush1.msra.mxu0 0.0
    %3001 = vmatprep.subr.mxu0 0.0
    %3002 = vmatpush1.msra.mxu0 0.0
    %3003 = vmatprep.subr.mxu0 0.0
    %3004 = vmatpush1.msra.mxu0 0.0
    %3005 = vmatprep.subr.mxu0 0.0
    %3006 = vmatpush1.msra.mxu0 0.0
    %3007 = vmatprep.subr.mxu0 0.0
    %3008 = vmatpush1.msra.mxu0 0.0
    %3009 = vmatprep.subr.mxu0 0.0
    %3010 = vmatpush1.msra.mxu0 0.0
    %3011 = vmatprep.mubr.f32.mxu0 0.0
    %3012 = vmatmul.mubr.f32.gmra.mrb[0].mxu0 %v2945
    %v3013 = vpop.f32.mrb[0].mxu0
    %v3014 = vadd.f32 0.0, %v3013
    %v3015 = vpop.f32.mrb[0].mxu0
    %3016 = vdwg.mxu0
    %v3018 = vrot.slane %v3014, 1
    %v3021 = vadd.f32 %v2923, %v3014
    %v3022 = vadd.f32 %v2928, %v3018
    %v3023 = vxor.u32 %v3021, 2147483648
    %v3024 = vxor.u32 %v3022, 2147483648
    %v3025 = vmul.f32 %v3023, 1.442695
    %v3026 = vpow.pop %v3025
    %v3027 = vmul.f32 %v3024, 1.442695
    %v3028 = vpow.pop %v3027
    %v3029 = vadd.f32 %v3026, 1.0
    %v3030 = vadd.f32 %v3028, 1.0
    %v3031 = vrcp.pop %v3029
    %v3032 = vmul.f32 1.0, %v3031
    %v3033 = vrcp.pop %v3030
    %v3034 = vmul.f32 1.0, %v3033
    %v3035 = vtanh.pop %v3021
    %v3036 = vtanh.pop %v3022
    %v3037 = vmul.f32 %v3032, 0.0
    %v3038 = vmul.f32 %v3034, 0.0
    %3041 = vrot.lane.b32.xlu0 %v3035, 64
    %v3042 = vpop.permute.xlu0 %3041
    %3043 = vrot.lane.b32.xlu0 %v3036, 64
    %v3044 = vpop.permute.xlu0 %3043
    %v3047 = vmul.f32 %v3032, %v3042
    %v3048 = vmul.f32 %v3034, %v3044
    %3051 = vrot.lane.b32.xlu0 %v3047, 32
    %v3052 = vpop.permute.xlu0 %3051
    %3053 = vrot.lane.b32.xlu0 %v3048, 32
    %v3054 = vpop.permute.xlu0 %3053
    %v3057 = vadd.f32 %v3037, %v3052
    %v3058 = vadd.f32 %v3038, %v3054
    %v3059 = vtanh.pop %v3057
    %v3060 = vtanh.pop %v3058
    %3063 = vrot.lane.b32.xlu0 %v3059, 64
    %v3064 = vpop.permute.xlu0 %3063
    %3065 = vrot.lane.b32.xlu0 %v3060, 64
    %v3066 = vpop.permute.xlu0 %3065
    %v3069 = vmul.f32 %v3032, %v3064
    %v3070 = vmul.f32 %v3034, %v3066
    %v3073 = vrot.slane %v3070, 7
    %v3074 = vsel %vm431, %v3073, %v3069
    %3075 = vrot.lane.b32.xlu0 %v3074, 32
    %v3076 = vpop.permute.xlu0 %3075
    %3078 = vst.msk [vmem:[#allocation4] sm:$0x3] %vm436, %v3076
    %3079 = vrot.lane.b32.xlu0 %v2839, 32
    %v3080 = vpop.permute.xlu0 %3079
    %3082 = vst.msk [vmem:[#allocation4] sm:$0x3] %vm441, %v3080
    %v3083 = vld [vmem:[#allocation4] sm:$0x3]
    %v3085 = vlaneseq
    %v3086 = vshrl.u32 %v3085, 7
    %v3087 = vsub.s32 0, %v3086
    %v3088 = vrot.slane %v2943, %v3087
    %v3091 = vsel %vm450, %v3083, 0
    %3093 = vmatprep.subr.mxu0 0.0
    %3094 = vmatpush1.msra.mxu0 %v2935
    %3095 = vmatprep.subr.mxu0 0.0
    %3096 = vmatpush1.msra.mxu0 %v2936
    %3097 = vmatprep.subr.mxu0 0.0
    %3098 = vmatpush1.msra.mxu0 %v2937
    %3099 = vmatprep.subr.mxu0 0.0
    %3100 = vmatpush1.msra.mxu0 %v2938
    %3101 = vmatprep.subr.mxu0 0.0
    %3102 = vmatpush1.msra.mxu0 %v2939
    %3103 = vmatprep.subr.mxu0 0.0
    %3104 = vmatpush1.msra.mxu0 %v2940
    %3105 = vmatprep.subr.mxu0 0.0
    %3106 = vmatpush1.msra.mxu0 %v2941
    %3107 = vmatprep.subr.mxu0 0.0
    %3108 = vmatpush1.msra.mxu0 %v2942
    %3109 = vmatprep.subr.mxu0 0.0
    %3110 = vmatpush1.msra.mxu0 0.0
    %3111 = vmatprep.subr.mxu0 0.0
    %3112 = vmatpush1.msra.mxu0 0.0
    %3113 = vmatprep.subr.mxu0 0.0
    %3114 = vmatpush1.msra.mxu0 0.0
    %3115 = vmatprep.subr.mxu0 0.0
    %3116 = vmatpush1.msra.mxu0 0.0
    %3117 = vmatprep.subr.mxu0 0.0
    %3118 = vmatpush1.msra.mxu0 0.0
    %3119 = vmatprep.subr.mxu0 0.0
    %3120 = vmatpush1.msra.mxu0 0.0
    %3121 = vmatprep.subr.mxu0 0.0
    %3122 = vmatpush1.msra.mxu0 0.0
    %3123 = vmatprep.subr.mxu0 0.0
    %3124 = vmatpush1.msra.mxu0 0.0
    %3125 = vmatprep.subr.mxu0 0.0
    %3126 = vmatpush1.msra.mxu0 0.0
    %3127 = vmatprep.subr.mxu0 0.0
    %3128 = vmatpush1.msra.mxu0 0.0
    %3129 = vmatprep.subr.mxu0 0.0
    %3130 = vmatpush1.msra.mxu0 0.0
    %3131 = vmatprep.subr.mxu0 0.0
    %3132 = vmatpush1.msra.mxu0 0.0
    %3133 = vmatprep.subr.mxu0 0.0
    %3134 = vmatpush1.msra.mxu0 0.0
    %3135 = vmatprep.subr.mxu0 0.0
    %3136 = vmatpush1.msra.mxu0 0.0
    %3137 = vmatprep.subr.mxu0 0.0
    %3138 = vmatpush1.msra.mxu0 0.0
    %3139 = vmatprep.subr.mxu0 0.0
    %3140 = vmatpush1.msra.mxu0 0.0
    %3141 = vmatprep.subr.mxu0 0.0
    %3142 = vmatpush1.msra.mxu0 0.0
    %3143 = vmatprep.subr.mxu0 0.0
    %3144 = vmatpush1.msra.mxu0 0.0
    %3145 = vmatprep.subr.mxu0 0.0
    %3146 = vmatpush1.msra.mxu0 0.0
    %3147 = vmatprep.subr.mxu0 0.0
    %3148 = vmatpush1.msra.mxu0 0.0
    %3149 = vmatprep.subr.mxu0 0.0
    %3150 = vmatpush1.msra.mxu0 0.0
    %3151 = vmatprep.subr.mxu0 0.0
    %3152 = vmatpush1.msra.mxu0 0.0
    %3153 = vmatprep.subr.mxu0 0.0
    %3154 = vmatpush1.msra.mxu0 0.0
    %3155 = vmatprep.subr.mxu0 0.0
    %3156 = vmatpush1.msra.mxu0 0.0
    %3157 = vmatprep.mubr.f32.mxu0 0.0
    %3158 = vmatmul.mubr.f32.gmra.mrb[0].mxu0 %v3091
    %v3159 = vpop.f32.mrb[0].mxu0
    %v3160 = vadd.f32 %v3088, %v3159
    %v3161 = vpop.f32.mrb[0].mxu0
    %3162 = vdwg.mxu0
    %v3163 = vxor.u32 %v3160, 2147483648
    %v3164 = vmul.f32 %v3163, 1.442695
    %v3165 = vpow.pop %v3164
    %v3166 = vadd.f32 %v3165, 1.0
    %v3167 = vrcp.pop %v3166
    %v3168 = vmul.f32 1.0, %v3167
    %v3169 = vtanh.pop %v3160
    %v3170 = vmul.f32 %v3168, 0.0
    %3172 = vrot.lane.b32.xlu0 %v3169, 64
    %v3173 = vpop.permute.xlu0 %3172
    %v3175 = vmul.f32 %v3168, %v3173
    %3177 = vrot.lane.b32.xlu0 %v3175, 32
    %v3178 = vpop.permute.xlu0 %3177
    %v3180 = vadd.f32 %v3170, %v3178
    %v3181 = vtanh.pop %v3180
    %3183 = vrot.lane.b32.xlu0 %v3181, 64
    %v3184 = vpop.permute.xlu0 %3183
    %v3186 = vmul.f32 %v3168, %v3184
    %v3189 = vunpack.c.l.s4 1966171168
    %v3190 = vunpack.c.0.s8 %v3189
    %v3191 = vlaneseq
    %v3192 = vshrl.u32 %v3191, 7
    %v3193 = vsub.s32 %v3190, %v3192
    %v3194 = vrot.slane %v3186, %v3193
    %v3195 = vcombine.high %v3194, %v3194
    %v3197 = vunpack.c.l.s4 1966171168
    %v3198 = vunpack.c.0.s8 %v3197
    %v3199 = vlaneseq
    %v3200 = vshrl.u32 %v3199, 7
    %v3201 = vsub.s32 %v3198, %v3200
    %v3202 = vrot.slane %v3194, %v3201
    %v3204 = vunpack.c.l.s4 1966171168
    %v3205 = vunpack.c.0.s8 %v3204
    %v3206 = vlaneseq
    %v3207 = vshrl.u32 %v3206, 7
    %v3208 = vsub.s32 %v3205, %v3207
    %v3209 = vrot.slane %v3195, %v3208
    %v3210 = vlaneseq
    %v3211 = vshrl.u32 %v3210, 7
    %v3212 = vsub.s32 0, %v3211
    %v3213 = vrot.slane %v3202, %v3212
    %v3214 = vlaneseq
    %v3215 = vshrl.u32 %v3214, 7
    %v3216 = vsub.s32 0, %v3215
    %v3217 = vrot.slane %v3209, %v3216
    %3218 = vrot.lane.b32.xlu0 %v3213, 32
    %v3219 = vpop.permute.xlu0 %3218
    %3220 = vrot.lane.b32.xlu0 %v3217, 32
    %v3221 = vpop.permute.xlu0 %3220
    %3224 = vst.msk [vmem:[#allocation3] sm:$0x1] %vm585, %v3219
    %3225 = vst.msk [vmem:[#allocation3 + $0x8] sm:$0x1] %vm585, %v3221
    %v3226 = vsel %vm300, %v3076, 0
    %3228 = vmatprep.subr.mxu0 0.0
    %3229 = vmatpush1.msra.mxu0 %v2931
    %3230 = vmatprep.subr.mxu0 0.0
    %3231 = vmatpush1.msra.mxu0 %v2932
    %3232 = vmatprep.subr.mxu0 0.0
    %3233 = vmatpush1.msra.mxu0 %v2933
    %3234 = vmatprep.subr.mxu0 0.0
    %3235 = vmatpush1.msra.mxu0 %v2934
    %3236 = vmatprep.subr.mxu0 0.0
    %3237 = vmatpush1.msra.mxu0 0.0
    %3238 = vmatprep.subr.mxu0 0.0
    %3239 = vmatpush1.msra.mxu0 0.0
    %3240 = vmatprep.subr.mxu0 0.0
    %3241 = vmatpush1.msra.mxu0 0.0
    %3242 = vmatprep.subr.mxu0 0.0
    %3243 = vmatpush1.msra.mxu0 0.0
    %3244 = vmatprep.subr.mxu0 0.0
    %3245 = vmatpush1.msra.mxu0 0.0
    %3246 = vmatprep.subr.mxu0 0.0
    %3247 = vmatpush1.msra.mxu0 0.0
    %3248 = vmatprep.subr.mxu0 0.0
    %3249 = vmatpush1.msra.mxu0 0.0
    %3250 = vmatprep.subr.mxu0 0.0
    %3251 = vmatpush1.msra.mxu0 0.0
    %3252 = vmatprep.subr.mxu0 0.0
    %3253 = vmatpush1.msra.mxu0 0.0
    %3254 = vmatprep.subr.mxu0 0.0
    %3255 = vmatpush1.msra.mxu0 0.0
    %3256 = vmatprep.subr.mxu0 0.0
    %3257 = vmatpush1.msra.mxu0 0.0
    %3258 = vmatprep.subr.mxu0 0.0
    %3259 = vmatpush1.msra.mxu0 0.0
    %3260 = vmatprep.subr.mxu0 0.0
    %3261 = vmatpush1.msra.mxu0 0.0
    %3262 = vmatprep.subr.mxu0 0.0
    %3263 = vmatpush1.msra.mxu0 0.0
    %3264 = vmatprep.subr.mxu0 0.0
    %3265 = vmatpush1.msra.mxu0 0.0
    %3266 = vmatprep.subr.mxu0 0.0
    %3267 = vmatpush1.msra.mxu0 0.0
    %3268 = vmatprep.subr.mxu0 0.0
    %3269 = vmatpush1.msra.mxu0 0.0
    %3270 = vmatprep.subr.mxu0 0.0
    %3271 = vmatpush1.msra.mxu0 0.0
    %3272 = vmatprep.subr.mxu0 0.0
    %3273 = vmatpush1.msra.mxu0 0.0
    %3274 = vmatprep.subr.mxu0 0.0
    %3275 = vmatpush1.msra.mxu0 0.0
    %3276 = vmatprep.subr.mxu0 0.0
    %3277 = vmatpush1.msra.mxu0 0.0
    %3278 = vmatprep.subr.mxu0 0.0
    %3279 = vmatpush1.msra.mxu0 0.0
    %3280 = vmatprep.subr.mxu0 0.0
    %3281 = vmatpush1.msra.mxu0 0.0
    %3282 = vmatprep.subr.mxu0 0.0
    %3283 = vmatpush1.msra.mxu0 0.0
    %3284 = vmatprep.subr.mxu0 0.0
    %3285 = vmatpush1.msra.mxu0 0.0
    %3286 = vmatprep.subr.mxu0 0.0
    %3287 = vmatpush1.msra.mxu0 0.0
    %3288 = vmatprep.subr.mxu0 0.0
    %3289 = vmatpush1.msra.mxu0 0.0
    %3290 = vmatprep.subr.mxu0 0.0
    %3291 = vmatpush1.msra.mxu0 0.0
    %3292 = vmatprep.mubr.f32.mxu0 0.0
    %3293 = vmatmul.mubr.f32.gmra.mrb[0].mxu0 %v3226
    %v3294 = vpop.f32.mrb[0].mxu0
    %v3295 = vadd.f32 0.0, %v3294
    %v3296 = vpop.f32.mrb[0].mxu0
    %3297 = vdwg.mxu0
    %v3299 = vrot.slane %v3295, 7
    %v3302 = vadd.f32 %v2923, %v3299
    %v3303 = vadd.f32 %v2928, %v3295
    %v3304 = vxor.u32 %v3302, 2147483648
    %v3305 = vxor.u32 %v3303, 2147483648
    %v3306 = vmul.f32 %v3304, 1.442695
    %v3307 = vpow.pop %v3306
    %v3308 = vmul.f32 %v3305, 1.442695
    %v3309 = vpow.pop %v3308
    %v3310 = vadd.f32 %v3307, 1.0
    %v3311 = vadd.f32 %v3309, 1.0
    %v3312 = vrcp.pop %v3310
    %v3313 = vmul.f32 1.0, %v3312
    %v3314 = vrcp.pop %v3311
    %v3315 = vmul.f32 1.0, %v3314
    %v3316 = vtanh.pop %v3302
    %v3317 = vtanh.pop %v3303
    %v3320 = vrot.slane %v3057, 7
    %v3321 = vrot.slane %v3058, 7
    %v3324 = vmul.f32 %v3313, %v3320
    %v3325 = vmul.f32 %v3315, %v3321
    %3328 = vrot.lane.b32.xlu0 %v3316, 64
    %v3329 = vpop.permute.xlu0 %3328
    %3330 = vrot.lane.b32.xlu0 %v3317, 64
    %v3331 = vpop.permute.xlu0 %3330
    %v3334 = vmul.f32 %v3313, %v3329
    %v3335 = vmul.f32 %v3315, %v3331
    %3338 = vrot.lane.b32.xlu0 %v3334, 32
    %v3339 = vpop.permute.xlu0 %3338
    %3340 = vrot.lane.b32.xlu0 %v3335, 32
    %v3341 = vpop.permute.xlu0 %3340
    %v3344 = vadd.f32 %v3324, %v3339
    %v3345 = vadd.f32 %v3325, %v3341
    %v3346 = vtanh.pop %v3344
    %v3347 = vtanh.pop %v3345
    %3350 = vrot.lane.b32.xlu0 %v3346, 64
    %v3351 = vpop.permute.xlu0 %3350
    %3352 = vrot.lane.b32.xlu0 %v3347, 64
    %v3353 = vpop.permute.xlu0 %3352
    %v3356 = vmul.f32 %v3313, %v3351
    %v3357 = vmul.f32 %v3315, %v3353
    %v3360 = vrot.slane %v3357, 7
    %v3361 = vsel %vm723, %v3360, %v3356
    %3362 = vrot.lane.b32.xlu0 %v3361, 32
    %v3363 = vpop.permute.xlu0 %3362
    %3365 = vst.msk [vmem:[#allocation4 - $0x1] sm:$0x6] %vm728, %v3363
    %3366 = vrot.lane.b32.xlu0 %v3186, 64
    %v3367 = vpop.permute.xlu0 %3366
    %3369 = vst.msk [vmem:[#allocation4] sm:$0x3] %vm441, %v3367
    %v3370 = vld [vmem:[#allocation4] sm:$0x3]
    %v3372 = vsel %vm450, %v3370, 0
    %3374 = vmatprep.subr.mxu0 0.0
    %3375 = vmatpush1.msra.mxu0 %v2935
    %3376 = vmatprep.subr.mxu0 0.0
    %3377 = vmatpush1.msra.mxu0 %v2936
    %3378 = vmatprep.subr.mxu0 0.0
    %3379 = vmatpush1.msra.mxu0 %v2937
    %3380 = vmatprep.subr.mxu0 0.0
    %3381 = vmatpush1.msra.mxu0 %v2938
    %3382 = vmatprep.subr.mxu0 0.0
    %3383 = vmatpush1.msra.mxu0 %v2939
    %3384 = vmatprep.subr.mxu0 0.0
    %3385 = vmatpush1.msra.mxu0 %v2940
    %3386 = vmatprep.subr.mxu0 0.0
    %3387 = vmatpush1.msra.mxu0 %v2941
    %3388 = vmatprep.subr.mxu0 0.0
    %3389 = vmatpush1.msra.mxu0 %v2942
    %3390 = vmatprep.subr.mxu0 0.0
    %3391 = vmatpush1.msra.mxu0 0.0
    %3392 = vmatprep.subr.mxu0 0.0
    %3393 = vmatpush1.msra.mxu0 0.0
    %3394 = vmatprep.subr.mxu0 0.0
    %3395 = vmatpush1.msra.mxu0 0.0
    %3396 = vmatprep.subr.mxu0 0.0
    %3397 = vmatpush1.msra.mxu0 0.0
    %3398 = vmatprep.subr.mxu0 0.0
    %3399 = vmatpush1.msra.mxu0 0.0
    %3400 = vmatprep.subr.mxu0 0.0
    %3401 = vmatpush1.msra.mxu0 0.0
    %3402 = vmatprep.subr.mxu0 0.0
    %3403 = vmatpush1.msra.mxu0 0.0
    %3404 = vmatprep.subr.mxu0 0.0
    %3405 = vmatpush1.msra.mxu0 0.0
    %3406 = vmatprep.subr.mxu0 0.0
    %3407 = vmatpush1.msra.mxu0 0.0
    %3408 = vmatprep.subr.mxu0 0.0
    %3409 = vmatpush1.msra.mxu0 0.0
    %3410 = vmatprep.subr.mxu0 0.0
    %3411 = vmatpush1.msra.mxu0 0.0
    %3412 = vmatprep.subr.mxu0 0.0
    %3413 = vmatpush1.msra.mxu0 0.0
    %3414 = vmatprep.subr.mxu0 0.0
    %3415 = vmatpush1.msra.mxu0 0.0
    %3416 = vmatprep.subr.mxu0 0.0
    %3417 = vmatpush1.msra.mxu0 0.0
    %3418 = vmatprep.subr.mxu0 0.0
    %3419 = vmatpush1.msra.mxu0 0.0
    %3420 = vmatprep.subr.mxu0 0.0
    %3421 = vmatpush1.msra.mxu0 0.0
    %3422 = vmatprep.subr.mxu0 0.0
    %3423 = vmatpush1.msra.mxu0 0.0
    %3424 = vmatprep.subr.mxu0 0.0
    %3425 = vmatpush1.msra.mxu0 0.0
    %3426 = vmatprep.subr.mxu0 0.0
    %3427 = vmatpush1.msra.mxu0 0.0
    %3428 = vmatprep.subr.mxu0 0.0
    %3429 = vmatpush1.msra.mxu0 0.0
    %3430 = vmatprep.subr.mxu0 0.0
    %3431 = vmatpush1.msra.mxu0 0.0
    %3432 = vmatprep.subr.mxu0 0.0
    %3433 = vmatpush1.msra.mxu0 0.0
    %3434 = vmatprep.subr.mxu0 0.0
    %3435 = vmatpush1.msra.mxu0 0.0
    %3436 = vmatprep.subr.mxu0 0.0
    %3437 = vmatpush1.msra.mxu0 0.0
    %3438 = vmatprep.mubr.f32.mxu0 0.0
    %3439 = vmatmul.mubr.f32.gmra.mrb[0].mxu0 %v3372
    %v3440 = vpop.f32.mrb[0].mxu0
    %v3441 = vadd.f32 %v3088, %v3440
    %v3442 = vpop.f32.mrb[0].mxu0
    %3443 = vdwg.mxu0
    %v3444 = vxor.u32 %v3441, 2147483648
    %v3445 = vmul.f32 %v3444, 1.442695
    %v3446 = vpow.pop %v3445
    %v3447 = vadd.f32 %v3446, 1.0
    %v3448 = vrcp.pop %v3447
    %v3449 = vmul.f32 1.0, %v3448
    %v3450 = vtanh.pop %v3441
    %v3451 = vmul.f32 %v3449, %v3180
    %3453 = vrot.lane.b32.xlu0 %v3450, 64
    %v3454 = vpop.permute.xlu0 %3453
    %v3456 = vmul.f32 %v3449, %v3454
    %3458 = vrot.lane.b32.xlu0 %v3456, 32
    %v3459 = vpop.permute.xlu0 %3458
    %v3461 = vadd.f32 %v3451, %v3459
    %v3462 = vtanh.pop %v3461
    %3464 = vrot.lane.b32.xlu0 %v3462, 64
    %v3465 = vpop.permute.xlu0 %3464
    %v3467 = vmul.f32 %v3449, %v3465
    %v3470 = vunpack.c.l.s4 1966171168
    %v3471 = vunpack.c.0.s8 %v3470
    %v3472 = vlaneseq
    %v3473 = vshrl.u32 %v3472, 7
    %v3474 = vsub.s32 %v3471, %v3473
    %v3475 = vrot.slane %v3467, %v3474
    %v3476 = vcombine.high %v3475, %v3475
    %v3478 = vunpack.c.l.s4 1966171168
    %v3479 = vunpack.c.0.s8 %v3478
    %v3480 = vlaneseq
    %v3481 = vshrl.u32 %v3480, 7
    %v3482 = vsub.s32 %v3479, %v3481
    %v3483 = vrot.slane %v3475, %v3482
    %v3485 = vunpack.c.l.s4 1966171168
    %v3486 = vunpack.c.0.s8 %v3485
    %v3487 = vlaneseq
    %v3488 = vshrl.u32 %v3487, 7
    %v3489 = vsub.s32 %v3486, %v3488
    %v3490 = vrot.slane %v3476, %v3489
    %v3491 = vlaneseq
    %v3492 = vshrl.u32 %v3491, 7
    %v3493 = vsub.s32 0, %v3492
    %v3494 = vrot.slane %v3483, %v3493
    %v3495 = vlaneseq
    %v3496 = vshrl.u32 %v3495, 7
    %v3497 = vsub.s32 0, %v3496
    %v3498 = vrot.slane %v3490, %v3497
    %3499 = vrot.lane.b32.xlu0 %v3494, 32
    %v3500 = vpop.permute.xlu0 %3499
    %3501 = vrot.lane.b32.xlu0 %v3498, 32
    %v3502 = vpop.permute.xlu0 %3501
    %3505 = vst.msk [vmem:[#allocation3 + $0x1] sm:$0x1] %vm585, %v3500
    %3506 = vst.msk [vmem:[#allocation3 + $0x9] sm:$0x1] %vm585, %v3502
    %v3507 = vrot.slane %v3356, 1
    %v3508 = vsel %vm431, %v3357, %v3507
    %3509 = vrot.lane.b32.xlu0 %v3508, 32
    %v3510 = vpop.permute.xlu0 %3509
    %v3511 = vsel %vm300, %v3510, 0
    %3513 = vmatprep.subr.mxu0 0.0
    %3514 = vmatpush1.msra.mxu0 %v2931
    %3515 = vmatprep.subr.mxu0 0.0
    %3516 = vmatpush1.msra.mxu0 %v2932
    %3517 = vmatprep.subr.mxu0 0.0
    %3518 = vmatpush1.msra.mxu0 %v2933
    %3519 = vmatprep.subr.mxu0 0.0
    %3520 = vmatpush1.msra.mxu0 %v2934
    %3521 = vmatprep.subr.mxu0 0.0
    %3522 = vmatpush1.msra.mxu0 0.0
    %3523 = vmatprep.subr.mxu0 0.0
    %3524 = vmatpush1.msra.mxu0 0.0
    %3525 = vmatprep.subr.mxu0 0.0
    %3526 = vmatpush1.msra.mxu0 0.0
    %3527 = vmatprep.subr.mxu0 0.0
    %3528 = vmatpush1.msra.mxu0 0.0
    %3529 = vmatprep.subr.mxu0 0.0
    %3530 = vmatpush1.msra.mxu0 0.0
    %3531 = vmatprep.subr.mxu0 0.0
    %3532 = vmatpush1.msra.mxu0 0.0
    %3533 = vmatprep.subr.mxu0 0.0
    %3534 = vmatpush1.msra.mxu0 0.0
    %3535 = vmatprep.subr.mxu0 0.0
    %3536 = vmatpush1.msra.mxu0 0.0
    %3537 = vmatprep.subr.mxu0 0.0
    %3538 = vmatpush1.msra.mxu0 0.0
    %3539 = vmatprep.subr.mxu0 0.0
    %3540 = vmatpush1.msra.mxu0 0.0
    %3541 = vmatprep.subr.mxu0 0.0
    %3542 = vmatpush1.msra.mxu0 0.0
    %3543 = vmatprep.subr.mxu0 0.0
    %3544 = vmatpush1.msra.mxu0 0.0
    %3545 = vmatprep.subr.mxu0 0.0
    %3546 = vmatpush1.msra.mxu0 0.0
    %3547 = vmatprep.subr.mxu0 0.0
    %3548 = vmatpush1.msra.mxu0 0.0
    %3549 = vmatprep.subr.mxu0 0.0
    %3550 = vmatpush1.msra.mxu0 0.0
    %3551 = vmatprep.subr.mxu0 0.0
    %3552 = vmatpush1.msra.mxu0 0.0
    %3553 = vmatprep.subr.mxu0 0.0
    %3554 = vmatpush1.msra.mxu0 0.0
    %3555 = vmatprep.subr.mxu0 0.0
    %3556 = vmatpush1.msra.mxu0 0.0
    %3557 = vmatprep.subr.mxu0 0.0
    %3558 = vmatpush1.msra.mxu0 0.0
    %3559 = vmatprep.subr.mxu0 0.0
    %3560 = vmatpush1.msra.mxu0 0.0
    %3561 = vmatprep.subr.mxu0 0.0
    %3562 = vmatpush1.msra.mxu0 0.0
    %3563 = vmatprep.subr.mxu0 0.0
    %3564 = vmatpush1.msra.mxu0 0.0
    %3565 = vmatprep.subr.mxu0 0.0
    %3566 = vmatpush1.msra.mxu0 0.0
    %3567 = vmatprep.subr.mxu0 0.0
    %3568 = vmatpush1.msra.mxu0 0.0
    %3569 = vmatprep.subr.mxu0 0.0
    %3570 = vmatpush1.msra.mxu0 0.0
    %3571 = vmatprep.subr.mxu0 0.0
    %3572 = vmatpush1.msra.mxu0 0.0
    %3573 = vmatprep.subr.mxu0 0.0
    %3574 = vmatpush1.msra.mxu0 0.0
    %3575 = vmatprep.subr.mxu0 0.0
    %3576 = vmatpush1.msra.mxu0 0.0
    %3577 = vmatprep.mubr.f32.mxu0 0.0
    %3578 = vmatmul.mubr.f32.gmra.mrb[0].mxu0 %v3511
    %v3579 = vpop.f32.mrb[0].mxu0
    %v3580 = vadd.f32 0.0, %v3579
    %v3581 = vpop.f32.mrb[0].mxu0
    %3582 = vdwg.mxu0
    %v3584 = vrot.slane %v3580, 6
    %v3585 = vrot.slane %v3580, 7
    %v3588 = vadd.f32 %v2923, %v3584
    %v3589 = vadd.f32 %v2928, %v3585
    %v3590 = vxor.u32 %v3588, 2147483648
    %v3591 = vxor.u32 %v3589, 2147483648
    %v3592 = vmul.f32 %v3590, 1.442695
    %v3593 = vpow.pop %v3592
    %v3594 = vmul.f32 %v3591, 1.442695
    %v3595 = vpow.pop %v3594
    %v3596 = vadd.f32 %v3593, 1.0
    %v3597 = vadd.f32 %v3595, 1.0
    %v3598 = vrcp.pop %v3596
    %v3599 = vmul.f32 1.0, %v3598
    %v3600 = vrcp.pop %v3597
    %v3601 = vmul.f32 1.0, %v3600
    %v3602 = vtanh.pop %v3588
    %v3603 = vtanh.pop %v3589
    %v3606 = vrot.slane %v3344, 7
    %v3607 = vrot.slane %v3345, 7
    %v3610 = vmul.f32 %v3599, %v3606
    %v3611 = vmul.f32 %v3601, %v3607
    %3614 = vrot.lane.b32.xlu0 %v3602, 64
    %v3615 = vpop.permute.xlu0 %3614
    %3616 = vrot.lane.b32.xlu0 %v3603, 64
    %v3617 = vpop.permute.xlu0 %3616
    %v3620 = vmul.f32 %v3599, %v3615
    %v3621 = vmul.f32 %v3601, %v3617
    %3624 = vrot.lane.b32.xlu0 %v3620, 32
    %v3625 = vpop.permute.xlu0 %3624
    %3626 = vrot.lane.b32.xlu0 %v3621, 32
    %v3627 = vpop.permute.xlu0 %3626
    %v3630 = vadd.f32 %v3610, %v3625
    %v3631 = vadd.f32 %v3611, %v3627
    %v3632 = vtanh.pop %v3630
    %v3633 = vtanh.pop %v3631
    %3636 = vrot.lane.b32.xlu0 %v3632, 64
    %v3637 = vpop.permute.xlu0 %3636
    %3638 = vrot.lane.b32.xlu0 %v3633, 64
    %v3639 = vpop.permute.xlu0 %3638
    %v3642 = vmul.f32 %v3599, %v3637
    %v3643 = vmul.f32 %v3601, %v3639
    %v3646 = vrot.slane %v3643, 7
    %v3647 = vsel %vm1011, %v3646, %v3642
    %3648 = vrot.lane.b32.xlu0 %v3647, 32
    %v3649 = vpop.permute.xlu0 %3648
    %3651 = vst.msk [vmem:[#allocation4 - $0x2] sm:$0xc] %vm1016, %v3649
    %3652 = vrot.lane.b32.xlu0 %v3467, 64
    %v3653 = vpop.permute.xlu0 %3652
    %3655 = vst.msk [vmem:[#allocation4] sm:$0x3] %vm441, %v3653
    %v3656 = vld [vmem:[#allocation4] sm:$0x3]
    %v3658 = vsel %vm450, %v3656, 0
    %3660 = vmatprep.subr.mxu0 0.0
    %3661 = vmatpush1.msra.mxu0 %v2935
    %3662 = vmatprep.subr.mxu0 0.0
    %3663 = vmatpush1.msra.mxu0 %v2936
    %3664 = vmatprep.subr.mxu0 0.0
    %3665 = vmatpush1.msra.mxu0 %v2937
    %3666 = vmatprep.subr.mxu0 0.0
    %3667 = vmatpush1.msra.mxu0 %v2938
    %3668 = vmatprep.subr.mxu0 0.0
    %3669 = vmatpush1.msra.mxu0 %v2939
    %3670 = vmatprep.subr.mxu0 0.0
    %3671 = vmatpush1.msra.mxu0 %v2940
    %3672 = vmatprep.subr.mxu0 0.0
    %3673 = vmatpush1.msra.mxu0 %v2941
    %3674 = vmatprep.subr.mxu0 0.0
    %3675 = vmatpush1.msra.mxu0 %v2942
    %3676 = vmatprep.subr.mxu0 0.0
    %3677 = vmatpush1.msra.mxu0 0.0
    %3678 = vmatprep.subr.mxu0 0.0
    %3679 = vmatpush1.msra.mxu0 0.0
    %3680 = vmatprep.subr.mxu0 0.0
    %3681 = vmatpush1.msra.mxu0 0.0
    %3682 = vmatprep.subr.mxu0 0.0
    %3683 = vmatpush1.msra.mxu0 0.0
    %3684 = vmatprep.subr.mxu0 0.0
    %3685 = vmatpush1.msra.mxu0 0.0
    %3686 = vmatprep.subr.mxu0 0.0
    %3687 = vmatpush1.msra.mxu0 0.0
    %3688 = vmatprep.subr.mxu0 0.0
    %3689 = vmatpush1.msra.mxu0 0.0
    %3690 = vmatprep.subr.mxu0 0.0
    %3691 = vmatpush1.msra.mxu0 0.0
    %3692 = vmatprep.subr.mxu0 0.0
    %3693 = vmatpush1.msra.mxu0 0.0
    %3694 = vmatprep.subr.mxu0 0.0
    %3695 = vmatpush1.msra.mxu0 0.0
    %3696 = vmatprep.subr.mxu0 0.0
    %3697 = vmatpush1.msra.mxu0 0.0
    %3698 = vmatprep.subr.mxu0 0.0
    %3699 = vmatpush1.msra.mxu0 0.0
    %3700 = vmatprep.subr.mxu0 0.0
    %3701 = vmatpush1.msra.mxu0 0.0
    %3702 = vmatprep.subr.mxu0 0.0
    %3703 = vmatpush1.msra.mxu0 0.0
    %3704 = vmatprep.subr.mxu0 0.0
    %3705 = vmatpush1.msra.mxu0 0.0
    %3706 = vmatprep.subr.mxu0 0.0
    %3707 = vmatpush1.msra.mxu0 0.0
    %3708 = vmatprep.subr.mxu0 0.0
    %3709 = vmatpush1.msra.mxu0 0.0
    %3710 = vmatprep.subr.mxu0 0.0
    %3711 = vmatpush1.msra.mxu0 0.0
    %3712 = vmatprep.subr.mxu0 0.0
    %3713 = vmatpush1.msra.mxu0 0.0
    %3714 = vmatprep.subr.mxu0 0.0
    %3715 = vmatpush1.msra.mxu0 0.0
    %3716 = vmatprep.subr.mxu0 0.0
    %3717 = vmatpush1.msra.mxu0 0.0
    %3718 = vmatprep.subr.mxu0 0.0
    %3719 = vmatpush1.msra.mxu0 0.0
    %3720 = vmatprep.subr.mxu0 0.0
    %3721 = vmatpush1.msra.mxu0 0.0
    %3722 = vmatprep.subr.mxu0 0.0
    %3723 = vmatpush1.msra.mxu0 0.0
    %3724 = vmatprep.mubr.f32.mxu0 0.0
    %3725 = vmatmul.mubr.f32.gmra.mrb[0].mxu0 %v3658
    %v3726 = vpop.f32.mrb[0].mxu0
    %v3727 = vadd.f32 %v3088, %v3726
    %v3728 = vpop.f32.mrb[0].mxu0
    %3729 = vdwg.mxu0
    %v3730 = vxor.u32 %v3727, 2147483648
    %v3731 = vmul.f32 %v3730, 1.442695
    %v3732 = vpow.pop %v3731
    %v3733 = vadd.f32 %v3732, 1.0
    %v3734 = vrcp.pop %v3733
    %v3735 = vmul.f32 1.0, %v3734
    %v3736 = vtanh.pop %v3727
    %v3737 = vmul.f32 %v3735, %v3461
    %3739 = vrot.lane.b32.xlu0 %v3736, 64
    %v3740 = vpop.permute.xlu0 %3739
    %v3742 = vmul.f32 %v3735, %v3740
    %3744 = vrot.lane.b32.xlu0 %v3742, 32
    %v3745 = vpop.permute.xlu0 %3744
    %v3747 = vadd.f32 %v3737, %v3745
    %v3748 = vtanh.pop %v3747
    %3750 = vrot.lane.b32.xlu0 %v3748, 64
    %v3751 = vpop.permute.xlu0 %3750
    %v3753 = vmul.f32 %v3735, %v3751
    %v3756 = vunpack.c.l.s4 1966171168
    %v3757 = vunpack.c.0.s8 %v3756
    %v3758 = vlaneseq
    %v3759 = vshrl.u32 %v3758, 7
    %v3760 = vsub.s32 %v3757, %v3759
    %v3761 = vrot.slane %v3753, %v3760
    %v3762 = vcombine.high %v3761, %v3761
    %v3764 = vunpack.c.l.s4 1966171168
    %v3765 = vunpack.c.0.s8 %v3764
    %v3766 = vlaneseq
    %v3767 = vshrl.u32 %v3766, 7
    %v3768 = vsub.s32 %v3765, %v3767
    %v3769 = vrot.slane %v3761, %v3768
    %v3771 = vunpack.c.l.s4 1966171168
    %v3772 = vunpack.c.0.s8 %v3771
    %v3773 = vlaneseq
    %v3774 = vshrl.u32 %v3773, 7
    %v3775 = vsub.s32 %v3772, %v3774
    %v3776 = vrot.slane %v3762, %v3775
    %v3777 = vlaneseq
    %v3778 = vshrl.u32 %v3777, 7
    %v3779 = vsub.s32 0, %v3778
    %v3780 = vrot.slane %v3769, %v3779
    %v3781 = vlaneseq
    %v3782 = vshrl.u32 %v3781, 7
    %v3783 = vsub.s32 0, %v3782
    %v3784 = vrot.slane %v3776, %v3783
    %3785 = vrot.lane.b32.xlu0 %v3780, 32
    %v3786 = vpop.permute.xlu0 %3785
    %3787 = vrot.lane.b32.xlu0 %v3784, 32
    %v3788 = vpop.permute.xlu0 %3787
    %3791 = vst.msk [vmem:[#allocation3 + $0x2] sm:$0x1] %vm585, %v3786
    %3792 = vst.msk [vmem:[#allocation3 + $0xa] sm:$0x1] %vm585, %v3788
    %v3793 = vrot.slane %v3642, 2
    %v3794 = vrot.slane %v3643, 1
    %v3795 = vsel %vm431, %v3794, %v3793
    %3796 = vrot.lane.b32.xlu0 %v3795, 32
    %v3797 = vpop.permute.xlu0 %3796
    %v3798 = vsel %vm300, %v3797, 0
    %3800 = vmatprep.subr.mxu0 0.0
    %3801 = vmatpush1.msra.mxu0 %v2931
    %3802 = vmatprep.subr.mxu0 0.0
    %3803 = vmatpush1.msra.mxu0 %v2932
    %3804 = vmatprep.subr.mxu0 0.0
    %3805 = vmatpush1.msra.mxu0 %v2933
    %3806 = vmatprep.subr.mxu0 0.0
    %3807 = vmatpush1.msra.mxu0 %v2934
    %3808 = vmatprep.subr.mxu0 0.0
    %3809 = vmatpush1.msra.mxu0 0.0
    %3810 = vmatprep.subr.mxu0 0.0
    %3811 = vmatpush1.msra.mxu0 0.0
    %3812 = vmatprep.subr.mxu0 0.0
    %3813 = vmatpush1.msra.mxu0 0.0
    %3814 = vmatprep.subr.mxu0 0.0
    %3815 = vmatpush1.msra.mxu0 0.0
    %3816 = vmatprep.subr.mxu0 0.0
    %3817 = vmatpush1.msra.mxu0 0.0
    %3818 = vmatprep.subr.mxu0 0.0
    %3819 = vmatpush1.msra.mxu0 0.0
    %3820 = vmatprep.subr.mxu0 0.0
    %3821 = vmatpush1.msra.mxu0 0.0
    %3822 = vmatprep.subr.mxu0 0.0
    %3823 = vmatpush1.msra.mxu0 0.0
    %3824 = vmatprep.subr.mxu0 0.0
    %3825 = vmatpush1.msra.mxu0 0.0
    %3826 = vmatprep.subr.mxu0 0.0
    %3827 = vmatpush1.msra.mxu0 0.0
    %3828 = vmatprep.subr.mxu0 0.0
    %3829 = vmatpush1.msra.mxu0 0.0
    %3830 = vmatprep.subr.mxu0 0.0
    %3831 = vmatpush1.msra.mxu0 0.0
    %3832 = vmatprep.subr.mxu0 0.0
    %3833 = vmatpush1.msra.mxu0 0.0
    %3834 = vmatprep.subr.mxu0 0.0
    %3835 = vmatpush1.msra.mxu0 0.0
    %3836 = vmatprep.subr.mxu0 0.0
    %3837 = vmatpush1.msra.mxu0 0.0
    %3838 = vmatprep.subr.mxu0 0.0
    %3839 = vmatpush1.msra.mxu0 0.0
    %3840 = vmatprep.subr.mxu0 0.0
    %3841 = vmatpush1.msra.mxu0 0.0
    %3842 = vmatprep.subr.mxu0 0.0
    %3843 = vmatpush1.msra.mxu0 0.0
    %3844 = vmatprep.subr.mxu0 0.0
    %3845 = vmatpush1.msra.mxu0 0.0
    %3846 = vmatprep.subr.mxu0 0.0
    %3847 = vmatpush1.msra.mxu0 0.0
    %3848 = vmatprep.subr.mxu0 0.0
    %3849 = vmatpush1.msra.mxu0 0.0
    %3850 = vmatprep.subr.mxu0 0.0
    %3851 = vmatpush1.msra.mxu0 0.0
    %3852 = vmatprep.subr.mxu0 0.0
    %3853 = vmatpush1.msra.mxu0 0.0
    %3854 = vmatprep.subr.mxu0 0.0
    %3855 = vmatpush1.msra.mxu0 0.0
    %3856 = vmatprep.subr.mxu0 0.0
    %3857 = vmatpush1.msra.mxu0 0.0
    %3858 = vmatprep.subr.mxu0 0.0
    %3859 = vmatpush1.msra.mxu0 0.0
    %3860 = vmatprep.subr.mxu0 0.0
    %3861 = vmatpush1.msra.mxu0 0.0
    %3862 = vmatprep.subr.mxu0 0.0
    %3863 = vmatpush1.msra.mxu0 0.0
    %3864 = vmatprep.mubr.f32.mxu0 0.0
    %3865 = vmatmul.mubr.f32.gmra.mrb[0].mxu0 %v3798
    %v3866 = vpop.f32.mrb[0].mxu0
    %v3867 = vadd.f32 0.0, %v3866
    %v3868 = vpop.f32.mrb[0].mxu0
    %3869 = vdwg.mxu0
    %v3871 = vrot.slane %v3867, 5
    %v3872 = vrot.slane %v3867, 6
    %v3875 = vadd.f32 %v2923, %v3871
    %v3876 = vadd.f32 %v2928, %v3872
    %v3877 = vxor.u32 %v3875, 2147483648
    %v3878 = vxor.u32 %v3876, 2147483648
    %v3879 = vmul.f32 %v3877, 1.442695
    %v3880 = vpow.pop %v3879
    %v3881 = vmul.f32 %v3878, 1.442695
    %v3882 = vpow.pop %v3881
    %v3883 = vadd.f32 %v3880, 1.0
    %v3884 = vadd.f32 %v3882, 1.0
    %v3885 = vrcp.pop %v3883
    %v3886 = vmul.f32 1.0, %v3885
    %v3887 = vrcp.pop %v3884
    %v3888 = vmul.f32 1.0, %v3887
    %v3889 = vtanh.pop %v3875
    %v3890 = vtanh.pop %v3876
    %v3893 = vrot.slane %v3630, 7
    %v3894 = vrot.slane %v3631, 7
    %v3897 = vmul.f32 %v3886, %v3893
    %v3898 = vmul.f32 %v3888, %v3894
    %3901 = vrot.lane.b32.xlu0 %v3889, 64
    %v3902 = vpop.permute.xlu0 %3901
    %3903 = vrot.lane.b32.xlu0 %v3890, 64
    %v3904 = vpop.permute.xlu0 %3903
    %v3907 = vmul.f32 %v3886, %v3902
    %v3908 = vmul.f32 %v3888, %v3904
    %3911 = vrot.lane.b32.xlu0 %v3907, 32
    %v3912 = vpop.permute.xlu0 %3911
    %3913 = vrot.lane.b32.xlu0 %v3908, 32
    %v3914 = vpop.permute.xlu0 %3913
    %v3917 = vadd.f32 %v3897, %v3912
    %v3918 = vadd.f32 %v3898, %v3914
    %v3919 = vtanh.pop %v3917
    %v3920 = vtanh.pop %v3918
    %3923 = vrot.lane.b32.xlu0 %v3919, 64
    %v3924 = vpop.permute.xlu0 %3923
    %3925 = vrot.lane.b32.xlu0 %v3920, 64
    %v3926 = vpop.permute.xlu0 %3925
    %v3929 = vmul.f32 %v3886, %v3924
    %v3930 = vmul.f32 %v3888, %v3926
    %v3933 = vrot.slane %v3930, 7
    %v3934 = vsel %vm1300, %v3933, %v3929
    %3935 = vrot.lane.b32.xlu0 %v3934, 32
    %v3936 = vpop.permute.xlu0 %3935
    %3938 = vst.msk [vmem:[#allocation4 - $0x3] sm:$0x18] %vm1305, %v3936
    %3939 = vrot.lane.b32.xlu0 %v3753, 64
    %v3940 = vpop.permute.xlu0 %3939
    %3942 = vst.msk [vmem:[#allocation4] sm:$0x3] %vm441, %v3940
    %v3943 = vld [vmem:[#allocation4] sm:$0x3]
    %v3945 = vsel %vm450, %v3943, 0
    %3947 = vmatprep.subr.mxu0 0.0
    %3948 = vmatpush1.msra.mxu0 %v2935
    %3949 = vmatprep.subr.mxu0 0.0
    %3950 = vmatpush1.msra.mxu0 %v2936
    %3951 = vmatprep.subr.mxu0 0.0
    %3952 = vmatpush1.msra.mxu0 %v2937
    %3953 = vmatprep.subr.mxu0 0.0
    %3954 = vmatpush1.msra.mxu0 %v2938
    %3955 = vmatprep.subr.mxu0 0.0
    %3956 = vmatpush1.msra.mxu0 %v2939
    %3957 = vmatprep.subr.mxu0 0.0
    %3958 = vmatpush1.msra.mxu0 %v2940
    %3959 = vmatprep.subr.mxu0 0.0
    %3960 = vmatpush1.msra.mxu0 %v2941
    %3961 = vmatprep.subr.mxu0 0.0
    %3962 = vmatpush1.msra.mxu0 %v2942
    %3963 = vmatprep.subr.mxu0 0.0
    %3964 = vmatpush1.msra.mxu0 0.0
    %3965 = vmatprep.subr.mxu0 0.0
    %3966 = vmatpush1.msra.mxu0 0.0
    %3967 = vmatprep.subr.mxu0 0.0
    %3968 = vmatpush1.msra.mxu0 0.0
    %3969 = vmatprep.subr.mxu0 0.0
    %3970 = vmatpush1.msra.mxu0 0.0
    %3971 = vmatprep.subr.mxu0 0.0
    %3972 = vmatpush1.msra.mxu0 0.0
    %3973 = vmatprep.subr.mxu0 0.0
    %3974 = vmatpush1.msra.mxu0 0.0
    %3975 = vmatprep.subr.mxu0 0.0
    %3976 = vmatpush1.msra.mxu0 0.0
    %3977 = vmatprep.subr.mxu0 0.0
    %3978 = vmatpush1.msra.mxu0 0.0
    %3979 = vmatprep.subr.mxu0 0.0
    %3980 = vmatpush1.msra.mxu0 0.0
    %3981 = vmatprep.subr.mxu0 0.0
    %3982 = vmatpush1.msra.mxu0 0.0
    %3983 = vmatprep.subr.mxu0 0.0
    %3984 = vmatpush1.msra.mxu0 0.0
    %3985 = vmatprep.subr.mxu0 0.0
    %3986 = vmatpush1.msra.mxu0 0.0
    %3987 = vmatprep.subr.mxu0 0.0
    %3988 = vmatpush1.msra.mxu0 0.0
    %3989 = vmatprep.subr.mxu0 0.0
    %3990 = vmatpush1.msra.mxu0 0.0
    %3991 = vmatprep.subr.mxu0 0.0
    %3992 = vmatpush1.msra.mxu0 0.0
    %3993 = vmatprep.subr.mxu0 0.0
    %3994 = vmatpush1.msra.mxu0 0.0
    %3995 = vmatprep.subr.mxu0 0.0
    %3996 = vmatpush1.msra.mxu0 0.0
    %3997 = vmatprep.subr.mxu0 0.0
    %3998 = vmatpush1.msra.mxu0 0.0
    %3999 = vmatprep.subr.mxu0 0.0
    %4000 = vmatpush1.msra.mxu0 0.0
    %4001 = vmatprep.subr.mxu0 0.0
    %4002 = vmatpush1.msra.mxu0 0.0
    %4003 = vmatprep.subr.mxu0 0.0
    %4004 = vmatpush1.msra.mxu0 0.0
    %4005 = vmatprep.subr.mxu0 0.0
    %4006 = vmatpush1.msra.mxu0 0.0
    %4007 = vmatprep.subr.mxu0 0.0
    %4008 = vmatpush1.msra.mxu0 0.0
    %4009 = vmatprep.subr.mxu0 0.0
    %4010 = vmatpush1.msra.mxu0 0.0
    %4011 = vmatprep.mubr.f32.mxu0 0.0
    %4012 = vmatmul.mubr.f32.gmra.mrb[0].mxu0 %v3945
    %v4013 = vpop.f32.mrb[0].mxu0
    %v4014 = vadd.f32 %v3088, %v4013
    %v4015 = vpop.f32.mrb[0].mxu0
    %4016 = vdwg.mxu0
    %v4017 = vxor.u32 %v4014, 2147483648
    %v4018 = vmul.f32 %v4017, 1.442695
    %v4019 = vpow.pop %v4018
    %v4020 = vadd.f32 %v4019, 1.0
    %v4021 = vrcp.pop %v4020
    %v4022 = vmul.f32 1.0, %v4021
    %v4023 = vtanh.pop %v4014
    %v4024 = vmul.f32 %v4022, %v3747
    %4026 = vrot.lane.b32.xlu0 %v4023, 64
    %v4027 = vpop.permute.xlu0 %4026
    %v4029 = vmul.f32 %v4022, %v4027
    %4031 = vrot.lane.b32.xlu0 %v4029, 32
    %v4032 = vpop.permute.xlu0 %4031
    %v4034 = vadd.f32 %v4024, %v4032
    %v4035 = vtanh.pop %v4034
    %4037 = vrot.lane.b32.xlu0 %v4035, 64
    %v4038 = vpop.permute.xlu0 %4037
    %v4040 = vmul.f32 %v4022, %v4038
    %v4043 = vunpack.c.l.s4 1966171168
    %v4044 = vunpack.c.0.s8 %v4043
    %v4045 = vlaneseq
    %v4046 = vshrl.u32 %v4045, 7
    %v4047 = vsub.s32 %v4044, %v4046
    %v4048 = vrot.slane %v4040, %v4047
    %v4049 = vcombine.high %v4048, %v4048
    %v4051 = vunpack.c.l.s4 1966171168
    %v4052 = vunpack.c.0.s8 %v4051
    %v4053 = vlaneseq
    %v4054 = vshrl.u32 %v4053, 7
    %v4055 = vsub.s32 %v4052, %v4054
    %v4056 = vrot.slane %v4048, %v4055
    %v4058 = vunpack.c.l.s4 1966171168
    %v4059 = vunpack.c.0.s8 %v4058
    %v4060 = vlaneseq
    %v4061 = vshrl.u32 %v4060, 7
    %v4062 = vsub.s32 %v4059, %v4061
    %v4063 = vrot.slane %v4049, %v4062
    %v4064 = vlaneseq
    %v4065 = vshrl.u32 %v4064, 7
    %v4066 = vsub.s32 0, %v4065
    %v4067 = vrot.slane %v4056, %v4066
    %v4068 = vlaneseq
    %v4069 = vshrl.u32 %v4068, 7
    %v4070 = vsub.s32 0, %v4069
    %v4071 = vrot.slane %v4063, %v4070
    %4072 = vrot.lane.b32.xlu0 %v4067, 32
    %v4073 = vpop.permute.xlu0 %4072
    %4074 = vrot.lane.b32.xlu0 %v4071, 32
    %v4075 = vpop.permute.xlu0 %4074
    %4078 = vst.msk [vmem:[#allocation3 + $0x3] sm:$0x1] %vm585, %v4073
    %4079 = vst.msk [vmem:[#allocation3 + $0xb] sm:$0x1] %vm585, %v4075
    %v4080 = vrot.slane %v3929, 3
    %v4081 = vrot.slane %v3930, 2
    %v4082 = vsel %vm431, %v4081, %v4080
    %4083 = vrot.lane.b32.xlu0 %v4082, 32
    %v4084 = vpop.permute.xlu0 %4083
    %v4085 = vsel %vm300, %v4084, 0
    %4087 = vmatprep.subr.mxu0 0.0
    %4088 = vmatpush1.msra.mxu0 %v2931
    %4089 = vmatprep.subr.mxu0 0.0
    %4090 = vmatpush1.msra.mxu0 %v2932
    %4091 = vmatprep.subr.mxu0 0.0
    %4092 = vmatpush1.msra.mxu0 %v2933
    %4093 = vmatprep.subr.mxu0 0.0
    %4094 = vmatpush1.msra.mxu0 %v2934
    %4095 = vmatprep.subr.mxu0 0.0
    %4096 = vmatpush1.msra.mxu0 0.0
    %4097 = vmatprep.subr.mxu0 0.0
    %4098 = vmatpush1.msra.mxu0 0.0
    %4099 = vmatprep.subr.mxu0 0.0
    %4100 = vmatpush1.msra.mxu0 0.0
    %4101 = vmatprep.subr.mxu0 0.0
    %4102 = vmatpush1.msra.mxu0 0.0
    %4103 = vmatprep.subr.mxu0 0.0
    %4104 = vmatpush1.msra.mxu0 0.0
    %4105 = vmatprep.subr.mxu0 0.0
    %4106 = vmatpush1.msra.mxu0 0.0
    %4107 = vmatprep.subr.mxu0 0.0
    %4108 = vmatpush1.msra.mxu0 0.0
    %4109 = vmatprep.subr.mxu0 0.0
    %4110 = vmatpush1.msra.mxu0 0.0
    %4111 = vmatprep.subr.mxu0 0.0
    %4112 = vmatpush1.msra.mxu0 0.0
    %4113 = vmatprep.subr.mxu0 0.0
    %4114 = vmatpush1.msra.mxu0 0.0
    %4115 = vmatprep.subr.mxu0 0.0
    %4116 = vmatpush1.msra.mxu0 0.0
    %4117 = vmatprep.subr.mxu0 0.0
    %4118 = vmatpush1.msra.mxu0 0.0
    %4119 = vmatprep.subr.mxu0 0.0
    %4120 = vmatpush1.msra.mxu0 0.0
    %4121 = vmatprep.subr.mxu0 0.0
    %4122 = vmatpush1.msra.mxu0 0.0
    %4123 = vmatprep.subr.mxu0 0.0
    %4124 = vmatpush1.msra.mxu0 0.0
    %4125 = vmatprep.subr.mxu0 0.0
    %4126 = vmatpush1.msra.mxu0 0.0
    %4127 = vmatprep.subr.mxu0 0.0
    %4128 = vmatpush1.msra.mxu0 0.0
    %4129 = vmatprep.subr.mxu0 0.0
    %4130 = vmatpush1.msra.mxu0 0.0
    %4131 = vmatprep.subr.mxu0 0.0
    %4132 = vmatpush1.msra.mxu0 0.0
    %4133 = vmatprep.subr.mxu0 0.0
    %4134 = vmatpush1.msra.mxu0 0.0
    %4135 = vmatprep.subr.mxu0 0.0
    %4136 = vmatpush1.msra.mxu0 0.0
    %4137 = vmatprep.subr.mxu0 0.0
    %4138 = vmatpush1.msra.mxu0 0.0
    %4139 = vmatprep.subr.mxu0 0.0
    %4140 = vmatpush1.msra.mxu0 0.0
    %4141 = vmatprep.subr.mxu0 0.0
    %4142 = vmatpush1.msra.mxu0 0.0
    %4143 = vmatprep.subr.mxu0 0.0
    %4144 = vmatpush1.msra.mxu0 0.0
    %4145 = vmatprep.subr.mxu0 0.0
    %4146 = vmatpush1.msra.mxu0 0.0
    %4147 = vmatprep.subr.mxu0 0.0
    %4148 = vmatpush1.msra.mxu0 0.0
    %4149 = vmatprep.subr.mxu0 0.0
    %4150 = vmatpush1.msra.mxu0 0.0
    %4151 = vmatprep.mubr.f32.mxu0 0.0
    %4152 = vmatmul.mubr.f32.gmra.mrb[0].mxu0 %v4085
    %v4153 = vpop.f32.mrb[0].mxu0
    %v4154 = vadd.f32 0.0, %v4153
    %v4155 = vpop.f32.mrb[0].mxu0
    %4156 = vdwg.mxu0
    %v4158 = vrot.slane %v4154, 4
    %v4159 = vrot.slane %v4154, 5
    %v4162 = vadd.f32 %v2923, %v4158
    %v4163 = vadd.f32 %v2928, %v4159
    %v4164 = vxor.u32 %v4162, 2147483648
    %v4165 = vxor.u32 %v4163, 2147483648
    %v4166 = vmul.f32 %v4164, 1.442695
    %v4167 = vpow.pop %v4166
    %v4168 = vmul.f32 %v4165, 1.442695
    %v4169 = vpow.pop %v4168
    %v4170 = vadd.f32 %v4167, 1.0
    %v4171 = vadd.f32 %v4169, 1.0
    %v4172 = vrcp.pop %v4170
    %v4173 = vmul.f32 1.0, %v4172
    %v4174 = vrcp.pop %v4171
    %v4175 = vmul.f32 1.0, %v4174
    %v4176 = vtanh.pop %v4162
    %v4177 = vtanh.pop %v4163
    %v4180 = vrot.slane %v3917, 7
    %v4181 = vrot.slane %v3918, 7
    %v4184 = vmul.f32 %v4173, %v4180
    %v4185 = vmul.f32 %v4175, %v4181
    %4188 = vrot.lane.b32.xlu0 %v4176, 64
    %v4189 = vpop.permute.xlu0 %4188
    %4190 = vrot.lane.b32.xlu0 %v4177, 64
    %v4191 = vpop.permute.xlu0 %4190
    %v4194 = vmul.f32 %v4173, %v4189
    %v4195 = vmul.f32 %v4175, %v4191
    %4198 = vrot.lane.b32.xlu0 %v4194, 32
    %v4199 = vpop.permute.xlu0 %4198
    %4200 = vrot.lane.b32.xlu0 %v4195, 32
    %v4201 = vpop.permute.xlu0 %4200
    %v4204 = vadd.f32 %v4184, %v4199
    %v4205 = vadd.f32 %v4185, %v4201
    %v4206 = vtanh.pop %v4204
    %v4207 = vtanh.pop %v4205
    %4210 = vrot.lane.b32.xlu0 %v4206, 64
    %v4211 = vpop.permute.xlu0 %4210
    %4212 = vrot.lane.b32.xlu0 %v4207, 64
    %v4213 = vpop.permute.xlu0 %4212
    %v4216 = vmul.f32 %v4173, %v4211
    %v4217 = vmul.f32 %v4175, %v4213
    %v4220 = vrot.slane %v4217, 7
    %v4221 = vsel %vm1589, %v4220, %v4216
    %4222 = vrot.lane.b32.xlu0 %v4221, 32
    %v4223 = vpop.permute.xlu0 %4222
    %4225 = vst.msk [vmem:[#allocation4 - $0x4] sm:$0x30] %vm1594, %v4223
    %4226 = vrot.lane.b32.xlu0 %v4040, 64
    %v4227 = vpop.permute.xlu0 %4226
    %4229 = vst.msk [vmem:[#allocation4] sm:$0x3] %vm441, %v4227
    %v4230 = vld [vmem:[#allocation4] sm:$0x3]
    %v4232 = vsel %vm450, %v4230, 0
    %4234 = vmatprep.subr.mxu0 0.0
    %4235 = vmatpush1.msra.mxu0 %v2935
    %4236 = vmatprep.subr.mxu0 0.0
    %4237 = vmatpush1.msra.mxu0 %v2936
    %4238 = vmatprep.subr.mxu0 0.0
    %4239 = vmatpush1.msra.mxu0 %v2937
    %4240 = vmatprep.subr.mxu0 0.0
    %4241 = vmatpush1.msra.mxu0 %v2938
    %4242 = vmatprep.subr.mxu0 0.0
    %4243 = vmatpush1.msra.mxu0 %v2939
    %4244 = vmatprep.subr.mxu0 0.0
    %4245 = vmatpush1.msra.mxu0 %v2940
    %4246 = vmatprep.subr.mxu0 0.0
    %4247 = vmatpush1.msra.mxu0 %v2941
    %4248 = vmatprep.subr.mxu0 0.0
    %4249 = vmatpush1.msra.mxu0 %v2942
    %4250 = vmatprep.subr.mxu0 0.0
    %4251 = vmatpush1.msra.mxu0 0.0
    %4252 = vmatprep.subr.mxu0 0.0
    %4253 = vmatpush1.msra.mxu0 0.0
    %4254 = vmatprep.subr.mxu0 0.0
    %4255 = vmatpush1.msra.mxu0 0.0
    %4256 = vmatprep.subr.mxu0 0.0
    %4257 = vmatpush1.msra.mxu0 0.0
    %4258 = vmatprep.subr.mxu0 0.0
    %4259 = vmatpush1.msra.mxu0 0.0
    %4260 = vmatprep.subr.mxu0 0.0
    %4261 = vmatpush1.msra.mxu0 0.0
    %4262 = vmatprep.subr.mxu0 0.0
    %4263 = vmatpush1.msra.mxu0 0.0
    %4264 = vmatprep.subr.mxu0 0.0
    %4265 = vmatpush1.msra.mxu0 0.0
    %4266 = vmatprep.subr.mxu0 0.0
    %4267 = vmatpush1.msra.mxu0 0.0
    %4268 = vmatprep.subr.mxu0 0.0
    %4269 = vmatpush1.msra.mxu0 0.0
    %4270 = vmatprep.subr.mxu0 0.0
    %4271 = vmatpush1.msra.mxu0 0.0
    %4272 = vmatprep.subr.mxu0 0.0
    %4273 = vmatpush1.msra.mxu0 0.0
    %4274 = vmatprep.subr.mxu0 0.0
    %4275 = vmatpush1.msra.mxu0 0.0
    %4276 = vmatprep.subr.mxu0 0.0
    %4277 = vmatpush1.msra.mxu0 0.0
    %4278 = vmatprep.subr.mxu0 0.0
    %4279 = vmatpush1.msra.mxu0 0.0
    %4280 = vmatprep.subr.mxu0 0.0
    %4281 = vmatpush1.msra.mxu0 0.0
    %4282 = vmatprep.subr.mxu0 0.0
    %4283 = vmatpush1.msra.mxu0 0.0
    %4284 = vmatprep.subr.mxu0 0.0
    %4285 = vmatpush1.msra.mxu0 0.0
    %4286 = vmatprep.subr.mxu0 0.0
    %4287 = vmatpush1.msra.mxu0 0.0
    %4288 = vmatprep.subr.mxu0 0.0
    %4289 = vmatpush1.msra.mxu0 0.0
    %4290 = vmatprep.subr.mxu0 0.0
    %4291 = vmatpush1.msra.mxu0 0.0
    %4292 = vmatprep.subr.mxu0 0.0
    %4293 = vmatpush1.msra.mxu0 0.0
    %4294 = vmatprep.subr.mxu0 0.0
    %4295 = vmatpush1.msra.mxu0 0.0
    %4296 = vmatprep.subr.mxu0 0.0
    %4297 = vmatpush1.msra.mxu0 0.0
    %4298 = vmatprep.mubr.f32.mxu0 0.0
    %4299 = vmatmul.mubr.f32.gmra.mrb[0].mxu0 %v4232
    %v4300 = vpop.f32.mrb[0].mxu0
    %v4301 = vadd.f32 %v3088, %v4300
    %v4302 = vpop.f32.mrb[0].mxu0
    %4303 = vdwg.mxu0
    %v4304 = vxor.u32 %v4301, 2147483648
    %v4305 = vmul.f32 %v4304, 1.442695
    %v4306 = vpow.pop %v4305
    %v4307 = vadd.f32 %v4306, 1.0
    %v4308 = vrcp.pop %v4307
    %v4309 = vmul.f32 1.0, %v4308
    %v4310 = vtanh.pop %v4301
    %v4311 = vmul.f32 %v4309, %v4034
    %4313 = vrot.lane.b32.xlu0 %v4310, 64
    %v4314 = vpop.permute.xlu0 %4313
    %v4316 = vmul.f32 %v4309, %v4314
    %4318 = vrot.lane.b32.xlu0 %v4316, 32
    %v4319 = vpop.permute.xlu0 %4318
    %v4321 = vadd.f32 %v4311, %v4319
    %v4322 = vtanh.pop %v4321
    %4324 = vrot.lane.b32.xlu0 %v4322, 64
    %v4325 = vpop.permute.xlu0 %4324
    %v4327 = vmul.f32 %v4309, %v4325
    %v4330 = vunpack.c.l.s4 1966171168
    %v4331 = vunpack.c.0.s8 %v4330
    %v4332 = vlaneseq
    %v4333 = vshrl.u32 %v4332, 7
    %v4334 = vsub.s32 %v4331, %v4333
    %v4335 = vrot.slane %v4327, %v4334
    %v4336 = vcombine.high %v4335, %v4335
    %v4338 = vunpack.c.l.s4 1966171168
    %v4339 = vunpack.c.0.s8 %v4338
    %v4340 = vlaneseq
    %v4341 = vshrl.u32 %v4340, 7
    %v4342 = vsub.s32 %v4339, %v4341
    %v4343 = vrot.slane %v4335, %v4342
    %v4345 = vunpack.c.l.s4 1966171168
    %v4346 = vunpack.c.0.s8 %v4345
    %v4347 = vlaneseq
    %v4348 = vshrl.u32 %v4347, 7
    %v4349 = vsub.s32 %v4346, %v4348
    %v4350 = vrot.slane %v4336, %v4349
    %v4351 = vlaneseq
    %v4352 = vshrl.u32 %v4351, 7
    %v4353 = vsub.s32 0, %v4352
    %v4354 = vrot.slane %v4343, %v4353
    %v4355 = vlaneseq
    %v4356 = vshrl.u32 %v4355, 7
    %v4357 = vsub.s32 0, %v4356
    %v4358 = vrot.slane %v4350, %v4357
    %4359 = vrot.lane.b32.xlu0 %v4354, 32
    %v4360 = vpop.permute.xlu0 %4359
    %4361 = vrot.lane.b32.xlu0 %v4358, 32
    %v4362 = vpop.permute.xlu0 %4361
    %4365 = vst.msk [vmem:[#allocation3 + $0x4] sm:$0x1] %vm585, %v4360
    %4366 = vst.msk [vmem:[#allocation3 + $0xc] sm:$0x1] %vm585, %v4362
    %v4367 = vrot.slane %v4216, 4
    %v4368 = vrot.slane %v4217, 3
    %v4369 = vsel %vm431, %v4368, %v4367
    %4370 = vrot.lane.b32.xlu0 %v4369, 32
    %v4371 = vpop.permute.xlu0 %4370
    %v4372 = vsel %vm300, %v4371, 0
    %4374 = vmatprep.subr.mxu0 0.0
    %4375 = vmatpush1.msra.mxu0 %v2931
    %4376 = vmatprep.subr.mxu0 0.0
    %4377 = vmatpush1.msra.mxu0 %v2932
    %4378 = vmatprep.subr.mxu0 0.0
    %4379 = vmatpush1.msra.mxu0 %v2933
    %4380 = vmatprep.subr.mxu0 0.0
    %4381 = vmatpush1.msra.mxu0 %v2934
    %4382 = vmatprep.subr.mxu0 0.0
    %4383 = vmatpush1.msra.mxu0 0.0
    %4384 = vmatprep.subr.mxu0 0.0
    %4385 = vmatpush1.msra.mxu0 0.0
    %4386 = vmatprep.subr.mxu0 0.0
    %4387 = vmatpush1.msra.mxu0 0.0
    %4388 = vmatprep.subr.mxu0 0.0
    %4389 = vmatpush1.msra.mxu0 0.0
    %4390 = vmatprep.subr.mxu0 0.0
    %4391 = vmatpush1.msra.mxu0 0.0
    %4392 = vmatprep.subr.mxu0 0.0
    %4393 = vmatpush1.msra.mxu0 0.0
    %4394 = vmatprep.subr.mxu0 0.0
    %4395 = vmatpush1.msra.mxu0 0.0
    %4396 = vmatprep.subr.mxu0 0.0
    %4397 = vmatpush1.msra.mxu0 0.0
    %4398 = vmatprep.subr.mxu0 0.0
    %4399 = vmatpush1.msra.mxu0 0.0
    %4400 = vmatprep.subr.mxu0 0.0
    %4401 = vmatpush1.msra.mxu0 0.0
    %4402 = vmatprep.subr.mxu0 0.0
    %4403 = vmatpush1.msra.mxu0 0.0
    %4404 = vmatprep.subr.mxu0 0.0
    %4405 = vmatpush1.msra.mxu0 0.0
    %4406 = vmatprep.subr.mxu0 0.0
    %4407 = vmatpush1.msra.mxu0 0.0
    %4408 = vmatprep.subr.mxu0 0.0
    %4409 = vmatpush1.msra.mxu0 0.0
    %4410 = vmatprep.subr.mxu0 0.0
    %4411 = vmatpush1.msra.mxu0 0.0
    %4412 = vmatprep.subr.mxu0 0.0
    %4413 = vmatpush1.msra.mxu0 0.0
    %4414 = vmatprep.subr.mxu0 0.0
    %4415 = vmatpush1.msra.mxu0 0.0
    %4416 = vmatprep.subr.mxu0 0.0
    %4417 = vmatpush1.msra.mxu0 0.0
    %4418 = vmatprep.subr.mxu0 0.0
    %4419 = vmatpush1.msra.mxu0 0.0
    %4420 = vmatprep.subr.mxu0 0.0
    %4421 = vmatpush1.msra.mxu0 0.0
    %4422 = vmatprep.subr.mxu0 0.0
    %4423 = vmatpush1.msra.mxu0 0.0
    %4424 = vmatprep.subr.mxu0 0.0
    %4425 = vmatpush1.msra.mxu0 0.0
    %4426 = vmatprep.subr.mxu0 0.0
    %4427 = vmatpush1.msra.mxu0 0.0
    %4428 = vmatprep.subr.mxu0 0.0
    %4429 = vmatpush1.msra.mxu0 0.0
    %4430 = vmatprep.subr.mxu0 0.0
    %4431 = vmatpush1.msra.mxu0 0.0
    %4432 = vmatprep.subr.mxu0 0.0
    %4433 = vmatpush1.msra.mxu0 0.0
    %4434 = vmatprep.subr.mxu0 0.0
    %4435 = vmatpush1.msra.mxu0 0.0
    %4436 = vmatprep.subr.mxu0 0.0
    %4437 = vmatpush1.msra.mxu0 0.0
    %4438 = vmatprep.mubr.f32.mxu0 0.0
    %4439 = vmatmul.mubr.f32.gmra.mrb[0].mxu0 %v4372
    %v4440 = vpop.f32.mrb[0].mxu0
    %v4441 = vadd.f32 0.0, %v4440
    %v4442 = vpop.f32.mrb[0].mxu0
    %4443 = vdwg.mxu0
    %v4445 = vrot.slane %v4441, 3
    %v4446 = vrot.slane %v4441, 4
    %v4449 = vadd.f32 %v2923, %v4445
    %v4450 = vadd.f32 %v2928, %v4446
    %v4451 = vxor.u32 %v4449, 2147483648
    %v4452 = vxor.u32 %v4450, 2147483648
    %v4453 = vmul.f32 %v4451, 1.442695
    %v4454 = vpow.pop %v4453
    %v4455 = vmul.f32 %v4452, 1.442695
    %v4456 = vpow.pop %v4455
    %v4457 = vadd.f32 %v4454, 1.0
    %v4458 = vadd.f32 %v4456, 1.0
    %v4459 = vrcp.pop %v4457
    %v4460 = vmul.f32 1.0, %v4459
    %v4461 = vrcp.pop %v4458
    %v4462 = vmul.f32 1.0, %v4461
    %v4463 = vtanh.pop %v4449
    %v4464 = vtanh.pop %v4450
    %v4467 = vrot.slane %v4204, 7
    %v4468 = vrot.slane %v4205, 7
    %v4471 = vmul.f32 %v4460, %v4467
    %v4472 = vmul.f32 %v4462, %v4468
    %4475 = vrot.lane.b32.xlu0 %v4463, 64
    %v4476 = vpop.permute.xlu0 %4475
    %4477 = vrot.lane.b32.xlu0 %v4464, 64
    %v4478 = vpop.permute.xlu0 %4477
    %v4481 = vmul.f32 %v4460, %v4476
    %v4482 = vmul.f32 %v4462, %v4478
    %4485 = vrot.lane.b32.xlu0 %v4481, 32
    %v4486 = vpop.permute.xlu0 %4485
    %4487 = vrot.lane.b32.xlu0 %v4482, 32
    %v4488 = vpop.permute.xlu0 %4487
    %v4491 = vadd.f32 %v4471, %v4486
    %v4492 = vadd.f32 %v4472, %v4488
    %v4493 = vtanh.pop %v4491
    %v4494 = vtanh.pop %v4492
    %4497 = vrot.lane.b32.xlu0 %v4493, 64
    %v4498 = vpop.permute.xlu0 %4497
    %4499 = vrot.lane.b32.xlu0 %v4494, 64
    %v4500 = vpop.permute.xlu0 %4499
    %v4503 = vmul.f32 %v4460, %v4498
    %v4504 = vmul.f32 %v4462, %v4500
    %v4507 = vrot.slane %v4504, 7
    %v4508 = vsel %vm1878, %v4507, %v4503
    %4509 = vrot.lane.b32.xlu0 %v4508, 32
    %v4510 = vpop.permute.xlu0 %4509
    %4512 = vst.msk [vmem:[#allocation4 - $0x5] sm:$0x60] %vm1883, %v4510
    %4513 = vrot.lane.b32.xlu0 %v4327, 64
    %v4514 = vpop.permute.xlu0 %4513
    %4516 = vst.msk [vmem:[#allocation4] sm:$0x3] %vm441, %v4514
    %v4517 = vld [vmem:[#allocation4] sm:$0x3]
    %v4519 = vsel %vm450, %v4517, 0
    %4521 = vmatprep.subr.mxu0 0.0
    %4522 = vmatpush1.msra.mxu0 %v2935
    %4523 = vmatprep.subr.mxu0 0.0
    %4524 = vmatpush1.msra.mxu0 %v2936
    %4525 = vmatprep.subr.mxu0 0.0
    %4526 = vmatpush1.msra.mxu0 %v2937
    %4527 = vmatprep.subr.mxu0 0.0
    %4528 = vmatpush1.msra.mxu0 %v2938
    %4529 = vmatprep.subr.mxu0 0.0
    %4530 = vmatpush1.msra.mxu0 %v2939
    %4531 = vmatprep.subr.mxu0 0.0
    %4532 = vmatpush1.msra.mxu0 %v2940
    %4533 = vmatprep.subr.mxu0 0.0
    %4534 = vmatpush1.msra.mxu0 %v2941
    %4535 = vmatprep.subr.mxu0 0.0
    %4536 = vmatpush1.msra.mxu0 %v2942
    %4537 = vmatprep.subr.mxu0 0.0
    %4538 = vmatpush1.msra.mxu0 0.0
    %4539 = vmatprep.subr.mxu0 0.0
    %4540 = vmatpush1.msra.mxu0 0.0
    %4541 = vmatprep.subr.mxu0 0.0
    %4542 = vmatpush1.msra.mxu0 0.0
    %4543 = vmatprep.subr.mxu0 0.0
    %4544 = vmatpush1.msra.mxu0 0.0
    %4545 = vmatprep.subr.mxu0 0.0
    %4546 = vmatpush1.msra.mxu0 0.0
    %4547 = vmatprep.subr.mxu0 0.0
    %4548 = vmatpush1.msra.mxu0 0.0
    %4549 = vmatprep.subr.mxu0 0.0
    %4550 = vmatpush1.msra.mxu0 0.0
    %4551 = vmatprep.subr.mxu0 0.0
    %4552 = vmatpush1.msra.mxu0 0.0
    %4553 = vmatprep.subr.mxu0 0.0
    %4554 = vmatpush1.msra.mxu0 0.0
    %4555 = vmatprep.subr.mxu0 0.0
    %4556 = vmatpush1.msra.mxu0 0.0
    %4557 = vmatprep.subr.mxu0 0.0
    %4558 = vmatpush1.msra.mxu0 0.0
    %4559 = vmatprep.subr.mxu0 0.0
    %4560 = vmatpush1.msra.mxu0 0.0
    %4561 = vmatprep.subr.mxu0 0.0
    %4562 = vmatpush1.msra.mxu0 0.0
    %4563 = vmatprep.subr.mxu0 0.0
    %4564 = vmatpush1.msra.mxu0 0.0
    %4565 = vmatprep.subr.mxu0 0.0
    %4566 = vmatpush1.msra.mxu0 0.0
    %4567 = vmatprep.subr.mxu0 0.0
    %4568 = vmatpush1.msra.mxu0 0.0
    %4569 = vmatprep.subr.mxu0 0.0
    %4570 = vmatpush1.msra.mxu0 0.0
    %4571 = vmatprep.subr.mxu0 0.0
    %4572 = vmatpush1.msra.mxu0 0.0
    %4573 = vmatprep.subr.mxu0 0.0
    %4574 = vmatpush1.msra.mxu0 0.0
    %4575 = vmatprep.subr.mxu0 0.0
    %4576 = vmatpush1.msra.mxu0 0.0
    %4577 = vmatprep.subr.mxu0 0.0
    %4578 = vmatpush1.msra.mxu0 0.0
    %4579 = vmatprep.subr.mxu0 0.0
    %4580 = vmatpush1.msra.mxu0 0.0
    %4581 = vmatprep.subr.mxu0 0.0
    %4582 = vmatpush1.msra.mxu0 0.0
    %4583 = vmatprep.subr.mxu0 0.0
    %4584 = vmatpush1.msra.mxu0 0.0
    %4585 = vmatprep.mubr.f32.mxu0 0.0
    %4586 = vmatmul.mubr.f32.gmra.mrb[0].mxu0 %v4519
    %v4587 = vpop.f32.mrb[0].mxu0
    %v4588 = vadd.f32 %v3088, %v4587
    %v4589 = vpop.f32.mrb[0].mxu0
    %4590 = vdwg.mxu0
    %v4591 = vxor.u32 %v4588, 2147483648
    %v4592 = vmul.f32 %v4591, 1.442695
    %v4593 = vpow.pop %v4592
    %v4594 = vadd.f32 %v4593, 1.0
    %v4595 = vrcp.pop %v4594
    %v4596 = vmul.f32 1.0, %v4595
    %v4597 = vtanh.pop %v4588
    %v4598 = vmul.f32 %v4596, %v4321
    %4600 = vrot.lane.b32.xlu0 %v4597, 64
    %v4601 = vpop.permute.xlu0 %4600
    %v4603 = vmul.f32 %v4596, %v4601
    %4605 = vrot.lane.b32.xlu0 %v4603, 32
    %v4606 = vpop.permute.xlu0 %4605
    %v4608 = vadd.f32 %v4598, %v4606
    %v4609 = vtanh.pop %v4608
    %4611 = vrot.lane.b32.xlu0 %v4609, 64
    %v4612 = vpop.permute.xlu0 %4611
    %v4614 = vmul.f32 %v4596, %v4612
    %v4617 = vunpack.c.l.s4 1966171168
    %v4618 = vunpack.c.0.s8 %v4617
    %v4619 = vlaneseq
    %v4620 = vshrl.u32 %v4619, 7
    %v4621 = vsub.s32 %v4618, %v4620
    %v4622 = vrot.slane %v4614, %v4621
    %v4623 = vcombine.high %v4622, %v4622
    %v4625 = vunpack.c.l.s4 1966171168
    %v4626 = vunpack.c.0.s8 %v4625
    %v4627 = vlaneseq
    %v4628 = vshrl.u32 %v4627, 7
    %v4629 = vsub.s32 %v4626, %v4628
    %v4630 = vrot.slane %v4622, %v4629
    %v4632 = vunpack.c.l.s4 1966171168
    %v4633 = vunpack.c.0.s8 %v4632
    %v4634 = vlaneseq
    %v4635 = vshrl.u32 %v4634, 7
    %v4636 = vsub.s32 %v4633, %v4635
    %v4637 = vrot.slane %v4623, %v4636
    %v4638 = vlaneseq
    %v4639 = vshrl.u32 %v4638, 7
    %v4640 = vsub.s32 0, %v4639
    %v4641 = vrot.slane %v4630, %v4640
    %v4642 = vlaneseq
    %v4643 = vshrl.u32 %v4642, 7
    %v4644 = vsub.s32 0, %v4643
    %v4645 = vrot.slane %v4637, %v4644
    %4646 = vrot.lane.b32.xlu0 %v4641, 32
    %v4647 = vpop.permute.xlu0 %4646
    %4648 = vrot.lane.b32.xlu0 %v4645, 32
    %v4649 = vpop.permute.xlu0 %4648
    %4652 = vst.msk [vmem:[#allocation3 + $0x5] sm:$0x1] %vm585, %v4647
    %4653 = vst.msk [vmem:[#allocation3 + $0xd] sm:$0x1] %vm585, %v4649
    %v4654 = vrot.slane %v4503, 5
    %v4655 = vrot.slane %v4504, 4
    %v4656 = vsel %vm431, %v4655, %v4654
    %4657 = vrot.lane.b32.xlu0 %v4656, 32
    %v4658 = vpop.permute.xlu0 %4657
    %v4659 = vsel %vm300, %v4658, 0
    %4661 = vmatprep.subr.mxu0 0.0
    %4662 = vmatpush1.msra.mxu0 %v2931
    %4663 = vmatprep.subr.mxu0 0.0
    %4664 = vmatpush1.msra.mxu0 %v2932
    %4665 = vmatprep.subr.mxu0 0.0
    %4666 = vmatpush1.msra.mxu0 %v2933
    %4667 = vmatprep.subr.mxu0 0.0
    %4668 = vmatpush1.msra.mxu0 %v2934
    %4669 = vmatprep.subr.mxu0 0.0
    %4670 = vmatpush1.msra.mxu0 0.0
    %4671 = vmatprep.subr.mxu0 0.0
    %4672 = vmatpush1.msra.mxu0 0.0
    %4673 = vmatprep.subr.mxu0 0.0
    %4674 = vmatpush1.msra.mxu0 0.0
    %4675 = vmatprep.subr.mxu0 0.0
    %4676 = vmatpush1.msra.mxu0 0.0
    %4677 = vmatprep.subr.mxu0 0.0
    %4678 = vmatpush1.msra.mxu0 0.0
    %4679 = vmatprep.subr.mxu0 0.0
    %4680 = vmatpush1.msra.mxu0 0.0
    %4681 = vmatprep.subr.mxu0 0.0
    %4682 = vmatpush1.msra.mxu0 0.0
    %4683 = vmatprep.subr.mxu0 0.0
    %4684 = vmatpush1.msra.mxu0 0.0
    %4685 = vmatprep.subr.mxu0 0.0
    %4686 = vmatpush1.msra.mxu0 0.0
    %4687 = vmatprep.subr.mxu0 0.0
    %4688 = vmatpush1.msra.mxu0 0.0
    %4689 = vmatprep.subr.mxu0 0.0
    %4690 = vmatpush1.msra.mxu0 0.0
    %4691 = vmatprep.subr.mxu0 0.0
    %4692 = vmatpush1.msra.mxu0 0.0
    %4693 = vmatprep.subr.mxu0 0.0
    %4694 = vmatpush1.msra.mxu0 0.0
    %4695 = vmatprep.subr.mxu0 0.0
    %4696 = vmatpush1.msra.mxu0 0.0
    %4697 = vmatprep.subr.mxu0 0.0
    %4698 = vmatpush1.msra.mxu0 0.0
    %4699 = vmatprep.subr.mxu0 0.0
    %4700 = vmatpush1.msra.mxu0 0.0
    %4701 = vmatprep.subr.mxu0 0.0
    %4702 = vmatpush1.msra.mxu0 0.0
    %4703 = vmatprep.subr.mxu0 0.0
    %4704 = vmatpush1.msra.mxu0 0.0
    %4705 = vmatprep.subr.mxu0 0.0
    %4706 = vmatpush1.msra.mxu0 0.0
    %4707 = vmatprep.subr.mxu0 0.0
    %4708 = vmatpush1.msra.mxu0 0.0
    %4709 = vmatprep.subr.mxu0 0.0
    %4710 = vmatpush1.msra.mxu0 0.0
    %4711 = vmatprep.subr.mxu0 0.0
    %4712 = vmatpush1.msra.mxu0 0.0
    %4713 = vmatprep.subr.mxu0 0.0
    %4714 = vmatpush1.msra.mxu0 0.0
    %4715 = vmatprep.subr.mxu0 0.0
    %4716 = vmatpush1.msra.mxu0 0.0
    %4717 = vmatprep.subr.mxu0 0.0
    %4718 = vmatpush1.msra.mxu0 0.0
    %4719 = vmatprep.subr.mxu0 0.0
    %4720 = vmatpush1.msra.mxu0 0.0
    %4721 = vmatprep.subr.mxu0 0.0
    %4722 = vmatpush1.msra.mxu0 0.0
    %4723 = vmatprep.subr.mxu0 0.0
    %4724 = vmatpush1.msra.mxu0 0.0
    %4725 = vmatprep.mubr.f32.mxu0 0.0
    %4726 = vmatmul.mubr.f32.gmra.mrb[0].mxu0 %v4659
    %v4727 = vpop.f32.mrb[0].mxu0
    %v4728 = vadd.f32 0.0, %v4727
    %v4729 = vpop.f32.mrb[0].mxu0
    %4730 = vdwg.mxu0
    %v4732 = vrot.slane %v4728, 2
    %v4733 = vrot.slane %v4728, 3
    %v4736 = vadd.f32 %v2923, %v4732
    %v4737 = vadd.f32 %v2928, %v4733
    %v4738 = vxor.u32 %v4736, 2147483648
    %v4739 = vxor.u32 %v4737, 2147483648
    %v4740 = vmul.f32 %v4738, 1.442695
    %v4741 = vpow.pop %v4740
    %v4742 = vmul.f32 %v4739, 1.442695
    %v4743 = vpow.pop %v4742
    %v4744 = vadd.f32 %v4741, 1.0
    %v4745 = vadd.f32 %v4743, 1.0
    %v4746 = vrcp.pop %v4744
    %v4747 = vmul.f32 1.0, %v4746
    %v4748 = vrcp.pop %v4745
    %v4749 = vmul.f32 1.0, %v4748
    %v4750 = vtanh.pop %v4736
    %v4751 = vtanh.pop %v4737
    %v4754 = vrot.slane %v4491, 7
    %v4755 = vrot.slane %v4492, 7
    %v4758 = vmul.f32 %v4747, %v4754
    %v4759 = vmul.f32 %v4749, %v4755
    %4762 = vrot.lane.b32.xlu0 %v4750, 64
    %v4763 = vpop.permute.xlu0 %4762
    %4764 = vrot.lane.b32.xlu0 %v4751, 64
    %v4765 = vpop.permute.xlu0 %4764
    %v4768 = vmul.f32 %v4747, %v4763
    %v4769 = vmul.f32 %v4749, %v4765
    %4772 = vrot.lane.b32.xlu0 %v4768, 32
    %v4773 = vpop.permute.xlu0 %4772
    %4774 = vrot.lane.b32.xlu0 %v4769, 32
    %v4775 = vpop.permute.xlu0 %4774
    %v4778 = vadd.f32 %v4758, %v4773
    %v4779 = vadd.f32 %v4759, %v4775
    %v4780 = vtanh.pop %v4778
    %v4781 = vtanh.pop %v4779
    %4784 = vrot.lane.b32.xlu0 %v4780, 64
    %v4785 = vpop.permute.xlu0 %4784
    %4786 = vrot.lane.b32.xlu0 %v4781, 64
    %v4787 = vpop.permute.xlu0 %4786
    %v4790 = vmul.f32 %v4747, %v4785
    %v4791 = vmul.f32 %v4749, %v4787
    %v4794 = vrot.slane %v4791, 7
    %v4795 = vsel %vm2167, %v4794, %v4790
    %4796 = vrot.lane.b32.xlu0 %v4795, 32
    %v4797 = vpop.permute.xlu0 %4796
    %4799 = vst.msk [vmem:[#allocation4 - $0x6] sm:$0xc0] %vm2172, %v4797
    %4800 = vrot.lane.b32.xlu0 %v4614, 64
    %v4801 = vpop.permute.xlu0 %4800
    %4803 = vst.msk [vmem:[#allocation4] sm:$0x3] %vm441, %v4801
    %v4804 = vld [vmem:[#allocation4] sm:$0x3]
    %v4806 = vsel %vm450, %v4804, 0
    %4808 = vmatprep.subr.mxu0 0.0
    %4809 = vmatpush1.msra.mxu0 %v2935
    %4810 = vmatprep.subr.mxu0 0.0
    %4811 = vmatpush1.msra.mxu0 %v2936
    %4812 = vmatprep.subr.mxu0 0.0
    %4813 = vmatpush1.msra.mxu0 %v2937
    %4814 = vmatprep.subr.mxu0 0.0
    %4815 = vmatpush1.msra.mxu0 %v2938
    %4816 = vmatprep.subr.mxu0 0.0
    %4817 = vmatpush1.msra.mxu0 %v2939
    %4818 = vmatprep.subr.mxu0 0.0
    %4819 = vmatpush1.msra.mxu0 %v2940
    %4820 = vmatprep.subr.mxu0 0.0
    %4821 = vmatpush1.msra.mxu0 %v2941
    %4822 = vmatprep.subr.mxu0 0.0
    %4823 = vmatpush1.msra.mxu0 %v2942
    %4824 = vmatprep.subr.mxu0 0.0
    %4825 = vmatpush1.msra.mxu0 0.0
    %4826 = vmatprep.subr.mxu0 0.0
    %4827 = vmatpush1.msra.mxu0 0.0
    %4828 = vmatprep.subr.mxu0 0.0
    %4829 = vmatpush1.msra.mxu0 0.0
    %4830 = vmatprep.subr.mxu0 0.0
    %4831 = vmatpush1.msra.mxu0 0.0
    %4832 = vmatprep.subr.mxu0 0.0
    %4833 = vmatpush1.msra.mxu0 0.0
    %4834 = vmatprep.subr.mxu0 0.0
    %4835 = vmatpush1.msra.mxu0 0.0
    %4836 = vmatprep.subr.mxu0 0.0
    %4837 = vmatpush1.msra.mxu0 0.0
    %4838 = vmatprep.subr.mxu0 0.0
    %4839 = vmatpush1.msra.mxu0 0.0
    %4840 = vmatprep.subr.mxu0 0.0
    %4841 = vmatpush1.msra.mxu0 0.0
    %4842 = vmatprep.subr.mxu0 0.0
    %4843 = vmatpush1.msra.mxu0 0.0
    %4844 = vmatprep.subr.mxu0 0.0
    %4845 = vmatpush1.msra.mxu0 0.0
    %4846 = vmatprep.subr.mxu0 0.0
    %4847 = vmatpush1.msra.mxu0 0.0
    %4848 = vmatprep.subr.mxu0 0.0
    %4849 = vmatpush1.msra.mxu0 0.0
    %4850 = vmatprep.subr.mxu0 0.0
    %4851 = vmatpush1.msra.mxu0 0.0
    %4852 = vmatprep.subr.mxu0 0.0
    %4853 = vmatpush1.msra.mxu0 0.0
    %4854 = vmatprep.subr.mxu0 0.0
    %4855 = vmatpush1.msra.mxu0 0.0
    %4856 = vmatprep.subr.mxu0 0.0
    %4857 = vmatpush1.msra.mxu0 0.0
    %4858 = vmatprep.subr.mxu0 0.0
    %4859 = vmatpush1.msra.mxu0 0.0
    %4860 = vmatprep.subr.mxu0 0.0
    %4861 = vmatpush1.msra.mxu0 0.0
    %4862 = vmatprep.subr.mxu0 0.0
    %4863 = vmatpush1.msra.mxu0 0.0
    %4864 = vmatprep.subr.mxu0 0.0
    %4865 = vmatpush1.msra.mxu0 0.0
    %4866 = vmatprep.subr.mxu0 0.0
    %4867 = vmatpush1.msra.mxu0 0.0
    %4868 = vmatprep.subr.mxu0 0.0
    %4869 = vmatpush1.msra.mxu0 0.0
    %4870 = vmatprep.subr.mxu0 0.0
    %4871 = vmatpush1.msra.mxu0 0.0
    %4872 = vmatprep.mubr.f32.mxu0 0.0
    %4873 = vmatmul.mubr.f32.gmra.mrb[0].mxu0 %v4806
    %v4874 = vpop.f32.mrb[0].mxu0
    %v4875 = vadd.f32 %v3088, %v4874
    %v4876 = vpop.f32.mrb[0].mxu0
    %4877 = vdwg.mxu0
    %v4878 = vxor.u32 %v4875, 2147483648
    %v4879 = vmul.f32 %v4878, 1.442695
    %v4880 = vpow.pop %v4879
    %v4881 = vadd.f32 %v4880, 1.0
    %v4882 = vrcp.pop %v4881
    %v4883 = vmul.f32 1.0, %v4882
    %v4884 = vtanh.pop %v4875
    %v4885 = vmul.f32 %v4883, %v4608
    %4887 = vrot.lane.b32.xlu0 %v4884, 64
    %v4888 = vpop.permute.xlu0 %4887
    %v4890 = vmul.f32 %v4883, %v4888
    %4892 = vrot.lane.b32.xlu0 %v4890, 32
    %v4893 = vpop.permute.xlu0 %4892
    %v4895 = vadd.f32 %v4885, %v4893
    %v4896 = vtanh.pop %v4895
    %4898 = vrot.lane.b32.xlu0 %v4896, 64
    %v4899 = vpop.permute.xlu0 %4898
    %v4901 = vmul.f32 %v4883, %v4899
    %v4904 = vunpack.c.l.s4 1966171168
    %v4905 = vunpack.c.0.s8 %v4904
    %v4906 = vlaneseq
    %v4907 = vshrl.u32 %v4906, 7
    %v4908 = vsub.s32 %v4905, %v4907
    %v4909 = vrot.slane %v4901, %v4908
    %v4910 = vcombine.high %v4909, %v4909
    %v4912 = vunpack.c.l.s4 1966171168
    %v4913 = vunpack.c.0.s8 %v4912
    %v4914 = vlaneseq
    %v4915 = vshrl.u32 %v4914, 7
    %v4916 = vsub.s32 %v4913, %v4915
    %v4917 = vrot.slane %v4909, %v4916
    %v4919 = vunpack.c.l.s4 1966171168
    %v4920 = vunpack.c.0.s8 %v4919
    %v4921 = vlaneseq
    %v4922 = vshrl.u32 %v4921, 7
    %v4923 = vsub.s32 %v4920, %v4922
    %v4924 = vrot.slane %v4910, %v4923
    %v4925 = vlaneseq
    %v4926 = vshrl.u32 %v4925, 7
    %v4927 = vsub.s32 0, %v4926
    %v4928 = vrot.slane %v4917, %v4927
    %v4929 = vlaneseq
    %v4930 = vshrl.u32 %v4929, 7
    %v4931 = vsub.s32 0, %v4930
    %v4932 = vrot.slane %v4924, %v4931
    %4933 = vrot.lane.b32.xlu0 %v4928, 32
    %v4934 = vpop.permute.xlu0 %4933
    %4935 = vrot.lane.b32.xlu0 %v4932, 32
    %v4936 = vpop.permute.xlu0 %4935
    %4939 = vst.msk [vmem:[#allocation3 + $0x6] sm:$0x1] %vm585, %v4934
    %4940 = vst.msk [vmem:[#allocation3 + $0xe] sm:$0x1] %vm585, %v4936
    %v4941 = vrot.slane %v4790, 6
    %v4942 = vrot.slane %v4791, 5
    %v4943 = vsel %vm431, %v4942, %v4941
    %4944 = vrot.lane.b32.xlu0 %v4943, 32
    %v4945 = vpop.permute.xlu0 %4944
    %v4946 = vsel %vm300, %v4945, 0
    %4948 = vmatprep.subr.mxu0 0.0
    %4949 = vmatpush1.msra.mxu0 %v2931
    %4950 = vmatprep.subr.mxu0 0.0
    %4951 = vmatpush1.msra.mxu0 %v2932
    %4952 = vmatprep.subr.mxu0 0.0
    %4953 = vmatpush1.msra.mxu0 %v2933
    %4954 = vmatprep.subr.mxu0 0.0
    %4955 = vmatpush1.msra.mxu0 %v2934
    %4956 = vmatprep.subr.mxu0 0.0
    %4957 = vmatpush1.msra.mxu0 0.0
    %4958 = vmatprep.subr.mxu0 0.0
    %4959 = vmatpush1.msra.mxu0 0.0
    %4960 = vmatprep.subr.mxu0 0.0
    %4961 = vmatpush1.msra.mxu0 0.0
    %4962 = vmatprep.subr.mxu0 0.0
    %4963 = vmatpush1.msra.mxu0 0.0
    %4964 = vmatprep.subr.mxu0 0.0
    %4965 = vmatpush1.msra.mxu0 0.0
    %4966 = vmatprep.subr.mxu0 0.0
    %4967 = vmatpush1.msra.mxu0 0.0
    %4968 = vmatprep.subr.mxu0 0.0
    %4969 = vmatpush1.msra.mxu0 0.0
    %4970 = vmatprep.subr.mxu0 0.0
    %4971 = vmatpush1.msra.mxu0 0.0
    %4972 = vmatprep.subr.mxu0 0.0
    %4973 = vmatpush1.msra.mxu0 0.0
    %4974 = vmatprep.subr.mxu0 0.0
    %4975 = vmatpush1.msra.mxu0 0.0
    %4976 = vmatprep.subr.mxu0 0.0
    %4977 = vmatpush1.msra.mxu0 0.0
    %4978 = vmatprep.subr.mxu0 0.0
    %4979 = vmatpush1.msra.mxu0 0.0
    %4980 = vmatprep.subr.mxu0 0.0
    %4981 = vmatpush1.msra.mxu0 0.0
    %4982 = vmatprep.subr.mxu0 0.0
    %4983 = vmatpush1.msra.mxu0 0.0
    %4984 = vmatprep.subr.mxu0 0.0
    %4985 = vmatpush1.msra.mxu0 0.0
    %4986 = vmatprep.subr.mxu0 0.0
    %4987 = vmatpush1.msra.mxu0 0.0
    %4988 = vmatprep.subr.mxu0 0.0
    %4989 = vmatpush1.msra.mxu0 0.0
    %4990 = vmatprep.subr.mxu0 0.0
    %4991 = vmatpush1.msra.mxu0 0.0
    %4992 = vmatprep.subr.mxu0 0.0
    %4993 = vmatpush1.msra.mxu0 0.0
    %4994 = vmatprep.subr.mxu0 0.0
    %4995 = vmatpush1.msra.mxu0 0.0
    %4996 = vmatprep.subr.mxu0 0.0
    %4997 = vmatpush1.msra.mxu0 0.0
    %4998 = vmatprep.subr.mxu0 0.0
    %4999 = vmatpush1.msra.mxu0 0.0
    %5000 = vmatprep.subr.mxu0 0.0
    %5001 = vmatpush1.msra.mxu0 0.0
    %5002 = vmatprep.subr.mxu0 0.0
    %5003 = vmatpush1.msra.mxu0 0.0
    %5004 = vmatprep.subr.mxu0 0.0
    %5005 = vmatpush1.msra.mxu0 0.0
    %5006 = vmatprep.subr.mxu0 0.0
    %5007 = vmatpush1.msra.mxu0 0.0
    %5008 = vmatprep.subr.mxu0 0.0
    %5009 = vmatpush1.msra.mxu0 0.0
    %5010 = vmatprep.subr.mxu0 0.0
    %5011 = vmatpush1.msra.mxu0 0.0
    %5012 = vmatprep.mubr.f32.mxu0 0.0
    %5013 = vmatmul.mubr.f32.gmra.mrb[0].mxu0 %v4946
    %v5014 = vpop.f32.mrb[0].mxu0
    %v5015 = vadd.f32 0.0, %v5014
    %v5016 = vpop.f32.mrb[0].mxu0
    %5017 = vdwg.mxu0
    %v5019 = vrot.slane %v5015, 1
    %v5020 = vrot.slane %v5015, 2
    %v5023 = vadd.f32 %v2923, %v5019
    %v5024 = vadd.f32 %v2928, %v5020
    %v5025 = vxor.u32 %v5023, 2147483648
    %v5026 = vxor.u32 %v5024, 2147483648
    %v5027 = vmul.f32 %v5025, 1.442695
    %v5028 = vpow.pop %v5027
    %v5029 = vmul.f32 %v5026, 1.442695
    %v5030 = vpow.pop %v5029
    %v5031 = vadd.f32 %v5028, 1.0
    %v5032 = vadd.f32 %v5030, 1.0
    %v5033 = vrcp.pop %v5031
    %v5034 = vmul.f32 1.0, %v5033
    %v5035 = vrcp.pop %v5032
    %v5036 = vmul.f32 1.0, %v5035
    %v5037 = vtanh.pop %v5023
    %v5038 = vtanh.pop %v5024
    %v5041 = vrot.slane %v4778, 7
    %v5042 = vrot.slane %v4779, 7
    %v5045 = vmul.f32 %v5034, %v5041
    %v5046 = vmul.f32 %v5036, %v5042
    %5049 = vrot.lane.b32.xlu0 %v5037, 64
    %v5050 = vpop.permute.xlu0 %5049
    %5051 = vrot.lane.b32.xlu0 %v5038, 64
    %v5052 = vpop.permute.xlu0 %5051
    %v5055 = vmul.f32 %v5034, %v5050
    %v5056 = vmul.f32 %v5036, %v5052
    %5059 = vrot.lane.b32.xlu0 %v5055, 32
    %v5060 = vpop.permute.xlu0 %5059
    %5061 = vrot.lane.b32.xlu0 %v5056, 32
    %v5062 = vpop.permute.xlu0 %5061
    %v5065 = vadd.f32 %v5045, %v5060
    %v5066 = vadd.f32 %v5046, %v5062
    %v5067 = vtanh.pop %v5065
    %v5068 = vtanh.pop %v5066
    %5071 = vrot.lane.b32.xlu0 %v5067, 64
    %v5072 = vpop.permute.xlu0 %5071
    %5073 = vrot.lane.b32.xlu0 %v5068, 64
    %v5074 = vpop.permute.xlu0 %5073
    %v5077 = vmul.f32 %v5034, %v5072
    %v5078 = vmul.f32 %v5036, %v5074
    %v5081 = vrot.slane %v5078, 7
    %5082 = vrot.lane.b32.xlu0 %v5077, 32
    %v5083 = vpop.permute.xlu0 %5082
    %5084 = vrot.lane.b32.xlu0 %v5081, 32
    %v5085 = vpop.permute.xlu0 %5084
    %5088 = vst.msk [vmem:[#allocation4 - $0x7] sm:$0x80] %vm2462, %v5083
    %5089 = vst.msk [vmem:[#allocation4 + $0x1] sm:$0x1] %vm585, %v5085
    %5090 = vrot.lane.b32.xlu0 %v4901, 64
    %v5091 = vpop.permute.xlu0 %5090
    %5093 = vst.msk [vmem:[#allocation4] sm:$0x3] %vm441, %v5091
    %v5094 = vld [vmem:[#allocation4] sm:$0x3]
    %v5096 = vsel %vm450, %v5094, 0
    %5098 = vmatprep.subr.mxu0 0.0
    %5099 = vmatpush1.msra.mxu0 %v2935
    %5100 = vmatprep.subr.mxu0 0.0
    %5101 = vmatpush1.msra.mxu0 %v2936
    %5102 = vmatprep.subr.mxu0 0.0
    %5103 = vmatpush1.msra.mxu0 %v2937
    %5104 = vmatprep.subr.mxu0 0.0
    %5105 = vmatpush1.msra.mxu0 %v2938
    %5106 = vmatprep.subr.mxu0 0.0
    %5107 = vmatpush1.msra.mxu0 %v2939
    %5108 = vmatprep.subr.mxu0 0.0
    %5109 = vmatpush1.msra.mxu0 %v2940
    %5110 = vmatprep.subr.mxu0 0.0
    %5111 = vmatpush1.msra.mxu0 %v2941
    %5112 = vmatprep.subr.mxu0 0.0
    %5113 = vmatpush1.msra.mxu0 %v2942
    %5114 = vmatprep.subr.mxu0 0.0
    %5115 = vmatpush1.msra.mxu0 0.0
    %5116 = vmatprep.subr.mxu0 0.0
    %5117 = vmatpush1.msra.mxu0 0.0
    %5118 = vmatprep.subr.mxu0 0.0
    %5119 = vmatpush1.msra.mxu0 0.0
    %5120 = vmatprep.subr.mxu0 0.0
    %5121 = vmatpush1.msra.mxu0 0.0
    %5122 = vmatprep.subr.mxu0 0.0
    %5123 = vmatpush1.msra.mxu0 0.0
    %5124 = vmatprep.subr.mxu0 0.0
    %5125 = vmatpush1.msra.mxu0 0.0
    %5126 = vmatprep.subr.mxu0 0.0
    %5127 = vmatpush1.msra.mxu0 0.0
    %5128 = vmatprep.subr.mxu0 0.0
    %5129 = vmatpush1.msra.mxu0 0.0
    %5130 = vmatprep.subr.mxu0 0.0
    %5131 = vmatpush1.msra.mxu0 0.0
    %5132 = vmatprep.subr.mxu0 0.0
    %5133 = vmatpush1.msra.mxu0 0.0
    %5134 = vmatprep.subr.mxu0 0.0
    %5135 = vmatpush1.msra.mxu0 0.0
    %5136 = vmatprep.subr.mxu0 0.0
    %5137 = vmatpush1.msra.mxu0 0.0
    %5138 = vmatprep.subr.mxu0 0.0
    %5139 = vmatpush1.msra.mxu0 0.0
    %5140 = vmatprep.subr.mxu0 0.0
    %5141 = vmatpush1.msra.mxu0 0.0
    %5142 = vmatprep.subr.mxu0 0.0
    %5143 = vmatpush1.msra.mxu0 0.0
    %5144 = vmatprep.subr.mxu0 0.0
    %5145 = vmatpush1.msra.mxu0 0.0
    %5146 = vmatprep.subr.mxu0 0.0
    %5147 = vmatpush1.msra.mxu0 0.0
    %5148 = vmatprep.subr.mxu0 0.0
    %5149 = vmatpush1.msra.mxu0 0.0
    %5150 = vmatprep.subr.mxu0 0.0
    %5151 = vmatpush1.msra.mxu0 0.0
    %5152 = vmatprep.subr.mxu0 0.0
    %5153 = vmatpush1.msra.mxu0 0.0
    %5154 = vmatprep.subr.mxu0 0.0
    %5155 = vmatpush1.msra.mxu0 0.0
    %5156 = vmatprep.subr.mxu0 0.0
    %5157 = vmatpush1.msra.mxu0 0.0
    %5158 = vmatprep.subr.mxu0 0.0
    %5159 = vmatpush1.msra.mxu0 0.0
    %5160 = vmatprep.subr.mxu0 0.0
    %5161 = vmatpush1.msra.mxu0 0.0
    %5162 = vmatprep.mubr.f32.mxu0 0.0
    %5163 = vmatmul.mubr.f32.gmra.mrb[0].mxu0 %v5096
    %v5164 = vpop.f32.mrb[0].mxu0
    %v5165 = vadd.f32 %v3088, %v5164
    %v5166 = vpop.f32.mrb[0].mxu0
    %5167 = vdwg.mxu0
    %v5168 = vxor.u32 %v5165, 2147483648
    %v5169 = vmul.f32 %v5168, 1.442695
    %v5170 = vpow.pop %v5169
    %v5171 = vadd.f32 %v5170, 1.0
    %v5172 = vrcp.pop %v5171
    %v5173 = vmul.f32 1.0, %v5172
    %v5174 = vtanh.pop %v5165
    %v5175 = vmul.f32 %v5173, %v4895
    %5177 = vrot.lane.b32.xlu0 %v5174, 64
    %v5178 = vpop.permute.xlu0 %5177
    %v5180 = vmul.f32 %v5173, %v5178
    %5182 = vrot.lane.b32.xlu0 %v5180, 32
    %v5183 = vpop.permute.xlu0 %5182
    %v5185 = vadd.f32 %v5175, %v5183
    %v5186 = vtanh.pop %v5185
    %5188 = vrot.lane.b32.xlu0 %v5186, 64
    %v5189 = vpop.permute.xlu0 %5188
    %v5191 = vmul.f32 %v5173, %v5189
    %v5194 = vunpack.c.l.s4 1966171168
    %v5195 = vunpack.c.0.s8 %v5194
    %v5196 = vlaneseq
    %v5197 = vshrl.u32 %v5196, 7
    %v5198 = vsub.s32 %v5195, %v5197
    %v5199 = vrot.slane %v5191, %v5198
    %v5200 = vcombine.high %v5199, %v5199
    %v5202 = vunpack.c.l.s4 1966171168
    %v5203 = vunpack.c.0.s8 %v5202
    %v5204 = vlaneseq
    %v5205 = vshrl.u32 %v5204, 7
    %v5206 = vsub.s32 %v5203, %v5205
    %v5207 = vrot.slane %v5199, %v5206
    %v5209 = vunpack.c.l.s4 1966171168
    %v5210 = vunpack.c.0.s8 %v5209
    %v5211 = vlaneseq
    %v5212 = vshrl.u32 %v5211, 7
    %v5213 = vsub.s32 %v5210, %v5212
    %v5214 = vrot.slane %v5200, %v5213
    %v5215 = vlaneseq
    %v5216 = vshrl.u32 %v5215, 7
    %v5217 = vsub.s32 0, %v5216
    %v5218 = vrot.slane %v5207, %v5217
    %v5219 = vlaneseq
    %v5220 = vshrl.u32 %v5219, 7
    %v5221 = vsub.s32 0, %v5220
    %v5222 = vrot.slane %v5214, %v5221
    %5223 = vrot.lane.b32.xlu0 %v5218, 32
    %v5224 = vpop.permute.xlu0 %5223
    %5225 = vrot.lane.b32.xlu0 %v5222, 32
    %v5226 = vpop.permute.xlu0 %5225
    %5229 = vst.msk [vmem:[#allocation3 + $0x7] sm:$0x1] %vm585, %v5224
    %5230 = vst.msk [vmem:[#allocation3 + $0xf] sm:$0x1] %vm585, %v5226
    %v5231 = vld [vmem:[#allocation3] sm:$0xff]
    %v5232 = vld [vmem:[#allocation3 + $0x8] sm:$0xff]
    %v5233 = vld [vmem:[%s19] sm:$0xff]
    %v5234 = vld [vmem:[%s19 + $0x8] sm:$0xff]
    %v5235 = vld [vmem:[%s19 + $0x10] sm:$0xff]
    %v5236 = vld [vmem:[%s19 + $0x18] sm:$0xff]
    %v5237 = vld [vmem:[%s20] sm:$0x1]
    %v5239 = vlaneseq
    %v5240 = vshrl.u32 %v5239, 7
    %v5241 = vsub.s32 0, %v5240
    %v5242 = vrot.slane %v5237, %v5241
    %v5245 = vsel %vm300, %v5231, 0
    %v5248 = vsel %vm300, %v5232, 0
    %5250 = vmatprep.subr.mxu0 0.0
    %5251 = vmatpush1.msra.mxu0 %v5233
    %5252 = vmatprep.subr.mxu0 0.0
    %5253 = vmatpush1.msra.mxu0 %v5234
    %5254 = vmatprep.subr.mxu0 0.0
    %5255 = vmatpush1.msra.mxu0 %v5235
    %5256 = vmatprep.subr.mxu0 0.0
    %5257 = vmatpush1.msra.mxu0 %v5236
    %5258 = vmatprep.subr.mxu0 0.0
    %5259 = vmatpush1.msra.mxu0 0.0
    %5260 = vmatprep.subr.mxu0 0.0
    %5261 = vmatpush1.msra.mxu0 0.0
    %5262 = vmatprep.subr.mxu0 0.0
    %5263 = vmatpush1.msra.mxu0 0.0
    %5264 = vmatprep.subr.mxu0 0.0
    %5265 = vmatpush1.msra.mxu0 0.0
    %5266 = vmatprep.subr.mxu0 0.0
    %5267 = vmatpush1.msra.mxu0 0.0
    %5268 = vmatprep.subr.mxu0 0.0
    %5269 = vmatpush1.msra.mxu0 0.0
    %5270 = vmatprep.subr.mxu0 0.0
    %5271 = vmatpush1.msra.mxu0 0.0
    %5272 = vmatprep.subr.mxu0 0.0
    %5273 = vmatpush1.msra.mxu0 0.0
    %5274 = vmatprep.subr.mxu0 0.0
    %5275 = vmatpush1.msra.mxu0 0.0
    %5276 = vmatprep.subr.mxu0 0.0
    %5277 = vmatpush1.msra.mxu0 0.0
    %5278 = vmatprep.subr.mxu0 0.0
    %5279 = vmatpush1.msra.mxu0 0.0
    %5280 = vmatprep.subr.mxu0 0.0
    %5281 = vmatpush1.msra.mxu0 0.0
    %5282 = vmatprep.subr.mxu0 0.0
    %5283 = vmatpush1.msra.mxu0 0.0
    %5284 = vmatprep.subr.mxu0 0.0
    %5285 = vmatpush1.msra.mxu0 0.0
    %5286 = vmatprep.subr.mxu0 0.0
    %5287 = vmatpush1.msra.mxu0 0.0
    %5288 = vmatprep.subr.mxu0 0.0
    %5289 = vmatpush1.msra.mxu0 0.0
    %5290 = vmatprep.subr.mxu0 0.0
    %5291 = vmatpush1.msra.mxu0 0.0
    %5292 = vmatprep.subr.mxu0 0.0
    %5293 = vmatpush1.msra.mxu0 0.0
    %5294 = vmatprep.subr.mxu0 0.0
    %5295 = vmatpush1.msra.mxu0 0.0
    %5296 = vmatprep.subr.mxu0 0.0
    %5297 = vmatpush1.msra.mxu0 0.0
    %5298 = vmatprep.subr.mxu0 0.0
    %5299 = vmatpush1.msra.mxu0 0.0
    %5300 = vmatprep.subr.mxu0 0.0
    %5301 = vmatpush1.msra.mxu0 0.0
    %5302 = vmatprep.subr.mxu0 0.0
    %5303 = vmatpush1.msra.mxu0 0.0
    %5304 = vmatprep.subr.mxu0 0.0
    %5305 = vmatpush1.msra.mxu0 0.0
    %5306 = vmatprep.subr.mxu0 0.0
    %5307 = vmatpush1.msra.mxu0 0.0
    %5308 = vmatprep.subr.mxu0 0.0
    %5309 = vmatpush1.msra.mxu0 0.0
    %5310 = vmatprep.subr.mxu0 0.0
    %5311 = vmatpush1.msra.mxu0 0.0
    %5312 = vmatprep.subr.mxu0 0.0
    %5313 = vmatpush1.msra.mxu0 0.0
    %5314 = vmatprep.mubr.f32.mxu0 0.0
    %5315 = vmatmul.mubr.f32.gmra.mrb[0].mxu0 %v5245
    %v5316 = vpop.f32.mrb[0].mxu0
    %v5317 = vadd.f32 %v5242, %v5316
    %v5318 = vpop.f32.mrb[0].mxu0
    %5319 = vmatprep.mubr.f32.mxu0 0.0
    %5320 = vmatmul.mubr.f32.gmra.mrb[0].mxu0 %v5248
    %v5321 = vpop.f32.mrb[0].mxu0
    %v5322 = vadd.f32 %v5242, %v5321
    %v5323 = vpop.f32.mrb[0].mxu0
    %5324 = vdwg.mxu0
    %5325 = vst.msk [vmem:[#allocation5] sm:$0xff] %vm205, %v5317
    %5326 = vst.msk [vmem:[#allocation5 + $0x8] sm:$0xff] %vm205, %v5322
    // Predicated region
    $region86: #{lstm_vae_forward.1} parent=1 // pred_check
      _
    $region87: #{lstm_vae_forward.1} parent=1 // pred_check_branch
      %5328 = sbr.rel (0) target = $region89
    $region88: #{lstm_vae_forward.1} parent=1 // pred_region
      %s5330 = ssub.s32 256, 256
      %5331 = vsyncadd [#allocation6], %s5330
      %s5332 = sshll.u32 [#allocation5], 4
      %s5333 = int_to_ptr.vmem [resolvable:$true] %s5332
      %5338 = dma.vmem_to_hbm [thread:$0]  %s5333, 256, %s21, [#allocation6], 128, 128, 8
    $region89: #{lstm_vae_forward.1} parent=1 // pred_fallthru
      _
    // Predicated region
    $region90: #{lstm_vae_forward.1} parent=1 // pred_check
      _
    $region91: #{lstm_vae_forward.1} parent=1 // pred_check_branch
      %5340 = sbr.rel (0) target = $region93
    $region92: #{lstm_vae_forward.1} parent=1 // pred_region
      %s5342 = ssub.s32 256, 256
      %5343 = vsyncadd [#allocation8], %s5342
      %s5344 = sshll.u32 [#allocation7], 4
      %s5345 = int_to_ptr.vmem [resolvable:$true] %s5344
      %5350 = dma.vmem_to_hbm [thread:$0]  %s5345, 256, %s22, [#allocation8], 128, 128, 8
    $region93: #{lstm_vae_forward.1} parent=1 // pred_fallthru
      _
    // Predicated region
    $region94: #{lstm_vae_forward.1} parent=1 // pred_check
      _
    $region95: #{lstm_vae_forward.1} parent=1 // pred_check_branch
      %5352 = sbr.rel (0) target = $region97
    $region96: #{lstm_vae_forward.1} parent=1 // pred_region
      %s5354 = ssub.s32 256, 256
      %5355 = vsyncadd [#allocation8], %s5354
      %s5356 = sshll.u32 [#allocation9], 4
      %s5357 = int_to_ptr.vmem [resolvable:$true] %s5356
      %5362 = dma.vmem_to_hbm [thread:$0]  %s5357, 256, %s23, [#allocation8], 128, 128, 8
    $region97: #{lstm_vae_forward.1} parent=1 // pred_fallthru
      _
    // Predicated region
    $region98: #{lstm_vae_forward.1} parent=1 // pred_check
      _
    $region99: #{lstm_vae_forward.1} parent=1 // pred_check_branch
      %5364 = sbr.rel (0) target = $region101
    $region100: #{lstm_vae_forward.1} parent=1 // pred_region
      %5365 = dma.done [#allocation6], 256
    $region101: #{lstm_vae_forward.1} parent=1 // pred_fallthru
      _
    // Predicated region
    $region102: #{lstm_vae_forward.1} parent=1 // pred_check
      _
    $region103: #{lstm_vae_forward.1} parent=1 // pred_check_branch
      %5367 = sbr.rel (0) target = $region105
    $region104: #{lstm_vae_forward.1} parent=1 // pred_region
      %5368 = dma.done [#allocation8], 256
    $region105: #{lstm_vae_forward.1} parent=1 // pred_fallthru
      _
    // Predicated region
    $region106: #{lstm_vae_forward.1} parent=1 // pred_check
      _
    $region107: #{lstm_vae_forward.1} parent=1 // pred_check_branch
      %5370 = sbr.rel (0) target = $region109
    $region108: #{lstm_vae_forward.1} parent=1 // pred_region
      %5371 = dma.done [#allocation8], 256
    $region109: #{lstm_vae_forward.1} parent=1 // pred_fallthru
      _
    %5372 = vsyncpa [#allocation6], 1
    %5373 = vsyncpa [#allocation8], 1

</llo_original>
